<compile_context>
chip_gen: v5e
topology: v5e:2x2
jax: 0.10.0
libtpu: 0.0.40
codegen_flags: <defaults>
</compile_context>

<pallas_src>
import functools

import numpy as np
import jax
import jax.numpy as jnp
from jax import lax
from jax.experimental import pallas as pl
from jax.experimental.pallas import tpu as pltpu


# ----------------------------------------------------------------------------
# Spec helpers
# ----------------------------------------------------------------------------
def _full_spec(shape):
    n = len(shape)
    return pl.BlockSpec(tuple(shape), lambda b, _n=n: (0,) * _n)


def _sample_spec(shape):
    n = len(shape)
    return pl.BlockSpec((1,) + tuple(shape[1:]),
                        lambda b, _n=n: (b,) + (0,) * (_n - 1))


def _round16(n):
    return ((n + 15) // 16) * 16


def _masks(H, W):
    """Edge masks on the base grid (all f32): left/right column validity and
    the 9-tap in-image mask used for the zero-padded z injection."""
    t, s = np.divmod(np.arange(H * W), W)
    mask_l = (s > 0).astype(np.float32)[:, None]           # has left neighbor
    mask_r = (s < W - 1).astype(np.float32)[:, None]        # has right neighbor
    cols = []
    for dy in (-1, 0, 1):
        for dx in (-1, 0, 1):
            cols.append((t + dy >= 0) & (t + dy < H) & (s + dx >= 0) & (s + dx < W))
    mask9 = np.stack(cols, axis=1).astype(np.float32)        # (HW, 9)
    return jnp.asarray(mask9), jnp.asarray(mask_l), jnp.asarray(mask_r)


# ----------------------------------------------------------------------------
# Fully fused decoder kernel
# ----------------------------------------------------------------------------
def _build_kernel(*, H, W, dim, n_blocks, num_ups):
    HW = H * W
    P = _round16(max(W, 1))                  # zero-pad rows (>= W, 16-aligned)
    f32, bf16 = jnp.float32, jnp.bfloat16
    n_up_refs = 2 * num_ups
    widths = [2 * dim * (1 << s) for s in range(num_ups)]    # upsample slab widths

    def kernel(*refs):
        (x_ref, zc_ref, m9_ref, ml_ref, mr_ref,
         w1_ref, b1_ref, w2_ref, b2_ref, w3_ref, b3_ref,
         wx_ref, wz_ref, br_ref) = refs[:14]
        up_refs = refs[14:14 + n_up_refs]
        wf_ref, bf_ref = refs[14 + n_up_refs], refs[15 + n_up_refs]
        out_ref = refs[16 + n_up_refs]
        slab_res = refs[17 + n_up_refs]
        up_slabs = refs[18 + n_up_refs:]

        b = pl.program_id(0)

        # ---- zero ONLY the pad rows of the scratch slabs (body rows are fully
        #      overwritten every sample / every conv). ----
        slab_res[pl.ds(0, P), :] = jnp.zeros((P, 3 * dim), bf16)
        slab_res[pl.ds(P + HW, P), :] = jnp.zeros((P, 3 * dim), bf16)
        for s in range(num_ups):
            up_slabs[s][pl.ds(HW, P), :] = jnp.zeros((P, widths[s]), bf16)

        mask9 = m9_ref[...]                                   # (HW, 9)  f32
        mask_l = ml_ref[...]                                  # (HW, 1)  f32
        mask_r = mr_ref[...]                                  # (HW, 1)  f32

        # ---------------- MLP: Linear+ReLU, Linear+ReLU, Linear ----------------
        zcv = zc_ref[pl.ds(b, 1), :].astype(bf16)             # (1, latent+dom)
        h = jnp.dot(zcv, w1_ref[...], preferred_element_type=f32) + b1_ref[...]
        h = jnp.maximum(h, 0.0).astype(bf16)
        h = jnp.dot(h, w2_ref[...], preferred_element_type=f32) + b2_ref[...]
        h = jnp.maximum(h, 0.0).astype(bf16)
        zall = jnp.dot(h, w3_ref[...], preferred_element_type=f32) + b3_ref[...]

        # ---------------- DecResnetBlocks (all fused) ----------------
        def conv3x3(v, ci):
            # v: (HW, dim) f32.  Build [x(p-1)|x(p)|x(p+1)] body (pltpu.roll has
            # jnp.roll semantics; the wrapped element is zeroed by the mask).
            left = pltpu.roll(v, 1, 0) * mask_l
            right = pltpu.roll(v, HW - 1, 0) * mask_r
            body = jnp.concatenate([left, v, right], axis=-1).astype(bf16)
            slab_res[pl.ds(P, HW), :] = body                  # (HW, 3*dim)
            acc = jnp.dot(body, wx_ref[ci, 1], preferred_element_type=f32)
            acc = acc + jnp.dot(slab_res[pl.ds(P - W, HW), :], wx_ref[ci, 0],
                                preferred_element_type=f32)
            acc = acc + jnp.dot(slab_res[pl.ds(P + W, HW), :], wx_ref[ci, 2],
                                preferred_element_type=f32)
            return acc

        def z_bias(ci, zvec):
            # bias + spatially-masked z injection (exact zero-pad semantics).
            zb = jnp.dot(zvec, wz_ref[ci], preferred_element_type=f32)  # (1, 9*dim)
            acc = br_ref[ci]                                            # (1, dim)
            for k in range(9):
                acc = acc + mask9[:, k:k + 1] * zb[:, k * dim:(k + 1) * dim]
            return acc                                                   # (HW, dim)

        cur = x_ref[0]                                        # (HW, dim) f32 residual stream
        for i in range(n_blocks):
            zvec = zall[:, i * dim:(i + 1) * dim].astype(bf16)
            hmid = jnp.maximum(conv3x3(cur, 2 * i) + z_bias(2 * i, zvec), 0.0)
            cur = conv3x3(hmid, 2 * i + 1) + z_bias(2 * i + 1, zvec) + cur

        # ---------------- Upsample stages: ConvT(3,2,1,op1) + LayerNorm + ReLU --------
        # Activations stay phase-packed on lanes over the base (H, W) grid.
        blocks = {(0, 0): cur}
        c_in = dim
        for s in range(num_ups):
            nph = 1 << s                                      # phases per axis (input)
            half = nph * nph * c_in
            cout = c_in // 2
            wref, scref = up_refs[2 * s], up_refs[2 * s + 1]
            w00 = wref[pl.ds(0, c_in), :]
            w01 = wref[pl.ds(c_in, 2 * c_in), :]
            w10 = wref[pl.ds(3 * c_in, 2 * c_in), :]
            w11 = wref[pl.ds(5 * c_in, 4 * c_in), :]
            bias = scref[pl.ds(0, 1), :]
            gamma = scref[pl.ds(1, 1), :]
            beta = scref[pl.ds(2, 1), :]

            order = [(pr, pc) for pr in range(nph) for pc in range(nph)]
            ypack = (blocks[(0, 0)] if len(order) == 1 else
                     jnp.concatenate([blocks[k] for k in order], axis=-1))   # (HW, half)
            yr = pltpu.roll(ypack, HW - 1, 0) * mask_r        # right neighbor, masked (f32)
            body = jnp.concatenate([ypack, yr], axis=-1).astype(bf16)        # (HW, 2*half)
            slab = up_slabs[s]
            slab[pl.ds(0, HW), :] = body
            below = slab[pl.ds(W, HW), :]                     # rows +W (zeros past bottom)

            def colslice(src, pr_, pc_, shifted, _half=half, _nph=nph, _c=c_in):
                start = (_half if shifted else 0) + (pr_ * _nph + pc_) * _c
                return src[:, start:start + _c]

            newblocks = {}
            s1 = jnp.zeros((1, 1), f32)
            for (ar, ac) in order:
                rwrap = (ac + 1 == nph)
                dwrap = (ar + 1 == nph)
                C = colslice(body, ar, ac, False)
                R = colslice(body, ar, (ac + 1) % nph, rwrap)
                D = colslice(below if dwrap else body, (ar + 1) % nph, ac, False)
                DR = colslice(below if dwrap else body,
                              (ar + 1) % nph, (ac + 1) % nph, rwrap)
                p00 = jnp.dot(C, w00, preferred_element_type=f32) + bias
                p01 = jnp.dot(jnp.concatenate([C, R], axis=-1), w01,
                              preferred_element_type=f32) + bias
                p10 = jnp.dot(jnp.concatenate([C, D], axis=-1), w10,
                              preferred_element_type=f32) + bias
                p11 = jnp.dot(jnp.concatenate([C, R, D, DR], axis=-1), w11,
                              preferred_element_type=f32) + bias
                for (a2, b2), pv in (((0, 0), p00), ((0, 1), p01),
                                     ((1, 0), p10), ((1, 1), p11)):
                    newblocks[(2 * ar + a2, 2 * ac + b2)] = pv
                    s1 = s1 + jnp.sum(jnp.sum(pv, axis=0, keepdims=True),
                                      axis=1, keepdims=True)

            # MUNIT-style LayerNorm over (C,H,W): two-pass mean / centered var.
            n_el = float(4 * nph * nph * HW * cout)
            mean = s1 * (1.0 / n_el)
            s2 = jnp.zeros((1, 1), f32)
            for k in newblocks:
                d = newblocks[k] - mean
                newblocks[k] = d
                s2 = s2 + jnp.sum(jnp.sum(d * d, axis=0, keepdims=True),
                                  axis=1, keepdims=True)
            inv = lax.rsqrt(s2 * (1.0 / n_el) + 1e-5)
            for k in newblocks:
                newblocks[k] = jnp.maximum(newblocks[k] * inv * gamma + beta, 0.0)

            blocks = newblocks
            c_in = cout

        # ---------------- final 1x1 ConvTranspose (pointwise) + tanh ----------------
        nph = 1 << num_ups
        order = [(pr, pc) for pr in range(nph) for pc in range(nph)]
        ycat = jnp.concatenate([blocks[k].astype(bf16) for k in order], axis=-1)
        o = jnp.dot(ycat, wf_ref[...], preferred_element_type=f32) + bf_ref[...]
        out_ref[0] = jnp.tanh(o)                              # (HW, 4**num_ups * out_dim)

    return kernel


# ----------------------------------------------------------------------------
# Decoder forward (single pallas_call + one layout transpose in the wrapper)
# ----------------------------------------------------------------------------
def decoder_forward(packed, x, z, c, *, dim, n_blocks, num_ups, output_dim):
    B, H, W, Cx = x.shape
    assert Cx == dim
    HW = H * W
    P = _round16(max(W, 1))
    od_big = (4 ** num_ups) * output_dim

    zc = jnp.concatenate([c, z], axis=1).astype(jnp.float32)   # torch.cat([c, z], 1)
    x_flat = x.reshape(B, HW, dim).astype(jnp.float32)
    mask9, mask_l, mask_r = _masks(H, W)

    lin, dec1 = packed["linear"], packed["dec1"]
    args = [x_flat, zc, mask9, mask_l, mask_r,
            lin["w1"], lin["b1"], lin["w2"], lin["b2"], lin["w3"], lin["b3"],
            dec1["wx"], dec1["wz"], dec1["b"]]
    for up in packed["ups"]:
        args += [up["w"], up["scale"]]
    args += [packed["final"]["w"], packed["final"]["b"]]

    in_specs = [_sample_spec(x_flat.shape)] + [_full_spec(a.shape) for a in args[1:]]
    scratch = [pltpu.VMEM((HW + 2 * P, 3 * dim), jnp.bfloat16)]
    for s in range(num_ups):
        scratch.append(pltpu.VMEM((HW + P, 2 * dim * (2 ** s)), jnp.bfloat16))

    kern = _build_kernel(H=H, W=W, dim=dim, n_blocks=n_blocks, num_ups=num_ups)
    out = pl.pallas_call(
        kern,
        out_shape=jax.ShapeDtypeStruct((B, HW, od_big), jnp.float32),
        grid=(B,),
        in_specs=in_specs,
        out_specs=_sample_spec((B, HW, od_big)),
        scratch_shapes=scratch,
        compiler_params=pltpu.CompilerParams(
            dimension_semantics=("parallel",),
            vmem_limit_bytes=48 * 1024 * 1024),
    )(*args)

    # Un-interleave the lane-packed phases -> (B, 2^n*H, 2^n*W, out_dim).
    up = 2 ** num_ups
    y = out.reshape(B, H, W, up, up, output_dim)
    y = jnp.transpose(y, (0, 1, 3, 2, 4, 5)).reshape(B, H * up, W * up, output_dim)
    return y


# ----------------------------------------------------------------------------
# Deterministic synthetic parameters + kernel-ready packing
# ----------------------------------------------------------------------------
def init_params(key, *, output_dim, dim, n_blocks, num_domains, num_ups, latent_dim):
    keys = iter(jax.random.split(key, 64))

    def w(shape, scale=0.05):
        return scale * jax.random.normal(next(keys), shape, jnp.float32)

    params = {}
    in_lin = latent_dim + num_domains
    params["linear"] = dict(
        w1=w((in_lin, 256)), b1=jnp.zeros((256,), jnp.float32),
        w2=w((256, 256)), b2=jnp.zeros((256,), jnp.float32),
        w3=w((256, dim * n_blocks)), b3=jnp.zeros((dim * n_blocks,), jnp.float32))
    params["dec1"] = [dict(
        w1=w((3, 3, 2 * dim, dim)), b1=jnp.zeros((dim,), jnp.float32),
        w2=w((3, 3, 2 * dim, dim)), b2=jnp.zeros((dim,), jnp.float32))
        for _ in range(n_blocks)]
    params["ups"] = []
    d = dim
    for _ in range(num_ups):
        params["ups"].append(dict(
            w=w((3, 3, d, d // 2)), b=jnp.zeros((d // 2,), jnp.float32),
            gamma=jnp.ones((d // 2,), jnp.float32),
            beta=jnp.zeros((d // 2,), jnp.float32)))
        d //= 2
    params["final"] = dict(w=w((1, 1, d, output_dim)),
                           b=jnp.zeros((output_dim,), jnp.float32))
    return params


def pack_params(params, *, dim, n_blocks, num_ups, output_dim):
    bf16 = jnp.bfloat16
    lin = params["linear"]
    packed = {"linear": dict(
        w1=lin["w1"].astype(bf16), b1=lin["b1"].reshape(1, -1),
        w2=lin["w2"].astype(bf16), b2=lin["b2"].reshape(1, -1),
        w3=lin["w3"].astype(bf16), b3=lin["b3"].reshape(1, -1))}

    wx, wz, bb = [], [], []
    for blk in params["dec1"]:
        for wk, bk in (("w1", "b1"), ("w2", "b2")):
            wfull = blk[wk]                               # (3,3,2*dim,dim), in = [x | z]
            wxp = wfull[:, :, :dim, :]                    # x-channel part
            wzp = wfull[:, :, dim:, :]                    # z-channel part
            wx.append(wxp.reshape(3, 3 * dim, dim))       # per ky: [kx=-1;0;+1] along K
            wz.append(wzp.reshape(9, dim, dim).transpose(1, 0, 2).reshape(dim, 9 * dim))
            bb.append(blk[bk].reshape(1, dim))
    packed["dec1"] = dict(wx=jnp.stack(wx).astype(bf16),
                          wz=jnp.stack(wz).astype(bf16),
                          b=jnp.stack(bb).astype(jnp.float32))

    ups = []
    for p in params["ups"]:
        w = p["w"]                                        # (3,3,cin,cout) HWIO
        wcat = jnp.concatenate([
            w[1, 1],                                       # phase (0,0): [C]
            w[1, 2], w[1, 0],                              # phase (0,1): [C; R]
            w[2, 1], w[0, 1],                              # phase (1,0): [C; D]
            w[2, 2], w[2, 0], w[0, 2], w[0, 0],            # phase (1,1): [C; R; D; DR]
        ], axis=0)                                         # (9*cin, cout)
        scale = jnp.stack([p["b"], p["gamma"], p["beta"]], axis=0)  # (3, cout)
        ups.append(dict(w=wcat.astype(bf16), scale=scale.astype(jnp.float32)))
    packed["ups"] = ups

    nb = 4 ** num_ups
    wf = params["final"]["w"].reshape(params["final"]["w"].shape[2], output_dim)
    packed["final"] = dict(
        w=jnp.kron(jnp.eye(nb, dtype=wf.dtype), wf).astype(bf16),   # block-diag over phases
        b=jnp.tile(params["final"]["b"].reshape(1, -1), (1, nb)).astype(jnp.float32))
    return packed


if __name__ == "__main__":
    OUTPUT_DIM, DIM, N_BLOCKS, NUM_DOMAINS, NUM_UPS, LATENT_DIM = 3, 32, 2, 2, 2, 8
    B, H, W = 2, 8, 8

    root = jax.random.PRNGKey(0)
    kp, kx, kz = jax.random.split(root, 3)
    params = init_params(kp, output_dim=OUTPUT_DIM, dim=DIM, n_blocks=N_BLOCKS,
                         num_domains=NUM_DOMAINS, num_ups=NUM_UPS,
                         latent_dim=LATENT_DIM)
    packed = pack_params(params, dim=DIM, n_blocks=N_BLOCKS, num_ups=NUM_UPS,
                         output_dim=OUTPUT_DIM)

    x = jax.random.normal(kx, (B, H, W, DIM), jnp.float32)   # NHWC (NCHW in PyTorch)
    z = jax.random.normal(kz, (B, LATENT_DIM), jnp.float32)
    c = jax.nn.one_hot(jnp.array([0, 1]), NUM_DOMAINS, dtype=jnp.float32)

    fwd = jax.jit(functools.partial(decoder_forward, dim=DIM, n_blocks=N_BLOCKS,
                                    num_ups=NUM_UPS, output_dim=OUTPUT_DIM))
    out = jax.block_until_ready(fwd(packed, x, z, c))

    assert out.shape == (B, H * 2 ** NUM_UPS, W * 2 ** NUM_UPS, OUTPUT_DIM), out.shape
    assert bool(jnp.all(jnp.isfinite(out)))
    assert bool(jnp.all(jnp.abs(out) <= 1.0))                # tanh output range
    print("KERNEL_OK")
</pallas_src>

<mosaic_0001>
module attributes {stable_mosaic.version = 11 : i64} {
  func.func @kernel(%arg0: i32, %arg1: memref<1x64x32xf32, #tpu.memory_space<vmem>>, %arg2: memref<2x10xf32, #tpu.memory_space<vmem>>, %arg3: memref<64x9xf32, #tpu.memory_space<vmem>>, %arg4: memref<64x1xf32, #tpu.memory_space<vmem>>, %arg5: memref<64x1xf32, #tpu.memory_space<vmem>>, %arg6: memref<10x256xbf16, #tpu.memory_space<vmem>>, %arg7: memref<1x256xf32, #tpu.memory_space<vmem>>, %arg8: memref<256x256xbf16, #tpu.memory_space<vmem>>, %arg9: memref<1x256xf32, #tpu.memory_space<vmem>>, %arg10: memref<256x64xbf16, #tpu.memory_space<vmem>>, %arg11: memref<1x64xf32, #tpu.memory_space<vmem>>, %arg12: memref<4x3x96x32xbf16, #tpu.memory_space<vmem>>, %arg13: memref<4x32x288xbf16, #tpu.memory_space<vmem>>, %arg14: memref<4x1x32xf32, #tpu.memory_space<vmem>>, %arg15: memref<288x16xbf16, #tpu.memory_space<vmem>>, %arg16: memref<3x16xf32, #tpu.memory_space<vmem>>, %arg17: memref<144x8xbf16, #tpu.memory_space<vmem>>, %arg18: memref<3x8xf32, #tpu.memory_space<vmem>>, %arg19: memref<128x48xbf16, #tpu.memory_space<vmem>>, %arg20: memref<1x48xf32, #tpu.memory_space<vmem>>, %arg21: memref<1x64x48xf32, #tpu.memory_space<vmem>>, %arg22: memref<96x96xbf16, #tpu.memory_space<vmem>>, %arg23: memref<80x64xbf16, #tpu.memory_space<vmem>>, %arg24: memref<80x128xbf16, #tpu.memory_space<vmem>>) attributes {dimension_semantics = [#tpu.dimension_semantics<parallel>], iteration_bounds = array<i64: 2>, scalar_prefetch = 0 : i64, scratch_operands = 3 : i64, tpu.core_type = #tpu.core_type<tc>, window_params = [{transform_indices = @transform_0, window_bounds = array<i64: 1, 64, 32>}, {pipeline_mode = #tpu.pipeline_mode<synchronous>, transform_indices = @transform_1, window_bounds = array<i64: 2, 10>}, {pipeline_mode = #tpu.pipeline_mode<synchronous>, transform_indices = @transform_2, window_bounds = array<i64: 64, 9>}, {pipeline_mode = #tpu.pipeline_mode<synchronous>, transform_indices = @transform_3, window_bounds = array<i64: 64, 1>}, {pipeline_mode = #tpu.pipeline_mode<synchronous>, transform_indices = @transform_4, window_bounds = array<i64: 64, 1>}, {pipeline_mode = #tpu.pipeline_mode<synchronous>, transform_indices = @transform_5, window_bounds = array<i64: 10, 256>}, {pipeline_mode = #tpu.pipeline_mode<synchronous>, transform_indices = @transform_6, window_bounds = array<i64: 1, 256>}, {pipeline_mode = #tpu.pipeline_mode<synchronous>, transform_indices = @transform_7, window_bounds = array<i64: 256, 256>}, {pipeline_mode = #tpu.pipeline_mode<synchronous>, transform_indices = @transform_8, window_bounds = array<i64: 1, 256>}, {pipeline_mode = #tpu.pipeline_mode<synchronous>, transform_indices = @transform_9, window_bounds = array<i64: 256, 64>}, {pipeline_mode = #tpu.pipeline_mode<synchronous>, transform_indices = @transform_10, window_bounds = array<i64: 1, 64>}, {pipeline_mode = #tpu.pipeline_mode<synchronous>, transform_indices = @transform_11, window_bounds = array<i64: 4, 3, 96, 32>}, {pipeline_mode = #tpu.pipeline_mode<synchronous>, transform_indices = @transform_12, window_bounds = array<i64: 4, 32, 288>}, {pipeline_mode = #tpu.pipeline_mode<synchronous>, transform_indices = @transform_13, window_bounds = array<i64: 4, 1, 32>}, {pipeline_mode = #tpu.pipeline_mode<synchronous>, transform_indices = @transform_14, window_bounds = array<i64: 288, 16>}, {pipeline_mode = #tpu.pipeline_mode<synchronous>, transform_indices = @transform_15, window_bounds = array<i64: 3, 16>}, {pipeline_mode = #tpu.pipeline_mode<synchronous>, transform_indices = @transform_16, window_bounds = array<i64: 144, 8>}, {pipeline_mode = #tpu.pipeline_mode<synchronous>, transform_indices = @transform_17, window_bounds = array<i64: 3, 8>}, {pipeline_mode = #tpu.pipeline_mode<synchronous>, transform_indices = @transform_18, window_bounds = array<i64: 128, 48>}, {pipeline_mode = #tpu.pipeline_mode<synchronous>, transform_indices = @transform_19, window_bounds = array<i64: 1, 48>}, {transform_indices = @transform_20, window_bounds = array<i64: 1, 64, 48>}]} {
    %cst = arith.constant 0.000000e+00 : bf16
    %0 = vector.broadcast %cst : bf16 to vector<16x96xbf16>
    %c0 = arith.constant 0 : index
    %c0_0 = arith.constant 0 : index
    %1 = vector.load %arg22[%c0, %c0_0] : memref<96x96xbf16, #tpu.memory_space<vmem>>, vector<16x96xbf16>
    tpu.vector_store %arg22[%c0, %c0_0], %0 {strides = array<i32>} : memref<96x96xbf16, #tpu.memory_space<vmem>>, vector<16x96xbf16>,
    %cst_1 = arith.constant 0.000000e+00 : bf16
    %2 = vector.broadcast %cst_1 : bf16 to vector<16x96xbf16>
    %c80 = arith.constant 80 : index
    %c0_2 = arith.constant 0 : index
    %3 = vector.load %arg22[%c80, %c0_2] : memref<96x96xbf16, #tpu.memory_space<vmem>>, vector<16x96xbf16>
    tpu.vector_store %arg22[%c80, %c0_2], %2 {strides = array<i32>} : memref<96x96xbf16, #tpu.memory_space<vmem>>, vector<16x96xbf16>,
    %cst_3 = arith.constant 0.000000e+00 : bf16
    %4 = vector.broadcast %cst_3 : bf16 to vector<16x64xbf16>
    %c64 = arith.constant 64 : index
    %c0_4 = arith.constant 0 : index
    %5 = vector.load %arg23[%c64, %c0_4] : memref<80x64xbf16, #tpu.memory_space<vmem>>, vector<16x64xbf16>
    tpu.vector_store %arg23[%c64, %c0_4], %4 {strides = array<i32>} : memref<80x64xbf16, #tpu.memory_space<vmem>>, vector<16x64xbf16>,
    %cst_5 = arith.constant 0.000000e+00 : bf16
    %6 = vector.broadcast %cst_5 : bf16 to vector<16x128xbf16>
    %c64_6 = arith.constant 64 : index
    %c0_7 = arith.constant 0 : index
    %7 = vector.load %arg24[%c64_6, %c0_7] : memref<80x128xbf16, #tpu.memory_space<vmem>>, vector<16x128xbf16>
    tpu.vector_store %arg24[%c64_6, %c0_7], %6 {strides = array<i32>} : memref<80x128xbf16, #tpu.memory_space<vmem>>, vector<16x128xbf16>,
    %c0_8 = arith.constant 0 : index
    %c0_9 = arith.constant 0 : index
    %8 = vector.load %arg3[%c0_8, %c0_9] : memref<64x9xf32, #tpu.memory_space<vmem>>, vector<64x9xf32>
    %c0_10 = arith.constant 0 : index
    %c0_11 = arith.constant 0 : index
    %9 = vector.load %arg4[%c0_10, %c0_11] : memref<64x1xf32, #tpu.memory_space<vmem>>, vector<64x1xf32>
    %c0_12 = arith.constant 0 : index
    %c0_13 = arith.constant 0 : index
    %10 = vector.load %arg5[%c0_12, %c0_13] : memref<64x1xf32, #tpu.memory_space<vmem>>, vector<64x1xf32>
    %11 = arith.index_cast %arg0 : i32 to index
    %c0_14 = arith.constant 0 : index
    %12 = vector.load %arg2[%11, %c0_14] : memref<2x10xf32, #tpu.memory_space<vmem>>, vector<1x10xf32>
    %13 = arith.truncf %12 : vector<1x10xf32> to vector<1x10xbf16>
    %c0_15 = arith.constant 0 : index
    %c0_16 = arith.constant 0 : index
    %14 = vector.load %arg6[%c0_15, %c0_16] : memref<10x256xbf16, #tpu.memory_space<vmem>>, vector<10x256xbf16>
    %cst_17 = arith.constant dense<0.000000e+00> : vector<1x256xf32>
    %15 = tpu.matmul %13, %14, %cst_17 {dimension_numbers = #tpu.dot_dimension_numbers<[1], [0], [0], [1], [0, 0, 1, 1], [], []>} : vector<1x10xbf16>, vector<10x256xbf16>, vector<1x256xf32> -> vector<1x256xf32>
    %c0_18 = arith.constant 0 : index
    %c0_19 = arith.constant 0 : index
    %16 = vector.load %arg7[%c0_18, %c0_19] : memref<1x256xf32, #tpu.memory_space<vmem>>, vector<1x256xf32>
    %17 = arith.addf %15, %16 : vector<1x256xf32>
    %cst_20 = arith.constant 0.000000e+00 : f32
    %18 = vector.broadcast %cst_20 : f32 to vector<1x256xf32>
    %19 = arith.maximumf %17, %18 : vector<1x256xf32>
    %20 = arith.truncf %19 : vector<1x256xf32> to vector<1x256xbf16>
    %c0_21 = arith.constant 0 : index
    %c0_22 = arith.constant 0 : index
    %21 = vector.load %arg8[%c0_21, %c0_22] : memref<256x256xbf16, #tpu.memory_space<vmem>>, vector<256x256xbf16>
    %cst_23 = arith.constant dense<0.000000e+00> : vector<1x256xf32>
    %22 = tpu.matmul %20, %21, %cst_23 {dimension_numbers = #tpu.dot_dimension_numbers<[1], [0], [0], [1], [0, 0, 1, 1], [], []>} : vector<1x256xbf16>, vector<256x256xbf16>, vector<1x256xf32> -> vector<1x256xf32>
    %c0_24 = arith.constant 0 : index
    %c0_25 = arith.constant 0 : index
    %23 = vector.load %arg9[%c0_24, %c0_25] : memref<1x256xf32, #tpu.memory_space<vmem>>, vector<1x256xf32>
    %24 = arith.addf %22, %23 : vector<1x256xf32>
    %cst_26 = arith.constant 0.000000e+00 : f32
    %25 = vector.broadcast %cst_26 : f32 to vector<1x256xf32>
    %26 = arith.maximumf %24, %25 : vector<1x256xf32>
    %27 = arith.truncf %26 : vector<1x256xf32> to vector<1x256xbf16>
    %c0_27 = arith.constant 0 : index
    %c0_28 = arith.constant 0 : index
    %28 = vector.load %arg10[%c0_27, %c0_28] : memref<256x64xbf16, #tpu.memory_space<vmem>>, vector<256x64xbf16>
    %cst_29 = arith.constant dense<0.000000e+00> : vector<1x64xf32>
    %29 = tpu.matmul %27, %28, %cst_29 {dimension_numbers = #tpu.dot_dimension_numbers<[1], [0], [0], [1], [0, 0, 1, 1], [], []>} : vector<1x256xbf16>, vector<256x64xbf16>, vector<1x64xf32> -> vector<1x64xf32>
    %c0_30 = arith.constant 0 : index
    %c0_31 = arith.constant 0 : index
    %30 = vector.load %arg11[%c0_30, %c0_31] : memref<1x64xf32, #tpu.memory_space<vmem>>, vector<1x64xf32>
    %31 = arith.addf %29, %30 : vector<1x64xf32>
    %c0_32 = arith.constant 0 : index
    %c0_33 = arith.constant 0 : index
    %c0_34 = arith.constant 0 : index
    %32 = vector.load %arg1[%c0_32, %c0_33, %c0_34] : memref<1x64x32xf32, #tpu.memory_space<vmem>>, vector<1x64x32xf32>
    %33 = vector.shape_cast %32 : vector<1x64x32xf32> to vector<64x32xf32>
    %34 = vector.extract_strided_slice %31 {offsets = [0, 0], sizes = [1, 32], strides = [1, 1]} : vector<1x64xf32> to vector<1x32xf32>
    %35 = arith.truncf %34 : vector<1x32xf32> to vector<1x32xbf16>
    %c1_i32 = arith.constant 1 : i32
    %36 = tpu.dynamic_rotate %33 by %c1_i32 dim 0 : vector<64x32xf32>, i32 -> vector<64x32xf32>
    %37 = vector.broadcast %9 : vector<64x1xf32> to vector<64x32xf32>
    %38 = arith.mulf %36, %37 : vector<64x32xf32>
    %c63_i32 = arith.constant 63 : i32
    %39 = tpu.dynamic_rotate %33 by %c63_i32 dim 0 : vector<64x32xf32>, i32 -> vector<64x32xf32>
    %40 = vector.broadcast %10 : vector<64x1xf32> to vector<64x32xf32>
    %41 = arith.mulf %39, %40 : vector<64x32xf32>
    %42 = tpu.concatenate %38, %33, %41 in 1 : vector<64x32xf32>, vector<64x32xf32>, vector<64x32xf32> -> vector<64x96xf32>
    %43 = arith.truncf %42 : vector<64x96xf32> to vector<64x96xbf16>
    %c16 = arith.constant 16 : index
    %c0_35 = arith.constant 0 : index
    %44 = vector.load %arg22[%c16, %c0_35] : memref<96x96xbf16, #tpu.memory_space<vmem>>, vector<64x96xbf16>
    tpu.vector_store %arg22[%c16, %c0_35], %43 {strides = array<i32>} : memref<96x96xbf16, #tpu.memory_space<vmem>>, vector<64x96xbf16>,
    %c0_36 = arith.constant 0 : index
    %c1 = arith.constant 1 : index
    %c0_37 = arith.constant 0 : index
    %c0_38 = arith.constant 0 : index
    %45 = vector.load %arg12[%c0_36, %c1, %c0_37, %c0_38] : memref<4x3x96x32xbf16, #tpu.memory_space<vmem>>, vector<1x1x96x32xbf16>
    %46 = vector.shape_cast %45 : vector<1x1x96x32xbf16> to vector<96x32xbf16>
    %cst_39 = arith.constant dense<0.000000e+00> : vector<64x32xf32>
    %47 = tpu.matmul %43, %46, %cst_39 {dimension_numbers = #tpu.dot_dimension_numbers<[1], [0], [0], [1], [0, 0, 1, 1], [], []>} : vector<64x96xbf16>, vector<96x32xbf16>, vector<64x32xf32> -> vector<64x32xf32>
    %c8 = arith.constant 8 : index
    %c0_40 = arith.constant 0 : index
    %48 = vector.load %arg22[%c8, %c0_40] : memref<96x96xbf16, #tpu.memory_space<vmem>>, vector<64x96xbf16>
    %c0_41 = arith.constant 0 : index
    %c0_42 = arith.constant 0 : index
    %c0_43 = arith.constant 0 : index
    %c0_44 = arith.constant 0 : index
    %49 = vector.load %arg12[%c0_41, %c0_42, %c0_43, %c0_44] : memref<4x3x96x32xbf16, #tpu.memory_space<vmem>>, vector<1x1x96x32xbf16>
    %50 = vector.shape_cast %49 : vector<1x1x96x32xbf16> to vector<96x32xbf16>
    %cst_45 = arith.constant dense<0.000000e+00> : vector<64x32xf32>
    %51 = tpu.matmul %48, %50, %cst_45 {dimension_numbers = #tpu.dot_dimension_numbers<[1], [0], [0], [1], [0, 0, 1, 1], [], []>} : vector<64x96xbf16>, vector<96x32xbf16>, vector<64x32xf32> -> vector<64x32xf32>
    %52 = arith.addf %47, %51 : vector<64x32xf32>
    %c24 = arith.constant 24 : index
    %c0_46 = arith.constant 0 : index
    %53 = vector.load %arg22[%c24, %c0_46] : memref<96x96xbf16, #tpu.memory_space<vmem>>, vector<64x96xbf16>
    %c0_47 = arith.constant 0 : index
    %c2 = arith.constant 2 : index
    %c0_48 = arith.constant 0 : index
    %c0_49 = arith.constant 0 : index
    %54 = vector.load %arg12[%c0_47, %c2, %c0_48, %c0_49] : memref<4x3x96x32xbf16, #tpu.memory_space<vmem>>, vector<1x1x96x32xbf16>
    %55 = vector.shape_cast %54 : vector<1x1x96x32xbf16> to vector<96x32xbf16>
    %cst_50 = arith.constant dense<0.000000e+00> : vector<64x32xf32>
    %56 = tpu.matmul %53, %55, %cst_50 {dimension_numbers = #tpu.dot_dimension_numbers<[1], [0], [0], [1], [0, 0, 1, 1], [], []>} : vector<64x96xbf16>, vector<96x32xbf16>, vector<64x32xf32> -> vector<64x32xf32>
    %57 = arith.addf %52, %56 : vector<64x32xf32>
    %c0_51 = arith.constant 0 : index
    %c0_52 = arith.constant 0 : index
    %c0_53 = arith.constant 0 : index
    %58 = vector.load %arg13[%c0_51, %c0_52, %c0_53] : memref<4x32x288xbf16, #tpu.memory_space<vmem>>, vector<1x32x288xbf16>
    %59 = vector.shape_cast %58 : vector<1x32x288xbf16> to vector<32x288xbf16>
    %cst_54 = arith.constant dense<0.000000e+00> : vector<1x288xf32>
    %60 = tpu.matmul %35, %59, %cst_54 {dimension_numbers = #tpu.dot_dimension_numbers<[1], [0], [0], [1], [0, 0, 1, 1], [], []>} : vector<1x32xbf16>, vector<32x288xbf16>, vector<1x288xf32> -> vector<1x288xf32>
    %c0_55 = arith.constant 0 : index
    %c0_56 = arith.constant 0 : index
    %c0_57 = arith.constant 0 : index
    %61 = vector.load %arg14[%c0_55, %c0_56, %c0_57] : memref<4x1x32xf32, #tpu.memory_space<vmem>>, vector<1x1x32xf32>
    %62 = vector.shape_cast %61 : vector<1x1x32xf32> to vector<1x32xf32>
    %63 = vector.extract_strided_slice %8 {offsets = [0, 0], sizes = [64, 1], strides = [1, 1]} : vector<64x9xf32> to vector<64x1xf32>
    %64 = vector.extract_strided_slice %60 {offsets = [0, 0], sizes = [1, 32], strides = [1, 1]} : vector<1x288xf32> to vector<1x32xf32>
    %65 = vector.broadcast %63 : vector<64x1xf32> to vector<64x32xf32>
    %66 = vector.broadcast %64 : vector<1x32xf32> to vector<64x32xf32>
    %67 = arith.mulf %65, %66 : vector<64x32xf32>
    %68 = vector.broadcast %62 : vector<1x32xf32> to vector<64x32xf32>
    %69 = arith.addf %68, %67 : vector<64x32xf32>
    %70 = vector.extract_strided_slice %8 {offsets = [0, 1], sizes = [64, 1], strides = [1, 1]} : vector<64x9xf32> to vector<64x1xf32>
    %71 = vector.extract_strided_slice %60 {offsets = [0, 32], sizes = [1, 32], strides = [1, 1]} : vector<1x288xf32> to vector<1x32xf32>
    %72 = vector.broadcast %70 : vector<64x1xf32> to vector<64x32xf32>
    %73 = vector.broadcast %71 : vector<1x32xf32> to vector<64x32xf32>
    %74 = arith.mulf %72, %73 : vector<64x32xf32>
    %75 = arith.addf %69, %74 : vector<64x32xf32>
    %76 = vector.extract_strided_slice %8 {offsets = [0, 2], sizes = [64, 1], strides = [1, 1]} : vector<64x9xf32> to vector<64x1xf32>
    %77 = vector.extract_strided_slice %60 {offsets = [0, 64], sizes = [1, 32], strides = [1, 1]} : vector<1x288xf32> to vector<1x32xf32>
    %78 = vector.broadcast %76 : vector<64x1xf32> to vector<64x32xf32>
    %79 = vector.broadcast %77 : vector<1x32xf32> to vector<64x32xf32>
    %80 = arith.mulf %78, %79 : vector<64x32xf32>
    %81 = arith.addf %75, %80 : vector<64x32xf32>
    %82 = vector.extract_strided_slice %8 {offsets = [0, 3], sizes = [64, 1], strides = [1, 1]} : vector<64x9xf32> to vector<64x1xf32>
    %83 = vector.extract_strided_slice %60 {offsets = [0, 96], sizes = [1, 32], strides = [1, 1]} : vector<1x288xf32> to vector<1x32xf32>
    %84 = vector.broadcast %82 : vector<64x1xf32> to vector<64x32xf32>
    %85 = vector.broadcast %83 : vector<1x32xf32> to vector<64x32xf32>
    %86 = arith.mulf %84, %85 : vector<64x32xf32>
    %87 = arith.addf %81, %86 : vector<64x32xf32>
    %88 = vector.extract_strided_slice %8 {offsets = [0, 4], sizes = [64, 1], strides = [1, 1]} : vector<64x9xf32> to vector<64x1xf32>
    %89 = vector.extract_strided_slice %60 {offsets = [0, 128], sizes = [1, 32], strides = [1, 1]} : vector<1x288xf32> to vector<1x32xf32>
    %90 = vector.broadcast %88 : vector<64x1xf32> to vector<64x32xf32>
    %91 = vector.broadcast %89 : vector<1x32xf32> to vector<64x32xf32>
    %92 = arith.mulf %90, %91 : vector<64x32xf32>
    %93 = arith.addf %87, %92 : vector<64x32xf32>
    %94 = vector.extract_strided_slice %8 {offsets = [0, 5], sizes = [64, 1], strides = [1, 1]} : vector<64x9xf32> to vector<64x1xf32>
    %95 = vector.extract_strided_slice %60 {offsets = [0, 160], sizes = [1, 32], strides = [1, 1]} : vector<1x288xf32> to vector<1x32xf32>
    %96 = vector.broadcast %94 : vector<64x1xf32> to vector<64x32xf32>
    %97 = vector.broadcast %95 : vector<1x32xf32> to vector<64x32xf32>
    %98 = arith.mulf %96, %97 : vector<64x32xf32>
    %99 = arith.addf %93, %98 : vector<64x32xf32>
    %100 = vector.extract_strided_slice %8 {offsets = [0, 6], sizes = [64, 1], strides = [1, 1]} : vector<64x9xf32> to vector<64x1xf32>
    %101 = vector.extract_strided_slice %60 {offsets = [0, 192], sizes = [1, 32], strides = [1, 1]} : vector<1x288xf32> to vector<1x32xf32>
    %102 = vector.broadcast %100 : vector<64x1xf32> to vector<64x32xf32>
    %103 = vector.broadcast %101 : vector<1x32xf32> to vector<64x32xf32>
    %104 = arith.mulf %102, %103 : vector<64x32xf32>
    %105 = arith.addf %99, %104 : vector<64x32xf32>
    %106 = vector.extract_strided_slice %8 {offsets = [0, 7], sizes = [64, 1], strides = [1, 1]} : vector<64x9xf32> to vector<64x1xf32>
    %107 = vector.extract_strided_slice %60 {offsets = [0, 224], sizes = [1, 32], strides = [1, 1]} : vector<1x288xf32> to vector<1x32xf32>
    %108 = vector.broadcast %106 : vector<64x1xf32> to vector<64x32xf32>
    %109 = vector.broadcast %107 : vector<1x32xf32> to vector<64x32xf32>
    %110 = arith.mulf %108, %109 : vector<64x32xf32>
    %111 = arith.addf %105, %110 : vector<64x32xf32>
    %112 = vector.extract_strided_slice %8 {offsets = [0, 8], sizes = [64, 1], strides = [1, 1]} : vector<64x9xf32> to vector<64x1xf32>
    %113 = vector.extract_strided_slice %60 {offsets = [0, 256], sizes = [1, 32], strides = [1, 1]} : vector<1x288xf32> to vector<1x32xf32>
    %114 = vector.broadcast %112 : vector<64x1xf32> to vector<64x32xf32>
    %115 = vector.broadcast %113 : vector<1x32xf32> to vector<64x32xf32>
    %116 = arith.mulf %114, %115 : vector<64x32xf32>
    %117 = arith.addf %111, %116 : vector<64x32xf32>
    %118 = arith.addf %57, %117 : vector<64x32xf32>
    %cst_58 = arith.constant 0.000000e+00 : f32
    %119 = vector.broadcast %cst_58 : f32 to vector<64x32xf32>
    %120 = arith.maximumf %118, %119 : vector<64x32xf32>
    %c1_i32_59 = arith.constant 1 : i32
    %121 = tpu.dynamic_rotate %120 by %c1_i32_59 dim 0 : vector<64x32xf32>, i32 -> vector<64x32xf32>
    %122 = vector.broadcast %9 : vector<64x1xf32> to vector<64x32xf32>
    %123 = arith.mulf %121, %122 : vector<64x32xf32>
    %c63_i32_60 = arith.constant 63 : i32
    %124 = tpu.dynamic_rotate %120 by %c63_i32_60 dim 0 : vector<64x32xf32>, i32 -> vector<64x32xf32>
    %125 = vector.broadcast %10 : vector<64x1xf32> to vector<64x32xf32>
    %126 = arith.mulf %124, %125 : vector<64x32xf32>
    %127 = tpu.concatenate %123, %120, %126 in 1 : vector<64x32xf32>, vector<64x32xf32>, vector<64x32xf32> -> vector<64x96xf32>
    %128 = arith.truncf %127 : vector<64x96xf32> to vector<64x96xbf16>
    %c16_61 = arith.constant 16 : index
    %c0_62 = arith.constant 0 : index
    %129 = vector.load %arg22[%c16_61, %c0_62] : memref<96x96xbf16, #tpu.memory_space<vmem>>, vector<64x96xbf16>
    tpu.vector_store %arg22[%c16_61, %c0_62], %128 {strides = array<i32>} : memref<96x96xbf16, #tpu.memory_space<vmem>>, vector<64x96xbf16>,
    %c1_63 = arith.constant 1 : index
    %c1_64 = arith.constant 1 : index
    %c0_65 = arith.constant 0 : index
    %c0_66 = arith.constant 0 : index
    %130 = vector.load %arg12[%c1_63, %c1_64, %c0_65, %c0_66] : memref<4x3x96x32xbf16, #tpu.memory_space<vmem>>, vector<1x1x96x32xbf16>
    %131 = vector.shape_cast %130 : vector<1x1x96x32xbf16> to vector<96x32xbf16>
    %cst_67 = arith.constant dense<0.000000e+00> : vector<64x32xf32>
    %132 = tpu.matmul %128, %131, %cst_67 {dimension_numbers = #tpu.dot_dimension_numbers<[1], [0], [0], [1], [0, 0, 1, 1], [], []>} : vector<64x96xbf16>, vector<96x32xbf16>, vector<64x32xf32> -> vector<64x32xf32>
    %c8_68 = arith.constant 8 : index
    %c0_69 = arith.constant 0 : index
    %133 = vector.load %arg22[%c8_68, %c0_69] : memref<96x96xbf16, #tpu.memory_space<vmem>>, vector<64x96xbf16>
    %c1_70 = arith.constant 1 : index
    %c0_71 = arith.constant 0 : index
    %c0_72 = arith.constant 0 : index
    %c0_73 = arith.constant 0 : index
    %134 = vector.load %arg12[%c1_70, %c0_71, %c0_72, %c0_73] : memref<4x3x96x32xbf16, #tpu.memory_space<vmem>>, vector<1x1x96x32xbf16>
    %135 = vector.shape_cast %134 : vector<1x1x96x32xbf16> to vector<96x32xbf16>
    %cst_74 = arith.constant dense<0.000000e+00> : vector<64x32xf32>
    %136 = tpu.matmul %133, %135, %cst_74 {dimension_numbers = #tpu.dot_dimension_numbers<[1], [0], [0], [1], [0, 0, 1, 1], [], []>} : vector<64x96xbf16>, vector<96x32xbf16>, vector<64x32xf32> -> vector<64x32xf32>
    %137 = arith.addf %132, %136 : vector<64x32xf32>
    %c24_75 = arith.constant 24 : index
    %c0_76 = arith.constant 0 : index
    %138 = vector.load %arg22[%c24_75, %c0_76] : memref<96x96xbf16, #tpu.memory_space<vmem>>, vector<64x96xbf16>
    %c1_77 = arith.constant 1 : index
    %c2_78 = arith.constant 2 : index
    %c0_79 = arith.constant 0 : index
    %c0_80 = arith.constant 0 : index
    %139 = vector.load %arg12[%c1_77, %c2_78, %c0_79, %c0_80] : memref<4x3x96x32xbf16, #tpu.memory_space<vmem>>, vector<1x1x96x32xbf16>
    %140 = vector.shape_cast %139 : vector<1x1x96x32xbf16> to vector<96x32xbf16>
    %cst_81 = arith.constant dense<0.000000e+00> : vector<64x32xf32>
    %141 = tpu.matmul %138, %140, %cst_81 {dimension_numbers = #tpu.dot_dimension_numbers<[1], [0], [0], [1], [0, 0, 1, 1], [], []>} : vector<64x96xbf16>, vector<96x32xbf16>, vector<64x32xf32> -> vector<64x32xf32>
    %142 = arith.addf %137, %141 : vector<64x32xf32>
    %c1_82 = arith.constant 1 : index
    %c0_83 = arith.constant 0 : index
    %c0_84 = arith.constant 0 : index
    %143 = vector.load %arg13[%c1_82, %c0_83, %c0_84] : memref<4x32x288xbf16, #tpu.memory_space<vmem>>, vector<1x32x288xbf16>
    %144 = vector.shape_cast %143 : vector<1x32x288xbf16> to vector<32x288xbf16>
    %cst_85 = arith.constant dense<0.000000e+00> : vector<1x288xf32>
    %145 = tpu.matmul %35, %144, %cst_85 {dimension_numbers = #tpu.dot_dimension_numbers<[1], [0], [0], [1], [0, 0, 1, 1], [], []>} : vector<1x32xbf16>, vector<32x288xbf16>, vector<1x288xf32> -> vector<1x288xf32>
    %c1_86 = arith.constant 1 : index
    %c0_87 = arith.constant 0 : index
    %c0_88 = arith.constant 0 : index
    %146 = vector.load %arg14[%c1_86, %c0_87, %c0_88] : memref<4x1x32xf32, #tpu.memory_space<vmem>>, vector<1x1x32xf32>
    %147 = vector.shape_cast %146 : vector<1x1x32xf32> to vector<1x32xf32>
    %148 = vector.extract_strided_slice %8 {offsets = [0, 0], sizes = [64, 1], strides = [1, 1]} : vector<64x9xf32> to vector<64x1xf32>
    %149 = vector.extract_strided_slice %145 {offsets = [0, 0], sizes = [1, 32], strides = [1, 1]} : vector<1x288xf32> to vector<1x32xf32>
    %150 = vector.broadcast %148 : vector<64x1xf32> to vector<64x32xf32>
    %151 = vector.broadcast %149 : vector<1x32xf32> to vector<64x32xf32>
    %152 = arith.mulf %150, %151 : vector<64x32xf32>
    %153 = vector.broadcast %147 : vector<1x32xf32> to vector<64x32xf32>
    %154 = arith.addf %153, %152 : vector<64x32xf32>
    %155 = vector.extract_strided_slice %8 {offsets = [0, 1], sizes = [64, 1], strides = [1, 1]} : vector<64x9xf32> to vector<64x1xf32>
    %156 = vector.extract_strided_slice %145 {offsets = [0, 32], sizes = [1, 32], strides = [1, 1]} : vector<1x288xf32> to vector<1x32xf32>
    %157 = vector.broadcast %155 : vector<64x1xf32> to vector<64x32xf32>
    %158 = vector.broadcast %156 : vector<1x32xf32> to vector<64x32xf32>
    %159 = arith.mulf %157, %158 : vector<64x32xf32>
    %160 = arith.addf %154, %159 : vector<64x32xf32>
    %161 = vector.extract_strided_slice %8 {offsets = [0, 2], sizes = [64, 1], strides = [1, 1]} : vector<64x9xf32> to vector<64x1xf32>
    %162 = vector.extract_strided_slice %145 {offsets = [0, 64], sizes = [1, 32], strides = [1, 1]} : vector<1x288xf32> to vector<1x32xf32>
    %163 = vector.broadcast %161 : vector<64x1xf32> to vector<64x32xf32>
    %164 = vector.broadcast %162 : vector<1x32xf32> to vector<64x32xf32>
    %165 = arith.mulf %163, %164 : vector<64x32xf32>
    %166 = arith.addf %160, %165 : vector<64x32xf32>
    %167 = vector.extract_strided_slice %8 {offsets = [0, 3], sizes = [64, 1], strides = [1, 1]} : vector<64x9xf32> to vector<64x1xf32>
    %168 = vector.extract_strided_slice %145 {offsets = [0, 96], sizes = [1, 32], strides = [1, 1]} : vector<1x288xf32> to vector<1x32xf32>
    %169 = vector.broadcast %167 : vector<64x1xf32> to vector<64x32xf32>
    %170 = vector.broadcast %168 : vector<1x32xf32> to vector<64x32xf32>
    %171 = arith.mulf %169, %170 : vector<64x32xf32>
    %172 = arith.addf %166, %171 : vector<64x32xf32>
    %173 = vector.extract_strided_slice %8 {offsets = [0, 4], sizes = [64, 1], strides = [1, 1]} : vector<64x9xf32> to vector<64x1xf32>
    %174 = vector.extract_strided_slice %145 {offsets = [0, 128], sizes = [1, 32], strides = [1, 1]} : vector<1x288xf32> to vector<1x32xf32>
    %175 = vector.broadcast %173 : vector<64x1xf32> to vector<64x32xf32>
    %176 = vector.broadcast %174 : vector<1x32xf32> to vector<64x32xf32>
    %177 = arith.mulf %175, %176 : vector<64x32xf32>
    %178 = arith.addf %172, %177 : vector<64x32xf32>
    %179 = vector.extract_strided_slice %8 {offsets = [0, 5], sizes = [64, 1], strides = [1, 1]} : vector<64x9xf32> to vector<64x1xf32>
    %180 = vector.extract_strided_slice %145 {offsets = [0, 160], sizes = [1, 32], strides = [1, 1]} : vector<1x288xf32> to vector<1x32xf32>
    %181 = vector.broadcast %179 : vector<64x1xf32> to vector<64x32xf32>
    %182 = vector.broadcast %180 : vector<1x32xf32> to vector<64x32xf32>
    %183 = arith.mulf %181, %182 : vector<64x32xf32>
    %184 = arith.addf %178, %183 : vector<64x32xf32>
    %185 = vector.extract_strided_slice %8 {offsets = [0, 6], sizes = [64, 1], strides = [1, 1]} : vector<64x9xf32> to vector<64x1xf32>
    %186 = vector.extract_strided_slice %145 {offsets = [0, 192], sizes = [1, 32], strides = [1, 1]} : vector<1x288xf32> to vector<1x32xf32>
    %187 = vector.broadcast %185 : vector<64x1xf32> to vector<64x32xf32>
    %188 = vector.broadcast %186 : vector<1x32xf32> to vector<64x32xf32>
    %189 = arith.mulf %187, %188 : vector<64x32xf32>
    %190 = arith.addf %184, %189 : vector<64x32xf32>
    %191 = vector.extract_strided_slice %8 {offsets = [0, 7], sizes = [64, 1], strides = [1, 1]} : vector<64x9xf32> to vector<64x1xf32>
    %192 = vector.extract_strided_slice %145 {offsets = [0, 224], sizes = [1, 32], strides = [1, 1]} : vector<1x288xf32> to vector<1x32xf32>
    %193 = vector.broadcast %191 : vector<64x1xf32> to vector<64x32xf32>
    %194 = vector.broadcast %192 : vector<1x32xf32> to vector<64x32xf32>
    %195 = arith.mulf %193, %194 : vector<64x32xf32>
    %196 = arith.addf %190, %195 : vector<64x32xf32>
    %197 = vector.extract_strided_slice %8 {offsets = [0, 8], sizes = [64, 1], strides = [1, 1]} : vector<64x9xf32> to vector<64x1xf32>
    %198 = vector.extract_strided_slice %145 {offsets = [0, 256], sizes = [1, 32], strides = [1, 1]} : vector<1x288xf32> to vector<1x32xf32>
    %199 = vector.broadcast %197 : vector<64x1xf32> to vector<64x32xf32>
    %200 = vector.broadcast %198 : vector<1x32xf32> to vector<64x32xf32>
    %201 = arith.mulf %199, %200 : vector<64x32xf32>
    %202 = arith.addf %196, %201 : vector<64x32xf32>
    %203 = arith.addf %142, %202 : vector<64x32xf32>
    %204 = arith.addf %203, %33 : vector<64x32xf32>
    %205 = vector.extract_strided_slice %31 {offsets = [0, 32], sizes = [1, 32], strides = [1, 1]} : vector<1x64xf32> to vector<1x32xf32>
    %206 = arith.truncf %205 : vector<1x32xf32> to vector<1x32xbf16>
    %c1_i32_89 = arith.constant 1 : i32
    %207 = tpu.dynamic_rotate %204 by %c1_i32_89 dim 0 : vector<64x32xf32>, i32 -> vector<64x32xf32>
    %208 = vector.broadcast %9 : vector<64x1xf32> to vector<64x32xf32>
    %209 = arith.mulf %207, %208 : vector<64x32xf32>
    %c63_i32_90 = arith.constant 63 : i32
    %210 = tpu.dynamic_rotate %204 by %c63_i32_90 dim 0 : vector<64x32xf32>, i32 -> vector<64x32xf32>
    %211 = vector.broadcast %10 : vector<64x1xf32> to vector<64x32xf32>
    %212 = arith.mulf %210, %211 : vector<64x32xf32>
    %213 = tpu.concatenate %209, %204, %212 in 1 : vector<64x32xf32>, vector<64x32xf32>, vector<64x32xf32> -> vector<64x96xf32>
    %214 = arith.truncf %213 : vector<64x96xf32> to vector<64x96xbf16>
    %c16_91 = arith.constant 16 : index
    %c0_92 = arith.constant 0 : index
    %215 = vector.load %arg22[%c16_91, %c0_92] : memref<96x96xbf16, #tpu.memory_space<vmem>>, vector<64x96xbf16>
    tpu.vector_store %arg22[%c16_91, %c0_92], %214 {strides = array<i32>} : memref<96x96xbf16, #tpu.memory_space<vmem>>, vector<64x96xbf16>,
    %c2_93 = arith.constant 2 : index
    %c1_94 = arith.constant 1 : index
    %c0_95 = arith.constant 0 : index
    %c0_96 = arith.constant 0 : index
    %216 = vector.load %arg12[%c2_93, %c1_94, %c0_95, %c0_96] : memref<4x3x96x32xbf16, #tpu.memory_space<vmem>>, vector<1x1x96x32xbf16>
    %217 = vector.shape_cast %216 : vector<1x1x96x32xbf16> to vector<96x32xbf16>
    %cst_97 = arith.constant dense<0.000000e+00> : vector<64x32xf32>
    %218 = tpu.matmul %214, %217, %cst_97 {dimension_numbers = #tpu.dot_dimension_numbers<[1], [0], [0], [1], [0, 0, 1, 1], [], []>} : vector<64x96xbf16>, vector<96x32xbf16>, vector<64x32xf32> -> vector<64x32xf32>
    %c8_98 = arith.constant 8 : index
    %c0_99 = arith.constant 0 : index
    %219 = vector.load %arg22[%c8_98, %c0_99] : memref<96x96xbf16, #tpu.memory_space<vmem>>, vector<64x96xbf16>
    %c2_100 = arith.constant 2 : index
    %c0_101 = arith.constant 0 : index
    %c0_102 = arith.constant 0 : index
    %c0_103 = arith.constant 0 : index
    %220 = vector.load %arg12[%c2_100, %c0_101, %c0_102, %c0_103] : memref<4x3x96x32xbf16, #tpu.memory_space<vmem>>, vector<1x1x96x32xbf16>
    %221 = vector.shape_cast %220 : vector<1x1x96x32xbf16> to vector<96x32xbf16>
    %cst_104 = arith.constant dense<0.000000e+00> : vector<64x32xf32>
    %222 = tpu.matmul %219, %221, %cst_104 {dimension_numbers = #tpu.dot_dimension_numbers<[1], [0], [0], [1], [0, 0, 1, 1], [], []>} : vector<64x96xbf16>, vector<96x32xbf16>, vector<64x32xf32> -> vector<64x32xf32>
    %223 = arith.addf %218, %222 : vector<64x32xf32>
    %c24_105 = arith.constant 24 : index
    %c0_106 = arith.constant 0 : index
    %224 = vector.load %arg22[%c24_105, %c0_106] : memref<96x96xbf16, #tpu.memory_space<vmem>>, vector<64x96xbf16>
    %c2_107 = arith.constant 2 : index
    %c2_108 = arith.constant 2 : index
    %c0_109 = arith.constant 0 : index
    %c0_110 = arith.constant 0 : index
    %225 = vector.load %arg12[%c2_107, %c2_108, %c0_109, %c0_110] : memref<4x3x96x32xbf16, #tpu.memory_space<vmem>>, vector<1x1x96x32xbf16>
    %226 = vector.shape_cast %225 : vector<1x1x96x32xbf16> to vector<96x32xbf16>
    %cst_111 = arith.constant dense<0.000000e+00> : vector<64x32xf32>
    %227 = tpu.matmul %224, %226, %cst_111 {dimension_numbers = #tpu.dot_dimension_numbers<[1], [0], [0], [1], [0, 0, 1, 1], [], []>} : vector<64x96xbf16>, vector<96x32xbf16>, vector<64x32xf32> -> vector<64x32xf32>
    %228 = arith.addf %223, %227 : vector<64x32xf32>
    %c2_112 = arith.constant 2 : index
    %c0_113 = arith.constant 0 : index
    %c0_114 = arith.constant 0 : index
    %229 = vector.load %arg13[%c2_112, %c0_113, %c0_114] : memref<4x32x288xbf16, #tpu.memory_space<vmem>>, vector<1x32x288xbf16>
    %230 = vector.shape_cast %229 : vector<1x32x288xbf16> to vector<32x288xbf16>
    %cst_115 = arith.constant dense<0.000000e+00> : vector<1x288xf32>
    %231 = tpu.matmul %206, %230, %cst_115 {dimension_numbers = #tpu.dot_dimension_numbers<[1], [0], [0], [1], [0, 0, 1, 1], [], []>} : vector<1x32xbf16>, vector<32x288xbf16>, vector<1x288xf32> -> vector<1x288xf32>
    %c2_116 = arith.constant 2 : index
    %c0_117 = arith.constant 0 : index
    %c0_118 = arith.constant 0 : index
    %232 = vector.load %arg14[%c2_116, %c0_117, %c0_118] : memref<4x1x32xf32, #tpu.memory_space<vmem>>, vector<1x1x32xf32>
    %233 = vector.shape_cast %232 : vector<1x1x32xf32> to vector<1x32xf32>
    %234 = vector.extract_strided_slice %8 {offsets = [0, 0], sizes = [64, 1], strides = [1, 1]} : vector<64x9xf32> to vector<64x1xf32>
    %235 = vector.extract_strided_slice %231 {offsets = [0, 0], sizes = [1, 32], strides = [1, 1]} : vector<1x288xf32> to vector<1x32xf32>
    %236 = vector.broadcast %234 : vector<64x1xf32> to vector<64x32xf32>
    %237 = vector.broadcast %235 : vector<1x32xf32> to vector<64x32xf32>
    %238 = arith.mulf %236, %237 : vector<64x32xf32>
    %239 = vector.broadcast %233 : vector<1x32xf32> to vector<64x32xf32>
    %240 = arith.addf %239, %238 : vector<64x32xf32>
    %241 = vector.extract_strided_slice %8 {offsets = [0, 1], sizes = [64, 1], strides = [1, 1]} : vector<64x9xf32> to vector<64x1xf32>
    %242 = vector.extract_strided_slice %231 {offsets = [0, 32], sizes = [1, 32], strides = [1, 1]} : vector<1x288xf32> to vector<1x32xf32>
    %243 = vector.broadcast %241 : vector<64x1xf32> to vector<64x32xf32>
    %244 = vector.broadcast %242 : vector<1x32xf32> to vector<64x32xf32>
    %245 = arith.mulf %243, %244 : vector<64x32xf32>
    %246 = arith.addf %240, %245 : vector<64x32xf32>
    %247 = vector.extract_strided_slice %8 {offsets = [0, 2], sizes = [64, 1], strides = [1, 1]} : vector<64x9xf32> to vector<64x1xf32>
    %248 = vector.extract_strided_slice %231 {offsets = [0, 64], sizes = [1, 32], strides = [1, 1]} : vector<1x288xf32> to vector<1x32xf32>
    %249 = vector.broadcast %247 : vector<64x1xf32> to vector<64x32xf32>
    %250 = vector.broadcast %248 : vector<1x32xf32> to vector<64x32xf32>
    %251 = arith.mulf %249, %250 : vector<64x32xf32>
    %252 = arith.addf %246, %251 : vector<64x32xf32>
    %253 = vector.extract_strided_slice %8 {offsets = [0, 3], sizes = [64, 1], strides = [1, 1]} : vector<64x9xf32> to vector<64x1xf32>
    %254 = vector.extract_strided_slice %231 {offsets = [0, 96], sizes = [1, 32], strides = [1, 1]} : vector<1x288xf32> to vector<1x32xf32>
    %255 = vector.broadcast %253 : vector<64x1xf32> to vector<64x32xf32>
    %256 = vector.broadcast %254 : vector<1x32xf32> to vector<64x32xf32>
    %257 = arith.mulf %255, %256 : vector<64x32xf32>
    %258 = arith.addf %252, %257 : vector<64x32xf32>
    %259 = vector.extract_strided_slice %8 {offsets = [0, 4], sizes = [64, 1], strides = [1, 1]} : vector<64x9xf32> to vector<64x1xf32>
    %260 = vector.extract_strided_slice %231 {offsets = [0, 128], sizes = [1, 32], strides = [1, 1]} : vector<1x288xf32> to vector<1x32xf32>
    %261 = vector.broadcast %259 : vector<64x1xf32> to vector<64x32xf32>
    %262 = vector.broadcast %260 : vector<1x32xf32> to vector<64x32xf32>
    %263 = arith.mulf %261, %262 : vector<64x32xf32>
    %264 = arith.addf %258, %263 : vector<64x32xf32>
    %265 = vector.extract_strided_slice %8 {offsets = [0, 5], sizes = [64, 1], strides = [1, 1]} : vector<64x9xf32> to vector<64x1xf32>
    %266 = vector.extract_strided_slice %231 {offsets = [0, 160], sizes = [1, 32], strides = [1, 1]} : vector<1x288xf32> to vector<1x32xf32>
    %267 = vector.broadcast %265 : vector<64x1xf32> to vector<64x32xf32>
    %268 = vector.broadcast %266 : vector<1x32xf32> to vector<64x32xf32>
    %269 = arith.mulf %267, %268 : vector<64x32xf32>
    %270 = arith.addf %264, %269 : vector<64x32xf32>
    %271 = vector.extract_strided_slice %8 {offsets = [0, 6], sizes = [64, 1], strides = [1, 1]} : vector<64x9xf32> to vector<64x1xf32>
    %272 = vector.extract_strided_slice %231 {offsets = [0, 192], sizes = [1, 32], strides = [1, 1]} : vector<1x288xf32> to vector<1x32xf32>
    %273 = vector.broadcast %271 : vector<64x1xf32> to vector<64x32xf32>
    %274 = vector.broadcast %272 : vector<1x32xf32> to vector<64x32xf32>
    %275 = arith.mulf %273, %274 : vector<64x32xf32>
    %276 = arith.addf %270, %275 : vector<64x32xf32>
    %277 = vector.extract_strided_slice %8 {offsets = [0, 7], sizes = [64, 1], strides = [1, 1]} : vector<64x9xf32> to vector<64x1xf32>
    %278 = vector.extract_strided_slice %231 {offsets = [0, 224], sizes = [1, 32], strides = [1, 1]} : vector<1x288xf32> to vector<1x32xf32>
    %279 = vector.broadcast %277 : vector<64x1xf32> to vector<64x32xf32>
    %280 = vector.broadcast %278 : vector<1x32xf32> to vector<64x32xf32>
    %281 = arith.mulf %279, %280 : vector<64x32xf32>
    %282 = arith.addf %276, %281 : vector<64x32xf32>
    %283 = vector.extract_strided_slice %8 {offsets = [0, 8], sizes = [64, 1], strides = [1, 1]} : vector<64x9xf32> to vector<64x1xf32>
    %284 = vector.extract_strided_slice %231 {offsets = [0, 256], sizes = [1, 32], strides = [1, 1]} : vector<1x288xf32> to vector<1x32xf32>
    %285 = vector.broadcast %283 : vector<64x1xf32> to vector<64x32xf32>
    %286 = vector.broadcast %284 : vector<1x32xf32> to vector<64x32xf32>
    %287 = arith.mulf %285, %286 : vector<64x32xf32>
    %288 = arith.addf %282, %287 : vector<64x32xf32>
    %289 = arith.addf %228, %288 : vector<64x32xf32>
    %cst_119 = arith.constant 0.000000e+00 : f32
    %290 = vector.broadcast %cst_119 : f32 to vector<64x32xf32>
    %291 = arith.maximumf %289, %290 : vector<64x32xf32>
    %c1_i32_120 = arith.constant 1 : i32
    %292 = tpu.dynamic_rotate %291 by %c1_i32_120 dim 0 : vector<64x32xf32>, i32 -> vector<64x32xf32>
    %293 = vector.broadcast %9 : vector<64x1xf32> to vector<64x32xf32>
    %294 = arith.mulf %292, %293 : vector<64x32xf32>
    %c63_i32_121 = arith.constant 63 : i32
    %295 = tpu.dynamic_rotate %291 by %c63_i32_121 dim 0 : vector<64x32xf32>, i32 -> vector<64x32xf32>
    %296 = vector.broadcast %10 : vector<64x1xf32> to vector<64x32xf32>
    %297 = arith.mulf %295, %296 : vector<64x32xf32>
    %298 = tpu.concatenate %294, %291, %297 in 1 : vector<64x32xf32>, vector<64x32xf32>, vector<64x32xf32> -> vector<64x96xf32>
    %299 = arith.truncf %298 : vector<64x96xf32> to vector<64x96xbf16>
    %c16_122 = arith.constant 16 : index
    %c0_123 = arith.constant 0 : index
    %300 = vector.load %arg22[%c16_122, %c0_123] : memref<96x96xbf16, #tpu.memory_space<vmem>>, vector<64x96xbf16>
    tpu.vector_store %arg22[%c16_122, %c0_123], %299 {strides = array<i32>} : memref<96x96xbf16, #tpu.memory_space<vmem>>, vector<64x96xbf16>,
    %c3 = arith.constant 3 : index
    %c1_124 = arith.constant 1 : index
    %c0_125 = arith.constant 0 : index
    %c0_126 = arith.constant 0 : index
    %301 = vector.load %arg12[%c3, %c1_124, %c0_125, %c0_126] : memref<4x3x96x32xbf16, #tpu.memory_space<vmem>>, vector<1x1x96x32xbf16>
    %302 = vector.shape_cast %301 : vector<1x1x96x32xbf16> to vector<96x32xbf16>
    %cst_127 = arith.constant dense<0.000000e+00> : vector<64x32xf32>
    %303 = tpu.matmul %299, %302, %cst_127 {dimension_numbers = #tpu.dot_dimension_numbers<[1], [0], [0], [1], [0, 0, 1, 1], [], []>} : vector<64x96xbf16>, vector<96x32xbf16>, vector<64x32xf32> -> vector<64x32xf32>
    %c8_128 = arith.constant 8 : index
    %c0_129 = arith.constant 0 : index
    %304 = vector.load %arg22[%c8_128, %c0_129] : memref<96x96xbf16, #tpu.memory_space<vmem>>, vector<64x96xbf16>
    %c3_130 = arith.constant 3 : index
    %c0_131 = arith.constant 0 : index
    %c0_132 = arith.constant 0 : index
    %c0_133 = arith.constant 0 : index
    %305 = vector.load %arg12[%c3_130, %c0_131, %c0_132, %c0_133] : memref<4x3x96x32xbf16, #tpu.memory_space<vmem>>, vector<1x1x96x32xbf16>
    %306 = vector.shape_cast %305 : vector<1x1x96x32xbf16> to vector<96x32xbf16>
    %cst_134 = arith.constant dense<0.000000e+00> : vector<64x32xf32>
    %307 = tpu.matmul %304, %306, %cst_134 {dimension_numbers = #tpu.dot_dimension_numbers<[1], [0], [0], [1], [0, 0, 1, 1], [], []>} : vector<64x96xbf16>, vector<96x32xbf16>, vector<64x32xf32> -> vector<64x32xf32>
    %308 = arith.addf %303, %307 : vector<64x32xf32>
    %c24_135 = arith.constant 24 : index
    %c0_136 = arith.constant 0 : index
    %309 = vector.load %arg22[%c24_135, %c0_136] : memref<96x96xbf16, #tpu.memory_space<vmem>>, vector<64x96xbf16>
    %c3_137 = arith.constant 3 : index
    %c2_138 = arith.constant 2 : index
    %c0_139 = arith.constant 0 : index
    %c0_140 = arith.constant 0 : index
    %310 = vector.load %arg12[%c3_137, %c2_138, %c0_139, %c0_140] : memref<4x3x96x32xbf16, #tpu.memory_space<vmem>>, vector<1x1x96x32xbf16>
    %311 = vector.shape_cast %310 : vector<1x1x96x32xbf16> to vector<96x32xbf16>
    %cst_141 = arith.constant dense<0.000000e+00> : vector<64x32xf32>
    %312 = tpu.matmul %309, %311, %cst_141 {dimension_numbers = #tpu.dot_dimension_numbers<[1], [0], [0], [1], [0, 0, 1, 1], [], []>} : vector<64x96xbf16>, vector<96x32xbf16>, vector<64x32xf32> -> vector<64x32xf32>
    %313 = arith.addf %308, %312 : vector<64x32xf32>
    %c3_142 = arith.constant 3 : index
    %c0_143 = arith.constant 0 : index
    %c0_144 = arith.constant 0 : index
    %314 = vector.load %arg13[%c3_142, %c0_143, %c0_144] : memref<4x32x288xbf16, #tpu.memory_space<vmem>>, vector<1x32x288xbf16>
    %315 = vector.shape_cast %314 : vector<1x32x288xbf16> to vector<32x288xbf16>
    %cst_145 = arith.constant dense<0.000000e+00> : vector<1x288xf32>
    %316 = tpu.matmul %206, %315, %cst_145 {dimension_numbers = #tpu.dot_dimension_numbers<[1], [0], [0], [1], [0, 0, 1, 1], [], []>} : vector<1x32xbf16>, vector<32x288xbf16>, vector<1x288xf32> -> vector<1x288xf32>
    %c3_146 = arith.constant 3 : index
    %c0_147 = arith.constant 0 : index
    %c0_148 = arith.constant 0 : index
    %317 = vector.load %arg14[%c3_146, %c0_147, %c0_148] : memref<4x1x32xf32, #tpu.memory_space<vmem>>, vector<1x1x32xf32>
    %318 = vector.shape_cast %317 : vector<1x1x32xf32> to vector<1x32xf32>
    %319 = vector.extract_strided_slice %8 {offsets = [0, 0], sizes = [64, 1], strides = [1, 1]} : vector<64x9xf32> to vector<64x1xf32>
    %320 = vector.extract_strided_slice %316 {offsets = [0, 0], sizes = [1, 32], strides = [1, 1]} : vector<1x288xf32> to vector<1x32xf32>
    %321 = vector.broadcast %319 : vector<64x1xf32> to vector<64x32xf32>
    %322 = vector.broadcast %320 : vector<1x32xf32> to vector<64x32xf32>
    %323 = arith.mulf %321, %322 : vector<64x32xf32>
    %324 = vector.broadcast %318 : vector<1x32xf32> to vector<64x32xf32>
    %325 = arith.addf %324, %323 : vector<64x32xf32>
    %326 = vector.extract_strided_slice %8 {offsets = [0, 1], sizes = [64, 1], strides = [1, 1]} : vector<64x9xf32> to vector<64x1xf32>
    %327 = vector.extract_strided_slice %316 {offsets = [0, 32], sizes = [1, 32], strides = [1, 1]} : vector<1x288xf32> to vector<1x32xf32>
    %328 = vector.broadcast %326 : vector<64x1xf32> to vector<64x32xf32>
    %329 = vector.broadcast %327 : vector<1x32xf32> to vector<64x32xf32>
    %330 = arith.mulf %328, %329 : vector<64x32xf32>
    %331 = arith.addf %325, %330 : vector<64x32xf32>
    %332 = vector.extract_strided_slice %8 {offsets = [0, 2], sizes = [64, 1], strides = [1, 1]} : vector<64x9xf32> to vector<64x1xf32>
    %333 = vector.extract_strided_slice %316 {offsets = [0, 64], sizes = [1, 32], strides = [1, 1]} : vector<1x288xf32> to vector<1x32xf32>
    %334 = vector.broadcast %332 : vector<64x1xf32> to vector<64x32xf32>
    %335 = vector.broadcast %333 : vector<1x32xf32> to vector<64x32xf32>
    %336 = arith.mulf %334, %335 : vector<64x32xf32>
    %337 = arith.addf %331, %336 : vector<64x32xf32>
    %338 = vector.extract_strided_slice %8 {offsets = [0, 3], sizes = [64, 1], strides = [1, 1]} : vector<64x9xf32> to vector<64x1xf32>
    %339 = vector.extract_strided_slice %316 {offsets = [0, 96], sizes = [1, 32], strides = [1, 1]} : vector<1x288xf32> to vector<1x32xf32>
    %340 = vector.broadcast %338 : vector<64x1xf32> to vector<64x32xf32>
    %341 = vector.broadcast %339 : vector<1x32xf32> to vector<64x32xf32>
    %342 = arith.mulf %340, %341 : vector<64x32xf32>
    %343 = arith.addf %337, %342 : vector<64x32xf32>
    %344 = vector.extract_strided_slice %8 {offsets = [0, 4], sizes = [64, 1], strides = [1, 1]} : vector<64x9xf32> to vector<64x1xf32>
    %345 = vector.extract_strided_slice %316 {offsets = [0, 128], sizes = [1, 32], strides = [1, 1]} : vector<1x288xf32> to vector<1x32xf32>
    %346 = vector.broadcast %344 : vector<64x1xf32> to vector<64x32xf32>
    %347 = vector.broadcast %345 : vector<1x32xf32> to vector<64x32xf32>
    %348 = arith.mulf %346, %347 : vector<64x32xf32>
    %349 = arith.addf %343, %348 : vector<64x32xf32>
    %350 = vector.extract_strided_slice %8 {offsets = [0, 5], sizes = [64, 1], strides = [1, 1]} : vector<64x9xf32> to vector<64x1xf32>
    %351 = vector.extract_strided_slice %316 {offsets = [0, 160], sizes = [1, 32], strides = [1, 1]} : vector<1x288xf32> to vector<1x32xf32>
    %352 = vector.broadcast %350 : vector<64x1xf32> to vector<64x32xf32>
    %353 = vector.broadcast %351 : vector<1x32xf32> to vector<64x32xf32>
    %354 = arith.mulf %352, %353 : vector<64x32xf32>
    %355 = arith.addf %349, %354 : vector<64x32xf32>
    %356 = vector.extract_strided_slice %8 {offsets = [0, 6], sizes = [64, 1], strides = [1, 1]} : vector<64x9xf32> to vector<64x1xf32>
    %357 = vector.extract_strided_slice %316 {offsets = [0, 192], sizes = [1, 32], strides = [1, 1]} : vector<1x288xf32> to vector<1x32xf32>
    %358 = vector.broadcast %356 : vector<64x1xf32> to vector<64x32xf32>
    %359 = vector.broadcast %357 : vector<1x32xf32> to vector<64x32xf32>
    %360 = arith.mulf %358, %359 : vector<64x32xf32>
    %361 = arith.addf %355, %360 : vector<64x32xf32>
    %362 = vector.extract_strided_slice %8 {offsets = [0, 7], sizes = [64, 1], strides = [1, 1]} : vector<64x9xf32> to vector<64x1xf32>
    %363 = vector.extract_strided_slice %316 {offsets = [0, 224], sizes = [1, 32], strides = [1, 1]} : vector<1x288xf32> to vector<1x32xf32>
    %364 = vector.broadcast %362 : vector<64x1xf32> to vector<64x32xf32>
    %365 = vector.broadcast %363 : vector<1x32xf32> to vector<64x32xf32>
    %366 = arith.mulf %364, %365 : vector<64x32xf32>
    %367 = arith.addf %361, %366 : vector<64x32xf32>
    %368 = vector.extract_strided_slice %8 {offsets = [0, 8], sizes = [64, 1], strides = [1, 1]} : vector<64x9xf32> to vector<64x1xf32>
    %369 = vector.extract_strided_slice %316 {offsets = [0, 256], sizes = [1, 32], strides = [1, 1]} : vector<1x288xf32> to vector<1x32xf32>
    %370 = vector.broadcast %368 : vector<64x1xf32> to vector<64x32xf32>
    %371 = vector.broadcast %369 : vector<1x32xf32> to vector<64x32xf32>
    %372 = arith.mulf %370, %371 : vector<64x32xf32>
    %373 = arith.addf %367, %372 : vector<64x32xf32>
    %374 = arith.addf %313, %373 : vector<64x32xf32>
    %375 = arith.addf %374, %204 : vector<64x32xf32>
    %c0_149 = arith.constant 0 : index
    %c0_150 = arith.constant 0 : index
    %376 = vector.load %arg15[%c0_149, %c0_150] : memref<288x16xbf16, #tpu.memory_space<vmem>>, vector<32x16xbf16>
    %c32 = arith.constant 32 : index
    %c0_151 = arith.constant 0 : index
    %377 = vector.load %arg15[%c32, %c0_151] : memref<288x16xbf16, #tpu.memory_space<vmem>>, vector<64x16xbf16>
    %c96 = arith.constant 96 : index
    %c0_152 = arith.constant 0 : index
    %378 = vector.load %arg15[%c96, %c0_152] : memref<288x16xbf16, #tpu.memory_space<vmem>>, vector<64x16xbf16>
    %c160 = arith.constant 160 : index
    %c0_153 = arith.constant 0 : index
    %379 = vector.load %arg15[%c160, %c0_153] : memref<288x16xbf16, #tpu.memory_space<vmem>>, vector<128x16xbf16>
    %c0_154 = arith.constant 0 : index
    %c0_155 = arith.constant 0 : index
    %380 = vector.load %arg16[%c0_154, %c0_155] : memref<3x16xf32, #tpu.memory_space<vmem>>, vector<1x16xf32>
    %c1_156 = arith.constant 1 : index
    %c0_157 = arith.constant 0 : index
    %381 = vector.load %arg16[%c1_156, %c0_157] : memref<3x16xf32, #tpu.memory_space<vmem>>, vector<1x16xf32>
    %c2_158 = arith.constant 2 : index
    %c0_159 = arith.constant 0 : index
    %382 = vector.load %arg16[%c2_158, %c0_159] : memref<3x16xf32, #tpu.memory_space<vmem>>, vector<1x16xf32>
    %c63_i32_160 = arith.constant 63 : i32
    %383 = tpu.dynamic_rotate %375 by %c63_i32_160 dim 0 : vector<64x32xf32>, i32 -> vector<64x32xf32>
    %384 = vector.broadcast %10 : vector<64x1xf32> to vector<64x32xf32>
    %385 = arith.mulf %383, %384 : vector<64x32xf32>
    %386 = tpu.concatenate %375, %385 in 1 : vector<64x32xf32>, vector<64x32xf32> -> vector<64x64xf32>
    %387 = arith.truncf %386 : vector<64x64xf32> to vector<64x64xbf16>
    %c0_161 = arith.constant 0 : index
    %c0_162 = arith.constant 0 : index
    %388 = vector.load %arg23[%c0_161, %c0_162] : memref<80x64xbf16, #tpu.memory_space<vmem>>, vector<64x64xbf16>
    tpu.vector_store %arg23[%c0_161, %c0_162], %387 {strides = array<i32>} : memref<80x64xbf16, #tpu.memory_space<vmem>>, vector<64x64xbf16>,
    %c8_163 = arith.constant 8 : index
    %c0_164 = arith.constant 0 : index
    %389 = vector.load %arg23[%c8_163, %c0_164] : memref<80x64xbf16, #tpu.memory_space<vmem>>, vector<64x64xbf16>
    %cst_165 = arith.constant 0.000000e+00 : f32
    %390 = vector.broadcast %cst_165 : f32 to vector<1x1xf32>
    %391 = vector.extract_strided_slice %387 {offsets = [0, 0], sizes = [64, 32], strides = [1, 1]} : vector<64x64xbf16> to vector<64x32xbf16>
    %392 = vector.extract_strided_slice %387 {offsets = [0, 32], sizes = [64, 32], strides = [1, 1]} : vector<64x64xbf16> to vector<64x32xbf16>
    %393 = vector.extract_strided_slice %389 {offsets = [0, 0], sizes = [64, 32], strides = [1, 1]} : vector<64x64xbf16> to vector<64x32xbf16>
    %394 = vector.extract_strided_slice %389 {offsets = [0, 32], sizes = [64, 32], strides = [1, 1]} : vector<64x64xbf16> to vector<64x32xbf16>
    %cst_166 = arith.constant dense<0.000000e+00> : vector<64x16xf32>
    %395 = tpu.matmul %391, %376, %cst_166 {dimension_numbers = #tpu.dot_dimension_numbers<[1], [0], [0], [1], [0, 0, 1, 1], [], []>} : vector<64x32xbf16>, vector<32x16xbf16>, vector<64x16xf32> -> vector<64x16xf32>
    %396 = vector.broadcast %380 : vector<1x16xf32> to vector<64x16xf32>
    %397 = arith.addf %395, %396 : vector<64x16xf32>
    %398 = tpu.concatenate %391, %392 in 1 : vector<64x32xbf16>, vector<64x32xbf16> -> vector<64x64xbf16>
    %cst_167 = arith.constant dense<0.000000e+00> : vector<64x16xf32>
    %399 = tpu.matmul %398, %377, %cst_167 {dimension_numbers = #tpu.dot_dimension_numbers<[1], [0], [0], [1], [0, 0, 1, 1], [], []>} : vector<64x64xbf16>, vector<64x16xbf16>, vector<64x16xf32> -> vector<64x16xf32>
    %400 = vector.broadcast %380 : vector<1x16xf32> to vector<64x16xf32>
    %401 = arith.addf %399, %400 : vector<64x16xf32>
    %402 = tpu.concatenate %391, %393 in 1 : vector<64x32xbf16>, vector<64x32xbf16> -> vector<64x64xbf16>
    %cst_168 = arith.constant dense<0.000000e+00> : vector<64x16xf32>
    %403 = tpu.matmul %402, %378, %cst_168 {dimension_numbers = #tpu.dot_dimension_numbers<[1], [0], [0], [1], [0, 0, 1, 1], [], []>} : vector<64x64xbf16>, vector<64x16xbf16>, vector<64x16xf32> -> vector<64x16xf32>
    %404 = vector.broadcast %380 : vector<1x16xf32> to vector<64x16xf32>
    %405 = arith.addf %403, %404 : vector<64x16xf32>
    %406 = tpu.concatenate %391, %392, %393, %394 in 1 : vector<64x32xbf16>, vector<64x32xbf16>, vector<64x32xbf16>, vector<64x32xbf16> -> vector<64x128xbf16>
    %cst_169 = arith.constant dense<0.000000e+00> : vector<64x16xf32>
    %407 = tpu.matmul %406, %379, %cst_169 {dimension_numbers = #tpu.dot_dimension_numbers<[1], [0], [0], [1], [0, 0, 1, 1], [], []>} : vector<64x128xbf16>, vector<128x16xbf16>, vector<64x16xf32> -> vector<64x16xf32>
    %408 = vector.broadcast %380 : vector<1x16xf32> to vector<64x16xf32>
    %409 = arith.addf %407, %408 : vector<64x16xf32>
    %cst_170 = arith.constant dense<0.000000e+00> : vector<16xf32>
    %410 = vector.multi_reduction <add>, %397, %cst_170 [0] : vector<64x16xf32> to vector<16xf32>
    %411 = vector.shape_cast %410 : vector<16xf32> to vector<1x16xf32>
    %cst_171 = arith.constant dense<0.000000e+00> : vector<1xf32>
    %412 = vector.multi_reduction <add>, %411, %cst_171 [1] : vector<1x16xf32> to vector<1xf32>
    %413 = vector.shape_cast %412 : vector<1xf32> to vector<1x1xf32>
    %414 = arith.addf %390, %413 : vector<1x1xf32>
    %cst_172 = arith.constant dense<0.000000e+00> : vector<16xf32>
    %415 = vector.multi_reduction <add>, %401, %cst_172 [0] : vector<64x16xf32> to vector<16xf32>
    %416 = vector.shape_cast %415 : vector<16xf32> to vector<1x16xf32>
    %cst_173 = arith.constant dense<0.000000e+00> : vector<1xf32>
    %417 = vector.multi_reduction <add>, %416, %cst_173 [1] : vector<1x16xf32> to vector<1xf32>
    %418 = vector.shape_cast %417 : vector<1xf32> to vector<1x1xf32>
    %419 = arith.addf %414, %418 : vector<1x1xf32>
    %cst_174 = arith.constant dense<0.000000e+00> : vector<16xf32>
    %420 = vector.multi_reduction <add>, %405, %cst_174 [0] : vector<64x16xf32> to vector<16xf32>
    %421 = vector.shape_cast %420 : vector<16xf32> to vector<1x16xf32>
    %cst_175 = arith.constant dense<0.000000e+00> : vector<1xf32>
    %422 = vector.multi_reduction <add>, %421, %cst_175 [1] : vector<1x16xf32> to vector<1xf32>
    %423 = vector.shape_cast %422 : vector<1xf32> to vector<1x1xf32>
    %424 = arith.addf %419, %423 : vector<1x1xf32>
    %cst_176 = arith.constant dense<0.000000e+00> : vector<16xf32>
    %425 = vector.multi_reduction <add>, %409, %cst_176 [0] : vector<64x16xf32> to vector<16xf32>
    %426 = vector.shape_cast %425 : vector<16xf32> to vector<1x16xf32>
    %cst_177 = arith.constant dense<0.000000e+00> : vector<1xf32>
    %427 = vector.multi_reduction <add>, %426, %cst_177 [1] : vector<1x16xf32> to vector<1xf32>
    %428 = vector.shape_cast %427 : vector<1xf32> to vector<1x1xf32>
    %429 = arith.addf %424, %428 : vector<1x1xf32>
    %cst_178 = arith.constant 2.44140625E-4 : f32
    %430 = vector.broadcast %cst_178 : f32 to vector<1x1xf32>
    %431 = arith.mulf %429, %430 : vector<1x1xf32>
    %cst_179 = arith.constant 0.000000e+00 : f32
    %432 = vector.broadcast %cst_179 : f32 to vector<1x1xf32>
    %433 = vector.broadcast %431 : vector<1x1xf32> to vector<64x16xf32>
    %434 = arith.subf %397, %433 : vector<64x16xf32>
    %435 = arith.mulf %434, %434 : vector<64x16xf32>
    %cst_180 = arith.constant dense<0.000000e+00> : vector<16xf32>
    %436 = vector.multi_reduction <add>, %435, %cst_180 [0] : vector<64x16xf32> to vector<16xf32>
    %437 = vector.shape_cast %436 : vector<16xf32> to vector<1x16xf32>
    %cst_181 = arith.constant dense<0.000000e+00> : vector<1xf32>
    %438 = vector.multi_reduction <add>, %437, %cst_181 [1] : vector<1x16xf32> to vector<1xf32>
    %439 = vector.shape_cast %438 : vector<1xf32> to vector<1x1xf32>
    %440 = arith.addf %432, %439 : vector<1x1xf32>
    %441 = vector.broadcast %431 : vector<1x1xf32> to vector<64x16xf32>
    %442 = arith.subf %401, %441 : vector<64x16xf32>
    %443 = arith.mulf %442, %442 : vector<64x16xf32>
    %cst_182 = arith.constant dense<0.000000e+00> : vector<16xf32>
    %444 = vector.multi_reduction <add>, %443, %cst_182 [0] : vector<64x16xf32> to vector<16xf32>
    %445 = vector.shape_cast %444 : vector<16xf32> to vector<1x16xf32>
    %cst_183 = arith.constant dense<0.000000e+00> : vector<1xf32>
    %446 = vector.multi_reduction <add>, %445, %cst_183 [1] : vector<1x16xf32> to vector<1xf32>
    %447 = vector.shape_cast %446 : vector<1xf32> to vector<1x1xf32>
    %448 = arith.addf %440, %447 : vector<1x1xf32>
    %449 = vector.broadcast %431 : vector<1x1xf32> to vector<64x16xf32>
    %450 = arith.subf %405, %449 : vector<64x16xf32>
    %451 = arith.mulf %450, %450 : vector<64x16xf32>
    %cst_184 = arith.constant dense<0.000000e+00> : vector<16xf32>
    %452 = vector.multi_reduction <add>, %451, %cst_184 [0] : vector<64x16xf32> to vector<16xf32>
    %453 = vector.shape_cast %452 : vector<16xf32> to vector<1x16xf32>
    %cst_185 = arith.constant dense<0.000000e+00> : vector<1xf32>
    %454 = vector.multi_reduction <add>, %453, %cst_185 [1] : vector<1x16xf32> to vector<1xf32>
    %455 = vector.shape_cast %454 : vector<1xf32> to vector<1x1xf32>
    %456 = arith.addf %448, %455 : vector<1x1xf32>
    %457 = vector.broadcast %431 : vector<1x1xf32> to vector<64x16xf32>
    %458 = arith.subf %409, %457 : vector<64x16xf32>
    %459 = arith.mulf %458, %458 : vector<64x16xf32>
    %cst_186 = arith.constant dense<0.000000e+00> : vector<16xf32>
    %460 = vector.multi_reduction <add>, %459, %cst_186 [0] : vector<64x16xf32> to vector<16xf32>
    %461 = vector.shape_cast %460 : vector<16xf32> to vector<1x16xf32>
    %cst_187 = arith.constant dense<0.000000e+00> : vector<1xf32>
    %462 = vector.multi_reduction <add>, %461, %cst_187 [1] : vector<1x16xf32> to vector<1xf32>
    %463 = vector.shape_cast %462 : vector<1xf32> to vector<1x1xf32>
    %464 = arith.addf %456, %463 : vector<1x1xf32>
    %cst_188 = arith.constant 2.44140625E-4 : f32
    %465 = vector.broadcast %cst_188 : f32 to vector<1x1xf32>
    %466 = arith.mulf %464, %465 : vector<1x1xf32>
    %cst_189 = arith.constant 9.99999974E-6 : f32
    %467 = vector.broadcast %cst_189 : f32 to vector<1x1xf32>
    %468 = arith.addf %466, %467 : vector<1x1xf32>
    %469 = math.rsqrt %468 : vector<1x1xf32>
    %470 = vector.broadcast %469 : vector<1x1xf32> to vector<64x16xf32>
    %471 = arith.mulf %434, %470 : vector<64x16xf32>
    %472 = vector.broadcast %381 : vector<1x16xf32> to vector<64x16xf32>
    %473 = arith.mulf %471, %472 : vector<64x16xf32>
    %474 = vector.broadcast %382 : vector<1x16xf32> to vector<64x16xf32>
    %475 = arith.addf %473, %474 : vector<64x16xf32>
    %cst_190 = arith.constant 0.000000e+00 : f32
    %476 = vector.broadcast %cst_190 : f32 to vector<64x16xf32>
    %477 = arith.maximumf %475, %476 : vector<64x16xf32>
    %478 = vector.broadcast %469 : vector<1x1xf32> to vector<64x16xf32>
    %479 = arith.mulf %442, %478 : vector<64x16xf32>
    %480 = vector.broadcast %381 : vector<1x16xf32> to vector<64x16xf32>
    %481 = arith.mulf %479, %480 : vector<64x16xf32>
    %482 = vector.broadcast %382 : vector<1x16xf32> to vector<64x16xf32>
    %483 = arith.addf %481, %482 : vector<64x16xf32>
    %cst_191 = arith.constant 0.000000e+00 : f32
    %484 = vector.broadcast %cst_191 : f32 to vector<64x16xf32>
    %485 = arith.maximumf %483, %484 : vector<64x16xf32>
    %486 = vector.broadcast %469 : vector<1x1xf32> to vector<64x16xf32>
    %487 = arith.mulf %450, %486 : vector<64x16xf32>
    %488 = vector.broadcast %381 : vector<1x16xf32> to vector<64x16xf32>
    %489 = arith.mulf %487, %488 : vector<64x16xf32>
    %490 = vector.broadcast %382 : vector<1x16xf32> to vector<64x16xf32>
    %491 = arith.addf %489, %490 : vector<64x16xf32>
    %cst_192 = arith.constant 0.000000e+00 : f32
    %492 = vector.broadcast %cst_192 : f32 to vector<64x16xf32>
    %493 = arith.maximumf %491, %492 : vector<64x16xf32>
    %494 = vector.broadcast %469 : vector<1x1xf32> to vector<64x16xf32>
    %495 = arith.mulf %458, %494 : vector<64x16xf32>
    %496 = vector.broadcast %381 : vector<1x16xf32> to vector<64x16xf32>
    %497 = arith.mulf %495, %496 : vector<64x16xf32>
    %498 = vector.broadcast %382 : vector<1x16xf32> to vector<64x16xf32>
    %499 = arith.addf %497, %498 : vector<64x16xf32>
    %cst_193 = arith.constant 0.000000e+00 : f32
    %500 = vector.broadcast %cst_193 : f32 to vector<64x16xf32>
    %501 = arith.maximumf %499, %500 : vector<64x16xf32>
    %c0_194 = arith.constant 0 : index
    %c0_195 = arith.constant 0 : index
    %502 = vector.load %arg17[%c0_194, %c0_195] : memref<144x8xbf16, #tpu.memory_space<vmem>>, vector<16x8xbf16>
    %c16_196 = arith.constant 16 : index
    %c0_197 = arith.constant 0 : index
    %503 = vector.load %arg17[%c16_196, %c0_197] : memref<144x8xbf16, #tpu.memory_space<vmem>>, vector<32x8xbf16>
    %c48 = arith.constant 48 : index
    %c0_198 = arith.constant 0 : index
    %504 = vector.load %arg17[%c48, %c0_198] : memref<144x8xbf16, #tpu.memory_space<vmem>>, vector<32x8xbf16>
    %c80_199 = arith.constant 80 : index
    %c0_200 = arith.constant 0 : index
    %505 = vector.load %arg17[%c80_199, %c0_200] : memref<144x8xbf16, #tpu.memory_space<vmem>>, vector<64x8xbf16>
    %c0_201 = arith.constant 0 : index
    %c0_202 = arith.constant 0 : index
    %506 = vector.load %arg18[%c0_201, %c0_202] : memref<3x8xf32, #tpu.memory_space<vmem>>, vector<1x8xf32>
    %c1_203 = arith.constant 1 : index
    %c0_204 = arith.constant 0 : index
    %507 = vector.load %arg18[%c1_203, %c0_204] : memref<3x8xf32, #tpu.memory_space<vmem>>, vector<1x8xf32>
    %c2_205 = arith.constant 2 : index
    %c0_206 = arith.constant 0 : index
    %508 = vector.load %arg18[%c2_205, %c0_206] : memref<3x8xf32, #tpu.memory_space<vmem>>, vector<1x8xf32>
    %509 = tpu.concatenate %477, %485, %493, %501 in 1 : vector<64x16xf32>, vector<64x16xf32>, vector<64x16xf32>, vector<64x16xf32> -> vector<64x64xf32>
    %c63_i32_207 = arith.constant 63 : i32
    %510 = tpu.dynamic_rotate %509 by %c63_i32_207 dim 0 : vector<64x64xf32>, i32 -> vector<64x64xf32>
    %511 = vector.broadcast %10 : vector<64x1xf32> to vector<64x64xf32>
    %512 = arith.mulf %510, %511 : vector<64x64xf32>
    %513 = tpu.concatenate %509, %512 in 1 : vector<64x64xf32>, vector<64x64xf32> -> vector<64x128xf32>
    %514 = arith.truncf %513 : vector<64x128xf32> to vector<64x128xbf16>
    %c0_208 = arith.constant 0 : index
    %c0_209 = arith.constant 0 : index
    %515 = vector.load %arg24[%c0_208, %c0_209] : memref<80x128xbf16, #tpu.memory_space<vmem>>, vector<64x128xbf16>
    tpu.vector_store %arg24[%c0_208, %c0_209], %514 {strides = array<i32>} : memref<80x128xbf16, #tpu.memory_space<vmem>>, vector<64x128xbf16>,
    %c8_210 = arith.constant 8 : index
    %c0_211 = arith.constant 0 : index
    %516 = vector.load %arg24[%c8_210, %c0_211] : memref<80x128xbf16, #tpu.memory_space<vmem>>, vector<64x128xbf16>
    %cst_212 = arith.constant 0.000000e+00 : f32
    %517 = vector.broadcast %cst_212 : f32 to vector<1x1xf32>
    %518 = vector.extract_strided_slice %514 {offsets = [0, 0], sizes = [64, 16], strides = [1, 1]} : vector<64x128xbf16> to vector<64x16xbf16>
    %519 = vector.extract_strided_slice %514 {offsets = [0, 16], sizes = [64, 16], strides = [1, 1]} : vector<64x128xbf16> to vector<64x16xbf16>
    %520 = vector.extract_strided_slice %514 {offsets = [0, 32], sizes = [64, 16], strides = [1, 1]} : vector<64x128xbf16> to vector<64x16xbf16>
    %521 = vector.extract_strided_slice %514 {offsets = [0, 48], sizes = [64, 16], strides = [1, 1]} : vector<64x128xbf16> to vector<64x16xbf16>
    %cst_213 = arith.constant dense<0.000000e+00> : vector<64x8xf32>
    %522 = tpu.matmul %518, %502, %cst_213 {dimension_numbers = #tpu.dot_dimension_numbers<[1], [0], [0], [1], [0, 0, 1, 1], [], []>} : vector<64x16xbf16>, vector<16x8xbf16>, vector<64x8xf32> -> vector<64x8xf32>
    %523 = vector.broadcast %506 : vector<1x8xf32> to vector<64x8xf32>
    %524 = arith.addf %522, %523 : vector<64x8xf32>
    %525 = tpu.concatenate %518, %519 in 1 : vector<64x16xbf16>, vector<64x16xbf16> -> vector<64x32xbf16>
    %cst_214 = arith.constant dense<0.000000e+00> : vector<64x8xf32>
    %526 = tpu.matmul %525, %503, %cst_214 {dimension_numbers = #tpu.dot_dimension_numbers<[1], [0], [0], [1], [0, 0, 1, 1], [], []>} : vector<64x32xbf16>, vector<32x8xbf16>, vector<64x8xf32> -> vector<64x8xf32>
    %527 = vector.broadcast %506 : vector<1x8xf32> to vector<64x8xf32>
    %528 = arith.addf %526, %527 : vector<64x8xf32>
    %529 = tpu.concatenate %518, %520 in 1 : vector<64x16xbf16>, vector<64x16xbf16> -> vector<64x32xbf16>
    %cst_215 = arith.constant dense<0.000000e+00> : vector<64x8xf32>
    %530 = tpu.matmul %529, %504, %cst_215 {dimension_numbers = #tpu.dot_dimension_numbers<[1], [0], [0], [1], [0, 0, 1, 1], [], []>} : vector<64x32xbf16>, vector<32x8xbf16>, vector<64x8xf32> -> vector<64x8xf32>
    %531 = vector.broadcast %506 : vector<1x8xf32> to vector<64x8xf32>
    %532 = arith.addf %530, %531 : vector<64x8xf32>
    %533 = tpu.concatenate %518, %519, %520, %521 in 1 : vector<64x16xbf16>, vector<64x16xbf16>, vector<64x16xbf16>, vector<64x16xbf16> -> vector<64x64xbf16>
    %cst_216 = arith.constant dense<0.000000e+00> : vector<64x8xf32>
    %534 = tpu.matmul %533, %505, %cst_216 {dimension_numbers = #tpu.dot_dimension_numbers<[1], [0], [0], [1], [0, 0, 1, 1], [], []>} : vector<64x64xbf16>, vector<64x8xbf16>, vector<64x8xf32> -> vector<64x8xf32>
    %535 = vector.broadcast %506 : vector<1x8xf32> to vector<64x8xf32>
    %536 = arith.addf %534, %535 : vector<64x8xf32>
    %cst_217 = arith.constant dense<0.000000e+00> : vector<8xf32>
    %537 = vector.multi_reduction <add>, %524, %cst_217 [0] : vector<64x8xf32> to vector<8xf32>
    %538 = vector.shape_cast %537 : vector<8xf32> to vector<1x8xf32>
    %cst_218 = arith.constant dense<0.000000e+00> : vector<1xf32>
    %539 = vector.multi_reduction <add>, %538, %cst_218 [1] : vector<1x8xf32> to vector<1xf32>
    %540 = vector.shape_cast %539 : vector<1xf32> to vector<1x1xf32>
    %541 = arith.addf %517, %540 : vector<1x1xf32>
    %cst_219 = arith.constant dense<0.000000e+00> : vector<8xf32>
    %542 = vector.multi_reduction <add>, %528, %cst_219 [0] : vector<64x8xf32> to vector<8xf32>
    %543 = vector.shape_cast %542 : vector<8xf32> to vector<1x8xf32>
    %cst_220 = arith.constant dense<0.000000e+00> : vector<1xf32>
    %544 = vector.multi_reduction <add>, %543, %cst_220 [1] : vector<1x8xf32> to vector<1xf32>
    %545 = vector.shape_cast %544 : vector<1xf32> to vector<1x1xf32>
    %546 = arith.addf %541, %545 : vector<1x1xf32>
    %cst_221 = arith.constant dense<0.000000e+00> : vector<8xf32>
    %547 = vector.multi_reduction <add>, %532, %cst_221 [0] : vector<64x8xf32> to vector<8xf32>
    %548 = vector.shape_cast %547 : vector<8xf32> to vector<1x8xf32>
    %cst_222 = arith.constant dense<0.000000e+00> : vector<1xf32>
    %549 = vector.multi_reduction <add>, %548, %cst_222 [1] : vector<1x8xf32> to vector<1xf32>
    %550 = vector.shape_cast %549 : vector<1xf32> to vector<1x1xf32>
    %551 = arith.addf %546, %550 : vector<1x1xf32>
    %cst_223 = arith.constant dense<0.000000e+00> : vector<8xf32>
    %552 = vector.multi_reduction <add>, %536, %cst_223 [0] : vector<64x8xf32> to vector<8xf32>
    %553 = vector.shape_cast %552 : vector<8xf32> to vector<1x8xf32>
    %cst_224 = arith.constant dense<0.000000e+00> : vector<1xf32>
    %554 = vector.multi_reduction <add>, %553, %cst_224 [1] : vector<1x8xf32> to vector<1xf32>
    %555 = vector.shape_cast %554 : vector<1xf32> to vector<1x1xf32>
    %556 = arith.addf %551, %555 : vector<1x1xf32>
    %557 = vector.extract_strided_slice %514 {offsets = [0, 16], sizes = [64, 16], strides = [1, 1]} : vector<64x128xbf16> to vector<64x16xbf16>
    %558 = vector.extract_strided_slice %514 {offsets = [0, 64], sizes = [64, 16], strides = [1, 1]} : vector<64x128xbf16> to vector<64x16xbf16>
    %559 = vector.extract_strided_slice %514 {offsets = [0, 48], sizes = [64, 16], strides = [1, 1]} : vector<64x128xbf16> to vector<64x16xbf16>
    %560 = vector.extract_strided_slice %514 {offsets = [0, 96], sizes = [64, 16], strides = [1, 1]} : vector<64x128xbf16> to vector<64x16xbf16>
    %cst_225 = arith.constant dense<0.000000e+00> : vector<64x8xf32>
    %561 = tpu.matmul %557, %502, %cst_225 {dimension_numbers = #tpu.dot_dimension_numbers<[1], [0], [0], [1], [0, 0, 1, 1], [], []>} : vector<64x16xbf16>, vector<16x8xbf16>, vector<64x8xf32> -> vector<64x8xf32>
    %562 = vector.broadcast %506 : vector<1x8xf32> to vector<64x8xf32>
    %563 = arith.addf %561, %562 : vector<64x8xf32>
    %564 = tpu.concatenate %557, %558 in 1 : vector<64x16xbf16>, vector<64x16xbf16> -> vector<64x32xbf16>
    %cst_226 = arith.constant dense<0.000000e+00> : vector<64x8xf32>
    %565 = tpu.matmul %564, %503, %cst_226 {dimension_numbers = #tpu.dot_dimension_numbers<[1], [0], [0], [1], [0, 0, 1, 1], [], []>} : vector<64x32xbf16>, vector<32x8xbf16>, vector<64x8xf32> -> vector<64x8xf32>
    %566 = vector.broadcast %506 : vector<1x8xf32> to vector<64x8xf32>
    %567 = arith.addf %565, %566 : vector<64x8xf32>
    %568 = tpu.concatenate %557, %559 in 1 : vector<64x16xbf16>, vector<64x16xbf16> -> vector<64x32xbf16>
    %cst_227 = arith.constant dense<0.000000e+00> : vector<64x8xf32>
    %569 = tpu.matmul %568, %504, %cst_227 {dimension_numbers = #tpu.dot_dimension_numbers<[1], [0], [0], [1], [0, 0, 1, 1], [], []>} : vector<64x32xbf16>, vector<32x8xbf16>, vector<64x8xf32> -> vector<64x8xf32>
    %570 = vector.broadcast %506 : vector<1x8xf32> to vector<64x8xf32>
    %571 = arith.addf %569, %570 : vector<64x8xf32>
    %572 = tpu.concatenate %557, %558, %559, %560 in 1 : vector<64x16xbf16>, vector<64x16xbf16>, vector<64x16xbf16>, vector<64x16xbf16> -> vector<64x64xbf16>
    %cst_228 = arith.constant dense<0.000000e+00> : vector<64x8xf32>
    %573 = tpu.matmul %572, %505, %cst_228 {dimension_numbers = #tpu.dot_dimension_numbers<[1], [0], [0], [1], [0, 0, 1, 1], [], []>} : vector<64x64xbf16>, vector<64x8xbf16>, vector<64x8xf32> -> vector<64x8xf32>
    %574 = vector.broadcast %506 : vector<1x8xf32> to vector<64x8xf32>
    %575 = arith.addf %573, %574 : vector<64x8xf32>
    %cst_229 = arith.constant dense<0.000000e+00> : vector<8xf32>
    %576 = vector.multi_reduction <add>, %563, %cst_229 [0] : vector<64x8xf32> to vector<8xf32>
    %577 = vector.shape_cast %576 : vector<8xf32> to vector<1x8xf32>
    %cst_230 = arith.constant dense<0.000000e+00> : vector<1xf32>
    %578 = vector.multi_reduction <add>, %577, %cst_230 [1] : vector<1x8xf32> to vector<1xf32>
    %579 = vector.shape_cast %578 : vector<1xf32> to vector<1x1xf32>
    %580 = arith.addf %556, %579 : vector<1x1xf32>
    %cst_231 = arith.constant dense<0.000000e+00> : vector<8xf32>
    %581 = vector.multi_reduction <add>, %567, %cst_231 [0] : vector<64x8xf32> to vector<8xf32>
    %582 = vector.shape_cast %581 : vector<8xf32> to vector<1x8xf32>
    %cst_232 = arith.constant dense<0.000000e+00> : vector<1xf32>
    %583 = vector.multi_reduction <add>, %582, %cst_232 [1] : vector<1x8xf32> to vector<1xf32>
    %584 = vector.shape_cast %583 : vector<1xf32> to vector<1x1xf32>
    %585 = arith.addf %580, %584 : vector<1x1xf32>
    %cst_233 = arith.constant dense<0.000000e+00> : vector<8xf32>
    %586 = vector.multi_reduction <add>, %571, %cst_233 [0] : vector<64x8xf32> to vector<8xf32>
    %587 = vector.shape_cast %586 : vector<8xf32> to vector<1x8xf32>
    %cst_234 = arith.constant dense<0.000000e+00> : vector<1xf32>
    %588 = vector.multi_reduction <add>, %587, %cst_234 [1] : vector<1x8xf32> to vector<1xf32>
    %589 = vector.shape_cast %588 : vector<1xf32> to vector<1x1xf32>
    %590 = arith.addf %585, %589 : vector<1x1xf32>
    %cst_235 = arith.constant dense<0.000000e+00> : vector<8xf32>
    %591 = vector.multi_reduction <add>, %575, %cst_235 [0] : vector<64x8xf32> to vector<8xf32>
    %592 = vector.shape_cast %591 : vector<8xf32> to vector<1x8xf32>
    %cst_236 = arith.constant dense<0.000000e+00> : vector<1xf32>
    %593 = vector.multi_reduction <add>, %592, %cst_236 [1] : vector<1x8xf32> to vector<1xf32>
    %594 = vector.shape_cast %593 : vector<1xf32> to vector<1x1xf32>
    %595 = arith.addf %590, %594 : vector<1x1xf32>
    %596 = vector.extract_strided_slice %514 {offsets = [0, 32], sizes = [64, 16], strides = [1, 1]} : vector<64x128xbf16> to vector<64x16xbf16>
    %597 = vector.extract_strided_slice %514 {offsets = [0, 48], sizes = [64, 16], strides = [1, 1]} : vector<64x128xbf16> to vector<64x16xbf16>
    %598 = vector.extract_strided_slice %516 {offsets = [0, 0], sizes = [64, 16], strides = [1, 1]} : vector<64x128xbf16> to vector<64x16xbf16>
    %599 = vector.extract_strided_slice %516 {offsets = [0, 16], sizes = [64, 16], strides = [1, 1]} : vector<64x128xbf16> to vector<64x16xbf16>
    %cst_237 = arith.constant dense<0.000000e+00> : vector<64x8xf32>
    %600 = tpu.matmul %596, %502, %cst_237 {dimension_numbers = #tpu.dot_dimension_numbers<[1], [0], [0], [1], [0, 0, 1, 1], [], []>} : vector<64x16xbf16>, vector<16x8xbf16>, vector<64x8xf32> -> vector<64x8xf32>
    %601 = vector.broadcast %506 : vector<1x8xf32> to vector<64x8xf32>
    %602 = arith.addf %600, %601 : vector<64x8xf32>
    %603 = tpu.concatenate %596, %597 in 1 : vector<64x16xbf16>, vector<64x16xbf16> -> vector<64x32xbf16>
    %cst_238 = arith.constant dense<0.000000e+00> : vector<64x8xf32>
    %604 = tpu.matmul %603, %503, %cst_238 {dimension_numbers = #tpu.dot_dimension_numbers<[1], [0], [0], [1], [0, 0, 1, 1], [], []>} : vector<64x32xbf16>, vector<32x8xbf16>, vector<64x8xf32> -> vector<64x8xf32>
    %605 = vector.broadcast %506 : vector<1x8xf32> to vector<64x8xf32>
    %606 = arith.addf %604, %605 : vector<64x8xf32>
    %607 = tpu.concatenate %596, %598 in 1 : vector<64x16xbf16>, vector<64x16xbf16> -> vector<64x32xbf16>
    %cst_239 = arith.constant dense<0.000000e+00> : vector<64x8xf32>
    %608 = tpu.matmul %607, %504, %cst_239 {dimension_numbers = #tpu.dot_dimension_numbers<[1], [0], [0], [1], [0, 0, 1, 1], [], []>} : vector<64x32xbf16>, vector<32x8xbf16>, vector<64x8xf32> -> vector<64x8xf32>
    %609 = vector.broadcast %506 : vector<1x8xf32> to vector<64x8xf32>
    %610 = arith.addf %608, %609 : vector<64x8xf32>
    %611 = tpu.concatenate %596, %597, %598, %599 in 1 : vector<64x16xbf16>, vector<64x16xbf16>, vector<64x16xbf16>, vector<64x16xbf16> -> vector<64x64xbf16>
    %cst_240 = arith.constant dense<0.000000e+00> : vector<64x8xf32>
    %612 = tpu.matmul %611, %505, %cst_240 {dimension_numbers = #tpu.dot_dimension_numbers<[1], [0], [0], [1], [0, 0, 1, 1], [], []>} : vector<64x64xbf16>, vector<64x8xbf16>, vector<64x8xf32> -> vector<64x8xf32>
    %613 = vector.broadcast %506 : vector<1x8xf32> to vector<64x8xf32>
    %614 = arith.addf %612, %613 : vector<64x8xf32>
    %cst_241 = arith.constant dense<0.000000e+00> : vector<8xf32>
    %615 = vector.multi_reduction <add>, %602, %cst_241 [0] : vector<64x8xf32> to vector<8xf32>
    %616 = vector.shape_cast %615 : vector<8xf32> to vector<1x8xf32>
    %cst_242 = arith.constant dense<0.000000e+00> : vector<1xf32>
    %617 = vector.multi_reduction <add>, %616, %cst_242 [1] : vector<1x8xf32> to vector<1xf32>
    %618 = vector.shape_cast %617 : vector<1xf32> to vector<1x1xf32>
    %619 = arith.addf %595, %618 : vector<1x1xf32>
    %cst_243 = arith.constant dense<0.000000e+00> : vector<8xf32>
    %620 = vector.multi_reduction <add>, %606, %cst_243 [0] : vector<64x8xf32> to vector<8xf32>
    %621 = vector.shape_cast %620 : vector<8xf32> to vector<1x8xf32>
    %cst_244 = arith.constant dense<0.000000e+00> : vector<1xf32>
    %622 = vector.multi_reduction <add>, %621, %cst_244 [1] : vector<1x8xf32> to vector<1xf32>
    %623 = vector.shape_cast %622 : vector<1xf32> to vector<1x1xf32>
    %624 = arith.addf %619, %623 : vector<1x1xf32>
    %cst_245 = arith.constant dense<0.000000e+00> : vector<8xf32>
    %625 = vector.multi_reduction <add>, %610, %cst_245 [0] : vector<64x8xf32> to vector<8xf32>
    %626 = vector.shape_cast %625 : vector<8xf32> to vector<1x8xf32>
    %cst_246 = arith.constant dense<0.000000e+00> : vector<1xf32>
    %627 = vector.multi_reduction <add>, %626, %cst_246 [1] : vector<1x8xf32> to vector<1xf32>
    %628 = vector.shape_cast %627 : vector<1xf32> to vector<1x1xf32>
    %629 = arith.addf %624, %628 : vector<1x1xf32>
    %cst_247 = arith.constant dense<0.000000e+00> : vector<8xf32>
    %630 = vector.multi_reduction <add>, %614, %cst_247 [0] : vector<64x8xf32> to vector<8xf32>
    %631 = vector.shape_cast %630 : vector<8xf32> to vector<1x8xf32>
    %cst_248 = arith.constant dense<0.000000e+00> : vector<1xf32>
    %632 = vector.multi_reduction <add>, %631, %cst_248 [1] : vector<1x8xf32> to vector<1xf32>
    %633 = vector.shape_cast %632 : vector<1xf32> to vector<1x1xf32>
    %634 = arith.addf %629, %633 : vector<1x1xf32>
    %635 = vector.extract_strided_slice %514 {offsets = [0, 48], sizes = [64, 16], strides = [1, 1]} : vector<64x128xbf16> to vector<64x16xbf16>
    %636 = vector.extract_strided_slice %514 {offsets = [0, 96], sizes = [64, 16], strides = [1, 1]} : vector<64x128xbf16> to vector<64x16xbf16>
    %637 = vector.extract_strided_slice %516 {offsets = [0, 16], sizes = [64, 16], strides = [1, 1]} : vector<64x128xbf16> to vector<64x16xbf16>
    %638 = vector.extract_strided_slice %516 {offsets = [0, 64], sizes = [64, 16], strides = [1, 1]} : vector<64x128xbf16> to vector<64x16xbf16>
    %cst_249 = arith.constant dense<0.000000e+00> : vector<64x8xf32>
    %639 = tpu.matmul %635, %502, %cst_249 {dimension_numbers = #tpu.dot_dimension_numbers<[1], [0], [0], [1], [0, 0, 1, 1], [], []>} : vector<64x16xbf16>, vector<16x8xbf16>, vector<64x8xf32> -> vector<64x8xf32>
    %640 = vector.broadcast %506 : vector<1x8xf32> to vector<64x8xf32>
    %641 = arith.addf %639, %640 : vector<64x8xf32>
    %642 = tpu.concatenate %635, %636 in 1 : vector<64x16xbf16>, vector<64x16xbf16> -> vector<64x32xbf16>
    %cst_250 = arith.constant dense<0.000000e+00> : vector<64x8xf32>
    %643 = tpu.matmul %642, %503, %cst_250 {dimension_numbers = #tpu.dot_dimension_numbers<[1], [0], [0], [1], [0, 0, 1, 1], [], []>} : vector<64x32xbf16>, vector<32x8xbf16>, vector<64x8xf32> -> vector<64x8xf32>
    %644 = vector.broadcast %506 : vector<1x8xf32> to vector<64x8xf32>
    %645 = arith.addf %643, %644 : vector<64x8xf32>
    %646 = tpu.concatenate %635, %637 in 1 : vector<64x16xbf16>, vector<64x16xbf16> -> vector<64x32xbf16>
    %cst_251 = arith.constant dense<0.000000e+00> : vector<64x8xf32>
    %647 = tpu.matmul %646, %504, %cst_251 {dimension_numbers = #tpu.dot_dimension_numbers<[1], [0], [0], [1], [0, 0, 1, 1], [], []>} : vector<64x32xbf16>, vector<32x8xbf16>, vector<64x8xf32> -> vector<64x8xf32>
    %648 = vector.broadcast %506 : vector<1x8xf32> to vector<64x8xf32>
    %649 = arith.addf %647, %648 : vector<64x8xf32>
    %650 = tpu.concatenate %635, %636, %637, %638 in 1 : vector<64x16xbf16>, vector<64x16xbf16>, vector<64x16xbf16>, vector<64x16xbf16> -> vector<64x64xbf16>
    %cst_252 = arith.constant dense<0.000000e+00> : vector<64x8xf32>
    %651 = tpu.matmul %650, %505, %cst_252 {dimension_numbers = #tpu.dot_dimension_numbers<[1], [0], [0], [1], [0, 0, 1, 1], [], []>} : vector<64x64xbf16>, vector<64x8xbf16>, vector<64x8xf32> -> vector<64x8xf32>
    %652 = vector.broadcast %506 : vector<1x8xf32> to vector<64x8xf32>
    %653 = arith.addf %651, %652 : vector<64x8xf32>
    %cst_253 = arith.constant dense<0.000000e+00> : vector<8xf32>
    %654 = vector.multi_reduction <add>, %641, %cst_253 [0] : vector<64x8xf32> to vector<8xf32>
    %655 = vector.shape_cast %654 : vector<8xf32> to vector<1x8xf32>
    %cst_254 = arith.constant dense<0.000000e+00> : vector<1xf32>
    %656 = vector.multi_reduction <add>, %655, %cst_254 [1] : vector<1x8xf32> to vector<1xf32>
    %657 = vector.shape_cast %656 : vector<1xf32> to vector<1x1xf32>
    %658 = arith.addf %634, %657 : vector<1x1xf32>
    %cst_255 = arith.constant dense<0.000000e+00> : vector<8xf32>
    %659 = vector.multi_reduction <add>, %645, %cst_255 [0] : vector<64x8xf32> to vector<8xf32>
    %660 = vector.shape_cast %659 : vector<8xf32> to vector<1x8xf32>
    %cst_256 = arith.constant dense<0.000000e+00> : vector<1xf32>
    %661 = vector.multi_reduction <add>, %660, %cst_256 [1] : vector<1x8xf32> to vector<1xf32>
    %662 = vector.shape_cast %661 : vector<1xf32> to vector<1x1xf32>
    %663 = arith.addf %658, %662 : vector<1x1xf32>
    %cst_257 = arith.constant dense<0.000000e+00> : vector<8xf32>
    %664 = vector.multi_reduction <add>, %649, %cst_257 [0] : vector<64x8xf32> to vector<8xf32>
    %665 = vector.shape_cast %664 : vector<8xf32> to vector<1x8xf32>
    %cst_258 = arith.constant dense<0.000000e+00> : vector<1xf32>
    %666 = vector.multi_reduction <add>, %665, %cst_258 [1] : vector<1x8xf32> to vector<1xf32>
    %667 = vector.shape_cast %666 : vector<1xf32> to vector<1x1xf32>
    %668 = arith.addf %663, %667 : vector<1x1xf32>
    %cst_259 = arith.constant dense<0.000000e+00> : vector<8xf32>
    %669 = vector.multi_reduction <add>, %653, %cst_259 [0] : vector<64x8xf32> to vector<8xf32>
    %670 = vector.shape_cast %669 : vector<8xf32> to vector<1x8xf32>
    %cst_260 = arith.constant dense<0.000000e+00> : vector<1xf32>
    %671 = vector.multi_reduction <add>, %670, %cst_260 [1] : vector<1x8xf32> to vector<1xf32>
    %672 = vector.shape_cast %671 : vector<1xf32> to vector<1x1xf32>
    %673 = arith.addf %668, %672 : vector<1x1xf32>
    %cst_261 = arith.constant 1.22070313E-4 : f32
    %674 = vector.broadcast %cst_261 : f32 to vector<1x1xf32>
    %675 = arith.mulf %673, %674 : vector<1x1xf32>
    %cst_262 = arith.constant 0.000000e+00 : f32
    %676 = vector.broadcast %cst_262 : f32 to vector<1x1xf32>
    %677 = vector.broadcast %675 : vector<1x1xf32> to vector<64x8xf32>
    %678 = arith.subf %524, %677 : vector<64x8xf32>
    %679 = arith.mulf %678, %678 : vector<64x8xf32>
    %cst_263 = arith.constant dense<0.000000e+00> : vector<8xf32>
    %680 = vector.multi_reduction <add>, %679, %cst_263 [0] : vector<64x8xf32> to vector<8xf32>
    %681 = vector.shape_cast %680 : vector<8xf32> to vector<1x8xf32>
    %cst_264 = arith.constant dense<0.000000e+00> : vector<1xf32>
    %682 = vector.multi_reduction <add>, %681, %cst_264 [1] : vector<1x8xf32> to vector<1xf32>
    %683 = vector.shape_cast %682 : vector<1xf32> to vector<1x1xf32>
    %684 = arith.addf %676, %683 : vector<1x1xf32>
    %685 = vector.broadcast %675 : vector<1x1xf32> to vector<64x8xf32>
    %686 = arith.subf %528, %685 : vector<64x8xf32>
    %687 = arith.mulf %686, %686 : vector<64x8xf32>
    %cst_265 = arith.constant dense<0.000000e+00> : vector<8xf32>
    %688 = vector.multi_reduction <add>, %687, %cst_265 [0] : vector<64x8xf32> to vector<8xf32>
    %689 = vector.shape_cast %688 : vector<8xf32> to vector<1x8xf32>
    %cst_266 = arith.constant dense<0.000000e+00> : vector<1xf32>
    %690 = vector.multi_reduction <add>, %689, %cst_266 [1] : vector<1x8xf32> to vector<1xf32>
    %691 = vector.shape_cast %690 : vector<1xf32> to vector<1x1xf32>
    %692 = arith.addf %684, %691 : vector<1x1xf32>
    %693 = vector.broadcast %675 : vector<1x1xf32> to vector<64x8xf32>
    %694 = arith.subf %532, %693 : vector<64x8xf32>
    %695 = arith.mulf %694, %694 : vector<64x8xf32>
    %cst_267 = arith.constant dense<0.000000e+00> : vector<8xf32>
    %696 = vector.multi_reduction <add>, %695, %cst_267 [0] : vector<64x8xf32> to vector<8xf32>
    %697 = vector.shape_cast %696 : vector<8xf32> to vector<1x8xf32>
    %cst_268 = arith.constant dense<0.000000e+00> : vector<1xf32>
    %698 = vector.multi_reduction <add>, %697, %cst_268 [1] : vector<1x8xf32> to vector<1xf32>
    %699 = vector.shape_cast %698 : vector<1xf32> to vector<1x1xf32>
    %700 = arith.addf %692, %699 : vector<1x1xf32>
    %701 = vector.broadcast %675 : vector<1x1xf32> to vector<64x8xf32>
    %702 = arith.subf %536, %701 : vector<64x8xf32>
    %703 = arith.mulf %702, %702 : vector<64x8xf32>
    %cst_269 = arith.constant dense<0.000000e+00> : vector<8xf32>
    %704 = vector.multi_reduction <add>, %703, %cst_269 [0] : vector<64x8xf32> to vector<8xf32>
    %705 = vector.shape_cast %704 : vector<8xf32> to vector<1x8xf32>
    %cst_270 = arith.constant dense<0.000000e+00> : vector<1xf32>
    %706 = vector.multi_reduction <add>, %705, %cst_270 [1] : vector<1x8xf32> to vector<1xf32>
    %707 = vector.shape_cast %706 : vector<1xf32> to vector<1x1xf32>
    %708 = arith.addf %700, %707 : vector<1x1xf32>
    %709 = vector.broadcast %675 : vector<1x1xf32> to vector<64x8xf32>
    %710 = arith.subf %563, %709 : vector<64x8xf32>
    %711 = arith.mulf %710, %710 : vector<64x8xf32>
    %cst_271 = arith.constant dense<0.000000e+00> : vector<8xf32>
    %712 = vector.multi_reduction <add>, %711, %cst_271 [0] : vector<64x8xf32> to vector<8xf32>
    %713 = vector.shape_cast %712 : vector<8xf32> to vector<1x8xf32>
    %cst_272 = arith.constant dense<0.000000e+00> : vector<1xf32>
    %714 = vector.multi_reduction <add>, %713, %cst_272 [1] : vector<1x8xf32> to vector<1xf32>
    %715 = vector.shape_cast %714 : vector<1xf32> to vector<1x1xf32>
    %716 = arith.addf %708, %715 : vector<1x1xf32>
    %717 = vector.broadcast %675 : vector<1x1xf32> to vector<64x8xf32>
    %718 = arith.subf %567, %717 : vector<64x8xf32>
    %719 = arith.mulf %718, %718 : vector<64x8xf32>
    %cst_273 = arith.constant dense<0.000000e+00> : vector<8xf32>
    %720 = vector.multi_reduction <add>, %719, %cst_273 [0] : vector<64x8xf32> to vector<8xf32>
    %721 = vector.shape_cast %720 : vector<8xf32> to vector<1x8xf32>
    %cst_274 = arith.constant dense<0.000000e+00> : vector<1xf32>
    %722 = vector.multi_reduction <add>, %721, %cst_274 [1] : vector<1x8xf32> to vector<1xf32>
    %723 = vector.shape_cast %722 : vector<1xf32> to vector<1x1xf32>
    %724 = arith.addf %716, %723 : vector<1x1xf32>
    %725 = vector.broadcast %675 : vector<1x1xf32> to vector<64x8xf32>
    %726 = arith.subf %571, %725 : vector<64x8xf32>
    %727 = arith.mulf %726, %726 : vector<64x8xf32>
    %cst_275 = arith.constant dense<0.000000e+00> : vector<8xf32>
    %728 = vector.multi_reduction <add>, %727, %cst_275 [0] : vector<64x8xf32> to vector<8xf32>
    %729 = vector.shape_cast %728 : vector<8xf32> to vector<1x8xf32>
    %cst_276 = arith.constant dense<0.000000e+00> : vector<1xf32>
    %730 = vector.multi_reduction <add>, %729, %cst_276 [1] : vector<1x8xf32> to vector<1xf32>
    %731 = vector.shape_cast %730 : vector<1xf32> to vector<1x1xf32>
    %732 = arith.addf %724, %731 : vector<1x1xf32>
    %733 = vector.broadcast %675 : vector<1x1xf32> to vector<64x8xf32>
    %734 = arith.subf %575, %733 : vector<64x8xf32>
    %735 = arith.mulf %734, %734 : vector<64x8xf32>
    %cst_277 = arith.constant dense<0.000000e+00> : vector<8xf32>
    %736 = vector.multi_reduction <add>, %735, %cst_277 [0] : vector<64x8xf32> to vector<8xf32>
    %737 = vector.shape_cast %736 : vector<8xf32> to vector<1x8xf32>
    %cst_278 = arith.constant dense<0.000000e+00> : vector<1xf32>
    %738 = vector.multi_reduction <add>, %737, %cst_278 [1] : vector<1x8xf32> to vector<1xf32>
    %739 = vector.shape_cast %738 : vector<1xf32> to vector<1x1xf32>
    %740 = arith.addf %732, %739 : vector<1x1xf32>
    %741 = vector.broadcast %675 : vector<1x1xf32> to vector<64x8xf32>
    %742 = arith.subf %602, %741 : vector<64x8xf32>
    %743 = arith.mulf %742, %742 : vector<64x8xf32>
    %cst_279 = arith.constant dense<0.000000e+00> : vector<8xf32>
    %744 = vector.multi_reduction <add>, %743, %cst_279 [0] : vector<64x8xf32> to vector<8xf32>
    %745 = vector.shape_cast %744 : vector<8xf32> to vector<1x8xf32>
    %cst_280 = arith.constant dense<0.000000e+00> : vector<1xf32>
    %746 = vector.multi_reduction <add>, %745, %cst_280 [1] : vector<1x8xf32> to vector<1xf32>
    %747 = vector.shape_cast %746 : vector<1xf32> to vector<1x1xf32>
    %748 = arith.addf %740, %747 : vector<1x1xf32>
    %749 = vector.broadcast %675 : vector<1x1xf32> to vector<64x8xf32>
    %750 = arith.subf %606, %749 : vector<64x8xf32>
    %751 = arith.mulf %750, %750 : vector<64x8xf32>
    %cst_281 = arith.constant dense<0.000000e+00> : vector<8xf32>
    %752 = vector.multi_reduction <add>, %751, %cst_281 [0] : vector<64x8xf32> to vector<8xf32>
    %753 = vector.shape_cast %752 : vector<8xf32> to vector<1x8xf32>
    %cst_282 = arith.constant dense<0.000000e+00> : vector<1xf32>
    %754 = vector.multi_reduction <add>, %753, %cst_282 [1] : vector<1x8xf32> to vector<1xf32>
    %755 = vector.shape_cast %754 : vector<1xf32> to vector<1x1xf32>
    %756 = arith.addf %748, %755 : vector<1x1xf32>
    %757 = vector.broadcast %675 : vector<1x1xf32> to vector<64x8xf32>
    %758 = arith.subf %610, %757 : vector<64x8xf32>
    %759 = arith.mulf %758, %758 : vector<64x8xf32>
    %cst_283 = arith.constant dense<0.000000e+00> : vector<8xf32>
    %760 = vector.multi_reduction <add>, %759, %cst_283 [0] : vector<64x8xf32> to vector<8xf32>
    %761 = vector.shape_cast %760 : vector<8xf32> to vector<1x8xf32>
    %cst_284 = arith.constant dense<0.000000e+00> : vector<1xf32>
    %762 = vector.multi_reduction <add>, %761, %cst_284 [1] : vector<1x8xf32> to vector<1xf32>
    %763 = vector.shape_cast %762 : vector<1xf32> to vector<1x1xf32>
    %764 = arith.addf %756, %763 : vector<1x1xf32>
    %765 = vector.broadcast %675 : vector<1x1xf32> to vector<64x8xf32>
    %766 = arith.subf %614, %765 : vector<64x8xf32>
    %767 = arith.mulf %766, %766 : vector<64x8xf32>
    %cst_285 = arith.constant dense<0.000000e+00> : vector<8xf32>
    %768 = vector.multi_reduction <add>, %767, %cst_285 [0] : vector<64x8xf32> to vector<8xf32>
    %769 = vector.shape_cast %768 : vector<8xf32> to vector<1x8xf32>
    %cst_286 = arith.constant dense<0.000000e+00> : vector<1xf32>
    %770 = vector.multi_reduction <add>, %769, %cst_286 [1] : vector<1x8xf32> to vector<1xf32>
    %771 = vector.shape_cast %770 : vector<1xf32> to vector<1x1xf32>
    %772 = arith.addf %764, %771 : vector<1x1xf32>
    %773 = vector.broadcast %675 : vector<1x1xf32> to vector<64x8xf32>
    %774 = arith.subf %641, %773 : vector<64x8xf32>
    %775 = arith.mulf %774, %774 : vector<64x8xf32>
    %cst_287 = arith.constant dense<0.000000e+00> : vector<8xf32>
    %776 = vector.multi_reduction <add>, %775, %cst_287 [0] : vector<64x8xf32> to vector<8xf32>
    %777 = vector.shape_cast %776 : vector<8xf32> to vector<1x8xf32>
    %cst_288 = arith.constant dense<0.000000e+00> : vector<1xf32>
    %778 = vector.multi_reduction <add>, %777, %cst_288 [1] : vector<1x8xf32> to vector<1xf32>
    %779 = vector.shape_cast %778 : vector<1xf32> to vector<1x1xf32>
    %780 = arith.addf %772, %779 : vector<1x1xf32>
    %781 = vector.broadcast %675 : vector<1x1xf32> to vector<64x8xf32>
    %782 = arith.subf %645, %781 : vector<64x8xf32>
    %783 = arith.mulf %782, %782 : vector<64x8xf32>
    %cst_289 = arith.constant dense<0.000000e+00> : vector<8xf32>
    %784 = vector.multi_reduction <add>, %783, %cst_289 [0] : vector<64x8xf32> to vector<8xf32>
    %785 = vector.shape_cast %784 : vector<8xf32> to vector<1x8xf32>
    %cst_290 = arith.constant dense<0.000000e+00> : vector<1xf32>
    %786 = vector.multi_reduction <add>, %785, %cst_290 [1] : vector<1x8xf32> to vector<1xf32>
    %787 = vector.shape_cast %786 : vector<1xf32> to vector<1x1xf32>
    %788 = arith.addf %780, %787 : vector<1x1xf32>
    %789 = vector.broadcast %675 : vector<1x1xf32> to vector<64x8xf32>
    %790 = arith.subf %649, %789 : vector<64x8xf32>
    %791 = arith.mulf %790, %790 : vector<64x8xf32>
    %cst_291 = arith.constant dense<0.000000e+00> : vector<8xf32>
    %792 = vector.multi_reduction <add>, %791, %cst_291 [0] : vector<64x8xf32> to vector<8xf32>
    %793 = vector.shape_cast %792 : vector<8xf32> to vector<1x8xf32>
    %cst_292 = arith.constant dense<0.000000e+00> : vector<1xf32>
    %794 = vector.multi_reduction <add>, %793, %cst_292 [1] : vector<1x8xf32> to vector<1xf32>
    %795 = vector.shape_cast %794 : vector<1xf32> to vector<1x1xf32>
    %796 = arith.addf %788, %795 : vector<1x1xf32>
    %797 = vector.broadcast %675 : vector<1x1xf32> to vector<64x8xf32>
    %798 = arith.subf %653, %797 : vector<64x8xf32>
    %799 = arith.mulf %798, %798 : vector<64x8xf32>
    %cst_293 = arith.constant dense<0.000000e+00> : vector<8xf32>
    %800 = vector.multi_reduction <add>, %799, %cst_293 [0] : vector<64x8xf32> to vector<8xf32>
    %801 = vector.shape_cast %800 : vector<8xf32> to vector<1x8xf32>
    %cst_294 = arith.constant dense<0.000000e+00> : vector<1xf32>
    %802 = vector.multi_reduction <add>, %801, %cst_294 [1] : vector<1x8xf32> to vector<1xf32>
    %803 = vector.shape_cast %802 : vector<1xf32> to vector<1x1xf32>
    %804 = arith.addf %796, %803 : vector<1x1xf32>
    %cst_295 = arith.constant 1.22070313E-4 : f32
    %805 = vector.broadcast %cst_295 : f32 to vector<1x1xf32>
    %806 = arith.mulf %804, %805 : vector<1x1xf32>
    %cst_296 = arith.constant 9.99999974E-6 : f32
    %807 = vector.broadcast %cst_296 : f32 to vector<1x1xf32>
    %808 = arith.addf %806, %807 : vector<1x1xf32>
    %809 = math.rsqrt %808 : vector<1x1xf32>
    %810 = vector.broadcast %809 : vector<1x1xf32> to vector<64x8xf32>
    %811 = arith.mulf %678, %810 : vector<64x8xf32>
    %812 = vector.broadcast %507 : vector<1x8xf32> to vector<64x8xf32>
    %813 = arith.mulf %811, %812 : vector<64x8xf32>
    %814 = vector.broadcast %508 : vector<1x8xf32> to vector<64x8xf32>
    %815 = arith.addf %813, %814 : vector<64x8xf32>
    %cst_297 = arith.constant 0.000000e+00 : f32
    %816 = vector.broadcast %cst_297 : f32 to vector<64x8xf32>
    %817 = arith.maximumf %815, %816 : vector<64x8xf32>
    %818 = vector.broadcast %809 : vector<1x1xf32> to vector<64x8xf32>
    %819 = arith.mulf %686, %818 : vector<64x8xf32>
    %820 = vector.broadcast %507 : vector<1x8xf32> to vector<64x8xf32>
    %821 = arith.mulf %819, %820 : vector<64x8xf32>
    %822 = vector.broadcast %508 : vector<1x8xf32> to vector<64x8xf32>
    %823 = arith.addf %821, %822 : vector<64x8xf32>
    %cst_298 = arith.constant 0.000000e+00 : f32
    %824 = vector.broadcast %cst_298 : f32 to vector<64x8xf32>
    %825 = arith.maximumf %823, %824 : vector<64x8xf32>
    %826 = vector.broadcast %809 : vector<1x1xf32> to vector<64x8xf32>
    %827 = arith.mulf %694, %826 : vector<64x8xf32>
    %828 = vector.broadcast %507 : vector<1x8xf32> to vector<64x8xf32>
    %829 = arith.mulf %827, %828 : vector<64x8xf32>
    %830 = vector.broadcast %508 : vector<1x8xf32> to vector<64x8xf32>
    %831 = arith.addf %829, %830 : vector<64x8xf32>
    %cst_299 = arith.constant 0.000000e+00 : f32
    %832 = vector.broadcast %cst_299 : f32 to vector<64x8xf32>
    %833 = arith.maximumf %831, %832 : vector<64x8xf32>
    %834 = vector.broadcast %809 : vector<1x1xf32> to vector<64x8xf32>
    %835 = arith.mulf %702, %834 : vector<64x8xf32>
    %836 = vector.broadcast %507 : vector<1x8xf32> to vector<64x8xf32>
    %837 = arith.mulf %835, %836 : vector<64x8xf32>
    %838 = vector.broadcast %508 : vector<1x8xf32> to vector<64x8xf32>
    %839 = arith.addf %837, %838 : vector<64x8xf32>
    %cst_300 = arith.constant 0.000000e+00 : f32
    %840 = vector.broadcast %cst_300 : f32 to vector<64x8xf32>
    %841 = arith.maximumf %839, %840 : vector<64x8xf32>
    %842 = vector.broadcast %809 : vector<1x1xf32> to vector<64x8xf32>
    %843 = arith.mulf %710, %842 : vector<64x8xf32>
    %844 = vector.broadcast %507 : vector<1x8xf32> to vector<64x8xf32>
    %845 = arith.mulf %843, %844 : vector<64x8xf32>
    %846 = vector.broadcast %508 : vector<1x8xf32> to vector<64x8xf32>
    %847 = arith.addf %845, %846 : vector<64x8xf32>
    %cst_301 = arith.constant 0.000000e+00 : f32
    %848 = vector.broadcast %cst_301 : f32 to vector<64x8xf32>
    %849 = arith.maximumf %847, %848 : vector<64x8xf32>
    %850 = vector.broadcast %809 : vector<1x1xf32> to vector<64x8xf32>
    %851 = arith.mulf %718, %850 : vector<64x8xf32>
    %852 = vector.broadcast %507 : vector<1x8xf32> to vector<64x8xf32>
    %853 = arith.mulf %851, %852 : vector<64x8xf32>
    %854 = vector.broadcast %508 : vector<1x8xf32> to vector<64x8xf32>
    %855 = arith.addf %853, %854 : vector<64x8xf32>
    %cst_302 = arith.constant 0.000000e+00 : f32
    %856 = vector.broadcast %cst_302 : f32 to vector<64x8xf32>
    %857 = arith.maximumf %855, %856 : vector<64x8xf32>
    %858 = vector.broadcast %809 : vector<1x1xf32> to vector<64x8xf32>
    %859 = arith.mulf %726, %858 : vector<64x8xf32>
    %860 = vector.broadcast %507 : vector<1x8xf32> to vector<64x8xf32>
    %861 = arith.mulf %859, %860 : vector<64x8xf32>
    %862 = vector.broadcast %508 : vector<1x8xf32> to vector<64x8xf32>
    %863 = arith.addf %861, %862 : vector<64x8xf32>
    %cst_303 = arith.constant 0.000000e+00 : f32
    %864 = vector.broadcast %cst_303 : f32 to vector<64x8xf32>
    %865 = arith.maximumf %863, %864 : vector<64x8xf32>
    %866 = vector.broadcast %809 : vector<1x1xf32> to vector<64x8xf32>
    %867 = arith.mulf %734, %866 : vector<64x8xf32>
    %868 = vector.broadcast %507 : vector<1x8xf32> to vector<64x8xf32>
    %869 = arith.mulf %867, %868 : vector<64x8xf32>
    %870 = vector.broadcast %508 : vector<1x8xf32> to vector<64x8xf32>
    %871 = arith.addf %869, %870 : vector<64x8xf32>
    %cst_304 = arith.constant 0.000000e+00 : f32
    %872 = vector.broadcast %cst_304 : f32 to vector<64x8xf32>
    %873 = arith.maximumf %871, %872 : vector<64x8xf32>
    %874 = vector.broadcast %809 : vector<1x1xf32> to vector<64x8xf32>
    %875 = arith.mulf %742, %874 : vector<64x8xf32>
    %876 = vector.broadcast %507 : vector<1x8xf32> to vector<64x8xf32>
    %877 = arith.mulf %875, %876 : vector<64x8xf32>
    %878 = vector.broadcast %508 : vector<1x8xf32> to vector<64x8xf32>
    %879 = arith.addf %877, %878 : vector<64x8xf32>
    %cst_305 = arith.constant 0.000000e+00 : f32
    %880 = vector.broadcast %cst_305 : f32 to vector<64x8xf32>
    %881 = arith.maximumf %879, %880 : vector<64x8xf32>
    %882 = vector.broadcast %809 : vector<1x1xf32> to vector<64x8xf32>
    %883 = arith.mulf %750, %882 : vector<64x8xf32>
    %884 = vector.broadcast %507 : vector<1x8xf32> to vector<64x8xf32>
    %885 = arith.mulf %883, %884 : vector<64x8xf32>
    %886 = vector.broadcast %508 : vector<1x8xf32> to vector<64x8xf32>
    %887 = arith.addf %885, %886 : vector<64x8xf32>
    %cst_306 = arith.constant 0.000000e+00 : f32
    %888 = vector.broadcast %cst_306 : f32 to vector<64x8xf32>
    %889 = arith.maximumf %887, %888 : vector<64x8xf32>
    %890 = vector.broadcast %809 : vector<1x1xf32> to vector<64x8xf32>
    %891 = arith.mulf %758, %890 : vector<64x8xf32>
    %892 = vector.broadcast %507 : vector<1x8xf32> to vector<64x8xf32>
    %893 = arith.mulf %891, %892 : vector<64x8xf32>
    %894 = vector.broadcast %508 : vector<1x8xf32> to vector<64x8xf32>
    %895 = arith.addf %893, %894 : vector<64x8xf32>
    %cst_307 = arith.constant 0.000000e+00 : f32
    %896 = vector.broadcast %cst_307 : f32 to vector<64x8xf32>
    %897 = arith.maximumf %895, %896 : vector<64x8xf32>
    %898 = vector.broadcast %809 : vector<1x1xf32> to vector<64x8xf32>
    %899 = arith.mulf %766, %898 : vector<64x8xf32>
    %900 = vector.broadcast %507 : vector<1x8xf32> to vector<64x8xf32>
    %901 = arith.mulf %899, %900 : vector<64x8xf32>
    %902 = vector.broadcast %508 : vector<1x8xf32> to vector<64x8xf32>
    %903 = arith.addf %901, %902 : vector<64x8xf32>
    %cst_308 = arith.constant 0.000000e+00 : f32
    %904 = vector.broadcast %cst_308 : f32 to vector<64x8xf32>
    %905 = arith.maximumf %903, %904 : vector<64x8xf32>
    %906 = vector.broadcast %809 : vector<1x1xf32> to vector<64x8xf32>
    %907 = arith.mulf %774, %906 : vector<64x8xf32>
    %908 = vector.broadcast %507 : vector<1x8xf32> to vector<64x8xf32>
    %909 = arith.mulf %907, %908 : vector<64x8xf32>
    %910 = vector.broadcast %508 : vector<1x8xf32> to vector<64x8xf32>
    %911 = arith.addf %909, %910 : vector<64x8xf32>
    %cst_309 = arith.constant 0.000000e+00 : f32
    %912 = vector.broadcast %cst_309 : f32 to vector<64x8xf32>
    %913 = arith.maximumf %911, %912 : vector<64x8xf32>
    %914 = vector.broadcast %809 : vector<1x1xf32> to vector<64x8xf32>
    %915 = arith.mulf %782, %914 : vector<64x8xf32>
    %916 = vector.broadcast %507 : vector<1x8xf32> to vector<64x8xf32>
    %917 = arith.mulf %915, %916 : vector<64x8xf32>
    %918 = vector.broadcast %508 : vector<1x8xf32> to vector<64x8xf32>
    %919 = arith.addf %917, %918 : vector<64x8xf32>
    %cst_310 = arith.constant 0.000000e+00 : f32
    %920 = vector.broadcast %cst_310 : f32 to vector<64x8xf32>
    %921 = arith.maximumf %919, %920 : vector<64x8xf32>
    %922 = vector.broadcast %809 : vector<1x1xf32> to vector<64x8xf32>
    %923 = arith.mulf %790, %922 : vector<64x8xf32>
    %924 = vector.broadcast %507 : vector<1x8xf32> to vector<64x8xf32>
    %925 = arith.mulf %923, %924 : vector<64x8xf32>
    %926 = vector.broadcast %508 : vector<1x8xf32> to vector<64x8xf32>
    %927 = arith.addf %925, %926 : vector<64x8xf32>
    %cst_311 = arith.constant 0.000000e+00 : f32
    %928 = vector.broadcast %cst_311 : f32 to vector<64x8xf32>
    %929 = arith.maximumf %927, %928 : vector<64x8xf32>
    %930 = vector.broadcast %809 : vector<1x1xf32> to vector<64x8xf32>
    %931 = arith.mulf %798, %930 : vector<64x8xf32>
    %932 = vector.broadcast %507 : vector<1x8xf32> to vector<64x8xf32>
    %933 = arith.mulf %931, %932 : vector<64x8xf32>
    %934 = vector.broadcast %508 : vector<1x8xf32> to vector<64x8xf32>
    %935 = arith.addf %933, %934 : vector<64x8xf32>
    %cst_312 = arith.constant 0.000000e+00 : f32
    %936 = vector.broadcast %cst_312 : f32 to vector<64x8xf32>
    %937 = arith.maximumf %935, %936 : vector<64x8xf32>
    %938 = arith.truncf %817 : vector<64x8xf32> to vector<64x8xbf16>
    %939 = arith.truncf %825 : vector<64x8xf32> to vector<64x8xbf16>
    %940 = arith.truncf %849 : vector<64x8xf32> to vector<64x8xbf16>
    %941 = arith.truncf %857 : vector<64x8xf32> to vector<64x8xbf16>
    %942 = arith.truncf %833 : vector<64x8xf32> to vector<64x8xbf16>
    %943 = arith.truncf %841 : vector<64x8xf32> to vector<64x8xbf16>
    %944 = arith.truncf %865 : vector<64x8xf32> to vector<64x8xbf16>
    %945 = arith.truncf %873 : vector<64x8xf32> to vector<64x8xbf16>
    %946 = arith.truncf %881 : vector<64x8xf32> to vector<64x8xbf16>
    %947 = arith.truncf %889 : vector<64x8xf32> to vector<64x8xbf16>
    %948 = arith.truncf %913 : vector<64x8xf32> to vector<64x8xbf16>
    %949 = arith.truncf %921 : vector<64x8xf32> to vector<64x8xbf16>
    %950 = arith.truncf %897 : vector<64x8xf32> to vector<64x8xbf16>
    %951 = arith.truncf %905 : vector<64x8xf32> to vector<64x8xbf16>
    %952 = arith.truncf %929 : vector<64x8xf32> to vector<64x8xbf16>
    %953 = arith.truncf %937 : vector<64x8xf32> to vector<64x8xbf16>
    %954 = tpu.concatenate %938, %939, %940, %941, %942, %943, %944, %945, %946, %947, %948, %949, %950, %951, %952, %953 in 1 : vector<64x8xbf16>, vector<64x8xbf16>, vector<64x8xbf16>, vector<64x8xbf16>, vector<64x8xbf16>, vector<64x8xbf16>, vector<64x8xbf16>, vector<64x8xbf16>, vector<64x8xbf16>, vector<64x8xbf16>, vector<64x8xbf16>, vector<64x8xbf16>, vector<64x8xbf16>, vector<64x8xbf16>, vector<64x8xbf16>, vector<64x8xbf16> -> vector<64x128xbf16>
    %c0_313 = arith.constant 0 : index
    %c0_314 = arith.constant 0 : index
    %955 = vector.load %arg19[%c0_313, %c0_314] : memref<128x48xbf16, #tpu.memory_space<vmem>>, vector<128x48xbf16>
    %cst_315 = arith.constant dense<0.000000e+00> : vector<64x48xf32>
    %956 = tpu.matmul %954, %955, %cst_315 {dimension_numbers = #tpu.dot_dimension_numbers<[1], [0], [0], [1], [0, 0, 1, 1], [], []>} : vector<64x128xbf16>, vector<128x48xbf16>, vector<64x48xf32> -> vector<64x48xf32>
    %c0_316 = arith.constant 0 : index
    %c0_317 = arith.constant 0 : index
    %957 = vector.load %arg20[%c0_316, %c0_317] : memref<1x48xf32, #tpu.memory_space<vmem>>, vector<1x48xf32>
    %958 = vector.broadcast %957 : vector<1x48xf32> to vector<64x48xf32>
    %959 = arith.addf %956, %958 : vector<64x48xf32>
    %960 = math.tanh %959 : vector<64x48xf32>
    %c0_318 = arith.constant 0 : index
    %c0_319 = arith.constant 0 : index
    %c0_320 = arith.constant 0 : index
    %961 = vector.load %arg21[%c0_318, %c0_319, %c0_320] : memref<1x64x48xf32, #tpu.memory_space<vmem>>, vector<1x64x48xf32>
    %962 = vector.shape_cast %961 : vector<1x64x48xf32> to vector<64x48xf32>
    %963 = vector.shape_cast %960 : vector<64x48xf32> to vector<1x64x48xf32>
    tpu.vector_store %arg21[%c0_318, %c0_319, %c0_320], %963 {strides = array<i32>} : memref<1x64x48xf32, #tpu.memory_space<vmem>>, vector<1x64x48xf32>,
    return
  }
  func.func @transform_0(%arg0: i32) -> (i32, i32, i32) {
    %c0_i32 = arith.constant 0 : i32
    %c0_i32_0 = arith.constant 0 : i32
    %c0_i32_1 = arith.constant 0 : i32
    return %arg0, %c0_i32, %c0_i32_0 : i32, i32, i32
  }
  func.func @transform_1(%arg0: i32) -> (i32, i32) {
    %c0_i32 = arith.constant 0 : i32
    %c0_i32_0 = arith.constant 0 : i32
    %c0_i32_1 = arith.constant 0 : i32
    return %c0_i32, %c0_i32_0 : i32, i32
  }
  func.func @transform_2(%arg0: i32) -> (i32, i32) {
    %c0_i32 = arith.constant 0 : i32
    %c0_i32_0 = arith.constant 0 : i32
    %c0_i32_1 = arith.constant 0 : i32
    return %c0_i32, %c0_i32_0 : i32, i32
  }
  func.func @transform_3(%arg0: i32) -> (i32, i32) {
    %c0_i32 = arith.constant 0 : i32
    %c0_i32_0 = arith.constant 0 : i32
    %c0_i32_1 = arith.constant 0 : i32
    return %c0_i32, %c0_i32_0 : i32, i32
  }
  func.func @transform_4(%arg0: i32) -> (i32, i32) {
    %c0_i32 = arith.constant 0 : i32
    %c0_i32_0 = arith.constant 0 : i32
    %c0_i32_1 = arith.constant 0 : i32
    return %c0_i32, %c0_i32_0 : i32, i32
  }
  func.func @transform_5(%arg0: i32) -> (i32, i32) {
    %c0_i32 = arith.constant 0 : i32
    %c0_i32_0 = arith.constant 0 : i32
    %c0_i32_1 = arith.constant 0 : i32
    return %c0_i32, %c0_i32_0 : i32, i32
  }
  func.func @transform_6(%arg0: i32) -> (i32, i32) {
    %c0_i32 = arith.constant 0 : i32
    %c0_i32_0 = arith.constant 0 : i32
    %c0_i32_1 = arith.constant 0 : i32
    return %c0_i32, %c0_i32_0 : i32, i32
  }
  func.func @transform_7(%arg0: i32) -> (i32, i32) {
    %c0_i32 = arith.constant 0 : i32
    %c0_i32_0 = arith.constant 0 : i32
    %c0_i32_1 = arith.constant 0 : i32
    return %c0_i32, %c0_i32_0 : i32, i32
  }
  func.func @transform_8(%arg0: i32) -> (i32, i32) {
    %c0_i32 = arith.constant 0 : i32
    %c0_i32_0 = arith.constant 0 : i32
    %c0_i32_1 = arith.constant 0 : i32
    return %c0_i32, %c0_i32_0 : i32, i32
  }
  func.func @transform_9(%arg0: i32) -> (i32, i32) {
    %c0_i32 = arith.constant 0 : i32
    %c0_i32_0 = arith.constant 0 : i32
    %c0_i32_1 = arith.constant 0 : i32
    return %c0_i32, %c0_i32_0 : i32, i32
  }
  func.func @transform_10(%arg0: i32) -> (i32, i32) {
    %c0_i32 = arith.constant 0 : i32
    %c0_i32_0 = arith.constant 0 : i32
    %c0_i32_1 = arith.constant 0 : i32
    return %c0_i32, %c0_i32_0 : i32, i32
  }
  func.func @transform_11(%arg0: i32) -> (i32, i32, i32, i32) {
    %c0_i32 = arith.constant 0 : i32
    %c0_i32_0 = arith.constant 0 : i32
    %c0_i32_1 = arith.constant 0 : i32
    %c0_i32_2 = arith.constant 0 : i32
    %c0_i32_3 = arith.constant 0 : i32
    return %c0_i32, %c0_i32_0, %c0_i32_1, %c0_i32_2 : i32, i32, i32, i32
  }
  func.func @transform_12(%arg0: i32) -> (i32, i32, i32) {
    %c0_i32 = arith.constant 0 : i32
    %c0_i32_0 = arith.constant 0 : i32
    %c0_i32_1 = arith.constant 0 : i32
    %c0_i32_2 = arith.constant 0 : i32
    return %c0_i32, %c0_i32_0, %c0_i32_1 : i32, i32, i32
  }
  func.func @transform_13(%arg0: i32) -> (i32, i32, i32) {
    %c0_i32 = arith.constant 0 : i32
    %c0_i32_0 = arith.constant 0 : i32
    %c0_i32_1 = arith.constant 0 : i32
    %c0_i32_2 = arith.constant 0 : i32
    return %c0_i32, %c0_i32_0, %c0_i32_1 : i32, i32, i32
  }
  func.func @transform_14(%arg0: i32) -> (i32, i32) {
    %c0_i32 = arith.constant 0 : i32
    %c0_i32_0 = arith.constant 0 : i32
    %c0_i32_1 = arith.constant 0 : i32
    return %c0_i32, %c0_i32_0 : i32, i32
  }
  func.func @transform_15(%arg0: i32) -> (i32, i32) {
    %c0_i32 = arith.constant 0 : i32
    %c0_i32_0 = arith.constant 0 : i32
    %c0_i32_1 = arith.constant 0 : i32
    return %c0_i32, %c0_i32_0 : i32, i32
  }
  func.func @transform_16(%arg0: i32) -> (i32, i32) {
    %c0_i32 = arith.constant 0 : i32
    %c0_i32_0 = arith.constant 0 : i32
    %c0_i32_1 = arith.constant 0 : i32
    return %c0_i32, %c0_i32_0 : i32, i32
  }
  func.func @transform_17(%arg0: i32) -> (i32, i32) {
    %c0_i32 = arith.constant 0 : i32
    %c0_i32_0 = arith.constant 0 : i32
    %c0_i32_1 = arith.constant 0 : i32
    return %c0_i32, %c0_i32_0 : i32, i32
  }
  func.func @transform_18(%arg0: i32) -> (i32, i32) {
    %c0_i32 = arith.constant 0 : i32
    %c0_i32_0 = arith.constant 0 : i32
    %c0_i32_1 = arith.constant 0 : i32
    return %c0_i32, %c0_i32_0 : i32, i32
  }
  func.func @transform_19(%arg0: i32) -> (i32, i32) {
    %c0_i32 = arith.constant 0 : i32
    %c0_i32_0 = arith.constant 0 : i32
    %c0_i32_1 = arith.constant 0 : i32
    return %c0_i32, %c0_i32_0 : i32, i32
  }
  func.func @transform_20(%arg0: i32) -> (i32, i32, i32) {
    %c0_i32 = arith.constant 0 : i32
    %c0_i32_0 = arith.constant 0 : i32
    %c0_i32_1 = arith.constant 0 : i32
    return %arg0, %c0_i32, %c0_i32_0 : i32, i32, i32
  }
}

</mosaic_0001>

<llo_original>
// kernel: decoder_forward.1
$region0: #{decoder_forward.1}
  #allocation0 [shape = 'u32[]', space=smem, size = 0x4, offset = 0x4, fixed_abs, tag = 'smem constant byte address 0x4 - core index']
  #allocation1 [shape = 'u32[72,128]{1,0:T(1,128)}', space=vmem, size = 0x9000, scoped, tag = 'internal scratch']
  #allocation2 [shape = 'bf16[96,96]{1,0:T(8,128)(2,1)}', space=vmem, size = 0x6000, scoped, tag = 'scratch operand']
  #allocation3 [shape = 'bf16[80,64]{1,0:T(8,128)(2,1)}', space=vmem, size = 0x5000, scoped, tag = 'scratch operand']
  #allocation4 [shape = 'bf16[80,128]{1,0:T(8,128)(2,1)}', space=vmem, size = 0x5000, scoped, tag = 'scratch operand']
  %s0 = inlined_call_operand.vmem [shape: f32[2,64,32], index: 0, kind: input, shape index: {}]
  %s1 = inlined_call_operand.vmem [shape: f32[2,10], index: 1, kind: input, shape index: {}]
  %s2 = inlined_call_operand.vmem [shape: f32[64,9], index: 2, kind: input, shape index: {}]
  %s3 = inlined_call_operand.vmem [shape: f32[64,1], index: 3, kind: input, shape index: {}]
  %s4 = inlined_call_operand.vmem [shape: f32[64,1], index: 4, kind: input, shape index: {}]
  %s5 = inlined_call_operand.vmem [shape: bf16[10,256], index: 5, kind: input, shape index: {}]
  %s6 = inlined_call_operand.vmem [shape: f32[1,256], index: 6, kind: input, shape index: {}]
  %s7 = inlined_call_operand.vmem [shape: bf16[256,256], index: 7, kind: input, shape index: {}]
  %s8 = inlined_call_operand.vmem [shape: f32[1,256], index: 8, kind: input, shape index: {}]
  %s9 = inlined_call_operand.vmem [shape: bf16[256,64], index: 9, kind: input, shape index: {}]
  %s10 = inlined_call_operand.vmem [shape: f32[1,64], index: 10, kind: input, shape index: {}]
  %s11 = inlined_call_operand.vmem [shape: bf16[4,3,96,32], index: 11, kind: input, shape index: {}]
  %s12 = inlined_call_operand.vmem [shape: bf16[4,32,288], index: 12, kind: input, shape index: {}]
  %s13 = inlined_call_operand.vmem [shape: f32[4,1,32], index: 13, kind: input, shape index: {}]
  %s14 = inlined_call_operand.vmem [shape: bf16[288,16], index: 14, kind: input, shape index: {}]
  %s15 = inlined_call_operand.vmem [shape: f32[3,16], index: 15, kind: input, shape index: {}]
  %s16 = inlined_call_operand.vmem [shape: bf16[144,8], index: 16, kind: input, shape index: {}]
  %s17 = inlined_call_operand.vmem [shape: f32[3,8], index: 17, kind: input, shape index: {}]
  %s18 = inlined_call_operand.vmem [shape: bf16[128,48], index: 18, kind: input, shape index: {}]
  %s19 = inlined_call_operand.vmem [shape: f32[1,48], index: 19, kind: input, shape index: {}]
  %s20 = inlined_call_operand.vmem [shape: f32[2,64,48], index: 20, kind: output, shape index: {}]
  %s21 = sld [smem:[#allocation0]]
  $region113: #{decoder_forward.1} parent=0
    _
  %s23 = ssub.s32 1, %s21
  %s24 = scalar_select 0, %s23, %s21
  loop: start=0, step=1, limit=4
  $region2: #{decoder_forward.1} parent=0 // loop_pre_header
    _
  $region3: #{decoder_forward.1} parent=0 // loop_header
    %s26 = sphi 0, %s30
    %p27 = scmp.ge.s32.totalorder %s26, 4
    %s36 = sphi 0, %s38
    %s39 = sphi 0, %s36
    %s40 = sphi 0, %s39
    %s56 = sphi 0, %s40
    %s60 = sphi 0, %s60
    %s62 = sphi 0, %s60
    %s63 = sphi 0, %s62
    %s77 = sphi 0, %s63
    %s81 = sphi 0, %s81
    %s83 = sphi 0, %s81
    %s84 = sphi 0, %s83
    %s98 = sphi 0, %s84
    %s102 = sphi 0, %s102
    %s104 = sphi 0, %s102
    %s105 = sphi 0, %s104
    %s119 = sphi 0, %s105
    %s123 = sphi 0, %s123
    %s125 = sphi 0, %s123
    %s126 = sphi 0, %s125
    %s140 = sphi 0, %s126
    %s144 = sphi 0, %s144
    %s146 = sphi 0, %s144
    %s147 = sphi 0, %s146
    %s161 = sphi 0, %s147
    %s165 = sphi 0, %s165
    %s167 = sphi 0, %s165
    %s168 = sphi 0, %s167
    %s182 = sphi 0, %s168
    %s186 = sphi 0, %s186
    %s188 = sphi 0, %s186
    %s189 = sphi 0, %s188
    %s203 = sphi 0, %s189
    %s207 = sphi 0, %s207
    %s209 = sphi 0, %s207
    %s210 = sphi 0, %s209
    %s224 = sphi 0, %s210
    %s228 = sphi 0, %s228
    %s230 = sphi 0, %s228
    %s231 = sphi 0, %s230
    %s245 = sphi 0, %s231
    %s249 = sphi 0, %s249
    %s251 = sphi 0, %s249
    %s252 = sphi 0, %s251
    %s266 = sphi 0, %s252
    %s270 = sphi 0, %s270
    %s272 = sphi 0, %s270
    %s273 = sphi 0, %s272
    %s287 = sphi 0, %s273
    %s291 = sphi 0, %s291
    %s293 = sphi 0, %s291
    %s294 = sphi 0, %s293
    %s308 = sphi 0, %s294
    %s312 = sphi 0, %s312
    %s314 = sphi 0, %s312
    %s315 = sphi 0, %s314
    %s329 = sphi 0, %s315
    %s333 = sphi 0, %s333
    %s335 = sphi 0, %s333
    %s336 = sphi 0, %s335
    %s350 = sphi 0, %s336
    %s354 = sphi 0, %s354
    %s356 = sphi 0, %s354
    %s357 = sphi 0, %s356
    %s371 = sphi 0, %s357
    %s375 = sphi 0, %s375
    %s377 = sphi 0, %s375
    %s378 = sphi 0, %s377
    %s392 = sphi 0, %s378
    %s396 = sphi 0, %s396
    %s398 = sphi 0, %s396
    %s399 = sphi 0, %s398
    %s413 = sphi 0, %s399
    %s417 = sphi 0, %s417
    %s419 = sphi 0, %s417
    %s420 = sphi 0, %s419
    %s434 = sphi 0, %s420
    %s438 = sphi 0, %s438
    %s440 = sphi 0, %s438
    %s441 = sphi 0, %s440
    %s455 = sphi 0, %s441
    %s461 = sphi 0, %s463
    %s464 = sphi 0, %s461
    %s465 = sphi 0, %s464
    %s481 = sphi 0, %s465
  $region4: #{decoder_forward.1} parent=0 // loop_header_branch
    %29 = sbr.rel (%p27) target = $region8
  $region5: #{decoder_forward.1} parent=0 // loop_body
    %s31 = ssub.s32 %s26, 1
    %s32 = ssub.s32 %s26, 2
    %s33 = sadd.s32 %s26, 1
    %s34 = ssub.s32 %s26, %s33
    %p35 = scmp.eq.s32.totalorder %s34, 0
    %s37 = sadd.s32 %s36, 1
    %s38 = scalar_select %p35, %s36, %s37
    %p41 = pneg %p35
    %p42 = scmp.eq.s32.totalorder %s26, 1
    %p43 = por %p41, %p42
    %p44 = scmp.ne.s32.totalorder %s36, %s39
    %p45 = scmp.eq.s32.totalorder %s26, 0
    %p46 = por %p44, %p45
    %p47 = scmp.ne.s32.totalorder %s36, %s39
    %p48 = scmp.eq.s32.totalorder %s31, 1
    %p49 = por %p47, %p48
    %p50 = scmp.ne.s32.totalorder %s39, %s40
    %p51 = scmp.eq.s32.totalorder %s31, 0
    %p52 = por %p50, %p51
    %p53 = scmp.ne.s32.totalorder %s39, %s40
    %p54 = scmp.eq.s32.totalorder %s32, 1
    %p55 = por %p53, %p54
    %p57 = scmp.ne.s32.totalorder %s40, %s56
    %p58 = scmp.eq.s32.totalorder %s32, 0
    %p59 = por %p57, %p58
    %s61 = sadd.s32 %s60, 1
    %p64 = scmp.eq.s32.totalorder %s26, 1
    %p65 = scmp.ne.s32.totalorder %s60, %s62
    %p66 = scmp.eq.s32.totalorder %s26, 0
    %p67 = por %p65, %p66
    %p68 = scmp.ne.s32.totalorder %s60, %s62
    %p69 = scmp.eq.s32.totalorder %s31, 1
    %p70 = por %p68, %p69
    %p71 = scmp.ne.s32.totalorder %s62, %s63
    %p72 = scmp.eq.s32.totalorder %s31, 0
    %p73 = por %p71, %p72
    %p74 = scmp.ne.s32.totalorder %s62, %s63
    %p75 = scmp.eq.s32.totalorder %s32, 1
    %p76 = por %p74, %p75
    %p78 = scmp.ne.s32.totalorder %s63, %s77
    %p79 = scmp.eq.s32.totalorder %s32, 0
    %p80 = por %p78, %p79
    %s82 = sadd.s32 %s81, 1
    %p85 = scmp.eq.s32.totalorder %s26, 1
    %p86 = scmp.ne.s32.totalorder %s81, %s83
    %p87 = scmp.eq.s32.totalorder %s26, 0
    %p88 = por %p86, %p87
    %p89 = scmp.ne.s32.totalorder %s81, %s83
    %p90 = scmp.eq.s32.totalorder %s31, 1
    %p91 = por %p89, %p90
    %p92 = scmp.ne.s32.totalorder %s83, %s84
    %p93 = scmp.eq.s32.totalorder %s31, 0
    %p94 = por %p92, %p93
    %p95 = scmp.ne.s32.totalorder %s83, %s84
    %p96 = scmp.eq.s32.totalorder %s32, 1
    %p97 = por %p95, %p96
    %p99 = scmp.ne.s32.totalorder %s84, %s98
    %p100 = scmp.eq.s32.totalorder %s32, 0
    %p101 = por %p99, %p100
    %s103 = sadd.s32 %s102, 1
    %p106 = scmp.eq.s32.totalorder %s26, 1
    %p107 = scmp.ne.s32.totalorder %s102, %s104
    %p108 = scmp.eq.s32.totalorder %s26, 0
    %p109 = por %p107, %p108
    %p110 = scmp.ne.s32.totalorder %s102, %s104
    %p111 = scmp.eq.s32.totalorder %s31, 1
    %p112 = por %p110, %p111
    %p113 = scmp.ne.s32.totalorder %s104, %s105
    %p114 = scmp.eq.s32.totalorder %s31, 0
    %p115 = por %p113, %p114
    %p116 = scmp.ne.s32.totalorder %s104, %s105
    %p117 = scmp.eq.s32.totalorder %s32, 1
    %p118 = por %p116, %p117
    %p120 = scmp.ne.s32.totalorder %s105, %s119
    %p121 = scmp.eq.s32.totalorder %s32, 0
    %p122 = por %p120, %p121
    %s124 = sadd.s32 %s123, 1
    %p127 = scmp.eq.s32.totalorder %s26, 1
    %p128 = scmp.ne.s32.totalorder %s123, %s125
    %p129 = scmp.eq.s32.totalorder %s26, 0
    %p130 = por %p128, %p129
    %p131 = scmp.ne.s32.totalorder %s123, %s125
    %p132 = scmp.eq.s32.totalorder %s31, 1
    %p133 = por %p131, %p132
    %p134 = scmp.ne.s32.totalorder %s125, %s126
    %p135 = scmp.eq.s32.totalorder %s31, 0
    %p136 = por %p134, %p135
    %p137 = scmp.ne.s32.totalorder %s125, %s126
    %p138 = scmp.eq.s32.totalorder %s32, 1
    %p139 = por %p137, %p138
    %p141 = scmp.ne.s32.totalorder %s126, %s140
    %p142 = scmp.eq.s32.totalorder %s32, 0
    %p143 = por %p141, %p142
    %s145 = sadd.s32 %s144, 1
    %p148 = scmp.eq.s32.totalorder %s26, 1
    %p149 = scmp.ne.s32.totalorder %s144, %s146
    %p150 = scmp.eq.s32.totalorder %s26, 0
    %p151 = por %p149, %p150
    %p152 = scmp.ne.s32.totalorder %s144, %s146
    %p153 = scmp.eq.s32.totalorder %s31, 1
    %p154 = por %p152, %p153
    %p155 = scmp.ne.s32.totalorder %s146, %s147
    %p156 = scmp.eq.s32.totalorder %s31, 0
    %p157 = por %p155, %p156
    %p158 = scmp.ne.s32.totalorder %s146, %s147
    %p159 = scmp.eq.s32.totalorder %s32, 1
    %p160 = por %p158, %p159
    %p162 = scmp.ne.s32.totalorder %s147, %s161
    %p163 = scmp.eq.s32.totalorder %s32, 0
    %p164 = por %p162, %p163
    %s166 = sadd.s32 %s165, 1
    %p169 = scmp.eq.s32.totalorder %s26, 1
    %p170 = scmp.ne.s32.totalorder %s165, %s167
    %p171 = scmp.eq.s32.totalorder %s26, 0
    %p172 = por %p170, %p171
    %p173 = scmp.ne.s32.totalorder %s165, %s167
    %p174 = scmp.eq.s32.totalorder %s31, 1
    %p175 = por %p173, %p174
    %p176 = scmp.ne.s32.totalorder %s167, %s168
    %p177 = scmp.eq.s32.totalorder %s31, 0
    %p178 = por %p176, %p177
    %p179 = scmp.ne.s32.totalorder %s167, %s168
    %p180 = scmp.eq.s32.totalorder %s32, 1
    %p181 = por %p179, %p180
    %p183 = scmp.ne.s32.totalorder %s168, %s182
    %p184 = scmp.eq.s32.totalorder %s32, 0
    %p185 = por %p183, %p184
    %s187 = sadd.s32 %s186, 1
    %p190 = scmp.eq.s32.totalorder %s26, 1
    %p191 = scmp.ne.s32.totalorder %s186, %s188
    %p192 = scmp.eq.s32.totalorder %s26, 0
    %p193 = por %p191, %p192
    %p194 = scmp.ne.s32.totalorder %s186, %s188
    %p195 = scmp.eq.s32.totalorder %s31, 1
    %p196 = por %p194, %p195
    %p197 = scmp.ne.s32.totalorder %s188, %s189
    %p198 = scmp.eq.s32.totalorder %s31, 0
    %p199 = por %p197, %p198
    %p200 = scmp.ne.s32.totalorder %s188, %s189
    %p201 = scmp.eq.s32.totalorder %s32, 1
    %p202 = por %p200, %p201
    %p204 = scmp.ne.s32.totalorder %s189, %s203
    %p205 = scmp.eq.s32.totalorder %s32, 0
    %p206 = por %p204, %p205
    %s208 = sadd.s32 %s207, 1
    %p211 = scmp.eq.s32.totalorder %s26, 1
    %p212 = scmp.ne.s32.totalorder %s207, %s209
    %p213 = scmp.eq.s32.totalorder %s26, 0
    %p214 = por %p212, %p213
    %p215 = scmp.ne.s32.totalorder %s207, %s209
    %p216 = scmp.eq.s32.totalorder %s31, 1
    %p217 = por %p215, %p216
    %p218 = scmp.ne.s32.totalorder %s209, %s210
    %p219 = scmp.eq.s32.totalorder %s31, 0
    %p220 = por %p218, %p219
    %p221 = scmp.ne.s32.totalorder %s209, %s210
    %p222 = scmp.eq.s32.totalorder %s32, 1
    %p223 = por %p221, %p222
    %p225 = scmp.ne.s32.totalorder %s210, %s224
    %p226 = scmp.eq.s32.totalorder %s32, 0
    %p227 = por %p225, %p226
    %s229 = sadd.s32 %s228, 1
    %p232 = scmp.eq.s32.totalorder %s26, 1
    %p233 = scmp.ne.s32.totalorder %s228, %s230
    %p234 = scmp.eq.s32.totalorder %s26, 0
    %p235 = por %p233, %p234
    %p236 = scmp.ne.s32.totalorder %s228, %s230
    %p237 = scmp.eq.s32.totalorder %s31, 1
    %p238 = por %p236, %p237
    %p239 = scmp.ne.s32.totalorder %s230, %s231
    %p240 = scmp.eq.s32.totalorder %s31, 0
    %p241 = por %p239, %p240
    %p242 = scmp.ne.s32.totalorder %s230, %s231
    %p243 = scmp.eq.s32.totalorder %s32, 1
    %p244 = por %p242, %p243
    %p246 = scmp.ne.s32.totalorder %s231, %s245
    %p247 = scmp.eq.s32.totalorder %s32, 0
    %p248 = por %p246, %p247
    %s250 = sadd.s32 %s249, 1
    %p253 = scmp.eq.s32.totalorder %s26, 1
    %p254 = scmp.ne.s32.totalorder %s249, %s251
    %p255 = scmp.eq.s32.totalorder %s26, 0
    %p256 = por %p254, %p255
    %p257 = scmp.ne.s32.totalorder %s249, %s251
    %p258 = scmp.eq.s32.totalorder %s31, 1
    %p259 = por %p257, %p258
    %p260 = scmp.ne.s32.totalorder %s251, %s252
    %p261 = scmp.eq.s32.totalorder %s31, 0
    %p262 = por %p260, %p261
    %p263 = scmp.ne.s32.totalorder %s251, %s252
    %p264 = scmp.eq.s32.totalorder %s32, 1
    %p265 = por %p263, %p264
    %p267 = scmp.ne.s32.totalorder %s252, %s266
    %p268 = scmp.eq.s32.totalorder %s32, 0
    %p269 = por %p267, %p268
    %s271 = sadd.s32 %s270, 1
    %p274 = scmp.eq.s32.totalorder %s26, 1
    %p275 = scmp.ne.s32.totalorder %s270, %s272
    %p276 = scmp.eq.s32.totalorder %s26, 0
    %p277 = por %p275, %p276
    %p278 = scmp.ne.s32.totalorder %s270, %s272
    %p279 = scmp.eq.s32.totalorder %s31, 1
    %p280 = por %p278, %p279
    %p281 = scmp.ne.s32.totalorder %s272, %s273
    %p282 = scmp.eq.s32.totalorder %s31, 0
    %p283 = por %p281, %p282
    %p284 = scmp.ne.s32.totalorder %s272, %s273
    %p285 = scmp.eq.s32.totalorder %s32, 1
    %p286 = por %p284, %p285
    %p288 = scmp.ne.s32.totalorder %s273, %s287
    %p289 = scmp.eq.s32.totalorder %s32, 0
    %p290 = por %p288, %p289
    %s292 = sadd.s32 %s291, 1
    %p295 = scmp.eq.s32.totalorder %s26, 1
    %p296 = scmp.ne.s32.totalorder %s291, %s293
    %p297 = scmp.eq.s32.totalorder %s26, 0
    %p298 = por %p296, %p297
    %p299 = scmp.ne.s32.totalorder %s291, %s293
    %p300 = scmp.eq.s32.totalorder %s31, 1
    %p301 = por %p299, %p300
    %p302 = scmp.ne.s32.totalorder %s293, %s294
    %p303 = scmp.eq.s32.totalorder %s31, 0
    %p304 = por %p302, %p303
    %p305 = scmp.ne.s32.totalorder %s293, %s294
    %p306 = scmp.eq.s32.totalorder %s32, 1
    %p307 = por %p305, %p306
    %p309 = scmp.ne.s32.totalorder %s294, %s308
    %p310 = scmp.eq.s32.totalorder %s32, 0
    %p311 = por %p309, %p310
    %s313 = sadd.s32 %s312, 1
    %p316 = scmp.eq.s32.totalorder %s26, 1
    %p317 = scmp.ne.s32.totalorder %s312, %s314
    %p318 = scmp.eq.s32.totalorder %s26, 0
    %p319 = por %p317, %p318
    %p320 = scmp.ne.s32.totalorder %s312, %s314
    %p321 = scmp.eq.s32.totalorder %s31, 1
    %p322 = por %p320, %p321
    %p323 = scmp.ne.s32.totalorder %s314, %s315
    %p324 = scmp.eq.s32.totalorder %s31, 0
    %p325 = por %p323, %p324
    %p326 = scmp.ne.s32.totalorder %s314, %s315
    %p327 = scmp.eq.s32.totalorder %s32, 1
    %p328 = por %p326, %p327
    %p330 = scmp.ne.s32.totalorder %s315, %s329
    %p331 = scmp.eq.s32.totalorder %s32, 0
    %p332 = por %p330, %p331
    %s334 = sadd.s32 %s333, 1
    %p337 = scmp.eq.s32.totalorder %s26, 1
    %p338 = scmp.ne.s32.totalorder %s333, %s335
    %p339 = scmp.eq.s32.totalorder %s26, 0
    %p340 = por %p338, %p339
    %p341 = scmp.ne.s32.totalorder %s333, %s335
    %p342 = scmp.eq.s32.totalorder %s31, 1
    %p343 = por %p341, %p342
    %p344 = scmp.ne.s32.totalorder %s335, %s336
    %p345 = scmp.eq.s32.totalorder %s31, 0
    %p346 = por %p344, %p345
    %p347 = scmp.ne.s32.totalorder %s335, %s336
    %p348 = scmp.eq.s32.totalorder %s32, 1
    %p349 = por %p347, %p348
    %p351 = scmp.ne.s32.totalorder %s336, %s350
    %p352 = scmp.eq.s32.totalorder %s32, 0
    %p353 = por %p351, %p352
    %s355 = sadd.s32 %s354, 1
    %p358 = scmp.eq.s32.totalorder %s26, 1
    %p359 = scmp.ne.s32.totalorder %s354, %s356
    %p360 = scmp.eq.s32.totalorder %s26, 0
    %p361 = por %p359, %p360
    %p362 = scmp.ne.s32.totalorder %s354, %s356
    %p363 = scmp.eq.s32.totalorder %s31, 1
    %p364 = por %p362, %p363
    %p365 = scmp.ne.s32.totalorder %s356, %s357
    %p366 = scmp.eq.s32.totalorder %s31, 0
    %p367 = por %p365, %p366
    %p368 = scmp.ne.s32.totalorder %s356, %s357
    %p369 = scmp.eq.s32.totalorder %s32, 1
    %p370 = por %p368, %p369
    %p372 = scmp.ne.s32.totalorder %s357, %s371
    %p373 = scmp.eq.s32.totalorder %s32, 0
    %p374 = por %p372, %p373
    %s376 = sadd.s32 %s375, 1
    %p379 = scmp.eq.s32.totalorder %s26, 1
    %p380 = scmp.ne.s32.totalorder %s375, %s377
    %p381 = scmp.eq.s32.totalorder %s26, 0
    %p382 = por %p380, %p381
    %p383 = scmp.ne.s32.totalorder %s375, %s377
    %p384 = scmp.eq.s32.totalorder %s31, 1
    %p385 = por %p383, %p384
    %p386 = scmp.ne.s32.totalorder %s377, %s378
    %p387 = scmp.eq.s32.totalorder %s31, 0
    %p388 = por %p386, %p387
    %p389 = scmp.ne.s32.totalorder %s377, %s378
    %p390 = scmp.eq.s32.totalorder %s32, 1
    %p391 = por %p389, %p390
    %p393 = scmp.ne.s32.totalorder %s378, %s392
    %p394 = scmp.eq.s32.totalorder %s32, 0
    %p395 = por %p393, %p394
    %s397 = sadd.s32 %s396, 1
    %p400 = scmp.eq.s32.totalorder %s26, 1
    %p401 = scmp.ne.s32.totalorder %s396, %s398
    %p402 = scmp.eq.s32.totalorder %s26, 0
    %p403 = por %p401, %p402
    %p404 = scmp.ne.s32.totalorder %s396, %s398
    %p405 = scmp.eq.s32.totalorder %s31, 1
    %p406 = por %p404, %p405
    %p407 = scmp.ne.s32.totalorder %s398, %s399
    %p408 = scmp.eq.s32.totalorder %s31, 0
    %p409 = por %p407, %p408
    %p410 = scmp.ne.s32.totalorder %s398, %s399
    %p411 = scmp.eq.s32.totalorder %s32, 1
    %p412 = por %p410, %p411
    %p414 = scmp.ne.s32.totalorder %s399, %s413
    %p415 = scmp.eq.s32.totalorder %s32, 0
    %p416 = por %p414, %p415
    %s418 = sadd.s32 %s417, 1
    %p421 = scmp.eq.s32.totalorder %s26, 1
    %p422 = scmp.ne.s32.totalorder %s417, %s419
    %p423 = scmp.eq.s32.totalorder %s26, 0
    %p424 = por %p422, %p423
    %p425 = scmp.ne.s32.totalorder %s417, %s419
    %p426 = scmp.eq.s32.totalorder %s31, 1
    %p427 = por %p425, %p426
    %p428 = scmp.ne.s32.totalorder %s419, %s420
    %p429 = scmp.eq.s32.totalorder %s31, 0
    %p430 = por %p428, %p429
    %p431 = scmp.ne.s32.totalorder %s419, %s420
    %p432 = scmp.eq.s32.totalorder %s32, 1
    %p433 = por %p431, %p432
    %p435 = scmp.ne.s32.totalorder %s420, %s434
    %p436 = scmp.eq.s32.totalorder %s32, 0
    %p437 = por %p435, %p436
    %s439 = sadd.s32 %s438, 1
    %p442 = scmp.eq.s32.totalorder %s26, 1
    %p443 = scmp.ne.s32.totalorder %s438, %s440
    %p444 = scmp.eq.s32.totalorder %s26, 0
    %p445 = por %p443, %p444
    %p446 = scmp.ne.s32.totalorder %s438, %s440
    %p447 = scmp.eq.s32.totalorder %s31, 1
    %p448 = por %p446, %p447
    %p449 = scmp.ne.s32.totalorder %s440, %s441
    %p450 = scmp.eq.s32.totalorder %s31, 0
    %p451 = por %p449, %p450
    %p452 = scmp.ne.s32.totalorder %s440, %s441
    %p453 = scmp.eq.s32.totalorder %s32, 1
    %p454 = por %p452, %p453
    %p456 = scmp.ne.s32.totalorder %s441, %s455
    %p457 = scmp.eq.s32.totalorder %s32, 0
    %p458 = por %p456, %p457
    %s459 = ssub.s32 %s26, %s33
    %p460 = scmp.eq.s32.totalorder %s459, 0
    %s462 = sadd.s32 %s461, 1
    %s463 = scalar_select %p460, %s461, %s462
    %p466 = pneg %p460
    %p467 = scmp.eq.s32.totalorder %s26, 1
    %p468 = por %p466, %p467
    %p469 = scmp.ne.s32.totalorder %s461, %s464
    %p470 = scmp.eq.s32.totalorder %s26, 0
    %p471 = por %p469, %p470
    %p472 = scmp.ne.s32.totalorder %s461, %s464
    %p473 = scmp.eq.s32.totalorder %s31, 1
    %p474 = por %p472, %p473
    %p475 = scmp.ne.s32.totalorder %s464, %s465
    %p476 = scmp.eq.s32.totalorder %s31, 0
    %p477 = por %p475, %p476
    %p478 = scmp.ne.s32.totalorder %s464, %s465
    %p479 = scmp.eq.s32.totalorder %s32, 1
    %p480 = por %p478, %p479
    %p482 = scmp.ne.s32.totalorder %s465, %s481
    %p483 = scmp.eq.s32.totalorder %s32, 0
    %p484 = por %p482, %p483
    %p485 = scmp.le.s32.totalorder 1, %s26
    %p486 = scmp.lt.s32.totalorder %s26, 3
    %p487 = pnand %p485, %p486
    %p488 = pneg %p487
    // Predicated region
    $region9: #{decoder_forward.1} parent=5 // pred_check
      _
    $region10: #{decoder_forward.1} parent=5 // pred_check_branch
      %490 = sbr.rel (%p487) target = $region12
    $region11: #{decoder_forward.1} parent=5 // pred_region
      %s491 = ssub.s32 %s26, 1
      // Predicated region
      $region13: #{decoder_forward.1} parent=11 // pred_check
        %p492 = pneg %p73
      $region14: #{decoder_forward.1} parent=11 // pred_check_branch
        %494 = sbr.rel (%p492) target = $region16
      $region15: #{decoder_forward.1} parent=11 // pred_region
        _
      $region16: #{decoder_forward.1} parent=11 // pred_fallthru
        _
      // Predicated region
      $region17: #{decoder_forward.1} parent=11 // pred_check
        %p495 = pneg %p94
      $region18: #{decoder_forward.1} parent=11 // pred_check_branch
        %497 = sbr.rel (%p495) target = $region20
      $region19: #{decoder_forward.1} parent=11 // pred_region
        _
      $region20: #{decoder_forward.1} parent=11 // pred_fallthru
        _
      // Predicated region
      $region21: #{decoder_forward.1} parent=11 // pred_check
        %p498 = pneg %p115
      $region22: #{decoder_forward.1} parent=11 // pred_check_branch
        %500 = sbr.rel (%p498) target = $region24
      $region23: #{decoder_forward.1} parent=11 // pred_region
        _
      $region24: #{decoder_forward.1} parent=11 // pred_fallthru
        _
      // Predicated region
      $region25: #{decoder_forward.1} parent=11 // pred_check
        %p501 = pneg %p136
      $region26: #{decoder_forward.1} parent=11 // pred_check_branch
        %503 = sbr.rel (%p501) target = $region28
      $region27: #{decoder_forward.1} parent=11 // pred_region
        _
      $region28: #{decoder_forward.1} parent=11 // pred_fallthru
        _
      // Predicated region
      $region29: #{decoder_forward.1} parent=11 // pred_check
        %p504 = pneg %p157
      $region30: #{decoder_forward.1} parent=11 // pred_check_branch
        %506 = sbr.rel (%p504) target = $region32
      $region31: #{decoder_forward.1} parent=11 // pred_region
        _
      $region32: #{decoder_forward.1} parent=11 // pred_fallthru
        _
      // Predicated region
      $region33: #{decoder_forward.1} parent=11 // pred_check
        %p507 = pneg %p178
      $region34: #{decoder_forward.1} parent=11 // pred_check_branch
        %509 = sbr.rel (%p507) target = $region36
      $region35: #{decoder_forward.1} parent=11 // pred_region
        _
      $region36: #{decoder_forward.1} parent=11 // pred_fallthru
        _
      // Predicated region
      $region37: #{decoder_forward.1} parent=11 // pred_check
        %p510 = pneg %p199
      $region38: #{decoder_forward.1} parent=11 // pred_check_branch
        %512 = sbr.rel (%p510) target = $region40
      $region39: #{decoder_forward.1} parent=11 // pred_region
        _
      $region40: #{decoder_forward.1} parent=11 // pred_fallthru
        _
      // Predicated region
      $region41: #{decoder_forward.1} parent=11 // pred_check
        %p513 = pneg %p220
      $region42: #{decoder_forward.1} parent=11 // pred_check_branch
        %515 = sbr.rel (%p513) target = $region44
      $region43: #{decoder_forward.1} parent=11 // pred_region
        _
      $region44: #{decoder_forward.1} parent=11 // pred_fallthru
        _
      // Predicated region
      $region45: #{decoder_forward.1} parent=11 // pred_check
        %p516 = pneg %p241
      $region46: #{decoder_forward.1} parent=11 // pred_check_branch
        %518 = sbr.rel (%p516) target = $region48
      $region47: #{decoder_forward.1} parent=11 // pred_region
        _
      $region48: #{decoder_forward.1} parent=11 // pred_fallthru
        _
      // Predicated region
      $region49: #{decoder_forward.1} parent=11 // pred_check
        %p519 = pneg %p262
      $region50: #{decoder_forward.1} parent=11 // pred_check_branch
        %521 = sbr.rel (%p519) target = $region52
      $region51: #{decoder_forward.1} parent=11 // pred_region
        _
      $region52: #{decoder_forward.1} parent=11 // pred_fallthru
        _
      // Predicated region
      $region53: #{decoder_forward.1} parent=11 // pred_check
        %p522 = pneg %p283
      $region54: #{decoder_forward.1} parent=11 // pred_check_branch
        %524 = sbr.rel (%p522) target = $region56
      $region55: #{decoder_forward.1} parent=11 // pred_region
        _
      $region56: #{decoder_forward.1} parent=11 // pred_fallthru
        _
      // Predicated region
      $region57: #{decoder_forward.1} parent=11 // pred_check
        %p525 = pneg %p304
      $region58: #{decoder_forward.1} parent=11 // pred_check_branch
        %527 = sbr.rel (%p525) target = $region60
      $region59: #{decoder_forward.1} parent=11 // pred_region
        _
      $region60: #{decoder_forward.1} parent=11 // pred_fallthru
        _
      // Predicated region
      $region61: #{decoder_forward.1} parent=11 // pred_check
        %p528 = pneg %p325
      $region62: #{decoder_forward.1} parent=11 // pred_check_branch
        %530 = sbr.rel (%p528) target = $region64
      $region63: #{decoder_forward.1} parent=11 // pred_region
        _
      $region64: #{decoder_forward.1} parent=11 // pred_fallthru
        _
      // Predicated region
      $region65: #{decoder_forward.1} parent=11 // pred_check
        %p531 = pneg %p346
      $region66: #{decoder_forward.1} parent=11 // pred_check_branch
        %533 = sbr.rel (%p531) target = $region68
      $region67: #{decoder_forward.1} parent=11 // pred_region
        _
      $region68: #{decoder_forward.1} parent=11 // pred_fallthru
        _
      // Predicated region
      $region69: #{decoder_forward.1} parent=11 // pred_check
        %p534 = pneg %p367
      $region70: #{decoder_forward.1} parent=11 // pred_check_branch
        %536 = sbr.rel (%p534) target = $region72
      $region71: #{decoder_forward.1} parent=11 // pred_region
        _
      $region72: #{decoder_forward.1} parent=11 // pred_fallthru
        _
      // Predicated region
      $region73: #{decoder_forward.1} parent=11 // pred_check
        %p537 = pneg %p388
      $region74: #{decoder_forward.1} parent=11 // pred_check_branch
        %539 = sbr.rel (%p537) target = $region76
      $region75: #{decoder_forward.1} parent=11 // pred_region
        _
      $region76: #{decoder_forward.1} parent=11 // pred_fallthru
        _
      // Predicated region
      $region77: #{decoder_forward.1} parent=11 // pred_check
        %p540 = pneg %p409
      $region78: #{decoder_forward.1} parent=11 // pred_check_branch
        %542 = sbr.rel (%p540) target = $region80
      $region79: #{decoder_forward.1} parent=11 // pred_region
        _
      $region80: #{decoder_forward.1} parent=11 // pred_fallthru
        _
      // Predicated region
      $region81: #{decoder_forward.1} parent=11 // pred_check
        %p543 = pneg %p430
      $region82: #{decoder_forward.1} parent=11 // pred_check_branch
        %545 = sbr.rel (%p543) target = $region84
      $region83: #{decoder_forward.1} parent=11 // pred_region
        _
      $region84: #{decoder_forward.1} parent=11 // pred_fallthru
        _
      // Predicated region
      $region85: #{decoder_forward.1} parent=11 // pred_check
        %p546 = pneg %p451
      $region86: #{decoder_forward.1} parent=11 // pred_check_branch
        %548 = sbr.rel (%p546) target = $region88
      $region87: #{decoder_forward.1} parent=11 // pred_region
        _
      $region88: #{decoder_forward.1} parent=11 // pred_fallthru
        _
    $region12: #{decoder_forward.1} parent=5 // pred_fallthru
      _
    %p549 = scmp.lt.s32.totalorder %s26, 2
    // Predicated region
    $region89: #{decoder_forward.1} parent=5 // pred_check
      %p550 = pneg %p549
    $region90: #{decoder_forward.1} parent=5 // pred_check_branch
      %552 = sbr.rel (%p550) target = $region92
    $region91: #{decoder_forward.1} parent=5 // pred_region
      // Predicated region
      $region93: #{decoder_forward.1} parent=91 // pred_check
        %p553 = pneg %p46
      $region94: #{decoder_forward.1} parent=91 // pred_check_branch
        %555 = sbr.rel (%p553) target = $region96
      $region95: #{decoder_forward.1} parent=91 // pred_region
        %p556 = scmp.lt.s32.totalorder %s26, 1
        %s557 = scalar_select %p556, %s26, 1
        %s558 = smul.addr %s557, 8
        %s559 = smul.addr %s558, 8
        %s560 = scalar_lea.vmem %s0, %s559
      $region96: #{decoder_forward.1} parent=91 // pred_fallthru
        _
    $region92: #{decoder_forward.1} parent=5 // pred_fallthru
      _
    %p561 = scmp.le.s32.totalorder 1, %s26
    %p562 = scmp.lt.s32.totalorder %s26, 3
    %p563 = pnand %p561, %p562
    %p564 = pneg %p563
    // Predicated region
    $region97: #{decoder_forward.1} parent=5 // pred_check
      _
    $region98: #{decoder_forward.1} parent=5 // pred_check_branch
      %566 = sbr.rel (%p563) target = $region100
    $region99: #{decoder_forward.1} parent=5 // pred_region
      %s567 = ssub.s32 %s26, 1
      %p568 = scmp.lt.s32.totalorder %s31, 1
      %s569 = scalar_select %p568, %s31, 1
      %s570 = smul.addr %s569, 8
      %s571 = smul.addr %s570, 8
      %s572 = scalar_lea.vmem %s0, %s571
      %p573 = pneg %p52
      %p574 = pneg %p49
      %p575 = pneg %p73
      %p576 = pneg %p70
      %p577 = pneg %p94
      %p578 = pneg %p91
      %p579 = pneg %p115
      %p580 = pneg %p112
      %p581 = pneg %p136
      %p582 = pneg %p133
      %p583 = pneg %p157
      %p584 = pneg %p154
      %p585 = pneg %p178
      %p586 = pneg %p175
      %p587 = pneg %p199
      %p588 = pneg %p196
      %p589 = pneg %p220
      %p590 = pneg %p217
      %p591 = pneg %p241
      %p592 = pneg %p238
      %p593 = pneg %p262
      %p594 = pneg %p259
      %p595 = pneg %p283
      %p596 = pneg %p280
      %p597 = pneg %p304
      %p598 = pneg %p301
      %p599 = pneg %p325
      %p600 = pneg %p322
      %p601 = pneg %p346
      %p602 = pneg %p343
      %p603 = pneg %p367
      %p604 = pneg %p364
      %p605 = pneg %p388
      %p606 = pneg %p385
      %p607 = pneg %p409
      %p608 = pneg %p406
      %p609 = pneg %p430
      %p610 = pneg %p427
      %p611 = pneg %p451
      %p612 = pneg %p448
      %p613 = pneg %p477
      %p614 = pneg %p474
      %p615 = scmp.lt.s32.totalorder %s31, 1
      %s616 = scalar_select %p615, %s31, 1
      %s617 = smul.addr %s616, 8
      %s618 = smul.addr %s617, 8
      %s619 = scalar_lea.vmem %s20, %s618
      %p620 = scmp.lt.s32.totalorder %s31, 1
      %s621 = scalar_select %p620, %s31, 1
      %s622 = smul.addr %s621, 8
      %s623 = smul.addr %s622, 8
      %s624 = scalar_lea.vmem %s0, %s623
      %p625 = scmp.lt.s32.totalorder %s31, 1
      %s626 = scalar_select %p625, %s31, 1
      %s627 = smul.addr %s626, 8
      %s628 = smul.addr %s627, 8
      %s629 = scalar_lea.vmem %s20, %s628
      %vm631 = vcmask 781312
      %632 = vst.msk [vmem:[#allocation2] sm:$0xf] %vm631, 0
      %633 = vst.msk [vmem:[#allocation2 + $0x4] sm:$0xf] %vm631, 0
      %634 = vst.msk [vmem:[#allocation2 + $0x28] sm:$0xf] %vm631, 0
      %635 = vst.msk [vmem:[#allocation2 + $0x2c] sm:$0xf] %vm631, 0
      %vm636 = vcmask 519168
      %637 = vst.msk [vmem:[#allocation3 + $0x20] sm:$0xf] %vm636, 0
      %638 = vst.msk [vmem:[#allocation3 + $0x24] sm:$0xf] %vm636, 0
      %639 = vst [vmem:[#allocation4 + $0x20] sm:$0xf] 0
      %640 = vst [vmem:[#allocation4 + $0x24] sm:$0xf] 0
      %v641 = vld [vmem:[%s2] sm:$0xff]
      %v642 = vld [vmem:[%s2 + $0x8] sm:$0xff]
      %v643 = vld [vmem:[%s2 + $0x10] sm:$0xff]
      %v644 = vld [vmem:[%s2 + $0x18] sm:$0xff]
      %v645 = vld [vmem:[%s2 + $0x20] sm:$0xff]
      %v646 = vld [vmem:[%s2 + $0x28] sm:$0xff]
      %v647 = vld [vmem:[%s2 + $0x30] sm:$0xff]
      %v648 = vld [vmem:[%s2 + $0x38] sm:$0xff]
      %v649 = vld [vmem:[%s3] sm:$0xff]
      %v650 = vld [vmem:[%s3 + $0x8] sm:$0xff]
      %v651 = vld [vmem:[%s3 + $0x10] sm:$0xff]
      %v652 = vld [vmem:[%s3 + $0x18] sm:$0xff]
      %v653 = vld [vmem:[%s3 + $0x20] sm:$0xff]
      %v654 = vld [vmem:[%s3 + $0x28] sm:$0xff]
      %v655 = vld [vmem:[%s3 + $0x30] sm:$0xff]
      %v656 = vld [vmem:[%s3 + $0x38] sm:$0xff]
      %v657 = vld [vmem:[%s4] sm:$0xff]
      %v658 = vld [vmem:[%s4 + $0x8] sm:$0xff]
      %v659 = vld [vmem:[%s4 + $0x10] sm:$0xff]
      %v660 = vld [vmem:[%s4 + $0x18] sm:$0xff]
      %v661 = vld [vmem:[%s4 + $0x20] sm:$0xff]
      %v662 = vld [vmem:[%s4 + $0x28] sm:$0xff]
      %v663 = vld [vmem:[%s4 + $0x30] sm:$0xff]
      %v664 = vld [vmem:[%s4 + $0x38] sm:$0xff]
      %s665 = scalar_lea.vmem %s1, %s31
      %v666 = vld [vmem:[%s665] sm:$0x1]
      %v667 = vpack.c.bf16 %v666, %v666
      %v668 = vld [vmem:[%s5] sm:$0xff]
      %v669 = vld [vmem:[%s5 + $0x8] sm:$0x11]
      %v670 = vld [vmem:[%s6] sm:$0x3]
      %v673 = vunpack.c.l.b16 %v668
      %v674 = vunpack.c.h.b16 %v668
      %v675 = vunpack.c.l.b16 %v669
      %v676 = vunpack.c.h.b16 %v669
      %v677 = vpack.c.b16 %v675, %v673
      %v678 = vpack.c.b16 %v676, %v674
      %v680 = vperm.slane %v670, 0
      %v681 = vperm.slane %v670, 1
      %vm684 = vcmask 80896
      %v686 = vsel %vm684, %v667, 0
      %vm688 = vcmask 1044480
      %v690 = vsel %vm688, %v677, 0
      %v693 = vsel %vm688, %v678, 0
      %695 = vmatpush.bf16.msra.mxu0 0
      %696 = vmatpush.bf16.msra.mxu0 0
      %697 = vmatpush.bf16.msra.mxu0 0
      %698 = vmatpush.bf16.msra.mxu0 0
      %699 = vmatpush.bf16.msra.mxu0 0
      %700 = vmatpush.bf16.msra.mxu0 0
      %701 = vmatpush.bf16.msra.mxu0 0
      %702 = vmatpush.bf16.msra.mxu0 %v690
      %703 = vmatmul.bf16.gmra.mxu0 %v686
      %v704 = vpop.f32.mrf.mxu0
      %v705 = vadd.f32 %v680, %v704
      %v706 = vpop.f32.mrf.mxu0
      %707 = vdwg.mxu0
      %708 = vmatpush.bf16.msra.mxu0 0
      %709 = vmatpush.bf16.msra.mxu0 0
      %710 = vmatpush.bf16.msra.mxu0 0
      %711 = vmatpush.bf16.msra.mxu0 0
      %712 = vmatpush.bf16.msra.mxu0 0
      %713 = vmatpush.bf16.msra.mxu0 0
      %714 = vmatpush.bf16.msra.mxu0 0
      %715 = vmatpush.bf16.msra.mxu0 %v693
      %716 = vmatmul.bf16.gmra.mxu0 %v686
      %v717 = vpop.f32.mrf.mxu0
      %v718 = vadd.f32 %v681, %v717
      %v719 = vpop.f32.mrf.mxu0
      %720 = vdwg.mxu0
      %v721 = vmax.f32 %v705, 0.0
      %v722 = vmax.f32 %v718, 0.0
      %v723 = vpack.c.bf16 %v721, %v721
      %v724 = vpack.c.bf16 %v722, %v722
      %v725 = vld [vmem:[%s7] sm:$0xff]
      %v726 = vld [vmem:[%s7 + $0x8] sm:$0xff]
      %v727 = vld [vmem:[%s7 + $0x10] sm:$0xff]
      %v728 = vld [vmem:[%s7 + $0x18] sm:$0xff]
      %v729 = vld [vmem:[%s7 + $0x20] sm:$0xff]
      %v730 = vld [vmem:[%s7 + $0x28] sm:$0xff]
      %v731 = vld [vmem:[%s7 + $0x30] sm:$0xff]
      %v732 = vld [vmem:[%s7 + $0x38] sm:$0xff]
      %v733 = vld [vmem:[%s7 + $0x40] sm:$0xff]
      %v734 = vld [vmem:[%s7 + $0x48] sm:$0xff]
      %v735 = vld [vmem:[%s7 + $0x50] sm:$0xff]
      %v736 = vld [vmem:[%s7 + $0x58] sm:$0xff]
      %v737 = vld [vmem:[%s7 + $0x60] sm:$0xff]
      %v738 = vld [vmem:[%s7 + $0x68] sm:$0xff]
      %v739 = vld [vmem:[%s7 + $0x70] sm:$0xff]
      %v740 = vld [vmem:[%s7 + $0x78] sm:$0xff]
      %v741 = vld [vmem:[%s7 + $0x80] sm:$0xff]
      %v742 = vld [vmem:[%s7 + $0x88] sm:$0xff]
      %v743 = vld [vmem:[%s7 + $0x90] sm:$0xff]
      %v744 = vld [vmem:[%s7 + $0x98] sm:$0xff]
      %v745 = vld [vmem:[%s7 + $0xa0] sm:$0xff]
      %v746 = vld [vmem:[%s7 + $0xa8] sm:$0xff]
      %v747 = vld [vmem:[%s7 + $0xb0] sm:$0xff]
      %v748 = vld [vmem:[%s7 + $0xb8] sm:$0xff]
      %v749 = vld [vmem:[%s7 + $0xc0] sm:$0xff]
      %v750 = vld [vmem:[%s7 + $0xc8] sm:$0xff]
      %v751 = vld [vmem:[%s7 + $0xd0] sm:$0xff]
      %v752 = vld [vmem:[%s7 + $0xd8] sm:$0xff]
      %v753 = vld [vmem:[%s7 + $0xe0] sm:$0xff]
      %v754 = vld [vmem:[%s7 + $0xe8] sm:$0xff]
      %v755 = vld [vmem:[%s7 + $0xf0] sm:$0xff]
      %v756 = vld [vmem:[%s7 + $0xf8] sm:$0xff]
      %v757 = vld [vmem:[%s8] sm:$0x3]
      %v790 = vunpack.c.l.b16 %v725
      %v791 = vunpack.c.h.b16 %v725
      %v792 = vunpack.c.l.b16 %v726
      %v793 = vunpack.c.h.b16 %v726
      %v794 = vunpack.c.l.b16 %v727
      %v795 = vunpack.c.h.b16 %v727
      %v796 = vunpack.c.l.b16 %v728
      %v797 = vunpack.c.h.b16 %v728
      %v798 = vunpack.c.l.b16 %v729
      %v799 = vunpack.c.h.b16 %v729
      %v800 = vunpack.c.l.b16 %v730
      %v801 = vunpack.c.h.b16 %v730
      %v802 = vunpack.c.l.b16 %v731
      %v803 = vunpack.c.h.b16 %v731
      %v804 = vunpack.c.l.b16 %v732
      %v805 = vunpack.c.h.b16 %v732
      %v806 = vunpack.c.l.b16 %v733
      %v807 = vunpack.c.h.b16 %v733
      %v808 = vunpack.c.l.b16 %v734
      %v809 = vunpack.c.h.b16 %v734
      %v810 = vunpack.c.l.b16 %v735
      %v811 = vunpack.c.h.b16 %v735
      %v812 = vunpack.c.l.b16 %v736
      %v813 = vunpack.c.h.b16 %v736
      %v814 = vunpack.c.l.b16 %v737
      %v815 = vunpack.c.h.b16 %v737
      %v816 = vunpack.c.l.b16 %v738
      %v817 = vunpack.c.h.b16 %v738
      %v818 = vunpack.c.l.b16 %v739
      %v819 = vunpack.c.h.b16 %v739
      %v820 = vunpack.c.l.b16 %v740
      %v821 = vunpack.c.h.b16 %v740
      %v822 = vunpack.c.l.b16 %v741
      %v823 = vunpack.c.h.b16 %v741
      %v824 = vunpack.c.l.b16 %v742
      %v825 = vunpack.c.h.b16 %v742
      %v826 = vunpack.c.l.b16 %v743
      %v827 = vunpack.c.h.b16 %v743
      %v828 = vunpack.c.l.b16 %v744
      %v829 = vunpack.c.h.b16 %v744
      %v830 = vunpack.c.l.b16 %v745
      %v831 = vunpack.c.h.b16 %v745
      %v832 = vunpack.c.l.b16 %v746
      %v833 = vunpack.c.h.b16 %v746
      %v834 = vunpack.c.l.b16 %v747
      %v835 = vunpack.c.h.b16 %v747
      %v836 = vunpack.c.l.b16 %v748
      %v837 = vunpack.c.h.b16 %v748
      %v838 = vunpack.c.l.b16 %v749
      %v839 = vunpack.c.h.b16 %v749
      %v840 = vunpack.c.l.b16 %v750
      %v841 = vunpack.c.h.b16 %v750
      %v842 = vunpack.c.l.b16 %v751
      %v843 = vunpack.c.h.b16 %v751
      %v844 = vunpack.c.l.b16 %v752
      %v845 = vunpack.c.h.b16 %v752
      %v846 = vunpack.c.l.b16 %v753
      %v847 = vunpack.c.h.b16 %v753
      %v848 = vunpack.c.l.b16 %v754
      %v849 = vunpack.c.h.b16 %v754
      %v850 = vunpack.c.l.b16 %v755
      %v851 = vunpack.c.h.b16 %v755
      %v852 = vunpack.c.l.b16 %v756
      %v853 = vunpack.c.h.b16 %v756
      %v854 = vpack.c.b16 %v792, %v790
      %v855 = vpack.c.b16 %v793, %v791
      %v856 = vpack.c.b16 %v796, %v794
      %v857 = vpack.c.b16 %v797, %v795
      %v858 = vpack.c.b16 %v800, %v798
      %v859 = vpack.c.b16 %v801, %v799
      %v860 = vpack.c.b16 %v804, %v802
      %v861 = vpack.c.b16 %v805, %v803
      %v862 = vpack.c.b16 %v808, %v806
      %v863 = vpack.c.b16 %v809, %v807
      %v864 = vpack.c.b16 %v812, %v810
      %v865 = vpack.c.b16 %v813, %v811
      %v866 = vpack.c.b16 %v816, %v814
      %v867 = vpack.c.b16 %v817, %v815
      %v868 = vpack.c.b16 %v820, %v818
      %v869 = vpack.c.b16 %v821, %v819
      %v870 = vpack.c.b16 %v824, %v822
      %v871 = vpack.c.b16 %v825, %v823
      %v872 = vpack.c.b16 %v828, %v826
      %v873 = vpack.c.b16 %v829, %v827
      %v874 = vpack.c.b16 %v832, %v830
      %v875 = vpack.c.b16 %v833, %v831
      %v876 = vpack.c.b16 %v836, %v834
      %v877 = vpack.c.b16 %v837, %v835
      %v878 = vpack.c.b16 %v840, %v838
      %v879 = vpack.c.b16 %v841, %v839
      %v880 = vpack.c.b16 %v844, %v842
      %v881 = vpack.c.b16 %v845, %v843
      %v882 = vpack.c.b16 %v848, %v846
      %v883 = vpack.c.b16 %v849, %v847
      %v884 = vpack.c.b16 %v852, %v850
      %v885 = vpack.c.b16 %v853, %v851
      %v919 = vperm.slane %v757, 0
      %v920 = vperm.slane %v757, 1
      %923 = vmatpush.bf16.msra.mxu0 %v868
      %924 = vmatpush.bf16.msra.mxu0 %v866
      %925 = vmatpush.bf16.msra.mxu0 %v864
      %926 = vmatpush.bf16.msra.mxu0 %v862
      %927 = vmatpush.bf16.msra.mxu0 %v860
      %928 = vmatpush.bf16.msra.mxu0 %v858
      %929 = vmatpush.bf16.msra.mxu0 %v856
      %930 = vmatpush.bf16.msra.mxu0 %v854
      %931 = vmatmul.bf16.gmra.mxu0 %v723
      %v932 = vpop.f32.mrf.mxu0
      %v933 = vadd.f32 %v919, %v932
      %v934 = vpop.f32.mrf.mxu0
      %935 = vdwg.mxu0
      %936 = vmatpush.bf16.msra.mxu0 %v884
      %937 = vmatpush.bf16.msra.mxu0 %v882
      %938 = vmatpush.bf16.msra.mxu0 %v880
      %939 = vmatpush.bf16.msra.mxu0 %v878
      %940 = vmatpush.bf16.msra.mxu0 %v876
      %941 = vmatpush.bf16.msra.mxu0 %v874
      %942 = vmatpush.bf16.msra.mxu0 %v872
      %943 = vmatpush.bf16.msra.mxu0 %v870
      %944 = vmatmul.bf16.gmra.mxu0 %v724
      %v945 = vpop.f32.mrf.mxu0
      %v946 = vadd.f32 %v933, %v945
      %v947 = vpop.f32.mrf.mxu0
      %948 = vdwg.mxu0
      %949 = vmatpush.bf16.msra.mxu0 %v869
      %950 = vmatpush.bf16.msra.mxu0 %v867
      %951 = vmatpush.bf16.msra.mxu0 %v865
      %952 = vmatpush.bf16.msra.mxu0 %v863
      %953 = vmatpush.bf16.msra.mxu0 %v861
      %954 = vmatpush.bf16.msra.mxu0 %v859
      %955 = vmatpush.bf16.msra.mxu0 %v857
      %956 = vmatpush.bf16.msra.mxu0 %v855
      %957 = vmatmul.bf16.gmra.mxu0 %v723
      %v958 = vpop.f32.mrf.mxu0
      %v959 = vadd.f32 %v920, %v958
      %v960 = vpop.f32.mrf.mxu0
      %961 = vdwg.mxu0
      %962 = vmatpush.bf16.msra.mxu0 %v885
      %963 = vmatpush.bf16.msra.mxu0 %v883
      %964 = vmatpush.bf16.msra.mxu0 %v881
      %965 = vmatpush.bf16.msra.mxu0 %v879
      %966 = vmatpush.bf16.msra.mxu0 %v877
      %967 = vmatpush.bf16.msra.mxu0 %v875
      %968 = vmatpush.bf16.msra.mxu0 %v873
      %969 = vmatpush.bf16.msra.mxu0 %v871
      %970 = vmatmul.bf16.gmra.mxu0 %v724
      %v971 = vpop.f32.mrf.mxu0
      %v972 = vadd.f32 %v959, %v971
      %v973 = vpop.f32.mrf.mxu0
      %974 = vdwg.mxu0
      %v975 = vmax.f32 %v946, 0.0
      %v976 = vmax.f32 %v972, 0.0
      %v977 = vpack.c.bf16 %v975, %v975
      %v978 = vpack.c.bf16 %v976, %v976
      %v979 = vld [vmem:[%s9] sm:$0xf]
      %v980 = vld [vmem:[%s9 + $0x4] sm:$0xf]
      %v981 = vld [vmem:[%s9 + $0x8] sm:$0xf]
      %v982 = vld [vmem:[%s9 + $0xc] sm:$0xf]
      %v983 = vld [vmem:[%s9 + $0x10] sm:$0xf]
      %v984 = vld [vmem:[%s9 + $0x14] sm:$0xf]
      %v985 = vld [vmem:[%s9 + $0x18] sm:$0xf]
      %v986 = vld [vmem:[%s9 + $0x1c] sm:$0xf]
      %v987 = vld [vmem:[%s9 + $0x20] sm:$0xf]
      %v988 = vld [vmem:[%s9 + $0x24] sm:$0xf]
      %v989 = vld [vmem:[%s9 + $0x28] sm:$0xf]
      %v990 = vld [vmem:[%s9 + $0x2c] sm:$0xf]
      %v991 = vld [vmem:[%s9 + $0x30] sm:$0xf]
      %v992 = vld [vmem:[%s9 + $0x34] sm:$0xf]
      %v993 = vld [vmem:[%s9 + $0x38] sm:$0xf]
      %v994 = vld [vmem:[%s9 + $0x3c] sm:$0xf]
      %v995 = vld [vmem:[%s9 + $0x40] sm:$0xf]
      %v996 = vld [vmem:[%s9 + $0x44] sm:$0xf]
      %v997 = vld [vmem:[%s9 + $0x48] sm:$0xf]
      %v998 = vld [vmem:[%s9 + $0x4c] sm:$0xf]
      %v999 = vld [vmem:[%s9 + $0x50] sm:$0xf]
      %v1000 = vld [vmem:[%s9 + $0x54] sm:$0xf]
      %v1001 = vld [vmem:[%s9 + $0x58] sm:$0xf]
      %v1002 = vld [vmem:[%s9 + $0x5c] sm:$0xf]
      %v1003 = vld [vmem:[%s9 + $0x60] sm:$0xf]
      %v1004 = vld [vmem:[%s9 + $0x64] sm:$0xf]
      %v1005 = vld [vmem:[%s9 + $0x68] sm:$0xf]
      %v1006 = vld [vmem:[%s9 + $0x6c] sm:$0xf]
      %v1007 = vld [vmem:[%s9 + $0x70] sm:$0xf]
      %v1008 = vld [vmem:[%s9 + $0x74] sm:$0xf]
      %v1009 = vld [vmem:[%s9 + $0x78] sm:$0xf]
      %v1010 = vld [vmem:[%s9 + $0x7c] sm:$0xf]
      %v1011 = vld [vmem:[%s10] sm:$0x1]
      %v1044 = vunpack.c.l.b16 %v979
      %v1045 = vunpack.c.l.b16 %v980
      %v1046 = vunpack.c.l.b16 %v981
      %v1047 = vunpack.c.l.b16 %v982
      %v1048 = vunpack.c.l.b16 %v983
      %v1049 = vunpack.c.l.b16 %v984
      %v1050 = vunpack.c.l.b16 %v985
      %v1051 = vunpack.c.l.b16 %v986
      %v1052 = vunpack.c.l.b16 %v987
      %v1053 = vunpack.c.l.b16 %v988
      %v1054 = vunpack.c.l.b16 %v989
      %v1055 = vunpack.c.l.b16 %v990
      %v1056 = vunpack.c.l.b16 %v991
      %v1057 = vunpack.c.l.b16 %v992
      %v1058 = vunpack.c.l.b16 %v993
      %v1059 = vunpack.c.l.b16 %v994
      %v1060 = vunpack.c.l.b16 %v995
      %v1061 = vunpack.c.l.b16 %v996
      %v1062 = vunpack.c.l.b16 %v997
      %v1063 = vunpack.c.l.b16 %v998
      %v1064 = vunpack.c.l.b16 %v999
      %v1065 = vunpack.c.l.b16 %v1000
      %v1066 = vunpack.c.l.b16 %v1001
      %v1067 = vunpack.c.l.b16 %v1002
      %v1068 = vunpack.c.l.b16 %v1003
      %v1069 = vunpack.c.l.b16 %v1004
      %v1070 = vunpack.c.l.b16 %v1005
      %v1071 = vunpack.c.l.b16 %v1006
      %v1072 = vunpack.c.l.b16 %v1007
      %v1073 = vunpack.c.l.b16 %v1008
      %v1074 = vunpack.c.l.b16 %v1009
      %v1075 = vunpack.c.l.b16 %v1010
      %v1076 = vpack.c.b16 %v1045, %v1044
      %v1077 = vpack.c.b16 %v1047, %v1046
      %v1078 = vpack.c.b16 %v1049, %v1048
      %v1079 = vpack.c.b16 %v1051, %v1050
      %v1080 = vpack.c.b16 %v1053, %v1052
      %v1081 = vpack.c.b16 %v1055, %v1054
      %v1082 = vpack.c.b16 %v1057, %v1056
      %v1083 = vpack.c.b16 %v1059, %v1058
      %v1084 = vpack.c.b16 %v1061, %v1060
      %v1085 = vpack.c.b16 %v1063, %v1062
      %v1086 = vpack.c.b16 %v1065, %v1064
      %v1087 = vpack.c.b16 %v1067, %v1066
      %v1088 = vpack.c.b16 %v1069, %v1068
      %v1089 = vpack.c.b16 %v1071, %v1070
      %v1090 = vpack.c.b16 %v1073, %v1072
      %v1091 = vpack.c.b16 %v1075, %v1074
      %1108 = vmatpush.bf16.msra.mxu0 %v1083
      %1109 = vmatpush.bf16.msra.mxu0 %v1082
      %1110 = vmatpush.bf16.msra.mxu0 %v1081
      %1111 = vmatpush.bf16.msra.mxu0 %v1080
      %1112 = vmatpush.bf16.msra.mxu0 %v1079
      %1113 = vmatpush.bf16.msra.mxu0 %v1078
      %1114 = vmatpush.bf16.msra.mxu0 %v1077
      %1115 = vmatpush.bf16.msra.mxu0 %v1076
      %1116 = vmatmul.bf16.gmra.mxu0 %v977
      %v1117 = vpop.f32.mrf.mxu0
      %v1118 = vadd.f32 %v1011, %v1117
      %v1119 = vpop.f32.mrf.mxu0
      %1120 = vdwg.mxu0
      %1121 = vmatpush.bf16.msra.mxu0 %v1091
      %1122 = vmatpush.bf16.msra.mxu0 %v1090
      %1123 = vmatpush.bf16.msra.mxu0 %v1089
      %1124 = vmatpush.bf16.msra.mxu0 %v1088
      %1125 = vmatpush.bf16.msra.mxu0 %v1087
      %1126 = vmatpush.bf16.msra.mxu0 %v1086
      %1127 = vmatpush.bf16.msra.mxu0 %v1085
      %1128 = vmatpush.bf16.msra.mxu0 %v1084
      %1129 = vmatmul.bf16.gmra.mxu0 %v978
      %v1130 = vpop.f32.mrf.mxu0
      %v1131 = vadd.f32 %v1118, %v1130
      %v1132 = vpop.f32.mrf.mxu0
      %1133 = vdwg.mxu0
      %v1134 = vld [vmem:[%s624] sm:$0xff]
      %v1135 = vld [vmem:[%s624 + $0x8] sm:$0xff]
      %v1136 = vld [vmem:[%s624 + $0x10] sm:$0xff]
      %v1137 = vld [vmem:[%s624 + $0x18] sm:$0xff]
      %v1138 = vld [vmem:[%s624 + $0x20] sm:$0xff]
      %v1139 = vld [vmem:[%s624 + $0x28] sm:$0xff]
      %v1140 = vld [vmem:[%s624 + $0x30] sm:$0xff]
      %v1141 = vld [vmem:[%s624 + $0x38] sm:$0xff]
      %v1142 = vpack.c.bf16 %v1131, %v1131
      %v1143 = vrot.slane %v1134, 7
      %v1144 = vrot.slane %v1135, 7
      %v1145 = vrot.slane %v1136, 7
      %v1146 = vrot.slane %v1137, 7
      %v1147 = vrot.slane %v1138, 7
      %v1148 = vrot.slane %v1139, 7
      %v1149 = vrot.slane %v1140, 7
      %v1150 = vrot.slane %v1141, 7
      %v1151 = vlaneseq
      %v1152 = vshrl.u32 %v1151, 7
      %vm1153 = vcmp.lt.s32.totalorder %v1152, 1
      %v1154 = vsel %vm1153, %v1149, %v1150
      %v1155 = vsel %vm1153, %v1148, %v1149
      %v1156 = vsel %vm1153, %v1147, %v1148
      %v1157 = vsel %vm1153, %v1146, %v1147
      %v1158 = vsel %vm1153, %v1145, %v1146
      %v1159 = vsel %vm1153, %v1144, %v1145
      %v1160 = vsel %vm1153, %v1143, %v1144
      %v1161 = vsel %vm1153, %v1150, %v1143
      %1163 = vset.pattern.permute.xlu0 0
      %1164 = vperm.xlu0 %1163, %v649
      %v1165 = vpop.permute.xlu0 %1164
      %1168 = vset.pattern.permute.xlu0 0
      %1169 = vperm.xlu0 %1168, %v650
      %v1170 = vpop.permute.xlu0 %1169
      %1173 = vset.pattern.permute.xlu0 0
      %1174 = vperm.xlu0 %1173, %v651
      %v1175 = vpop.permute.xlu0 %1174
      %1178 = vset.pattern.permute.xlu0 0
      %1179 = vperm.xlu0 %1178, %v652
      %v1180 = vpop.permute.xlu0 %1179
      %1183 = vset.pattern.permute.xlu0 0
      %1184 = vperm.xlu0 %1183, %v653
      %v1185 = vpop.permute.xlu0 %1184
      %1188 = vset.pattern.permute.xlu0 0
      %1189 = vperm.xlu0 %1188, %v654
      %v1190 = vpop.permute.xlu0 %1189
      %1193 = vset.pattern.permute.xlu0 0
      %1194 = vperm.xlu0 %1193, %v655
      %v1195 = vpop.permute.xlu0 %1194
      %1198 = vset.pattern.permute.xlu0 0
      %1199 = vperm.xlu0 %1198, %v656
      %v1200 = vpop.permute.xlu0 %1199
      %v1202 = vmul.f32 %v1161, %v1165
      %v1203 = vmul.f32 %v1160, %v1170
      %v1204 = vmul.f32 %v1159, %v1175
      %v1205 = vmul.f32 %v1158, %v1180
      %v1206 = vmul.f32 %v1157, %v1185
      %v1207 = vmul.f32 %v1156, %v1190
      %v1208 = vmul.f32 %v1155, %v1195
      %v1209 = vmul.f32 %v1154, %v1200
      %v1210 = vrot.slane %v1134, 1
      %v1211 = vrot.slane %v1135, 1
      %v1212 = vrot.slane %v1136, 1
      %v1213 = vrot.slane %v1137, 1
      %v1214 = vrot.slane %v1138, 1
      %v1215 = vrot.slane %v1139, 1
      %v1216 = vrot.slane %v1140, 1
      %v1217 = vrot.slane %v1141, 1
      %vm1218 = vcmp.lt.s32.totalorder %v1152, 7
      %v1219 = vsel %vm1218, %v1216, %v1217
      %v1220 = vsel %vm1218, %v1215, %v1216
      %v1221 = vsel %vm1218, %v1214, %v1215
      %v1222 = vsel %vm1218, %v1213, %v1214
      %v1223 = vsel %vm1218, %v1212, %v1213
      %v1224 = vsel %vm1218, %v1211, %v1212
      %v1225 = vsel %vm1218, %v1210, %v1211
      %v1226 = vsel %vm1218, %v1217, %v1210
      %1228 = vset.pattern.permute.xlu0 0
      %1229 = vperm.xlu0 %1228, %v657
      %v1230 = vpop.permute.xlu0 %1229
      %1233 = vset.pattern.permute.xlu0 0
      %1234 = vperm.xlu0 %1233, %v658
      %v1235 = vpop.permute.xlu0 %1234
      %1238 = vset.pattern.permute.xlu0 0
      %1239 = vperm.xlu0 %1238, %v659
      %v1240 = vpop.permute.xlu0 %1239
      %1243 = vset.pattern.permute.xlu0 0
      %1244 = vperm.xlu0 %1243, %v660
      %v1245 = vpop.permute.xlu0 %1244
      %1248 = vset.pattern.permute.xlu0 0
      %1249 = vperm.xlu0 %1248, %v661
      %v1250 = vpop.permute.xlu0 %1249
      %1253 = vset.pattern.permute.xlu0 0
      %1254 = vperm.xlu0 %1253, %v662
      %v1255 = vpop.permute.xlu0 %1254
      %1258 = vset.pattern.permute.xlu0 0
      %1259 = vperm.xlu0 %1258, %v663
      %v1260 = vpop.permute.xlu0 %1259
      %1263 = vset.pattern.permute.xlu0 0
      %1264 = vperm.xlu0 %1263, %v664
      %v1265 = vpop.permute.xlu0 %1264
      %v1267 = vmul.f32 %v1225, %v1230
      %v1268 = vmul.f32 %v1224, %v1235
      %v1269 = vmul.f32 %v1223, %v1240
      %v1270 = vmul.f32 %v1222, %v1245
      %v1271 = vmul.f32 %v1221, %v1250
      %v1272 = vmul.f32 %v1220, %v1255
      %v1273 = vmul.f32 %v1219, %v1260
      %v1274 = vmul.f32 %v1226, %v1265
      %1283 = vrot.lane.b32.xlu0 %v1134, 32
      %v1284 = vpop.permute.xlu0 %1283
      %1285 = vrot.lane.b32.xlu0 %v1135, 32
      %v1286 = vpop.permute.xlu0 %1285
      %1287 = vrot.lane.b32.xlu0 %v1136, 32
      %v1288 = vpop.permute.xlu0 %1287
      %1289 = vrot.lane.b32.xlu0 %v1137, 32
      %v1290 = vpop.permute.xlu0 %1289
      %1291 = vrot.lane.b32.xlu0 %v1138, 32
      %v1292 = vpop.permute.xlu0 %1291
      %1293 = vrot.lane.b32.xlu0 %v1139, 32
      %v1294 = vpop.permute.xlu0 %1293
      %1295 = vrot.lane.b32.xlu0 %v1140, 32
      %v1296 = vpop.permute.xlu0 %1295
      %1297 = vrot.lane.b32.xlu0 %v1141, 32
      %v1298 = vpop.permute.xlu0 %1297
      %1315 = vrot.lane.b32.xlu0 %v1267, 64
      %v1316 = vpop.permute.xlu0 %1315
      %1317 = vrot.lane.b32.xlu0 %v1268, 64
      %v1318 = vpop.permute.xlu0 %1317
      %1319 = vrot.lane.b32.xlu0 %v1269, 64
      %v1320 = vpop.permute.xlu0 %1319
      %1321 = vrot.lane.b32.xlu0 %v1270, 64
      %v1322 = vpop.permute.xlu0 %1321
      %1323 = vrot.lane.b32.xlu0 %v1271, 64
      %v1324 = vpop.permute.xlu0 %1323
      %1325 = vrot.lane.b32.xlu0 %v1272, 64
      %v1326 = vpop.permute.xlu0 %1325
      %1327 = vrot.lane.b32.xlu0 %v1273, 64
      %v1328 = vpop.permute.xlu0 %1327
      %1329 = vrot.lane.b32.xlu0 %v1274, 64
      %v1330 = vpop.permute.xlu0 %1329
      %vm1339 = vcmask 261120
      %v1340 = vsel %vm1339, %v1202, %v1284
      %v1341 = vsel %vm1339, %v1203, %v1286
      %v1342 = vsel %vm1339, %v1204, %v1288
      %v1343 = vsel %vm1339, %v1205, %v1290
      %v1344 = vsel %vm1339, %v1206, %v1292
      %v1345 = vsel %vm1339, %v1207, %v1294
      %v1346 = vsel %vm1339, %v1208, %v1296
      %v1347 = vsel %vm1339, %v1209, %v1298
      %vm1348 = vcmask 523264
      %v1349 = vsel %vm1348, %v1340, %v1316
      %v1350 = vsel %vm1348, %v1341, %v1318
      %v1351 = vsel %vm1348, %v1342, %v1320
      %v1352 = vsel %vm1348, %v1343, %v1322
      %v1353 = vsel %vm1348, %v1344, %v1324
      %v1354 = vsel %vm1348, %v1345, %v1326
      %v1355 = vsel %vm1348, %v1346, %v1328
      %v1356 = vsel %vm1348, %v1347, %v1330
      %v1357 = vpack.c.bf16 %v1349, %v1349
      %v1358 = vpack.c.bf16 %v1350, %v1350
      %v1359 = vpack.c.bf16 %v1351, %v1351
      %v1360 = vpack.c.bf16 %v1352, %v1352
      %v1361 = vpack.c.bf16 %v1353, %v1353
      %v1362 = vpack.c.bf16 %v1354, %v1354
      %v1363 = vpack.c.bf16 %v1355, %v1355
      %v1364 = vpack.c.bf16 %v1356, %v1356
      %1365 = vst.msk [vmem:[#allocation2 + $0x8] sm:$0xf] %vm631, %v1357
      %1366 = vst.msk [vmem:[#allocation2 + $0xc] sm:$0xf] %vm631, %v1358
      %1367 = vst.msk [vmem:[#allocation2 + $0x10] sm:$0xf] %vm631, %v1359
      %1368 = vst.msk [vmem:[#allocation2 + $0x14] sm:$0xf] %vm631, %v1360
      %1369 = vst.msk [vmem:[#allocation2 + $0x18] sm:$0xf] %vm631, %v1361
      %1370 = vst.msk [vmem:[#allocation2 + $0x1c] sm:$0xf] %vm631, %v1362
      %1371 = vst.msk [vmem:[#allocation2 + $0x20] sm:$0xf] %vm631, %v1363
      %1372 = vst.msk [vmem:[#allocation2 + $0x24] sm:$0xf] %vm631, %v1364
      %s1373 = scalar_lea.vmem %s11, 48
      %v1374 = vld [vmem:[%s1373] sm:$0xf]
      %v1375 = vld [vmem:[%s1373 + $0x4] sm:$0xf]
      %v1376 = vld [vmem:[%s1373 + $0x8] sm:$0xf]
      %v1377 = vld [vmem:[%s1373 + $0xc] sm:$0xf]
      %v1378 = vld [vmem:[%s1373 + $0x10] sm:$0xf]
      %v1379 = vld [vmem:[%s1373 + $0x14] sm:$0xf]
      %v1380 = vld [vmem:[%s1373 + $0x18] sm:$0xf]
      %v1381 = vld [vmem:[%s1373 + $0x1c] sm:$0xf]
      %v1382 = vld [vmem:[%s1373 + $0x20] sm:$0xf]
      %v1383 = vld [vmem:[%s1373 + $0x24] sm:$0xf]
      %v1384 = vld [vmem:[%s1373 + $0x28] sm:$0xf]
      %v1385 = vld [vmem:[%s1373 + $0x2c] sm:$0xf]
      %v1386 = vld [vmem:[#allocation2 + $0x4] sm:$0xf]
      %v1387 = vld [vmem:[#allocation2 + $0x8] sm:$0xf]
      %v1388 = vld [vmem:[#allocation2 + $0xc] sm:$0xf]
      %v1389 = vld [vmem:[#allocation2 + $0x10] sm:$0xf]
      %v1390 = vld [vmem:[#allocation2 + $0x14] sm:$0xf]
      %v1391 = vld [vmem:[#allocation2 + $0x18] sm:$0xf]
      %v1392 = vld [vmem:[#allocation2 + $0x1c] sm:$0xf]
      %v1393 = vld [vmem:[#allocation2 + $0x20] sm:$0xf]
      %v1394 = vld [vmem:[%s11] sm:$0xf]
      %v1395 = vld [vmem:[%s11 + $0x4] sm:$0xf]
      %v1396 = vld [vmem:[%s11 + $0x8] sm:$0xf]
      %v1397 = vld [vmem:[%s11 + $0xc] sm:$0xf]
      %v1398 = vld [vmem:[%s11 + $0x10] sm:$0xf]
      %v1399 = vld [vmem:[%s11 + $0x14] sm:$0xf]
      %v1400 = vld [vmem:[%s11 + $0x18] sm:$0xf]
      %v1401 = vld [vmem:[%s11 + $0x1c] sm:$0xf]
      %v1402 = vld [vmem:[%s11 + $0x20] sm:$0xf]
      %v1403 = vld [vmem:[%s11 + $0x24] sm:$0xf]
      %v1404 = vld [vmem:[%s11 + $0x28] sm:$0xf]
      %v1405 = vld [vmem:[%s11 + $0x2c] sm:$0xf]
      %v1414 = vunpack.c.l.b16 %v1386
      %v1415 = vunpack.c.l.b16 %v1387
      %v1416 = vunpack.c.l.b16 %v1388
      %v1417 = vunpack.c.l.b16 %v1389
      %v1418 = vunpack.c.l.b16 %v1390
      %v1419 = vunpack.c.l.b16 %v1391
      %v1420 = vunpack.c.l.b16 %v1392
      %v1421 = vunpack.c.l.b16 %v1393
      %v1422 = vpack.c.b16 %v1415, %v1414
      %v1423 = vpack.c.b16 %v1417, %v1416
      %v1424 = vpack.c.b16 %v1419, %v1418
      %v1425 = vpack.c.b16 %v1421, %v1420
      %v1438 = vunpack.c.l.b16 %v1394
      %v1439 = vunpack.c.l.b16 %v1395
      %v1440 = vunpack.c.l.b16 %v1396
      %v1441 = vunpack.c.l.b16 %v1397
      %v1442 = vunpack.c.l.b16 %v1398
      %v1443 = vunpack.c.l.b16 %v1399
      %v1444 = vunpack.c.l.b16 %v1400
      %v1445 = vunpack.c.l.b16 %v1401
      %v1446 = vunpack.c.l.b16 %v1402
      %v1447 = vunpack.c.l.b16 %v1403
      %v1448 = vunpack.c.l.b16 %v1404
      %v1449 = vunpack.c.l.b16 %v1405
      %v1450 = vpack.c.b16 %v1439, %v1438
      %v1451 = vpack.c.b16 %v1441, %v1440
      %v1452 = vpack.c.b16 %v1443, %v1442
      %v1453 = vpack.c.b16 %v1445, %v1444
      %v1454 = vpack.c.b16 %v1447, %v1446
      %v1455 = vpack.c.b16 %v1449, %v1448
      %vm1462 = vcmask 785408
      %v1464 = vsel %vm1462, %v1422, 0
      %v1467 = vsel %vm1462, %v1423, 0
      %v1470 = vsel %vm1462, %v1424, 0
      %v1473 = vsel %vm1462, %v1425, 0
      %1475 = vmatpush.bf16.msra.mxu0 0
      %1476 = vmatpush.bf16.msra.mxu0 0
      %1477 = vmatpush.bf16.msra.mxu0 %v1455
      %1478 = vmatpush.bf16.msra.mxu0 %v1454
      %1479 = vmatpush.bf16.msra.mxu0 %v1453
      %1480 = vmatpush.bf16.msra.mxu0 %v1452
      %1481 = vmatpush.bf16.msra.mxu0 %v1451
      %1482 = vmatpush.bf16.msra.mxu0 %v1450
      %1483 = vmatmul.bf16.gmra.mxu0 %v1464
      %v1484 = vpop.f32.mrf.mxu0
      %v1485 = vadd.f32 0.0, %v1484
      %v1486 = vpop.f32.mrf.mxu0
      %v1487 = vadd.f32 0.0, %v1486
      %1488 = vmatmul.bf16.gmra.mxu0 %v1467
      %v1489 = vpop.f32.mrf.mxu0
      %v1490 = vadd.f32 0.0, %v1489
      %v1491 = vpop.f32.mrf.mxu0
      %v1492 = vadd.f32 0.0, %v1491
      %1493 = vmatmul.bf16.gmra.mxu0 %v1470
      %v1494 = vpop.f32.mrf.mxu0
      %v1495 = vadd.f32 0.0, %v1494
      %v1496 = vpop.f32.mrf.mxu0
      %v1497 = vadd.f32 0.0, %v1496
      %1498 = vmatmul.bf16.gmra.mxu0 %v1473
      %v1499 = vpop.f32.mrf.mxu0
      %v1500 = vadd.f32 0.0, %v1499
      %v1501 = vpop.f32.mrf.mxu0
      %v1502 = vadd.f32 0.0, %v1501
      %1503 = vdwg.mxu0
      %v1512 = vunpack.c.l.b16 %v1357
      %v1513 = vunpack.c.l.b16 %v1358
      %v1514 = vunpack.c.l.b16 %v1359
      %v1515 = vunpack.c.l.b16 %v1360
      %v1516 = vunpack.c.l.b16 %v1361
      %v1517 = vunpack.c.l.b16 %v1362
      %v1518 = vunpack.c.l.b16 %v1363
      %v1519 = vunpack.c.l.b16 %v1364
      %v1520 = vpack.c.b16 %v1513, %v1512
      %v1521 = vpack.c.b16 %v1515, %v1514
      %v1522 = vpack.c.b16 %v1517, %v1516
      %v1523 = vpack.c.b16 %v1519, %v1518
      %v1536 = vunpack.c.l.b16 %v1374
      %v1537 = vunpack.c.l.b16 %v1375
      %v1538 = vunpack.c.l.b16 %v1376
      %v1539 = vunpack.c.l.b16 %v1377
      %v1540 = vunpack.c.l.b16 %v1378
      %v1541 = vunpack.c.l.b16 %v1379
      %v1542 = vunpack.c.l.b16 %v1380
      %v1543 = vunpack.c.l.b16 %v1381
      %v1544 = vunpack.c.l.b16 %v1382
      %v1545 = vunpack.c.l.b16 %v1383
      %v1546 = vunpack.c.l.b16 %v1384
      %v1547 = vunpack.c.l.b16 %v1385
      %v1548 = vpack.c.b16 %v1537, %v1536
      %v1549 = vpack.c.b16 %v1539, %v1538
      %v1550 = vpack.c.b16 %v1541, %v1540
      %v1551 = vpack.c.b16 %v1543, %v1542
      %v1552 = vpack.c.b16 %v1545, %v1544
      %v1553 = vpack.c.b16 %v1547, %v1546
      %v1561 = vsel %vm1462, %v1520, 0
      %v1564 = vsel %vm1462, %v1521, 0
      %v1567 = vsel %vm1462, %v1522, 0
      %v1570 = vsel %vm1462, %v1523, 0
      %1572 = vmatpush.bf16.msra.mxu0 0
      %1573 = vmatpush.bf16.msra.mxu0 0
      %1574 = vmatpush.bf16.msra.mxu0 %v1553
      %1575 = vmatpush.bf16.msra.mxu0 %v1552
      %1576 = vmatpush.bf16.msra.mxu0 %v1551
      %1577 = vmatpush.bf16.msra.mxu0 %v1550
      %1578 = vmatpush.bf16.msra.mxu0 %v1549
      %1579 = vmatpush.bf16.msra.mxu0 %v1548
      %1580 = vmatmul.bf16.gmra.mxu0 %v1561
      %v1581 = vpop.f32.mrf.mxu0
      %v1582 = vadd.f32 %v1485, %v1581
      %v1583 = vpop.f32.mrf.mxu0
      %v1584 = vadd.f32 %v1487, %v1583
      %1585 = vmatmul.bf16.gmra.mxu0 %v1564
      %v1586 = vpop.f32.mrf.mxu0
      %v1587 = vadd.f32 %v1490, %v1586
      %v1588 = vpop.f32.mrf.mxu0
      %v1589 = vadd.f32 %v1492, %v1588
      %1590 = vmatmul.bf16.gmra.mxu0 %v1567
      %v1591 = vpop.f32.mrf.mxu0
      %v1592 = vadd.f32 %v1495, %v1591
      %v1593 = vpop.f32.mrf.mxu0
      %v1594 = vadd.f32 %v1497, %v1593
      %1595 = vmatmul.bf16.gmra.mxu0 %v1570
      %v1596 = vpop.f32.mrf.mxu0
      %v1597 = vadd.f32 %v1500, %v1596
      %v1598 = vpop.f32.mrf.mxu0
      %v1599 = vadd.f32 %v1502, %v1598
      %1600 = vdwg.mxu0
      %v1601 = vld [vmem:[#allocation2 + $0xc] sm:$0xf]
      %v1602 = vld [vmem:[#allocation2 + $0x10] sm:$0xf]
      %v1603 = vld [vmem:[#allocation2 + $0x14] sm:$0xf]
      %v1604 = vld [vmem:[#allocation2 + $0x18] sm:$0xf]
      %v1605 = vld [vmem:[#allocation2 + $0x1c] sm:$0xf]
      %v1606 = vld [vmem:[#allocation2 + $0x20] sm:$0xf]
      %v1607 = vld [vmem:[#allocation2 + $0x24] sm:$0xf]
      %v1608 = vld [vmem:[#allocation2 + $0x28] sm:$0xf]
      %s1609 = scalar_lea.vmem %s11, 96
      %v1610 = vld [vmem:[%s1609] sm:$0xf]
      %v1611 = vld [vmem:[%s1609 + $0x4] sm:$0xf]
      %v1612 = vld [vmem:[%s1609 + $0x8] sm:$0xf]
      %v1613 = vld [vmem:[%s1609 + $0xc] sm:$0xf]
      %v1614 = vld [vmem:[%s1609 + $0x10] sm:$0xf]
      %v1615 = vld [vmem:[%s1609 + $0x14] sm:$0xf]
      %v1616 = vld [vmem:[%s1609 + $0x18] sm:$0xf]
      %v1617 = vld [vmem:[%s1609 + $0x1c] sm:$0xf]
      %v1618 = vld [vmem:[%s1609 + $0x20] sm:$0xf]
      %v1619 = vld [vmem:[%s1609 + $0x24] sm:$0xf]
      %v1620 = vld [vmem:[%s1609 + $0x28] sm:$0xf]
      %v1621 = vld [vmem:[%s1609 + $0x2c] sm:$0xf]
      %v1630 = vunpack.c.l.b16 %v1601
      %v1631 = vunpack.c.l.b16 %v1602
      %v1632 = vunpack.c.l.b16 %v1603
      %v1633 = vunpack.c.l.b16 %v1604
      %v1634 = vunpack.c.l.b16 %v1605
      %v1635 = vunpack.c.l.b16 %v1606
      %v1636 = vunpack.c.l.b16 %v1607
      %v1637 = vunpack.c.l.b16 %v1608
      %v1638 = vpack.c.b16 %v1631, %v1630
      %v1639 = vpack.c.b16 %v1633, %v1632
      %v1640 = vpack.c.b16 %v1635, %v1634
      %v1641 = vpack.c.b16 %v1637, %v1636
      %v1654 = vunpack.c.l.b16 %v1610
      %v1655 = vunpack.c.l.b16 %v1611
      %v1656 = vunpack.c.l.b16 %v1612
      %v1657 = vunpack.c.l.b16 %v1613
      %v1658 = vunpack.c.l.b16 %v1614
      %v1659 = vunpack.c.l.b16 %v1615
      %v1660 = vunpack.c.l.b16 %v1616
      %v1661 = vunpack.c.l.b16 %v1617
      %v1662 = vunpack.c.l.b16 %v1618
      %v1663 = vunpack.c.l.b16 %v1619
      %v1664 = vunpack.c.l.b16 %v1620
      %v1665 = vunpack.c.l.b16 %v1621
      %v1666 = vpack.c.b16 %v1655, %v1654
      %v1667 = vpack.c.b16 %v1657, %v1656
      %v1668 = vpack.c.b16 %v1659, %v1658
      %v1669 = vpack.c.b16 %v1661, %v1660
      %v1670 = vpack.c.b16 %v1663, %v1662
      %v1671 = vpack.c.b16 %v1665, %v1664
      %v1679 = vsel %vm1462, %v1638, 0
      %v1682 = vsel %vm1462, %v1639, 0
      %v1685 = vsel %vm1462, %v1640, 0
      %v1688 = vsel %vm1462, %v1641, 0
      %1690 = vmatpush.bf16.msra.mxu0 0
      %1691 = vmatpush.bf16.msra.mxu0 0
      %1692 = vmatpush.bf16.msra.mxu0 %v1671
      %1693 = vmatpush.bf16.msra.mxu0 %v1670
      %1694 = vmatpush.bf16.msra.mxu0 %v1669
      %1695 = vmatpush.bf16.msra.mxu0 %v1668
      %1696 = vmatpush.bf16.msra.mxu0 %v1667
      %1697 = vmatpush.bf16.msra.mxu0 %v1666
      %1698 = vmatmul.bf16.gmra.mxu0 %v1679
      %v1699 = vpop.f32.mrf.mxu0
      %v1700 = vadd.f32 0.0, %v1699
      %v1701 = vpop.f32.mrf.mxu0
      %v1702 = vadd.f32 0.0, %v1701
      %1703 = vmatmul.bf16.gmra.mxu0 %v1682
      %v1704 = vpop.f32.mrf.mxu0
      %v1705 = vadd.f32 0.0, %v1704
      %v1706 = vpop.f32.mrf.mxu0
      %v1707 = vadd.f32 0.0, %v1706
      %1708 = vmatmul.bf16.gmra.mxu0 %v1685
      %v1709 = vpop.f32.mrf.mxu0
      %v1710 = vadd.f32 0.0, %v1709
      %v1711 = vpop.f32.mrf.mxu0
      %v1712 = vadd.f32 0.0, %v1711
      %1713 = vmatmul.bf16.gmra.mxu0 %v1688
      %v1714 = vpop.f32.mrf.mxu0
      %v1715 = vadd.f32 0.0, %v1714
      %v1716 = vpop.f32.mrf.mxu0
      %v1717 = vadd.f32 0.0, %v1716
      %1718 = vdwg.mxu0
      %v1719 = vadd.f32 %v1582, %v1700
      %v1720 = vadd.f32 %v1584, %v1702
      %v1721 = vadd.f32 %v1587, %v1705
      %v1722 = vadd.f32 %v1589, %v1707
      %v1723 = vadd.f32 %v1592, %v1710
      %v1724 = vadd.f32 %v1594, %v1712
      %v1725 = vadd.f32 %v1597, %v1715
      %v1726 = vadd.f32 %v1599, %v1717
      %v1727 = vld [vmem:[%s12] sm:$0xff]
      %v1728 = vld [vmem:[%s12 + $0x8] sm:$0xf]
      %v1729 = vld [vmem:[%s12 + $0xc] sm:$0xff]
      %v1730 = vld [vmem:[%s12 + $0x14] sm:$0xf]
      %v1731 = vld [vmem:[%s12 + $0x18] sm:$0xff]
      %v1732 = vld [vmem:[%s12 + $0x20] sm:$0xf]
      %v1733 = vld [vmem:[%s12 + $0x24] sm:$0xff]
      %v1734 = vld [vmem:[%s12 + $0x2c] sm:$0xf]
      %v1743 = vunpack.c.l.b16 %v1727
      %v1744 = vunpack.c.h.b16 %v1727
      %v1745 = vunpack.c.l.b16 %v1728
      %v1746 = vunpack.c.l.b16 %v1729
      %v1747 = vunpack.c.h.b16 %v1729
      %v1748 = vunpack.c.l.b16 %v1730
      %v1749 = vunpack.c.l.b16 %v1731
      %v1750 = vunpack.c.h.b16 %v1731
      %v1751 = vunpack.c.l.b16 %v1732
      %v1752 = vunpack.c.l.b16 %v1733
      %v1753 = vunpack.c.h.b16 %v1733
      %v1754 = vunpack.c.l.b16 %v1734
      %v1755 = vpack.c.b16 %v1746, %v1743
      %v1756 = vpack.c.b16 %v1747, %v1744
      %v1757 = vpack.c.b16 %v1748, %v1745
      %v1758 = vpack.c.b16 %v1752, %v1749
      %v1759 = vpack.c.b16 %v1753, %v1750
      %v1760 = vpack.c.b16 %v1754, %v1751
      %v1768 = vsel %vm1339, %v1142, 0
      %1770 = vmatpush.bf16.msra.mxu0 0
      %1771 = vmatpush.bf16.msra.mxu0 0
      %1772 = vmatpush.bf16.msra.mxu0 0
      %1773 = vmatpush.bf16.msra.mxu0 0
      %1774 = vmatpush.bf16.msra.mxu0 0
      %1775 = vmatpush.bf16.msra.mxu0 0
      %1776 = vmatpush.bf16.msra.mxu0 %v1758
      %1777 = vmatpush.bf16.msra.mxu0 %v1755
      %1778 = vmatmul.bf16.gmra.mxu0 %v1768
      %v1779 = vpop.f32.mrf.mxu0
      %v1780 = vadd.f32 0.0, %v1779
      %v1781 = vpop.f32.mrf.mxu0
      %1782 = vdwg.mxu0
      %1783 = vmatpush.bf16.msra.mxu0 0
      %1784 = vmatpush.bf16.msra.mxu0 0
      %1785 = vmatpush.bf16.msra.mxu0 0
      %1786 = vmatpush.bf16.msra.mxu0 0
      %1787 = vmatpush.bf16.msra.mxu0 0
      %1788 = vmatpush.bf16.msra.mxu0 0
      %1789 = vmatpush.bf16.msra.mxu0 %v1759
      %1790 = vmatpush.bf16.msra.mxu0 %v1756
      %1791 = vmatmul.bf16.gmra.mxu0 %v1768
      %v1792 = vpop.f32.mrf.mxu0
      %v1793 = vadd.f32 0.0, %v1792
      %v1794 = vpop.f32.mrf.mxu0
      %1795 = vdwg.mxu0
      %1796 = vmatpush.bf16.msra.mxu0 0
      %1797 = vmatpush.bf16.msra.mxu0 0
      %1798 = vmatpush.bf16.msra.mxu0 0
      %1799 = vmatpush.bf16.msra.mxu0 0
      %1800 = vmatpush.bf16.msra.mxu0 0
      %1801 = vmatpush.bf16.msra.mxu0 0
      %1802 = vmatpush.bf16.msra.mxu0 %v1760
      %1803 = vmatpush.bf16.msra.mxu0 %v1757
      %1804 = vmatmul.bf16.gmra.mxu0 %v1768
      %v1805 = vpop.f32.mrf.mxu0
      %v1806 = vadd.f32 0.0, %v1805
      %v1807 = vpop.f32.mrf.mxu0
      %1808 = vdwg.mxu0
      %v1809 = vld [vmem:[%s13] sm:$0x1]
      %1811 = vset.pattern.permute.xlu0 0
      %1812 = vperm.xlu0 %1811, %v641
      %v1813 = vpop.permute.xlu0 %1812
      %1816 = vset.pattern.permute.xlu0 0
      %1817 = vperm.xlu0 %1816, %v642
      %v1818 = vpop.permute.xlu0 %1817
      %1821 = vset.pattern.permute.xlu0 0
      %1822 = vperm.xlu0 %1821, %v643
      %v1823 = vpop.permute.xlu0 %1822
      %1826 = vset.pattern.permute.xlu0 0
      %1827 = vperm.xlu0 %1826, %v644
      %v1828 = vpop.permute.xlu0 %1827
      %1831 = vset.pattern.permute.xlu0 0
      %1832 = vperm.xlu0 %1831, %v645
      %v1833 = vpop.permute.xlu0 %1832
      %1836 = vset.pattern.permute.xlu0 0
      %1837 = vperm.xlu0 %1836, %v646
      %v1838 = vpop.permute.xlu0 %1837
      %1841 = vset.pattern.permute.xlu0 0
      %1842 = vperm.xlu0 %1841, %v647
      %v1843 = vpop.permute.xlu0 %1842
      %1846 = vset.pattern.permute.xlu0 0
      %1847 = vperm.xlu0 %1846, %v648
      %v1848 = vpop.permute.xlu0 %1847
      %v1850 = vperm.slane %v1780, 0
      %v1851 = vmul.f32 %v1813, %v1850
      %v1852 = vmul.f32 %v1818, %v1850
      %v1853 = vmul.f32 %v1823, %v1850
      %v1854 = vmul.f32 %v1828, %v1850
      %v1855 = vmul.f32 %v1833, %v1850
      %v1856 = vmul.f32 %v1838, %v1850
      %v1857 = vmul.f32 %v1843, %v1850
      %v1858 = vmul.f32 %v1848, %v1850
      %v1860 = vperm.slane %v1809, 0
      %v1862 = vadd.f32 %v1860, %v1851
      %v1863 = vadd.f32 %v1860, %v1852
      %v1864 = vadd.f32 %v1860, %v1853
      %v1865 = vadd.f32 %v1860, %v1854
      %v1866 = vadd.f32 %v1860, %v1855
      %v1867 = vadd.f32 %v1860, %v1856
      %v1868 = vadd.f32 %v1860, %v1857
      %v1869 = vadd.f32 %v1860, %v1858
      %1870 = vset.pattern.permute.xlu0 1
      %1871 = vperm.xlu0 %1870, %v641
      %v1872 = vpop.permute.xlu0 %1871
      %1874 = vset.pattern.permute.xlu0 1
      %1875 = vperm.xlu0 %1874, %v642
      %v1876 = vpop.permute.xlu0 %1875
      %1878 = vset.pattern.permute.xlu0 1
      %1879 = vperm.xlu0 %1878, %v643
      %v1880 = vpop.permute.xlu0 %1879
      %1882 = vset.pattern.permute.xlu0 1
      %1883 = vperm.xlu0 %1882, %v644
      %v1884 = vpop.permute.xlu0 %1883
      %1886 = vset.pattern.permute.xlu0 1
      %1887 = vperm.xlu0 %1886, %v645
      %v1888 = vpop.permute.xlu0 %1887
      %1890 = vset.pattern.permute.xlu0 1
      %1891 = vperm.xlu0 %1890, %v646
      %v1892 = vpop.permute.xlu0 %1891
      %1894 = vset.pattern.permute.xlu0 1
      %1895 = vperm.xlu0 %1894, %v647
      %v1896 = vpop.permute.xlu0 %1895
      %1898 = vset.pattern.permute.xlu0 1
      %1899 = vperm.xlu0 %1898, %v648
      %v1900 = vpop.permute.xlu0 %1899
      %v1902 = vmul.f32 %v1872, %v1850
      %v1903 = vmul.f32 %v1876, %v1850
      %v1904 = vmul.f32 %v1880, %v1850
      %v1905 = vmul.f32 %v1884, %v1850
      %v1906 = vmul.f32 %v1888, %v1850
      %v1907 = vmul.f32 %v1892, %v1850
      %v1908 = vmul.f32 %v1896, %v1850
      %v1909 = vmul.f32 %v1900, %v1850
      %1918 = vrot.lane.b32.xlu0 %v1902, 96
      %v1919 = vpop.permute.xlu0 %1918
      %1920 = vrot.lane.b32.xlu0 %v1903, 96
      %v1921 = vpop.permute.xlu0 %1920
      %1922 = vrot.lane.b32.xlu0 %v1904, 96
      %v1923 = vpop.permute.xlu0 %1922
      %1924 = vrot.lane.b32.xlu0 %v1905, 96
      %v1925 = vpop.permute.xlu0 %1924
      %1926 = vrot.lane.b32.xlu0 %v1906, 96
      %v1927 = vpop.permute.xlu0 %1926
      %1928 = vrot.lane.b32.xlu0 %v1907, 96
      %v1929 = vpop.permute.xlu0 %1928
      %1930 = vrot.lane.b32.xlu0 %v1908, 96
      %v1931 = vpop.permute.xlu0 %1930
      %1932 = vrot.lane.b32.xlu0 %v1909, 96
      %v1933 = vpop.permute.xlu0 %1932
      %v1942 = vadd.f32 %v1862, %v1919
      %v1943 = vadd.f32 %v1863, %v1921
      %v1944 = vadd.f32 %v1864, %v1923
      %v1945 = vadd.f32 %v1865, %v1925
      %v1946 = vadd.f32 %v1866, %v1927
      %v1947 = vadd.f32 %v1867, %v1929
      %v1948 = vadd.f32 %v1868, %v1931
      %v1949 = vadd.f32 %v1869, %v1933
      %1950 = vset.pattern.permute.xlu0 2
      %1951 = vperm.xlu0 %1950, %v641
      %v1952 = vpop.permute.xlu0 %1951
      %1954 = vset.pattern.permute.xlu0 2
      %1955 = vperm.xlu0 %1954, %v642
      %v1956 = vpop.permute.xlu0 %1955
      %1958 = vset.pattern.permute.xlu0 2
      %1959 = vperm.xlu0 %1958, %v643
      %v1960 = vpop.permute.xlu0 %1959
      %1962 = vset.pattern.permute.xlu0 2
      %1963 = vperm.xlu0 %1962, %v644
      %v1964 = vpop.permute.xlu0 %1963
      %1966 = vset.pattern.permute.xlu0 2
      %1967 = vperm.xlu0 %1966, %v645
      %v1968 = vpop.permute.xlu0 %1967
      %1970 = vset.pattern.permute.xlu0 2
      %1971 = vperm.xlu0 %1970, %v646
      %v1972 = vpop.permute.xlu0 %1971
      %1974 = vset.pattern.permute.xlu0 2
      %1975 = vperm.xlu0 %1974, %v647
      %v1976 = vpop.permute.xlu0 %1975
      %1978 = vset.pattern.permute.xlu0 2
      %1979 = vperm.xlu0 %1978, %v648
      %v1980 = vpop.permute.xlu0 %1979
      %v1982 = vmul.f32 %v1952, %v1850
      %v1983 = vmul.f32 %v1956, %v1850
      %v1984 = vmul.f32 %v1960, %v1850
      %v1985 = vmul.f32 %v1964, %v1850
      %v1986 = vmul.f32 %v1968, %v1850
      %v1987 = vmul.f32 %v1972, %v1850
      %v1988 = vmul.f32 %v1976, %v1850
      %v1989 = vmul.f32 %v1980, %v1850
      %1998 = vrot.lane.b32.xlu0 %v1982, 64
      %v1999 = vpop.permute.xlu0 %1998
      %2000 = vrot.lane.b32.xlu0 %v1983, 64
      %v2001 = vpop.permute.xlu0 %2000
      %2002 = vrot.lane.b32.xlu0 %v1984, 64
      %v2003 = vpop.permute.xlu0 %2002
      %2004 = vrot.lane.b32.xlu0 %v1985, 64
      %v2005 = vpop.permute.xlu0 %2004
      %2006 = vrot.lane.b32.xlu0 %v1986, 64
      %v2007 = vpop.permute.xlu0 %2006
      %2008 = vrot.lane.b32.xlu0 %v1987, 64
      %v2009 = vpop.permute.xlu0 %2008
      %2010 = vrot.lane.b32.xlu0 %v1988, 64
      %v2011 = vpop.permute.xlu0 %2010
      %2012 = vrot.lane.b32.xlu0 %v1989, 64
      %v2013 = vpop.permute.xlu0 %2012
      %v2022 = vadd.f32 %v1942, %v1999
      %v2023 = vadd.f32 %v1943, %v2001
      %v2024 = vadd.f32 %v1944, %v2003
      %v2025 = vadd.f32 %v1945, %v2005
      %v2026 = vadd.f32 %v1946, %v2007
      %v2027 = vadd.f32 %v1947, %v2009
      %v2028 = vadd.f32 %v1948, %v2011
      %v2029 = vadd.f32 %v1949, %v2013
      %2030 = vset.pattern.permute.xlu0 3
      %2031 = vperm.xlu0 %2030, %v641
      %v2032 = vpop.permute.xlu0 %2031
      %2034 = vset.pattern.permute.xlu0 3
      %2035 = vperm.xlu0 %2034, %v642
      %v2036 = vpop.permute.xlu0 %2035
      %2038 = vset.pattern.permute.xlu0 3
      %2039 = vperm.xlu0 %2038, %v643
      %v2040 = vpop.permute.xlu0 %2039
      %2042 = vset.pattern.permute.xlu0 3
      %2043 = vperm.xlu0 %2042, %v644
      %v2044 = vpop.permute.xlu0 %2043
      %2046 = vset.pattern.permute.xlu0 3
      %2047 = vperm.xlu0 %2046, %v645
      %v2048 = vpop.permute.xlu0 %2047
      %2050 = vset.pattern.permute.xlu0 3
      %2051 = vperm.xlu0 %2050, %v646
      %v2052 = vpop.permute.xlu0 %2051
      %2054 = vset.pattern.permute.xlu0 3
      %2055 = vperm.xlu0 %2054, %v647
      %v2056 = vpop.permute.xlu0 %2055
      %2058 = vset.pattern.permute.xlu0 3
      %2059 = vperm.xlu0 %2058, %v648
      %v2060 = vpop.permute.xlu0 %2059
      %v2062 = vmul.f32 %v2032, %v1850
      %v2063 = vmul.f32 %v2036, %v1850
      %v2064 = vmul.f32 %v2040, %v1850
      %v2065 = vmul.f32 %v2044, %v1850
      %v2066 = vmul.f32 %v2048, %v1850
      %v2067 = vmul.f32 %v2052, %v1850
      %v2068 = vmul.f32 %v2056, %v1850
      %v2069 = vmul.f32 %v2060, %v1850
      %2078 = vrot.lane.b32.xlu0 %v2062, 32
      %v2079 = vpop.permute.xlu0 %2078
      %2080 = vrot.lane.b32.xlu0 %v2063, 32
      %v2081 = vpop.permute.xlu0 %2080
      %2082 = vrot.lane.b32.xlu0 %v2064, 32
      %v2083 = vpop.permute.xlu0 %2082
      %2084 = vrot.lane.b32.xlu0 %v2065, 32
      %v2085 = vpop.permute.xlu0 %2084
      %2086 = vrot.lane.b32.xlu0 %v2066, 32
      %v2087 = vpop.permute.xlu0 %2086
      %2088 = vrot.lane.b32.xlu0 %v2067, 32
      %v2089 = vpop.permute.xlu0 %2088
      %2090 = vrot.lane.b32.xlu0 %v2068, 32
      %v2091 = vpop.permute.xlu0 %2090
      %2092 = vrot.lane.b32.xlu0 %v2069, 32
      %v2093 = vpop.permute.xlu0 %2092
      %v2102 = vadd.f32 %v2022, %v2079
      %v2103 = vadd.f32 %v2023, %v2081
      %v2104 = vadd.f32 %v2024, %v2083
      %v2105 = vadd.f32 %v2025, %v2085
      %v2106 = vadd.f32 %v2026, %v2087
      %v2107 = vadd.f32 %v2027, %v2089
      %v2108 = vadd.f32 %v2028, %v2091
      %v2109 = vadd.f32 %v2029, %v2093
      %2110 = vset.pattern.permute.xlu0 4
      %2111 = vperm.xlu0 %2110, %v641
      %v2112 = vpop.permute.xlu0 %2111
      %2114 = vset.pattern.permute.xlu0 4
      %2115 = vperm.xlu0 %2114, %v642
      %v2116 = vpop.permute.xlu0 %2115
      %2118 = vset.pattern.permute.xlu0 4
      %2119 = vperm.xlu0 %2118, %v643
      %v2120 = vpop.permute.xlu0 %2119
      %2122 = vset.pattern.permute.xlu0 4
      %2123 = vperm.xlu0 %2122, %v644
      %v2124 = vpop.permute.xlu0 %2123
      %2126 = vset.pattern.permute.xlu0 4
      %2127 = vperm.xlu0 %2126, %v645
      %v2128 = vpop.permute.xlu0 %2127
      %2130 = vset.pattern.permute.xlu0 4
      %2131 = vperm.xlu0 %2130, %v646
      %v2132 = vpop.permute.xlu0 %2131
      %2134 = vset.pattern.permute.xlu0 4
      %2135 = vperm.xlu0 %2134, %v647
      %v2136 = vpop.permute.xlu0 %2135
      %2138 = vset.pattern.permute.xlu0 4
      %2139 = vperm.xlu0 %2138, %v648
      %v2140 = vpop.permute.xlu0 %2139
      %v2142 = vperm.slane %v1793, 0
      %v2143 = vmul.f32 %v2112, %v2142
      %v2144 = vmul.f32 %v2116, %v2142
      %v2145 = vmul.f32 %v2120, %v2142
      %v2146 = vmul.f32 %v2124, %v2142
      %v2147 = vmul.f32 %v2128, %v2142
      %v2148 = vmul.f32 %v2132, %v2142
      %v2149 = vmul.f32 %v2136, %v2142
      %v2150 = vmul.f32 %v2140, %v2142
      %v2151 = vadd.f32 %v2102, %v2143
      %v2152 = vadd.f32 %v2103, %v2144
      %v2153 = vadd.f32 %v2104, %v2145
      %v2154 = vadd.f32 %v2105, %v2146
      %v2155 = vadd.f32 %v2106, %v2147
      %v2156 = vadd.f32 %v2107, %v2148
      %v2157 = vadd.f32 %v2108, %v2149
      %v2158 = vadd.f32 %v2109, %v2150
      %2159 = vset.pattern.permute.xlu0 5
      %2160 = vperm.xlu0 %2159, %v641
      %v2161 = vpop.permute.xlu0 %2160
      %2163 = vset.pattern.permute.xlu0 5
      %2164 = vperm.xlu0 %2163, %v642
      %v2165 = vpop.permute.xlu0 %2164
      %2167 = vset.pattern.permute.xlu0 5
      %2168 = vperm.xlu0 %2167, %v643
      %v2169 = vpop.permute.xlu0 %2168
      %2171 = vset.pattern.permute.xlu0 5
      %2172 = vperm.xlu0 %2171, %v644
      %v2173 = vpop.permute.xlu0 %2172
      %2175 = vset.pattern.permute.xlu0 5
      %2176 = vperm.xlu0 %2175, %v645
      %v2177 = vpop.permute.xlu0 %2176
      %2179 = vset.pattern.permute.xlu0 5
      %2180 = vperm.xlu0 %2179, %v646
      %v2181 = vpop.permute.xlu0 %2180
      %2183 = vset.pattern.permute.xlu0 5
      %2184 = vperm.xlu0 %2183, %v647
      %v2185 = vpop.permute.xlu0 %2184
      %2187 = vset.pattern.permute.xlu0 5
      %2188 = vperm.xlu0 %2187, %v648
      %v2189 = vpop.permute.xlu0 %2188
      %v2191 = vmul.f32 %v2161, %v2142
      %v2192 = vmul.f32 %v2165, %v2142
      %v2193 = vmul.f32 %v2169, %v2142
      %v2194 = vmul.f32 %v2173, %v2142
      %v2195 = vmul.f32 %v2177, %v2142
      %v2196 = vmul.f32 %v2181, %v2142
      %v2197 = vmul.f32 %v2185, %v2142
      %v2198 = vmul.f32 %v2189, %v2142
      %2207 = vrot.lane.b32.xlu0 %v2191, 96
      %v2208 = vpop.permute.xlu0 %2207
      %2209 = vrot.lane.b32.xlu0 %v2192, 96
      %v2210 = vpop.permute.xlu0 %2209
      %2211 = vrot.lane.b32.xlu0 %v2193, 96
      %v2212 = vpop.permute.xlu0 %2211
      %2213 = vrot.lane.b32.xlu0 %v2194, 96
      %v2214 = vpop.permute.xlu0 %2213
      %2215 = vrot.lane.b32.xlu0 %v2195, 96
      %v2216 = vpop.permute.xlu0 %2215
      %2217 = vrot.lane.b32.xlu0 %v2196, 96
      %v2218 = vpop.permute.xlu0 %2217
      %2219 = vrot.lane.b32.xlu0 %v2197, 96
      %v2220 = vpop.permute.xlu0 %2219
      %2221 = vrot.lane.b32.xlu0 %v2198, 96
      %v2222 = vpop.permute.xlu0 %2221
      %v2231 = vadd.f32 %v2151, %v2208
      %v2232 = vadd.f32 %v2152, %v2210
      %v2233 = vadd.f32 %v2153, %v2212
      %v2234 = vadd.f32 %v2154, %v2214
      %v2235 = vadd.f32 %v2155, %v2216
      %v2236 = vadd.f32 %v2156, %v2218
      %v2237 = vadd.f32 %v2157, %v2220
      %v2238 = vadd.f32 %v2158, %v2222
      %2239 = vset.pattern.permute.xlu0 6
      %2240 = vperm.xlu0 %2239, %v641
      %v2241 = vpop.permute.xlu0 %2240
      %2243 = vset.pattern.permute.xlu0 6
      %2244 = vperm.xlu0 %2243, %v642
      %v2245 = vpop.permute.xlu0 %2244
      %2247 = vset.pattern.permute.xlu0 6
      %2248 = vperm.xlu0 %2247, %v643
      %v2249 = vpop.permute.xlu0 %2248
      %2251 = vset.pattern.permute.xlu0 6
      %2252 = vperm.xlu0 %2251, %v644
      %v2253 = vpop.permute.xlu0 %2252
      %2255 = vset.pattern.permute.xlu0 6
      %2256 = vperm.xlu0 %2255, %v645
      %v2257 = vpop.permute.xlu0 %2256
      %2259 = vset.pattern.permute.xlu0 6
      %2260 = vperm.xlu0 %2259, %v646
      %v2261 = vpop.permute.xlu0 %2260
      %2263 = vset.pattern.permute.xlu0 6
      %2264 = vperm.xlu0 %2263, %v647
      %v2265 = vpop.permute.xlu0 %2264
      %2267 = vset.pattern.permute.xlu0 6
      %2268 = vperm.xlu0 %2267, %v648
      %v2269 = vpop.permute.xlu0 %2268
      %v2271 = vmul.f32 %v2241, %v2142
      %v2272 = vmul.f32 %v2245, %v2142
      %v2273 = vmul.f32 %v2249, %v2142
      %v2274 = vmul.f32 %v2253, %v2142
      %v2275 = vmul.f32 %v2257, %v2142
      %v2276 = vmul.f32 %v2261, %v2142
      %v2277 = vmul.f32 %v2265, %v2142
      %v2278 = vmul.f32 %v2269, %v2142
      %2287 = vrot.lane.b32.xlu0 %v2271, 64
      %v2288 = vpop.permute.xlu0 %2287
      %2289 = vrot.lane.b32.xlu0 %v2272, 64
      %v2290 = vpop.permute.xlu0 %2289
      %2291 = vrot.lane.b32.xlu0 %v2273, 64
      %v2292 = vpop.permute.xlu0 %2291
      %2293 = vrot.lane.b32.xlu0 %v2274, 64
      %v2294 = vpop.permute.xlu0 %2293
      %2295 = vrot.lane.b32.xlu0 %v2275, 64
      %v2296 = vpop.permute.xlu0 %2295
      %2297 = vrot.lane.b32.xlu0 %v2276, 64
      %v2298 = vpop.permute.xlu0 %2297
      %2299 = vrot.lane.b32.xlu0 %v2277, 64
      %v2300 = vpop.permute.xlu0 %2299
      %2301 = vrot.lane.b32.xlu0 %v2278, 64
      %v2302 = vpop.permute.xlu0 %2301
      %v2311 = vadd.f32 %v2231, %v2288
      %v2312 = vadd.f32 %v2232, %v2290
      %v2313 = vadd.f32 %v2233, %v2292
      %v2314 = vadd.f32 %v2234, %v2294
      %v2315 = vadd.f32 %v2235, %v2296
      %v2316 = vadd.f32 %v2236, %v2298
      %v2317 = vadd.f32 %v2237, %v2300
      %v2318 = vadd.f32 %v2238, %v2302
      %2319 = vset.pattern.permute.xlu0 7
      %2320 = vperm.xlu0 %2319, %v641
      %v2321 = vpop.permute.xlu0 %2320
      %2323 = vset.pattern.permute.xlu0 7
      %2324 = vperm.xlu0 %2323, %v642
      %v2325 = vpop.permute.xlu0 %2324
      %2327 = vset.pattern.permute.xlu0 7
      %2328 = vperm.xlu0 %2327, %v643
      %v2329 = vpop.permute.xlu0 %2328
      %2331 = vset.pattern.permute.xlu0 7
      %2332 = vperm.xlu0 %2331, %v644
      %v2333 = vpop.permute.xlu0 %2332
      %2335 = vset.pattern.permute.xlu0 7
      %2336 = vperm.xlu0 %2335, %v645
      %v2337 = vpop.permute.xlu0 %2336
      %2339 = vset.pattern.permute.xlu0 7
      %2340 = vperm.xlu0 %2339, %v646
      %v2341 = vpop.permute.xlu0 %2340
      %2343 = vset.pattern.permute.xlu0 7
      %2344 = vperm.xlu0 %2343, %v647
      %v2345 = vpop.permute.xlu0 %2344
      %2347 = vset.pattern.permute.xlu0 7
      %2348 = vperm.xlu0 %2347, %v648
      %v2349 = vpop.permute.xlu0 %2348
      %v2351 = vmul.f32 %v2321, %v2142
      %v2352 = vmul.f32 %v2325, %v2142
      %v2353 = vmul.f32 %v2329, %v2142
      %v2354 = vmul.f32 %v2333, %v2142
      %v2355 = vmul.f32 %v2337, %v2142
      %v2356 = vmul.f32 %v2341, %v2142
      %v2357 = vmul.f32 %v2345, %v2142
      %v2358 = vmul.f32 %v2349, %v2142
      %2367 = vrot.lane.b32.xlu0 %v2351, 32
      %v2368 = vpop.permute.xlu0 %2367
      %2369 = vrot.lane.b32.xlu0 %v2352, 32
      %v2370 = vpop.permute.xlu0 %2369
      %2371 = vrot.lane.b32.xlu0 %v2353, 32
      %v2372 = vpop.permute.xlu0 %2371
      %2373 = vrot.lane.b32.xlu0 %v2354, 32
      %v2374 = vpop.permute.xlu0 %2373
      %2375 = vrot.lane.b32.xlu0 %v2355, 32
      %v2376 = vpop.permute.xlu0 %2375
      %2377 = vrot.lane.b32.xlu0 %v2356, 32
      %v2378 = vpop.permute.xlu0 %2377
      %2379 = vrot.lane.b32.xlu0 %v2357, 32
      %v2380 = vpop.permute.xlu0 %2379
      %2381 = vrot.lane.b32.xlu0 %v2358, 32
      %v2382 = vpop.permute.xlu0 %2381
      %v2391 = vadd.f32 %v2311, %v2368
      %v2392 = vadd.f32 %v2312, %v2370
      %v2393 = vadd.f32 %v2313, %v2372
      %v2394 = vadd.f32 %v2314, %v2374
      %v2395 = vadd.f32 %v2315, %v2376
      %v2396 = vadd.f32 %v2316, %v2378
      %v2397 = vadd.f32 %v2317, %v2380
      %v2398 = vadd.f32 %v2318, %v2382
      %2399 = vset.pattern.permute.xlu0 8
      %2400 = vperm.xlu0 %2399, %v641
      %v2401 = vpop.permute.xlu0 %2400
      %2403 = vset.pattern.permute.xlu0 8
      %2404 = vperm.xlu0 %2403, %v642
      %v2405 = vpop.permute.xlu0 %2404
      %2407 = vset.pattern.permute.xlu0 8
      %2408 = vperm.xlu0 %2407, %v643
      %v2409 = vpop.permute.xlu0 %2408
      %2411 = vset.pattern.permute.xlu0 8
      %2412 = vperm.xlu0 %2411, %v644
      %v2413 = vpop.permute.xlu0 %2412
      %2415 = vset.pattern.permute.xlu0 8
      %2416 = vperm.xlu0 %2415, %v645
      %v2417 = vpop.permute.xlu0 %2416
      %2419 = vset.pattern.permute.xlu0 8
      %2420 = vperm.xlu0 %2419, %v646
      %v2421 = vpop.permute.xlu0 %2420
      %2423 = vset.pattern.permute.xlu0 8
      %2424 = vperm.xlu0 %2423, %v647
      %v2425 = vpop.permute.xlu0 %2424
      %2427 = vset.pattern.permute.xlu0 8
      %2428 = vperm.xlu0 %2427, %v648
      %v2429 = vpop.permute.xlu0 %2428
      %v2431 = vperm.slane %v1806, 0
      %v2432 = vmul.f32 %v2401, %v2431
      %v2433 = vmul.f32 %v2405, %v2431
      %v2434 = vmul.f32 %v2409, %v2431
      %v2435 = vmul.f32 %v2413, %v2431
      %v2436 = vmul.f32 %v2417, %v2431
      %v2437 = vmul.f32 %v2421, %v2431
      %v2438 = vmul.f32 %v2425, %v2431
      %v2439 = vmul.f32 %v2429, %v2431
      %v2440 = vadd.f32 %v2391, %v2432
      %v2441 = vadd.f32 %v2392, %v2433
      %v2442 = vadd.f32 %v2393, %v2434
      %v2443 = vadd.f32 %v2394, %v2435
      %v2444 = vadd.f32 %v2395, %v2436
      %v2445 = vadd.f32 %v2396, %v2437
      %v2446 = vadd.f32 %v2397, %v2438
      %v2447 = vadd.f32 %v2398, %v2439
      %v2448 = vadd.f32 %v1719, %v2440
      %v2449 = vadd.f32 %v1720, %v2441
      %v2450 = vadd.f32 %v1721, %v2442
      %v2451 = vadd.f32 %v1722, %v2443
      %v2452 = vadd.f32 %v1723, %v2444
      %v2453 = vadd.f32 %v1724, %v2445
      %v2454 = vadd.f32 %v1725, %v2446
      %v2455 = vadd.f32 %v1726, %v2447
      %v2456 = vmax.f32 %v2448, 0.0
      %v2457 = vmax.f32 %v2449, 0.0
      %v2458 = vmax.f32 %v2450, 0.0
      %v2459 = vmax.f32 %v2451, 0.0
      %v2460 = vmax.f32 %v2452, 0.0
      %v2461 = vmax.f32 %v2453, 0.0
      %v2462 = vmax.f32 %v2454, 0.0
      %v2463 = vmax.f32 %v2455, 0.0
      %v2464 = vrot.slane %v2456, 7
      %v2465 = vrot.slane %v2457, 7
      %v2466 = vrot.slane %v2458, 7
      %v2467 = vrot.slane %v2459, 7
      %v2468 = vrot.slane %v2460, 7
      %v2469 = vrot.slane %v2461, 7
      %v2470 = vrot.slane %v2462, 7
      %v2471 = vrot.slane %v2463, 7
      %v2472 = vsel %vm1153, %v2470, %v2471
      %v2473 = vsel %vm1153, %v2469, %v2470
      %v2474 = vsel %vm1153, %v2468, %v2469
      %v2475 = vsel %vm1153, %v2467, %v2468
      %v2476 = vsel %vm1153, %v2466, %v2467
      %v2477 = vsel %vm1153, %v2465, %v2466
      %v2478 = vsel %vm1153, %v2464, %v2465
      %v2479 = vsel %vm1153, %v2471, %v2464
      %v2480 = vmul.f32 %v2479, %v1165
      %v2481 = vmul.f32 %v2478, %v1170
      %v2482 = vmul.f32 %v2477, %v1175
      %v2483 = vmul.f32 %v2476, %v1180
      %v2484 = vmul.f32 %v2475, %v1185
      %v2485 = vmul.f32 %v2474, %v1190
      %v2486 = vmul.f32 %v2473, %v1195
      %v2487 = vmul.f32 %v2472, %v1200
      %v2488 = vrot.slane %v2456, 1
      %v2489 = vrot.slane %v2457, 1
      %v2490 = vrot.slane %v2458, 1
      %v2491 = vrot.slane %v2459, 1
      %v2492 = vrot.slane %v2460, 1
      %v2493 = vrot.slane %v2461, 1
      %v2494 = vrot.slane %v2462, 1
      %v2495 = vrot.slane %v2463, 1
      %v2496 = vsel %vm1218, %v2494, %v2495
      %v2497 = vsel %vm1218, %v2493, %v2494
      %v2498 = vsel %vm1218, %v2492, %v2493
      %v2499 = vsel %vm1218, %v2491, %v2492
      %v2500 = vsel %vm1218, %v2490, %v2491
      %v2501 = vsel %vm1218, %v2489, %v2490
      %v2502 = vsel %vm1218, %v2488, %v2489
      %v2503 = vsel %vm1218, %v2495, %v2488
      %v2504 = vmul.f32 %v2502, %v1230
      %v2505 = vmul.f32 %v2501, %v1235
      %v2506 = vmul.f32 %v2500, %v1240
      %v2507 = vmul.f32 %v2499, %v1245
      %v2508 = vmul.f32 %v2498, %v1250
      %v2509 = vmul.f32 %v2497, %v1255
      %v2510 = vmul.f32 %v2496, %v1260
      %v2511 = vmul.f32 %v2503, %v1265
      %2520 = vrot.lane.b32.xlu0 %v2456, 32
      %v2521 = vpop.permute.xlu0 %2520
      %2522 = vrot.lane.b32.xlu0 %v2457, 32
      %v2523 = vpop.permute.xlu0 %2522
      %2524 = vrot.lane.b32.xlu0 %v2458, 32
      %v2525 = vpop.permute.xlu0 %2524
      %2526 = vrot.lane.b32.xlu0 %v2459, 32
      %v2527 = vpop.permute.xlu0 %2526
      %2528 = vrot.lane.b32.xlu0 %v2460, 32
      %v2529 = vpop.permute.xlu0 %2528
      %2530 = vrot.lane.b32.xlu0 %v2461, 32
      %v2531 = vpop.permute.xlu0 %2530
      %2532 = vrot.lane.b32.xlu0 %v2462, 32
      %v2533 = vpop.permute.xlu0 %2532
      %2534 = vrot.lane.b32.xlu0 %v2463, 32
      %v2535 = vpop.permute.xlu0 %2534
      %2552 = vrot.lane.b32.xlu0 %v2504, 64
      %v2553 = vpop.permute.xlu0 %2552
      %2554 = vrot.lane.b32.xlu0 %v2505, 64
      %v2555 = vpop.permute.xlu0 %2554
      %2556 = vrot.lane.b32.xlu0 %v2506, 64
      %v2557 = vpop.permute.xlu0 %2556
      %2558 = vrot.lane.b32.xlu0 %v2507, 64
      %v2559 = vpop.permute.xlu0 %2558
      %2560 = vrot.lane.b32.xlu0 %v2508, 64
      %v2561 = vpop.permute.xlu0 %2560
      %2562 = vrot.lane.b32.xlu0 %v2509, 64
      %v2563 = vpop.permute.xlu0 %2562
      %2564 = vrot.lane.b32.xlu0 %v2510, 64
      %v2565 = vpop.permute.xlu0 %2564
      %2566 = vrot.lane.b32.xlu0 %v2511, 64
      %v2567 = vpop.permute.xlu0 %2566
      %v2576 = vsel %vm1339, %v2480, %v2521
      %v2577 = vsel %vm1339, %v2481, %v2523
      %v2578 = vsel %vm1339, %v2482, %v2525
      %v2579 = vsel %vm1339, %v2483, %v2527
      %v2580 = vsel %vm1339, %v2484, %v2529
      %v2581 = vsel %vm1339, %v2485, %v2531
      %v2582 = vsel %vm1339, %v2486, %v2533
      %v2583 = vsel %vm1339, %v2487, %v2535
      %v2584 = vsel %vm1348, %v2576, %v2553
      %v2585 = vsel %vm1348, %v2577, %v2555
      %v2586 = vsel %vm1348, %v2578, %v2557
      %v2587 = vsel %vm1348, %v2579, %v2559
      %v2588 = vsel %vm1348, %v2580, %v2561
      %v2589 = vsel %vm1348, %v2581, %v2563
      %v2590 = vsel %vm1348, %v2582, %v2565
      %v2591 = vsel %vm1348, %v2583, %v2567
      %v2592 = vpack.c.bf16 %v2584, %v2584
      %v2593 = vpack.c.bf16 %v2585, %v2585
      %v2594 = vpack.c.bf16 %v2586, %v2586
      %v2595 = vpack.c.bf16 %v2587, %v2587
      %v2596 = vpack.c.bf16 %v2588, %v2588
      %v2597 = vpack.c.bf16 %v2589, %v2589
      %v2598 = vpack.c.bf16 %v2590, %v2590
      %v2599 = vpack.c.bf16 %v2591, %v2591
      %2600 = vst.msk [vmem:[#allocation2 + $0x8] sm:$0xf] %vm631, %v2592
      %2601 = vst.msk [vmem:[#allocation2 + $0xc] sm:$0xf] %vm631, %v2593
      %2602 = vst.msk [vmem:[#allocation2 + $0x10] sm:$0xf] %vm631, %v2594
      %2603 = vst.msk [vmem:[#allocation2 + $0x14] sm:$0xf] %vm631, %v2595
      %2604 = vst.msk [vmem:[#allocation2 + $0x18] sm:$0xf] %vm631, %v2596
      %2605 = vst.msk [vmem:[#allocation2 + $0x1c] sm:$0xf] %vm631, %v2597
      %2606 = vst.msk [vmem:[#allocation2 + $0x20] sm:$0xf] %vm631, %v2598
      %2607 = vst.msk [vmem:[#allocation2 + $0x24] sm:$0xf] %vm631, %v2599
      %s2608 = scalar_lea.vmem %s11, 192
      %v2609 = vld [vmem:[%s2608] sm:$0xf]
      %v2610 = vld [vmem:[%s2608 + $0x4] sm:$0xf]
      %v2611 = vld [vmem:[%s2608 + $0x8] sm:$0xf]
      %v2612 = vld [vmem:[%s2608 + $0xc] sm:$0xf]
      %v2613 = vld [vmem:[%s2608 + $0x10] sm:$0xf]
      %v2614 = vld [vmem:[%s2608 + $0x14] sm:$0xf]
      %v2615 = vld [vmem:[%s2608 + $0x18] sm:$0xf]
      %v2616 = vld [vmem:[%s2608 + $0x1c] sm:$0xf]
      %v2617 = vld [vmem:[%s2608 + $0x20] sm:$0xf]
      %v2618 = vld [vmem:[%s2608 + $0x24] sm:$0xf]
      %v2619 = vld [vmem:[%s2608 + $0x28] sm:$0xf]
      %v2620 = vld [vmem:[%s2608 + $0x2c] sm:$0xf]
      %v2621 = vld [vmem:[#allocation2 + $0x4] sm:$0xf]
      %v2622 = vld [vmem:[#allocation2 + $0x8] sm:$0xf]
      %v2623 = vld [vmem:[#allocation2 + $0xc] sm:$0xf]
      %v2624 = vld [vmem:[#allocation2 + $0x10] sm:$0xf]
      %v2625 = vld [vmem:[#allocation2 + $0x14] sm:$0xf]
      %v2626 = vld [vmem:[#allocation2 + $0x18] sm:$0xf]
      %v2627 = vld [vmem:[#allocation2 + $0x1c] sm:$0xf]
      %v2628 = vld [vmem:[#allocation2 + $0x20] sm:$0xf]
      %s2629 = scalar_lea.vmem %s11, 144
      %v2630 = vld [vmem:[%s2629] sm:$0xf]
      %v2631 = vld [vmem:[%s2629 + $0x4] sm:$0xf]
      %v2632 = vld [vmem:[%s2629 + $0x8] sm:$0xf]
      %v2633 = vld [vmem:[%s2629 + $0xc] sm:$0xf]
      %v2634 = vld [vmem:[%s2629 + $0x10] sm:$0xf]
      %v2635 = vld [vmem:[%s2629 + $0x14] sm:$0xf]
      %v2636 = vld [vmem:[%s2629 + $0x18] sm:$0xf]
      %v2637 = vld [vmem:[%s2629 + $0x1c] sm:$0xf]
      %v2638 = vld [vmem:[%s2629 + $0x20] sm:$0xf]
      %v2639 = vld [vmem:[%s2629 + $0x24] sm:$0xf]
      %v2640 = vld [vmem:[%s2629 + $0x28] sm:$0xf]
      %v2641 = vld [vmem:[%s2629 + $0x2c] sm:$0xf]
      %v2650 = vunpack.c.l.b16 %v2621
      %v2651 = vunpack.c.l.b16 %v2622
      %v2652 = vunpack.c.l.b16 %v2623
      %v2653 = vunpack.c.l.b16 %v2624
      %v2654 = vunpack.c.l.b16 %v2625
      %v2655 = vunpack.c.l.b16 %v2626
      %v2656 = vunpack.c.l.b16 %v2627
      %v2657 = vunpack.c.l.b16 %v2628
      %v2658 = vpack.c.b16 %v2651, %v2650
      %v2659 = vpack.c.b16 %v2653, %v2652
      %v2660 = vpack.c.b16 %v2655, %v2654
      %v2661 = vpack.c.b16 %v2657, %v2656
      %v2674 = vunpack.c.l.b16 %v2630
      %v2675 = vunpack.c.l.b16 %v2631
      %v2676 = vunpack.c.l.b16 %v2632
      %v2677 = vunpack.c.l.b16 %v2633
      %v2678 = vunpack.c.l.b16 %v2634
      %v2679 = vunpack.c.l.b16 %v2635
      %v2680 = vunpack.c.l.b16 %v2636
      %v2681 = vunpack.c.l.b16 %v2637
      %v2682 = vunpack.c.l.b16 %v2638
      %v2683 = vunpack.c.l.b16 %v2639
      %v2684 = vunpack.c.l.b16 %v2640
      %v2685 = vunpack.c.l.b16 %v2641
      %v2686 = vpack.c.b16 %v2675, %v2674
      %v2687 = vpack.c.b16 %v2677, %v2676
      %v2688 = vpack.c.b16 %v2679, %v2678
      %v2689 = vpack.c.b16 %v2681, %v2680
      %v2690 = vpack.c.b16 %v2683, %v2682
      %v2691 = vpack.c.b16 %v2685, %v2684
      %v2699 = vsel %vm1462, %v2658, 0
      %v2702 = vsel %vm1462, %v2659, 0
      %v2705 = vsel %vm1462, %v2660, 0
      %v2708 = vsel %vm1462, %v2661, 0
      %2710 = vmatpush.bf16.msra.mxu0 0
      %2711 = vmatpush.bf16.msra.mxu0 0
      %2712 = vmatpush.bf16.msra.mxu0 %v2691
      %2713 = vmatpush.bf16.msra.mxu0 %v2690
      %2714 = vmatpush.bf16.msra.mxu0 %v2689
      %2715 = vmatpush.bf16.msra.mxu0 %v2688
      %2716 = vmatpush.bf16.msra.mxu0 %v2687
      %2717 = vmatpush.bf16.msra.mxu0 %v2686
      %2718 = vmatmul.bf16.gmra.mxu0 %v2699
      %v2719 = vpop.f32.mrf.mxu0
      %v2720 = vadd.f32 0.0, %v2719
      %v2721 = vpop.f32.mrf.mxu0
      %v2722 = vadd.f32 0.0, %v2721
      %2723 = vmatmul.bf16.gmra.mxu0 %v2702
      %v2724 = vpop.f32.mrf.mxu0
      %v2725 = vadd.f32 0.0, %v2724
      %v2726 = vpop.f32.mrf.mxu0
      %v2727 = vadd.f32 0.0, %v2726
      %2728 = vmatmul.bf16.gmra.mxu0 %v2705
      %v2729 = vpop.f32.mrf.mxu0
      %v2730 = vadd.f32 0.0, %v2729
      %v2731 = vpop.f32.mrf.mxu0
      %v2732 = vadd.f32 0.0, %v2731
      %2733 = vmatmul.bf16.gmra.mxu0 %v2708
      %v2734 = vpop.f32.mrf.mxu0
      %v2735 = vadd.f32 0.0, %v2734
      %v2736 = vpop.f32.mrf.mxu0
      %v2737 = vadd.f32 0.0, %v2736
      %2738 = vdwg.mxu0
      %v2747 = vunpack.c.l.b16 %v2592
      %v2748 = vunpack.c.l.b16 %v2593
      %v2749 = vunpack.c.l.b16 %v2594
      %v2750 = vunpack.c.l.b16 %v2595
      %v2751 = vunpack.c.l.b16 %v2596
      %v2752 = vunpack.c.l.b16 %v2597
      %v2753 = vunpack.c.l.b16 %v2598
      %v2754 = vunpack.c.l.b16 %v2599
      %v2755 = vpack.c.b16 %v2748, %v2747
      %v2756 = vpack.c.b16 %v2750, %v2749
      %v2757 = vpack.c.b16 %v2752, %v2751
      %v2758 = vpack.c.b16 %v2754, %v2753
      %v2771 = vunpack.c.l.b16 %v2609
      %v2772 = vunpack.c.l.b16 %v2610
      %v2773 = vunpack.c.l.b16 %v2611
      %v2774 = vunpack.c.l.b16 %v2612
      %v2775 = vunpack.c.l.b16 %v2613
      %v2776 = vunpack.c.l.b16 %v2614
      %v2777 = vunpack.c.l.b16 %v2615
      %v2778 = vunpack.c.l.b16 %v2616
      %v2779 = vunpack.c.l.b16 %v2617
      %v2780 = vunpack.c.l.b16 %v2618
      %v2781 = vunpack.c.l.b16 %v2619
      %v2782 = vunpack.c.l.b16 %v2620
      %v2783 = vpack.c.b16 %v2772, %v2771
      %v2784 = vpack.c.b16 %v2774, %v2773
      %v2785 = vpack.c.b16 %v2776, %v2775
      %v2786 = vpack.c.b16 %v2778, %v2777
      %v2787 = vpack.c.b16 %v2780, %v2779
      %v2788 = vpack.c.b16 %v2782, %v2781
      %v2796 = vsel %vm1462, %v2755, 0
      %v2799 = vsel %vm1462, %v2756, 0
      %v2802 = vsel %vm1462, %v2757, 0
      %v2805 = vsel %vm1462, %v2758, 0
      %2807 = vmatpush.bf16.msra.mxu0 0
      %2808 = vmatpush.bf16.msra.mxu0 0
      %2809 = vmatpush.bf16.msra.mxu0 %v2788
      %2810 = vmatpush.bf16.msra.mxu0 %v2787
      %2811 = vmatpush.bf16.msra.mxu0 %v2786
      %2812 = vmatpush.bf16.msra.mxu0 %v2785
      %2813 = vmatpush.bf16.msra.mxu0 %v2784
      %2814 = vmatpush.bf16.msra.mxu0 %v2783
      %2815 = vmatmul.bf16.gmra.mxu0 %v2796
      %v2816 = vpop.f32.mrf.mxu0
      %v2817 = vadd.f32 %v2720, %v2816
      %v2818 = vpop.f32.mrf.mxu0
      %v2819 = vadd.f32 %v2722, %v2818
      %2820 = vmatmul.bf16.gmra.mxu0 %v2799
      %v2821 = vpop.f32.mrf.mxu0
      %v2822 = vadd.f32 %v2725, %v2821
      %v2823 = vpop.f32.mrf.mxu0
      %v2824 = vadd.f32 %v2727, %v2823
      %2825 = vmatmul.bf16.gmra.mxu0 %v2802
      %v2826 = vpop.f32.mrf.mxu0
      %v2827 = vadd.f32 %v2730, %v2826
      %v2828 = vpop.f32.mrf.mxu0
      %v2829 = vadd.f32 %v2732, %v2828
      %2830 = vmatmul.bf16.gmra.mxu0 %v2805
      %v2831 = vpop.f32.mrf.mxu0
      %v2832 = vadd.f32 %v2735, %v2831
      %v2833 = vpop.f32.mrf.mxu0
      %v2834 = vadd.f32 %v2737, %v2833
      %2835 = vdwg.mxu0
      %v2836 = vld [vmem:[#allocation2 + $0xc] sm:$0xf]
      %v2837 = vld [vmem:[#allocation2 + $0x10] sm:$0xf]
      %v2838 = vld [vmem:[#allocation2 + $0x14] sm:$0xf]
      %v2839 = vld [vmem:[#allocation2 + $0x18] sm:$0xf]
      %v2840 = vld [vmem:[#allocation2 + $0x1c] sm:$0xf]
      %v2841 = vld [vmem:[#allocation2 + $0x20] sm:$0xf]
      %v2842 = vld [vmem:[#allocation2 + $0x24] sm:$0xf]
      %v2843 = vld [vmem:[#allocation2 + $0x28] sm:$0xf]
      %s2844 = scalar_lea.vmem %s11, 240
      %v2845 = vld [vmem:[%s2844] sm:$0xf]
      %v2846 = vld [vmem:[%s2844 + $0x4] sm:$0xf]
      %v2847 = vld [vmem:[%s2844 + $0x8] sm:$0xf]
      %v2848 = vld [vmem:[%s2844 + $0xc] sm:$0xf]
      %v2849 = vld [vmem:[%s2844 + $0x10] sm:$0xf]
      %v2850 = vld [vmem:[%s2844 + $0x14] sm:$0xf]
      %v2851 = vld [vmem:[%s2844 + $0x18] sm:$0xf]
      %v2852 = vld [vmem:[%s2844 + $0x1c] sm:$0xf]
      %v2853 = vld [vmem:[%s2844 + $0x20] sm:$0xf]
      %v2854 = vld [vmem:[%s2844 + $0x24] sm:$0xf]
      %v2855 = vld [vmem:[%s2844 + $0x28] sm:$0xf]
      %v2856 = vld [vmem:[%s2844 + $0x2c] sm:$0xf]
      %v2865 = vunpack.c.l.b16 %v2836
      %v2866 = vunpack.c.l.b16 %v2837
      %v2867 = vunpack.c.l.b16 %v2838
      %v2868 = vunpack.c.l.b16 %v2839
      %v2869 = vunpack.c.l.b16 %v2840
      %v2870 = vunpack.c.l.b16 %v2841
      %v2871 = vunpack.c.l.b16 %v2842
      %v2872 = vunpack.c.l.b16 %v2843
      %v2873 = vpack.c.b16 %v2866, %v2865
      %v2874 = vpack.c.b16 %v2868, %v2867
      %v2875 = vpack.c.b16 %v2870, %v2869
      %v2876 = vpack.c.b16 %v2872, %v2871
      %v2889 = vunpack.c.l.b16 %v2845
      %v2890 = vunpack.c.l.b16 %v2846
      %v2891 = vunpack.c.l.b16 %v2847
      %v2892 = vunpack.c.l.b16 %v2848
      %v2893 = vunpack.c.l.b16 %v2849
      %v2894 = vunpack.c.l.b16 %v2850
      %v2895 = vunpack.c.l.b16 %v2851
      %v2896 = vunpack.c.l.b16 %v2852
      %v2897 = vunpack.c.l.b16 %v2853
      %v2898 = vunpack.c.l.b16 %v2854
      %v2899 = vunpack.c.l.b16 %v2855
      %v2900 = vunpack.c.l.b16 %v2856
      %v2901 = vpack.c.b16 %v2890, %v2889
      %v2902 = vpack.c.b16 %v2892, %v2891
      %v2903 = vpack.c.b16 %v2894, %v2893
      %v2904 = vpack.c.b16 %v2896, %v2895
      %v2905 = vpack.c.b16 %v2898, %v2897
      %v2906 = vpack.c.b16 %v2900, %v2899
      %v2914 = vsel %vm1462, %v2873, 0
      %v2917 = vsel %vm1462, %v2874, 0
      %v2920 = vsel %vm1462, %v2875, 0
      %v2923 = vsel %vm1462, %v2876, 0
      %2925 = vmatpush.bf16.msra.mxu0 0
      %2926 = vmatpush.bf16.msra.mxu0 0
      %2927 = vmatpush.bf16.msra.mxu0 %v2906
      %2928 = vmatpush.bf16.msra.mxu0 %v2905
      %2929 = vmatpush.bf16.msra.mxu0 %v2904
      %2930 = vmatpush.bf16.msra.mxu0 %v2903
      %2931 = vmatpush.bf16.msra.mxu0 %v2902
      %2932 = vmatpush.bf16.msra.mxu0 %v2901
      %2933 = vmatmul.bf16.gmra.mxu0 %v2914
      %v2934 = vpop.f32.mrf.mxu0
      %v2935 = vadd.f32 0.0, %v2934
      %v2936 = vpop.f32.mrf.mxu0
      %v2937 = vadd.f32 0.0, %v2936
      %2938 = vmatmul.bf16.gmra.mxu0 %v2917
      %v2939 = vpop.f32.mrf.mxu0
      %v2940 = vadd.f32 0.0, %v2939
      %v2941 = vpop.f32.mrf.mxu0
      %v2942 = vadd.f32 0.0, %v2941
      %2943 = vmatmul.bf16.gmra.mxu0 %v2920
      %v2944 = vpop.f32.mrf.mxu0
      %v2945 = vadd.f32 0.0, %v2944
      %v2946 = vpop.f32.mrf.mxu0
      %v2947 = vadd.f32 0.0, %v2946
      %2948 = vmatmul.bf16.gmra.mxu0 %v2923
      %v2949 = vpop.f32.mrf.mxu0
      %v2950 = vadd.f32 0.0, %v2949
      %v2951 = vpop.f32.mrf.mxu0
      %v2952 = vadd.f32 0.0, %v2951
      %2953 = vdwg.mxu0
      %v2954 = vadd.f32 %v2817, %v2935
      %v2955 = vadd.f32 %v2819, %v2937
      %v2956 = vadd.f32 %v2822, %v2940
      %v2957 = vadd.f32 %v2824, %v2942
      %v2958 = vadd.f32 %v2827, %v2945
      %v2959 = vadd.f32 %v2829, %v2947
      %v2960 = vadd.f32 %v2832, %v2950
      %v2961 = vadd.f32 %v2834, %v2952
      %s2962 = scalar_lea.vmem %s12, 48
      %v2963 = vld [vmem:[%s2962] sm:$0xff]
      %v2964 = vld [vmem:[%s2962 + $0x8] sm:$0xf]
      %v2965 = vld [vmem:[%s2962 + $0xc] sm:$0xff]
      %v2966 = vld [vmem:[%s2962 + $0x14] sm:$0xf]
      %v2967 = vld [vmem:[%s2962 + $0x18] sm:$0xff]
      %v2968 = vld [vmem:[%s2962 + $0x20] sm:$0xf]
      %v2969 = vld [vmem:[%s2962 + $0x24] sm:$0xff]
      %v2970 = vld [vmem:[%s2962 + $0x2c] sm:$0xf]
      %v2979 = vunpack.c.l.b16 %v2963
      %v2980 = vunpack.c.h.b16 %v2963
      %v2981 = vunpack.c.l.b16 %v2964
      %v2982 = vunpack.c.l.b16 %v2965
      %v2983 = vunpack.c.h.b16 %v2965
      %v2984 = vunpack.c.l.b16 %v2966
      %v2985 = vunpack.c.l.b16 %v2967
      %v2986 = vunpack.c.h.b16 %v2967
      %v2987 = vunpack.c.l.b16 %v2968
      %v2988 = vunpack.c.l.b16 %v2969
      %v2989 = vunpack.c.h.b16 %v2969
      %v2990 = vunpack.c.l.b16 %v2970
      %v2991 = vpack.c.b16 %v2982, %v2979
      %v2992 = vpack.c.b16 %v2983, %v2980
      %v2993 = vpack.c.b16 %v2984, %v2981
      %v2994 = vpack.c.b16 %v2988, %v2985
      %v2995 = vpack.c.b16 %v2989, %v2986
      %v2996 = vpack.c.b16 %v2990, %v2987
      %3003 = vmatpush.bf16.msra.mxu0 0
      %3004 = vmatpush.bf16.msra.mxu0 0
      %3005 = vmatpush.bf16.msra.mxu0 0
      %3006 = vmatpush.bf16.msra.mxu0 0
      %3007 = vmatpush.bf16.msra.mxu0 0
      %3008 = vmatpush.bf16.msra.mxu0 0
      %3009 = vmatpush.bf16.msra.mxu0 %v2994
      %3010 = vmatpush.bf16.msra.mxu0 %v2991
      %3011 = vmatmul.bf16.gmra.mxu0 %v1768
      %v3012 = vpop.f32.mrf.mxu0
      %v3013 = vadd.f32 0.0, %v3012
      %v3014 = vpop.f32.mrf.mxu0
      %3015 = vdwg.mxu0
      %3016 = vmatpush.bf16.msra.mxu0 0
      %3017 = vmatpush.bf16.msra.mxu0 0
      %3018 = vmatpush.bf16.msra.mxu0 0
      %3019 = vmatpush.bf16.msra.mxu0 0
      %3020 = vmatpush.bf16.msra.mxu0 0
      %3021 = vmatpush.bf16.msra.mxu0 0
      %3022 = vmatpush.bf16.msra.mxu0 %v2995
      %3023 = vmatpush.bf16.msra.mxu0 %v2992
      %3024 = vmatmul.bf16.gmra.mxu0 %v1768
      %v3025 = vpop.f32.mrf.mxu0
      %v3026 = vadd.f32 0.0, %v3025
      %v3027 = vpop.f32.mrf.mxu0
      %3028 = vdwg.mxu0
      %3029 = vmatpush.bf16.msra.mxu0 0
      %3030 = vmatpush.bf16.msra.mxu0 0
      %3031 = vmatpush.bf16.msra.mxu0 0
      %3032 = vmatpush.bf16.msra.mxu0 0
      %3033 = vmatpush.bf16.msra.mxu0 0
      %3034 = vmatpush.bf16.msra.mxu0 0
      %3035 = vmatpush.bf16.msra.mxu0 %v2996
      %3036 = vmatpush.bf16.msra.mxu0 %v2993
      %3037 = vmatmul.bf16.gmra.mxu0 %v1768
      %v3038 = vpop.f32.mrf.mxu0
      %v3039 = vadd.f32 0.0, %v3038
      %v3040 = vpop.f32.mrf.mxu0
      %3041 = vdwg.mxu0
      %s3042 = scalar_lea.vmem %s13, 1
      %v3043 = vld [vmem:[%s3042] sm:$0x1]
      %v3044 = vperm.slane %v3013, 0
      %v3045 = vmul.f32 %v1813, %v3044
      %v3046 = vmul.f32 %v1818, %v3044
      %v3047 = vmul.f32 %v1823, %v3044
      %v3048 = vmul.f32 %v1828, %v3044
      %v3049 = vmul.f32 %v1833, %v3044
      %v3050 = vmul.f32 %v1838, %v3044
      %v3051 = vmul.f32 %v1843, %v3044
      %v3052 = vmul.f32 %v1848, %v3044
      %v3054 = vperm.slane %v3043, 0
      %v3056 = vadd.f32 %v3054, %v3045
      %v3057 = vadd.f32 %v3054, %v3046
      %v3058 = vadd.f32 %v3054, %v3047
      %v3059 = vadd.f32 %v3054, %v3048
      %v3060 = vadd.f32 %v3054, %v3049
      %v3061 = vadd.f32 %v3054, %v3050
      %v3062 = vadd.f32 %v3054, %v3051
      %v3063 = vadd.f32 %v3054, %v3052
      %v3064 = vmul.f32 %v1872, %v3044
      %v3065 = vmul.f32 %v1876, %v3044
      %v3066 = vmul.f32 %v1880, %v3044
      %v3067 = vmul.f32 %v1884, %v3044
      %v3068 = vmul.f32 %v1888, %v3044
      %v3069 = vmul.f32 %v1892, %v3044
      %v3070 = vmul.f32 %v1896, %v3044
      %v3071 = vmul.f32 %v1900, %v3044
      %3080 = vrot.lane.b32.xlu0 %v3064, 96
      %v3081 = vpop.permute.xlu0 %3080
      %3082 = vrot.lane.b32.xlu0 %v3065, 96
      %v3083 = vpop.permute.xlu0 %3082
      %3084 = vrot.lane.b32.xlu0 %v3066, 96
      %v3085 = vpop.permute.xlu0 %3084
      %3086 = vrot.lane.b32.xlu0 %v3067, 96
      %v3087 = vpop.permute.xlu0 %3086
      %3088 = vrot.lane.b32.xlu0 %v3068, 96
      %v3089 = vpop.permute.xlu0 %3088
      %3090 = vrot.lane.b32.xlu0 %v3069, 96
      %v3091 = vpop.permute.xlu0 %3090
      %3092 = vrot.lane.b32.xlu0 %v3070, 96
      %v3093 = vpop.permute.xlu0 %3092
      %3094 = vrot.lane.b32.xlu0 %v3071, 96
      %v3095 = vpop.permute.xlu0 %3094
      %v3104 = vadd.f32 %v3056, %v3081
      %v3105 = vadd.f32 %v3057, %v3083
      %v3106 = vadd.f32 %v3058, %v3085
      %v3107 = vadd.f32 %v3059, %v3087
      %v3108 = vadd.f32 %v3060, %v3089
      %v3109 = vadd.f32 %v3061, %v3091
      %v3110 = vadd.f32 %v3062, %v3093
      %v3111 = vadd.f32 %v3063, %v3095
      %v3112 = vmul.f32 %v1952, %v3044
      %v3113 = vmul.f32 %v1956, %v3044
      %v3114 = vmul.f32 %v1960, %v3044
      %v3115 = vmul.f32 %v1964, %v3044
      %v3116 = vmul.f32 %v1968, %v3044
      %v3117 = vmul.f32 %v1972, %v3044
      %v3118 = vmul.f32 %v1976, %v3044
      %v3119 = vmul.f32 %v1980, %v3044
      %3128 = vrot.lane.b32.xlu0 %v3112, 64
      %v3129 = vpop.permute.xlu0 %3128
      %3130 = vrot.lane.b32.xlu0 %v3113, 64
      %v3131 = vpop.permute.xlu0 %3130
      %3132 = vrot.lane.b32.xlu0 %v3114, 64
      %v3133 = vpop.permute.xlu0 %3132
      %3134 = vrot.lane.b32.xlu0 %v3115, 64
      %v3135 = vpop.permute.xlu0 %3134
      %3136 = vrot.lane.b32.xlu0 %v3116, 64
      %v3137 = vpop.permute.xlu0 %3136
      %3138 = vrot.lane.b32.xlu0 %v3117, 64
      %v3139 = vpop.permute.xlu0 %3138
      %3140 = vrot.lane.b32.xlu0 %v3118, 64
      %v3141 = vpop.permute.xlu0 %3140
      %3142 = vrot.lane.b32.xlu0 %v3119, 64
      %v3143 = vpop.permute.xlu0 %3142
      %v3152 = vadd.f32 %v3104, %v3129
      %v3153 = vadd.f32 %v3105, %v3131
      %v3154 = vadd.f32 %v3106, %v3133
      %v3155 = vadd.f32 %v3107, %v3135
      %v3156 = vadd.f32 %v3108, %v3137
      %v3157 = vadd.f32 %v3109, %v3139
      %v3158 = vadd.f32 %v3110, %v3141
      %v3159 = vadd.f32 %v3111, %v3143
      %v3160 = vmul.f32 %v2032, %v3044
      %v3161 = vmul.f32 %v2036, %v3044
      %v3162 = vmul.f32 %v2040, %v3044
      %v3163 = vmul.f32 %v2044, %v3044
      %v3164 = vmul.f32 %v2048, %v3044
      %v3165 = vmul.f32 %v2052, %v3044
      %v3166 = vmul.f32 %v2056, %v3044
      %v3167 = vmul.f32 %v2060, %v3044
      %3176 = vrot.lane.b32.xlu0 %v3160, 32
      %v3177 = vpop.permute.xlu0 %3176
      %3178 = vrot.lane.b32.xlu0 %v3161, 32
      %v3179 = vpop.permute.xlu0 %3178
      %3180 = vrot.lane.b32.xlu0 %v3162, 32
      %v3181 = vpop.permute.xlu0 %3180
      %3182 = vrot.lane.b32.xlu0 %v3163, 32
      %v3183 = vpop.permute.xlu0 %3182
      %3184 = vrot.lane.b32.xlu0 %v3164, 32
      %v3185 = vpop.permute.xlu0 %3184
      %3186 = vrot.lane.b32.xlu0 %v3165, 32
      %v3187 = vpop.permute.xlu0 %3186
      %3188 = vrot.lane.b32.xlu0 %v3166, 32
      %v3189 = vpop.permute.xlu0 %3188
      %3190 = vrot.lane.b32.xlu0 %v3167, 32
      %v3191 = vpop.permute.xlu0 %3190
      %v3200 = vadd.f32 %v3152, %v3177
      %v3201 = vadd.f32 %v3153, %v3179
      %v3202 = vadd.f32 %v3154, %v3181
      %v3203 = vadd.f32 %v3155, %v3183
      %v3204 = vadd.f32 %v3156, %v3185
      %v3205 = vadd.f32 %v3157, %v3187
      %v3206 = vadd.f32 %v3158, %v3189
      %v3207 = vadd.f32 %v3159, %v3191
      %v3208 = vperm.slane %v3026, 0
      %v3209 = vmul.f32 %v2112, %v3208
      %v3210 = vmul.f32 %v2116, %v3208
      %v3211 = vmul.f32 %v2120, %v3208
      %v3212 = vmul.f32 %v2124, %v3208
      %v3213 = vmul.f32 %v2128, %v3208
      %v3214 = vmul.f32 %v2132, %v3208
      %v3215 = vmul.f32 %v2136, %v3208
      %v3216 = vmul.f32 %v2140, %v3208
      %v3217 = vadd.f32 %v3200, %v3209
      %v3218 = vadd.f32 %v3201, %v3210
      %v3219 = vadd.f32 %v3202, %v3211
      %v3220 = vadd.f32 %v3203, %v3212
      %v3221 = vadd.f32 %v3204, %v3213
      %v3222 = vadd.f32 %v3205, %v3214
      %v3223 = vadd.f32 %v3206, %v3215
      %v3224 = vadd.f32 %v3207, %v3216
      %v3225 = vmul.f32 %v2161, %v3208
      %v3226 = vmul.f32 %v2165, %v3208
      %v3227 = vmul.f32 %v2169, %v3208
      %v3228 = vmul.f32 %v2173, %v3208
      %v3229 = vmul.f32 %v2177, %v3208
      %v3230 = vmul.f32 %v2181, %v3208
      %v3231 = vmul.f32 %v2185, %v3208
      %v3232 = vmul.f32 %v2189, %v3208
      %3241 = vrot.lane.b32.xlu0 %v3225, 96
      %v3242 = vpop.permute.xlu0 %3241
      %3243 = vrot.lane.b32.xlu0 %v3226, 96
      %v3244 = vpop.permute.xlu0 %3243
      %3245 = vrot.lane.b32.xlu0 %v3227, 96
      %v3246 = vpop.permute.xlu0 %3245
      %3247 = vrot.lane.b32.xlu0 %v3228, 96
      %v3248 = vpop.permute.xlu0 %3247
      %3249 = vrot.lane.b32.xlu0 %v3229, 96
      %v3250 = vpop.permute.xlu0 %3249
      %3251 = vrot.lane.b32.xlu0 %v3230, 96
      %v3252 = vpop.permute.xlu0 %3251
      %3253 = vrot.lane.b32.xlu0 %v3231, 96
      %v3254 = vpop.permute.xlu0 %3253
      %3255 = vrot.lane.b32.xlu0 %v3232, 96
      %v3256 = vpop.permute.xlu0 %3255
      %v3265 = vadd.f32 %v3217, %v3242
      %v3266 = vadd.f32 %v3218, %v3244
      %v3267 = vadd.f32 %v3219, %v3246
      %v3268 = vadd.f32 %v3220, %v3248
      %v3269 = vadd.f32 %v3221, %v3250
      %v3270 = vadd.f32 %v3222, %v3252
      %v3271 = vadd.f32 %v3223, %v3254
      %v3272 = vadd.f32 %v3224, %v3256
      %v3273 = vmul.f32 %v2241, %v3208
      %v3274 = vmul.f32 %v2245, %v3208
      %v3275 = vmul.f32 %v2249, %v3208
      %v3276 = vmul.f32 %v2253, %v3208
      %v3277 = vmul.f32 %v2257, %v3208
      %v3278 = vmul.f32 %v2261, %v3208
      %v3279 = vmul.f32 %v2265, %v3208
      %v3280 = vmul.f32 %v2269, %v3208
      %3289 = vrot.lane.b32.xlu0 %v3273, 64
      %v3290 = vpop.permute.xlu0 %3289
      %3291 = vrot.lane.b32.xlu0 %v3274, 64
      %v3292 = vpop.permute.xlu0 %3291
      %3293 = vrot.lane.b32.xlu0 %v3275, 64
      %v3294 = vpop.permute.xlu0 %3293
      %3295 = vrot.lane.b32.xlu0 %v3276, 64
      %v3296 = vpop.permute.xlu0 %3295
      %3297 = vrot.lane.b32.xlu0 %v3277, 64
      %v3298 = vpop.permute.xlu0 %3297
      %3299 = vrot.lane.b32.xlu0 %v3278, 64
      %v3300 = vpop.permute.xlu0 %3299
      %3301 = vrot.lane.b32.xlu0 %v3279, 64
      %v3302 = vpop.permute.xlu0 %3301
      %3303 = vrot.lane.b32.xlu0 %v3280, 64
      %v3304 = vpop.permute.xlu0 %3303
      %v3313 = vadd.f32 %v3265, %v3290
      %v3314 = vadd.f32 %v3266, %v3292
      %v3315 = vadd.f32 %v3267, %v3294
      %v3316 = vadd.f32 %v3268, %v3296
      %v3317 = vadd.f32 %v3269, %v3298
      %v3318 = vadd.f32 %v3270, %v3300
      %v3319 = vadd.f32 %v3271, %v3302
      %v3320 = vadd.f32 %v3272, %v3304
      %v3321 = vmul.f32 %v2321, %v3208
      %v3322 = vmul.f32 %v2325, %v3208
      %v3323 = vmul.f32 %v2329, %v3208
      %v3324 = vmul.f32 %v2333, %v3208
      %v3325 = vmul.f32 %v2337, %v3208
      %v3326 = vmul.f32 %v2341, %v3208
      %v3327 = vmul.f32 %v2345, %v3208
      %v3328 = vmul.f32 %v2349, %v3208
      %3337 = vrot.lane.b32.xlu0 %v3321, 32
      %v3338 = vpop.permute.xlu0 %3337
      %3339 = vrot.lane.b32.xlu0 %v3322, 32
      %v3340 = vpop.permute.xlu0 %3339
      %3341 = vrot.lane.b32.xlu0 %v3323, 32
      %v3342 = vpop.permute.xlu0 %3341
      %3343 = vrot.lane.b32.xlu0 %v3324, 32
      %v3344 = vpop.permute.xlu0 %3343
      %3345 = vrot.lane.b32.xlu0 %v3325, 32
      %v3346 = vpop.permute.xlu0 %3345
      %3347 = vrot.lane.b32.xlu0 %v3326, 32
      %v3348 = vpop.permute.xlu0 %3347
      %3349 = vrot.lane.b32.xlu0 %v3327, 32
      %v3350 = vpop.permute.xlu0 %3349
      %3351 = vrot.lane.b32.xlu0 %v3328, 32
      %v3352 = vpop.permute.xlu0 %3351
      %v3361 = vadd.f32 %v3313, %v3338
      %v3362 = vadd.f32 %v3314, %v3340
      %v3363 = vadd.f32 %v3315, %v3342
      %v3364 = vadd.f32 %v3316, %v3344
      %v3365 = vadd.f32 %v3317, %v3346
      %v3366 = vadd.f32 %v3318, %v3348
      %v3367 = vadd.f32 %v3319, %v3350
      %v3368 = vadd.f32 %v3320, %v3352
      %v3369 = vperm.slane %v3039, 0
      %v3370 = vmul.f32 %v2401, %v3369
      %v3371 = vmul.f32 %v2405, %v3369
      %v3372 = vmul.f32 %v2409, %v3369
      %v3373 = vmul.f32 %v2413, %v3369
      %v3374 = vmul.f32 %v2417, %v3369
      %v3375 = vmul.f32 %v2421, %v3369
      %v3376 = vmul.f32 %v2425, %v3369
      %v3377 = vmul.f32 %v2429, %v3369
      %v3378 = vadd.f32 %v3361, %v3370
      %v3379 = vadd.f32 %v3362, %v3371
      %v3380 = vadd.f32 %v3363, %v3372
      %v3381 = vadd.f32 %v3364, %v3373
      %v3382 = vadd.f32 %v3365, %v3374
      %v3383 = vadd.f32 %v3366, %v3375
      %v3384 = vadd.f32 %v3367, %v3376
      %v3385 = vadd.f32 %v3368, %v3377
      %v3386 = vadd.f32 %v2954, %v3378
      %v3387 = vadd.f32 %v2955, %v3379
      %v3388 = vadd.f32 %v2956, %v3380
      %v3389 = vadd.f32 %v2957, %v3381
      %v3390 = vadd.f32 %v2958, %v3382
      %v3391 = vadd.f32 %v2959, %v3383
      %v3392 = vadd.f32 %v2960, %v3384
      %v3393 = vadd.f32 %v2961, %v3385
      %v3394 = vadd.f32 %v3386, %v1134
      %v3395 = vadd.f32 %v3387, %v1135
      %v3396 = vadd.f32 %v3388, %v1136
      %v3397 = vadd.f32 %v3389, %v1137
      %v3398 = vadd.f32 %v3390, %v1138
      %v3399 = vadd.f32 %v3391, %v1139
      %v3400 = vadd.f32 %v3392, %v1140
      %v3401 = vadd.f32 %v3393, %v1141
      %v3402 = vrot.slane %v3394, 7
      %v3403 = vrot.slane %v3395, 7
      %v3404 = vrot.slane %v3396, 7
      %v3405 = vrot.slane %v3397, 7
      %v3406 = vrot.slane %v3398, 7
      %v3407 = vrot.slane %v3399, 7
      %v3408 = vrot.slane %v3400, 7
      %v3409 = vrot.slane %v3401, 7
      %v3410 = vsel %vm1153, %v3408, %v3409
      %v3411 = vsel %vm1153, %v3407, %v3408
      %v3412 = vsel %vm1153, %v3406, %v3407
      %v3413 = vsel %vm1153, %v3405, %v3406
      %v3414 = vsel %vm1153, %v3404, %v3405
      %v3415 = vsel %vm1153, %v3403, %v3404
      %v3416 = vsel %vm1153, %v3402, %v3403
      %v3417 = vsel %vm1153, %v3409, %v3402
      %v3418 = vmul.f32 %v3417, %v1165
      %v3419 = vmul.f32 %v3416, %v1170
      %v3420 = vmul.f32 %v3415, %v1175
      %v3421 = vmul.f32 %v3414, %v1180
      %v3422 = vmul.f32 %v3413, %v1185
      %v3423 = vmul.f32 %v3412, %v1190
      %v3424 = vmul.f32 %v3411, %v1195
      %v3425 = vmul.f32 %v3410, %v1200
      %v3426 = vrot.slane %v3394, 1
      %v3427 = vrot.slane %v3395, 1
      %v3428 = vrot.slane %v3396, 1
      %v3429 = vrot.slane %v3397, 1
      %v3430 = vrot.slane %v3398, 1
      %v3431 = vrot.slane %v3399, 1
      %v3432 = vrot.slane %v3400, 1
      %v3433 = vrot.slane %v3401, 1
      %v3434 = vsel %vm1218, %v3432, %v3433
      %v3435 = vsel %vm1218, %v3431, %v3432
      %v3436 = vsel %vm1218, %v3430, %v3431
      %v3437 = vsel %vm1218, %v3429, %v3430
      %v3438 = vsel %vm1218, %v3428, %v3429
      %v3439 = vsel %vm1218, %v3427, %v3428
      %v3440 = vsel %vm1218, %v3426, %v3427
      %v3441 = vsel %vm1218, %v3433, %v3426
      %v3442 = vmul.f32 %v3440, %v1230
      %v3443 = vmul.f32 %v3439, %v1235
      %v3444 = vmul.f32 %v3438, %v1240
      %v3445 = vmul.f32 %v3437, %v1245
      %v3446 = vmul.f32 %v3436, %v1250
      %v3447 = vmul.f32 %v3435, %v1255
      %v3448 = vmul.f32 %v3434, %v1260
      %v3449 = vmul.f32 %v3441, %v1265
      %3458 = vrot.lane.b32.xlu0 %v3394, 32
      %v3459 = vpop.permute.xlu0 %3458
      %3460 = vrot.lane.b32.xlu0 %v3395, 32
      %v3461 = vpop.permute.xlu0 %3460
      %3462 = vrot.lane.b32.xlu0 %v3396, 32
      %v3463 = vpop.permute.xlu0 %3462
      %3464 = vrot.lane.b32.xlu0 %v3397, 32
      %v3465 = vpop.permute.xlu0 %3464
      %3466 = vrot.lane.b32.xlu0 %v3398, 32
      %v3467 = vpop.permute.xlu0 %3466
      %3468 = vrot.lane.b32.xlu0 %v3399, 32
      %v3469 = vpop.permute.xlu0 %3468
      %3470 = vrot.lane.b32.xlu0 %v3400, 32
      %v3471 = vpop.permute.xlu0 %3470
      %3472 = vrot.lane.b32.xlu0 %v3401, 32
      %v3473 = vpop.permute.xlu0 %3472
      %3490 = vrot.lane.b32.xlu0 %v3442, 64
      %v3491 = vpop.permute.xlu0 %3490
      %3492 = vrot.lane.b32.xlu0 %v3443, 64
      %v3493 = vpop.permute.xlu0 %3492
      %3494 = vrot.lane.b32.xlu0 %v3444, 64
      %v3495 = vpop.permute.xlu0 %3494
      %3496 = vrot.lane.b32.xlu0 %v3445, 64
      %v3497 = vpop.permute.xlu0 %3496
      %3498 = vrot.lane.b32.xlu0 %v3446, 64
      %v3499 = vpop.permute.xlu0 %3498
      %3500 = vrot.lane.b32.xlu0 %v3447, 64
      %v3501 = vpop.permute.xlu0 %3500
      %3502 = vrot.lane.b32.xlu0 %v3448, 64
      %v3503 = vpop.permute.xlu0 %3502
      %3504 = vrot.lane.b32.xlu0 %v3449, 64
      %v3505 = vpop.permute.xlu0 %3504
      %v3514 = vsel %vm1339, %v3418, %v3459
      %v3515 = vsel %vm1339, %v3419, %v3461
      %v3516 = vsel %vm1339, %v3420, %v3463
      %v3517 = vsel %vm1339, %v3421, %v3465
      %v3518 = vsel %vm1339, %v3422, %v3467
      %v3519 = vsel %vm1339, %v3423, %v3469
      %v3520 = vsel %vm1339, %v3424, %v3471
      %v3521 = vsel %vm1339, %v3425, %v3473
      %v3522 = vsel %vm1348, %v3514, %v3491
      %v3523 = vsel %vm1348, %v3515, %v3493
      %v3524 = vsel %vm1348, %v3516, %v3495
      %v3525 = vsel %vm1348, %v3517, %v3497
      %v3526 = vsel %vm1348, %v3518, %v3499
      %v3527 = vsel %vm1348, %v3519, %v3501
      %v3528 = vsel %vm1348, %v3520, %v3503
      %v3529 = vsel %vm1348, %v3521, %v3505
      %v3530 = vpack.c.bf16 %v3522, %v3522
      %v3531 = vpack.c.bf16 %v3523, %v3523
      %v3532 = vpack.c.bf16 %v3524, %v3524
      %v3533 = vpack.c.bf16 %v3525, %v3525
      %v3534 = vpack.c.bf16 %v3526, %v3526
      %v3535 = vpack.c.bf16 %v3527, %v3527
      %v3536 = vpack.c.bf16 %v3528, %v3528
      %v3537 = vpack.c.bf16 %v3529, %v3529
      %3538 = vst.msk [vmem:[#allocation2 + $0x8] sm:$0xf] %vm631, %v3530
      %3539 = vst.msk [vmem:[#allocation2 + $0xc] sm:$0xf] %vm631, %v3531
      %3540 = vst.msk [vmem:[#allocation2 + $0x10] sm:$0xf] %vm631, %v3532
      %3541 = vst.msk [vmem:[#allocation2 + $0x14] sm:$0xf] %vm631, %v3533
      %3542 = vst.msk [vmem:[#allocation2 + $0x18] sm:$0xf] %vm631, %v3534
      %3543 = vst.msk [vmem:[#allocation2 + $0x1c] sm:$0xf] %vm631, %v3535
      %3544 = vst.msk [vmem:[#allocation2 + $0x20] sm:$0xf] %vm631, %v3536
      %3545 = vst.msk [vmem:[#allocation2 + $0x24] sm:$0xf] %vm631, %v3537
      %s3546 = scalar_lea.vmem %s11, 336
      %v3547 = vld [vmem:[%s3546] sm:$0xf]
      %v3548 = vld [vmem:[%s3546 + $0x4] sm:$0xf]
      %v3549 = vld [vmem:[%s3546 + $0x8] sm:$0xf]
      %v3550 = vld [vmem:[%s3546 + $0xc] sm:$0xf]
      %v3551 = vld [vmem:[%s3546 + $0x10] sm:$0xf]
      %v3552 = vld [vmem:[%s3546 + $0x14] sm:$0xf]
      %v3553 = vld [vmem:[%s3546 + $0x18] sm:$0xf]
      %v3554 = vld [vmem:[%s3546 + $0x1c] sm:$0xf]
      %v3555 = vld [vmem:[%s3546 + $0x20] sm:$0xf]
      %v3556 = vld [vmem:[%s3546 + $0x24] sm:$0xf]
      %v3557 = vld [vmem:[%s3546 + $0x28] sm:$0xf]
      %v3558 = vld [vmem:[%s3546 + $0x2c] sm:$0xf]
      %v3559 = vld [vmem:[#allocation2 + $0x4] sm:$0xf]
      %v3560 = vld [vmem:[#allocation2 + $0x8] sm:$0xf]
      %v3561 = vld [vmem:[#allocation2 + $0xc] sm:$0xf]
      %v3562 = vld [vmem:[#allocation2 + $0x10] sm:$0xf]
      %v3563 = vld [vmem:[#allocation2 + $0x14] sm:$0xf]
      %v3564 = vld [vmem:[#allocation2 + $0x18] sm:$0xf]
      %v3565 = vld [vmem:[#allocation2 + $0x1c] sm:$0xf]
      %v3566 = vld [vmem:[#allocation2 + $0x20] sm:$0xf]
      %s3567 = scalar_lea.vmem %s11, 288
      %v3568 = vld [vmem:[%s3567] sm:$0xf]
      %v3569 = vld [vmem:[%s3567 + $0x4] sm:$0xf]
      %v3570 = vld [vmem:[%s3567 + $0x8] sm:$0xf]
      %v3571 = vld [vmem:[%s3567 + $0xc] sm:$0xf]
      %v3572 = vld [vmem:[%s3567 + $0x10] sm:$0xf]
      %v3573 = vld [vmem:[%s3567 + $0x14] sm:$0xf]
      %v3574 = vld [vmem:[%s3567 + $0x18] sm:$0xf]
      %v3575 = vld [vmem:[%s3567 + $0x1c] sm:$0xf]
      %v3576 = vld [vmem:[%s3567 + $0x20] sm:$0xf]
      %v3577 = vld [vmem:[%s3567 + $0x24] sm:$0xf]
      %v3578 = vld [vmem:[%s3567 + $0x28] sm:$0xf]
      %v3579 = vld [vmem:[%s3567 + $0x2c] sm:$0xf]
      %v3588 = vunpack.c.l.b16 %v3559
      %v3589 = vunpack.c.l.b16 %v3560
      %v3590 = vunpack.c.l.b16 %v3561
      %v3591 = vunpack.c.l.b16 %v3562
      %v3592 = vunpack.c.l.b16 %v3563
      %v3593 = vunpack.c.l.b16 %v3564
      %v3594 = vunpack.c.l.b16 %v3565
      %v3595 = vunpack.c.l.b16 %v3566
      %v3596 = vpack.c.b16 %v3589, %v3588
      %v3597 = vpack.c.b16 %v3591, %v3590
      %v3598 = vpack.c.b16 %v3593, %v3592
      %v3599 = vpack.c.b16 %v3595, %v3594
      %v3612 = vunpack.c.l.b16 %v3568
      %v3613 = vunpack.c.l.b16 %v3569
      %v3614 = vunpack.c.l.b16 %v3570
      %v3615 = vunpack.c.l.b16 %v3571
      %v3616 = vunpack.c.l.b16 %v3572
      %v3617 = vunpack.c.l.b16 %v3573
      %v3618 = vunpack.c.l.b16 %v3574
      %v3619 = vunpack.c.l.b16 %v3575
      %v3620 = vunpack.c.l.b16 %v3576
      %v3621 = vunpack.c.l.b16 %v3577
      %v3622 = vunpack.c.l.b16 %v3578
      %v3623 = vunpack.c.l.b16 %v3579
      %v3624 = vpack.c.b16 %v3613, %v3612
      %v3625 = vpack.c.b16 %v3615, %v3614
      %v3626 = vpack.c.b16 %v3617, %v3616
      %v3627 = vpack.c.b16 %v3619, %v3618
      %v3628 = vpack.c.b16 %v3621, %v3620
      %v3629 = vpack.c.b16 %v3623, %v3622
      %v3637 = vsel %vm1462, %v3596, 0
      %v3640 = vsel %vm1462, %v3597, 0
      %v3643 = vsel %vm1462, %v3598, 0
      %v3646 = vsel %vm1462, %v3599, 0
      %3648 = vmatpush.bf16.msra.mxu0 0
      %3649 = vmatpush.bf16.msra.mxu0 0
      %3650 = vmatpush.bf16.msra.mxu0 %v3629
      %3651 = vmatpush.bf16.msra.mxu0 %v3628
      %3652 = vmatpush.bf16.msra.mxu0 %v3627
      %3653 = vmatpush.bf16.msra.mxu0 %v3626
      %3654 = vmatpush.bf16.msra.mxu0 %v3625
      %3655 = vmatpush.bf16.msra.mxu0 %v3624
      %3656 = vmatmul.bf16.gmra.mxu0 %v3637
      %v3657 = vpop.f32.mrf.mxu0
      %v3658 = vadd.f32 0.0, %v3657
      %v3659 = vpop.f32.mrf.mxu0
      %v3660 = vadd.f32 0.0, %v3659
      %3661 = vmatmul.bf16.gmra.mxu0 %v3640
      %v3662 = vpop.f32.mrf.mxu0
      %v3663 = vadd.f32 0.0, %v3662
      %v3664 = vpop.f32.mrf.mxu0
      %v3665 = vadd.f32 0.0, %v3664
      %3666 = vmatmul.bf16.gmra.mxu0 %v3643
      %v3667 = vpop.f32.mrf.mxu0
      %v3668 = vadd.f32 0.0, %v3667
      %v3669 = vpop.f32.mrf.mxu0
      %v3670 = vadd.f32 0.0, %v3669
      %3671 = vmatmul.bf16.gmra.mxu0 %v3646
      %v3672 = vpop.f32.mrf.mxu0
      %v3673 = vadd.f32 0.0, %v3672
      %v3674 = vpop.f32.mrf.mxu0
      %v3675 = vadd.f32 0.0, %v3674
      %3676 = vdwg.mxu0
      %v3685 = vunpack.c.l.b16 %v3530
      %v3686 = vunpack.c.l.b16 %v3531
      %v3687 = vunpack.c.l.b16 %v3532
      %v3688 = vunpack.c.l.b16 %v3533
      %v3689 = vunpack.c.l.b16 %v3534
      %v3690 = vunpack.c.l.b16 %v3535
      %v3691 = vunpack.c.l.b16 %v3536
      %v3692 = vunpack.c.l.b16 %v3537
      %v3693 = vpack.c.b16 %v3686, %v3685
      %v3694 = vpack.c.b16 %v3688, %v3687
      %v3695 = vpack.c.b16 %v3690, %v3689
      %v3696 = vpack.c.b16 %v3692, %v3691
      %v3709 = vunpack.c.l.b16 %v3547
      %v3710 = vunpack.c.l.b16 %v3548
      %v3711 = vunpack.c.l.b16 %v3549
      %v3712 = vunpack.c.l.b16 %v3550
      %v3713 = vunpack.c.l.b16 %v3551
      %v3714 = vunpack.c.l.b16 %v3552
      %v3715 = vunpack.c.l.b16 %v3553
      %v3716 = vunpack.c.l.b16 %v3554
      %v3717 = vunpack.c.l.b16 %v3555
      %v3718 = vunpack.c.l.b16 %v3556
      %v3719 = vunpack.c.l.b16 %v3557
      %v3720 = vunpack.c.l.b16 %v3558
      %v3721 = vpack.c.b16 %v3710, %v3709
      %v3722 = vpack.c.b16 %v3712, %v3711
      %v3723 = vpack.c.b16 %v3714, %v3713
      %v3724 = vpack.c.b16 %v3716, %v3715
      %v3725 = vpack.c.b16 %v3718, %v3717
      %v3726 = vpack.c.b16 %v3720, %v3719
      %v3734 = vsel %vm1462, %v3693, 0
      %v3737 = vsel %vm1462, %v3694, 0
      %v3740 = vsel %vm1462, %v3695, 0
      %v3743 = vsel %vm1462, %v3696, 0
      %3745 = vmatpush.bf16.msra.mxu0 0
      %3746 = vmatpush.bf16.msra.mxu0 0
      %3747 = vmatpush.bf16.msra.mxu0 %v3726
      %3748 = vmatpush.bf16.msra.mxu0 %v3725
      %3749 = vmatpush.bf16.msra.mxu0 %v3724
      %3750 = vmatpush.bf16.msra.mxu0 %v3723
      %3751 = vmatpush.bf16.msra.mxu0 %v3722
      %3752 = vmatpush.bf16.msra.mxu0 %v3721
      %3753 = vmatmul.bf16.gmra.mxu0 %v3734
      %v3754 = vpop.f32.mrf.mxu0
      %v3755 = vadd.f32 %v3658, %v3754
      %v3756 = vpop.f32.mrf.mxu0
      %v3757 = vadd.f32 %v3660, %v3756
      %3758 = vmatmul.bf16.gmra.mxu0 %v3737
      %v3759 = vpop.f32.mrf.mxu0
      %v3760 = vadd.f32 %v3663, %v3759
      %v3761 = vpop.f32.mrf.mxu0
      %v3762 = vadd.f32 %v3665, %v3761
      %3763 = vmatmul.bf16.gmra.mxu0 %v3740
      %v3764 = vpop.f32.mrf.mxu0
      %v3765 = vadd.f32 %v3668, %v3764
      %v3766 = vpop.f32.mrf.mxu0
      %v3767 = vadd.f32 %v3670, %v3766
      %3768 = vmatmul.bf16.gmra.mxu0 %v3743
      %v3769 = vpop.f32.mrf.mxu0
      %v3770 = vadd.f32 %v3673, %v3769
      %v3771 = vpop.f32.mrf.mxu0
      %v3772 = vadd.f32 %v3675, %v3771
      %3773 = vdwg.mxu0
      %v3774 = vld [vmem:[#allocation2 + $0xc] sm:$0xf]
      %v3775 = vld [vmem:[#allocation2 + $0x10] sm:$0xf]
      %v3776 = vld [vmem:[#allocation2 + $0x14] sm:$0xf]
      %v3777 = vld [vmem:[#allocation2 + $0x18] sm:$0xf]
      %v3778 = vld [vmem:[#allocation2 + $0x1c] sm:$0xf]
      %v3779 = vld [vmem:[#allocation2 + $0x20] sm:$0xf]
      %v3780 = vld [vmem:[#allocation2 + $0x24] sm:$0xf]
      %v3781 = vld [vmem:[#allocation2 + $0x28] sm:$0xf]
      %s3782 = scalar_lea.vmem %s11, 384
      %v3783 = vld [vmem:[%s3782] sm:$0xf]
      %v3784 = vld [vmem:[%s3782 + $0x4] sm:$0xf]
      %v3785 = vld [vmem:[%s3782 + $0x8] sm:$0xf]
      %v3786 = vld [vmem:[%s3782 + $0xc] sm:$0xf]
      %v3787 = vld [vmem:[%s3782 + $0x10] sm:$0xf]
      %v3788 = vld [vmem:[%s3782 + $0x14] sm:$0xf]
      %v3789 = vld [vmem:[%s3782 + $0x18] sm:$0xf]
      %v3790 = vld [vmem:[%s3782 + $0x1c] sm:$0xf]
      %v3791 = vld [vmem:[%s3782 + $0x20] sm:$0xf]
      %v3792 = vld [vmem:[%s3782 + $0x24] sm:$0xf]
      %v3793 = vld [vmem:[%s3782 + $0x28] sm:$0xf]
      %v3794 = vld [vmem:[%s3782 + $0x2c] sm:$0xf]
      %v3803 = vunpack.c.l.b16 %v3774
      %v3804 = vunpack.c.l.b16 %v3775
      %v3805 = vunpack.c.l.b16 %v3776
      %v3806 = vunpack.c.l.b16 %v3777
      %v3807 = vunpack.c.l.b16 %v3778
      %v3808 = vunpack.c.l.b16 %v3779
      %v3809 = vunpack.c.l.b16 %v3780
      %v3810 = vunpack.c.l.b16 %v3781
      %v3811 = vpack.c.b16 %v3804, %v3803
      %v3812 = vpack.c.b16 %v3806, %v3805
      %v3813 = vpack.c.b16 %v3808, %v3807
      %v3814 = vpack.c.b16 %v3810, %v3809
      %v3827 = vunpack.c.l.b16 %v3783
      %v3828 = vunpack.c.l.b16 %v3784
      %v3829 = vunpack.c.l.b16 %v3785
      %v3830 = vunpack.c.l.b16 %v3786
      %v3831 = vunpack.c.l.b16 %v3787
      %v3832 = vunpack.c.l.b16 %v3788
      %v3833 = vunpack.c.l.b16 %v3789
      %v3834 = vunpack.c.l.b16 %v3790
      %v3835 = vunpack.c.l.b16 %v3791
      %v3836 = vunpack.c.l.b16 %v3792
      %v3837 = vunpack.c.l.b16 %v3793
      %v3838 = vunpack.c.l.b16 %v3794
      %v3839 = vpack.c.b16 %v3828, %v3827
      %v3840 = vpack.c.b16 %v3830, %v3829
      %v3841 = vpack.c.b16 %v3832, %v3831
      %v3842 = vpack.c.b16 %v3834, %v3833
      %v3843 = vpack.c.b16 %v3836, %v3835
      %v3844 = vpack.c.b16 %v3838, %v3837
      %v3852 = vsel %vm1462, %v3811, 0
      %v3855 = vsel %vm1462, %v3812, 0
      %v3858 = vsel %vm1462, %v3813, 0
      %v3861 = vsel %vm1462, %v3814, 0
      %3863 = vmatpush.bf16.msra.mxu0 0
      %3864 = vmatpush.bf16.msra.mxu0 0
      %3865 = vmatpush.bf16.msra.mxu0 %v3844
      %3866 = vmatpush.bf16.msra.mxu0 %v3843
      %3867 = vmatpush.bf16.msra.mxu0 %v3842
      %3868 = vmatpush.bf16.msra.mxu0 %v3841
      %3869 = vmatpush.bf16.msra.mxu0 %v3840
      %3870 = vmatpush.bf16.msra.mxu0 %v3839
      %3871 = vmatmul.bf16.gmra.mxu0 %v3852
      %v3872 = vpop.f32.mrf.mxu0
      %v3873 = vadd.f32 0.0, %v3872
      %v3874 = vpop.f32.mrf.mxu0
      %v3875 = vadd.f32 0.0, %v3874
      %3876 = vmatmul.bf16.gmra.mxu0 %v3855
      %v3877 = vpop.f32.mrf.mxu0
      %v3878 = vadd.f32 0.0, %v3877
      %v3879 = vpop.f32.mrf.mxu0
      %v3880 = vadd.f32 0.0, %v3879
      %3881 = vmatmul.bf16.gmra.mxu0 %v3858
      %v3882 = vpop.f32.mrf.mxu0
      %v3883 = vadd.f32 0.0, %v3882
      %v3884 = vpop.f32.mrf.mxu0
      %v3885 = vadd.f32 0.0, %v3884
      %3886 = vmatmul.bf16.gmra.mxu0 %v3861
      %v3887 = vpop.f32.mrf.mxu0
      %v3888 = vadd.f32 0.0, %v3887
      %v3889 = vpop.f32.mrf.mxu0
      %v3890 = vadd.f32 0.0, %v3889
      %3891 = vdwg.mxu0
      %v3892 = vadd.f32 %v3755, %v3873
      %v3893 = vadd.f32 %v3757, %v3875
      %v3894 = vadd.f32 %v3760, %v3878
      %v3895 = vadd.f32 %v3762, %v3880
      %v3896 = vadd.f32 %v3765, %v3883
      %v3897 = vadd.f32 %v3767, %v3885
      %v3898 = vadd.f32 %v3770, %v3888
      %v3899 = vadd.f32 %v3772, %v3890
      %s3900 = scalar_lea.vmem %s12, 96
      %v3901 = vld [vmem:[%s3900] sm:$0xff]
      %v3902 = vld [vmem:[%s3900 + $0x8] sm:$0xf]
      %v3903 = vld [vmem:[%s3900 + $0xc] sm:$0xff]
      %v3904 = vld [vmem:[%s3900 + $0x14] sm:$0xf]
      %v3905 = vld [vmem:[%s3900 + $0x18] sm:$0xff]
      %v3906 = vld [vmem:[%s3900 + $0x20] sm:$0xf]
      %v3907 = vld [vmem:[%s3900 + $0x24] sm:$0xff]
      %v3908 = vld [vmem:[%s3900 + $0x2c] sm:$0xf]
      %3910 = vrot.lane.b32.xlu0 %v1142, 96
      %v3911 = vpop.permute.xlu0 %3910
      %v3920 = vunpack.c.l.b16 %v3901
      %v3921 = vunpack.c.h.b16 %v3901
      %v3922 = vunpack.c.l.b16 %v3902
      %v3923 = vunpack.c.l.b16 %v3903
      %v3924 = vunpack.c.h.b16 %v3903
      %v3925 = vunpack.c.l.b16 %v3904
      %v3926 = vunpack.c.l.b16 %v3905
      %v3927 = vunpack.c.h.b16 %v3905
      %v3928 = vunpack.c.l.b16 %v3906
      %v3929 = vunpack.c.l.b16 %v3907
      %v3930 = vunpack.c.h.b16 %v3907
      %v3931 = vunpack.c.l.b16 %v3908
      %v3932 = vpack.c.b16 %v3923, %v3920
      %v3933 = vpack.c.b16 %v3924, %v3921
      %v3934 = vpack.c.b16 %v3925, %v3922
      %v3935 = vpack.c.b16 %v3929, %v3926
      %v3936 = vpack.c.b16 %v3930, %v3927
      %v3937 = vpack.c.b16 %v3931, %v3928
      %v3945 = vsel %vm1339, %v3911, 0
      %3947 = vmatpush.bf16.msra.mxu0 0
      %3948 = vmatpush.bf16.msra.mxu0 0
      %3949 = vmatpush.bf16.msra.mxu0 0
      %3950 = vmatpush.bf16.msra.mxu0 0
      %3951 = vmatpush.bf16.msra.mxu0 0
      %3952 = vmatpush.bf16.msra.mxu0 0
      %3953 = vmatpush.bf16.msra.mxu0 %v3935
      %3954 = vmatpush.bf16.msra.mxu0 %v3932
      %3955 = vmatmul.bf16.gmra.mxu0 %v3945
      %v3956 = vpop.f32.mrf.mxu0
      %v3957 = vadd.f32 0.0, %v3956
      %v3958 = vpop.f32.mrf.mxu0
      %3959 = vdwg.mxu0
      %3960 = vmatpush.bf16.msra.mxu0 0
      %3961 = vmatpush.bf16.msra.mxu0 0
      %3962 = vmatpush.bf16.msra.mxu0 0
      %3963 = vmatpush.bf16.msra.mxu0 0
      %3964 = vmatpush.bf16.msra.mxu0 0
      %3965 = vmatpush.bf16.msra.mxu0 0
      %3966 = vmatpush.bf16.msra.mxu0 %v3936
      %3967 = vmatpush.bf16.msra.mxu0 %v3933
      %3968 = vmatmul.bf16.gmra.mxu0 %v3945
      %v3969 = vpop.f32.mrf.mxu0
      %v3970 = vadd.f32 0.0, %v3969
      %v3971 = vpop.f32.mrf.mxu0
      %3972 = vdwg.mxu0
      %3973 = vmatpush.bf16.msra.mxu0 0
      %3974 = vmatpush.bf16.msra.mxu0 0
      %3975 = vmatpush.bf16.msra.mxu0 0
      %3976 = vmatpush.bf16.msra.mxu0 0
      %3977 = vmatpush.bf16.msra.mxu0 0
      %3978 = vmatpush.bf16.msra.mxu0 0
      %3979 = vmatpush.bf16.msra.mxu0 %v3937
      %3980 = vmatpush.bf16.msra.mxu0 %v3934
      %3981 = vmatmul.bf16.gmra.mxu0 %v3945
      %v3982 = vpop.f32.mrf.mxu0
      %v3983 = vadd.f32 0.0, %v3982
      %v3984 = vpop.f32.mrf.mxu0
      %3985 = vdwg.mxu0
      %s3986 = scalar_lea.vmem %s13, 2
      %v3987 = vld [vmem:[%s3986] sm:$0x1]
      %v3988 = vperm.slane %v3957, 0
      %v3989 = vmul.f32 %v1813, %v3988
      %v3990 = vmul.f32 %v1818, %v3988
      %v3991 = vmul.f32 %v1823, %v3988
      %v3992 = vmul.f32 %v1828, %v3988
      %v3993 = vmul.f32 %v1833, %v3988
      %v3994 = vmul.f32 %v1838, %v3988
      %v3995 = vmul.f32 %v1843, %v3988
      %v3996 = vmul.f32 %v1848, %v3988
      %v3998 = vperm.slane %v3987, 0
      %v4000 = vadd.f32 %v3998, %v3989
      %v4001 = vadd.f32 %v3998, %v3990
      %v4002 = vadd.f32 %v3998, %v3991
      %v4003 = vadd.f32 %v3998, %v3992
      %v4004 = vadd.f32 %v3998, %v3993
      %v4005 = vadd.f32 %v3998, %v3994
      %v4006 = vadd.f32 %v3998, %v3995
      %v4007 = vadd.f32 %v3998, %v3996
      %v4008 = vmul.f32 %v1872, %v3988
      %v4009 = vmul.f32 %v1876, %v3988
      %v4010 = vmul.f32 %v1880, %v3988
      %v4011 = vmul.f32 %v1884, %v3988
      %v4012 = vmul.f32 %v1888, %v3988
      %v4013 = vmul.f32 %v1892, %v3988
      %v4014 = vmul.f32 %v1896, %v3988
      %v4015 = vmul.f32 %v1900, %v3988
      %4024 = vrot.lane.b32.xlu0 %v4008, 96
      %v4025 = vpop.permute.xlu0 %4024
      %4026 = vrot.lane.b32.xlu0 %v4009, 96
      %v4027 = vpop.permute.xlu0 %4026
      %4028 = vrot.lane.b32.xlu0 %v4010, 96
      %v4029 = vpop.permute.xlu0 %4028
      %4030 = vrot.lane.b32.xlu0 %v4011, 96
      %v4031 = vpop.permute.xlu0 %4030
      %4032 = vrot.lane.b32.xlu0 %v4012, 96
      %v4033 = vpop.permute.xlu0 %4032
      %4034 = vrot.lane.b32.xlu0 %v4013, 96
      %v4035 = vpop.permute.xlu0 %4034
      %4036 = vrot.lane.b32.xlu0 %v4014, 96
      %v4037 = vpop.permute.xlu0 %4036
      %4038 = vrot.lane.b32.xlu0 %v4015, 96
      %v4039 = vpop.permute.xlu0 %4038
      %v4048 = vadd.f32 %v4000, %v4025
      %v4049 = vadd.f32 %v4001, %v4027
      %v4050 = vadd.f32 %v4002, %v4029
      %v4051 = vadd.f32 %v4003, %v4031
      %v4052 = vadd.f32 %v4004, %v4033
      %v4053 = vadd.f32 %v4005, %v4035
      %v4054 = vadd.f32 %v4006, %v4037
      %v4055 = vadd.f32 %v4007, %v4039
      %v4056 = vmul.f32 %v1952, %v3988
      %v4057 = vmul.f32 %v1956, %v3988
      %v4058 = vmul.f32 %v1960, %v3988
      %v4059 = vmul.f32 %v1964, %v3988
      %v4060 = vmul.f32 %v1968, %v3988
      %v4061 = vmul.f32 %v1972, %v3988
      %v4062 = vmul.f32 %v1976, %v3988
      %v4063 = vmul.f32 %v1980, %v3988
      %4072 = vrot.lane.b32.xlu0 %v4056, 64
      %v4073 = vpop.permute.xlu0 %4072
      %4074 = vrot.lane.b32.xlu0 %v4057, 64
      %v4075 = vpop.permute.xlu0 %4074
      %4076 = vrot.lane.b32.xlu0 %v4058, 64
      %v4077 = vpop.permute.xlu0 %4076
      %4078 = vrot.lane.b32.xlu0 %v4059, 64
      %v4079 = vpop.permute.xlu0 %4078
      %4080 = vrot.lane.b32.xlu0 %v4060, 64
      %v4081 = vpop.permute.xlu0 %4080
      %4082 = vrot.lane.b32.xlu0 %v4061, 64
      %v4083 = vpop.permute.xlu0 %4082
      %4084 = vrot.lane.b32.xlu0 %v4062, 64
      %v4085 = vpop.permute.xlu0 %4084
      %4086 = vrot.lane.b32.xlu0 %v4063, 64
      %v4087 = vpop.permute.xlu0 %4086
      %v4096 = vadd.f32 %v4048, %v4073
      %v4097 = vadd.f32 %v4049, %v4075
      %v4098 = vadd.f32 %v4050, %v4077
      %v4099 = vadd.f32 %v4051, %v4079
      %v4100 = vadd.f32 %v4052, %v4081
      %v4101 = vadd.f32 %v4053, %v4083
      %v4102 = vadd.f32 %v4054, %v4085
      %v4103 = vadd.f32 %v4055, %v4087
      %v4104 = vmul.f32 %v2032, %v3988
      %v4105 = vmul.f32 %v2036, %v3988
      %v4106 = vmul.f32 %v2040, %v3988
      %v4107 = vmul.f32 %v2044, %v3988
      %v4108 = vmul.f32 %v2048, %v3988
      %v4109 = vmul.f32 %v2052, %v3988
      %v4110 = vmul.f32 %v2056, %v3988
      %v4111 = vmul.f32 %v2060, %v3988
      %4120 = vrot.lane.b32.xlu0 %v4104, 32
      %v4121 = vpop.permute.xlu0 %4120
      %4122 = vrot.lane.b32.xlu0 %v4105, 32
      %v4123 = vpop.permute.xlu0 %4122
      %4124 = vrot.lane.b32.xlu0 %v4106, 32
      %v4125 = vpop.permute.xlu0 %4124
      %4126 = vrot.lane.b32.xlu0 %v4107, 32
      %v4127 = vpop.permute.xlu0 %4126
      %4128 = vrot.lane.b32.xlu0 %v4108, 32
      %v4129 = vpop.permute.xlu0 %4128
      %4130 = vrot.lane.b32.xlu0 %v4109, 32
      %v4131 = vpop.permute.xlu0 %4130
      %4132 = vrot.lane.b32.xlu0 %v4110, 32
      %v4133 = vpop.permute.xlu0 %4132
      %4134 = vrot.lane.b32.xlu0 %v4111, 32
      %v4135 = vpop.permute.xlu0 %4134
      %v4144 = vadd.f32 %v4096, %v4121
      %v4145 = vadd.f32 %v4097, %v4123
      %v4146 = vadd.f32 %v4098, %v4125
      %v4147 = vadd.f32 %v4099, %v4127
      %v4148 = vadd.f32 %v4100, %v4129
      %v4149 = vadd.f32 %v4101, %v4131
      %v4150 = vadd.f32 %v4102, %v4133
      %v4151 = vadd.f32 %v4103, %v4135
      %v4152 = vperm.slane %v3970, 0
      %v4153 = vmul.f32 %v2112, %v4152
      %v4154 = vmul.f32 %v2116, %v4152
      %v4155 = vmul.f32 %v2120, %v4152
      %v4156 = vmul.f32 %v2124, %v4152
      %v4157 = vmul.f32 %v2128, %v4152
      %v4158 = vmul.f32 %v2132, %v4152
      %v4159 = vmul.f32 %v2136, %v4152
      %v4160 = vmul.f32 %v2140, %v4152
      %v4161 = vadd.f32 %v4144, %v4153
      %v4162 = vadd.f32 %v4145, %v4154
      %v4163 = vadd.f32 %v4146, %v4155
      %v4164 = vadd.f32 %v4147, %v4156
      %v4165 = vadd.f32 %v4148, %v4157
      %v4166 = vadd.f32 %v4149, %v4158
      %v4167 = vadd.f32 %v4150, %v4159
      %v4168 = vadd.f32 %v4151, %v4160
      %v4169 = vmul.f32 %v2161, %v4152
      %v4170 = vmul.f32 %v2165, %v4152
      %v4171 = vmul.f32 %v2169, %v4152
      %v4172 = vmul.f32 %v2173, %v4152
      %v4173 = vmul.f32 %v2177, %v4152
      %v4174 = vmul.f32 %v2181, %v4152
      %v4175 = vmul.f32 %v2185, %v4152
      %v4176 = vmul.f32 %v2189, %v4152
      %4185 = vrot.lane.b32.xlu0 %v4169, 96
      %v4186 = vpop.permute.xlu0 %4185
      %4187 = vrot.lane.b32.xlu0 %v4170, 96
      %v4188 = vpop.permute.xlu0 %4187
      %4189 = vrot.lane.b32.xlu0 %v4171, 96
      %v4190 = vpop.permute.xlu0 %4189
      %4191 = vrot.lane.b32.xlu0 %v4172, 96
      %v4192 = vpop.permute.xlu0 %4191
      %4193 = vrot.lane.b32.xlu0 %v4173, 96
      %v4194 = vpop.permute.xlu0 %4193
      %4195 = vrot.lane.b32.xlu0 %v4174, 96
      %v4196 = vpop.permute.xlu0 %4195
      %4197 = vrot.lane.b32.xlu0 %v4175, 96
      %v4198 = vpop.permute.xlu0 %4197
      %4199 = vrot.lane.b32.xlu0 %v4176, 96
      %v4200 = vpop.permute.xlu0 %4199
      %v4209 = vadd.f32 %v4161, %v4186
      %v4210 = vadd.f32 %v4162, %v4188
      %v4211 = vadd.f32 %v4163, %v4190
      %v4212 = vadd.f32 %v4164, %v4192
      %v4213 = vadd.f32 %v4165, %v4194
      %v4214 = vadd.f32 %v4166, %v4196
      %v4215 = vadd.f32 %v4167, %v4198
      %v4216 = vadd.f32 %v4168, %v4200
      %v4217 = vmul.f32 %v2241, %v4152
      %v4218 = vmul.f32 %v2245, %v4152
      %v4219 = vmul.f32 %v2249, %v4152
      %v4220 = vmul.f32 %v2253, %v4152
      %v4221 = vmul.f32 %v2257, %v4152
      %v4222 = vmul.f32 %v2261, %v4152
      %v4223 = vmul.f32 %v2265, %v4152
      %v4224 = vmul.f32 %v2269, %v4152
      %4233 = vrot.lane.b32.xlu0 %v4217, 64
      %v4234 = vpop.permute.xlu0 %4233
      %4235 = vrot.lane.b32.xlu0 %v4218, 64
      %v4236 = vpop.permute.xlu0 %4235
      %4237 = vrot.lane.b32.xlu0 %v4219, 64
      %v4238 = vpop.permute.xlu0 %4237
      %4239 = vrot.lane.b32.xlu0 %v4220, 64
      %v4240 = vpop.permute.xlu0 %4239
      %4241 = vrot.lane.b32.xlu0 %v4221, 64
      %v4242 = vpop.permute.xlu0 %4241
      %4243 = vrot.lane.b32.xlu0 %v4222, 64
      %v4244 = vpop.permute.xlu0 %4243
      %4245 = vrot.lane.b32.xlu0 %v4223, 64
      %v4246 = vpop.permute.xlu0 %4245
      %4247 = vrot.lane.b32.xlu0 %v4224, 64
      %v4248 = vpop.permute.xlu0 %4247
      %v4257 = vadd.f32 %v4209, %v4234
      %v4258 = vadd.f32 %v4210, %v4236
      %v4259 = vadd.f32 %v4211, %v4238
      %v4260 = vadd.f32 %v4212, %v4240
      %v4261 = vadd.f32 %v4213, %v4242
      %v4262 = vadd.f32 %v4214, %v4244
      %v4263 = vadd.f32 %v4215, %v4246
      %v4264 = vadd.f32 %v4216, %v4248
      %v4265 = vmul.f32 %v2321, %v4152
      %v4266 = vmul.f32 %v2325, %v4152
      %v4267 = vmul.f32 %v2329, %v4152
      %v4268 = vmul.f32 %v2333, %v4152
      %v4269 = vmul.f32 %v2337, %v4152
      %v4270 = vmul.f32 %v2341, %v4152
      %v4271 = vmul.f32 %v2345, %v4152
      %v4272 = vmul.f32 %v2349, %v4152
      %4281 = vrot.lane.b32.xlu0 %v4265, 32
      %v4282 = vpop.permute.xlu0 %4281
      %4283 = vrot.lane.b32.xlu0 %v4266, 32
      %v4284 = vpop.permute.xlu0 %4283
      %4285 = vrot.lane.b32.xlu0 %v4267, 32
      %v4286 = vpop.permute.xlu0 %4285
      %4287 = vrot.lane.b32.xlu0 %v4268, 32
      %v4288 = vpop.permute.xlu0 %4287
      %4289 = vrot.lane.b32.xlu0 %v4269, 32
      %v4290 = vpop.permute.xlu0 %4289
      %4291 = vrot.lane.b32.xlu0 %v4270, 32
      %v4292 = vpop.permute.xlu0 %4291
      %4293 = vrot.lane.b32.xlu0 %v4271, 32
      %v4294 = vpop.permute.xlu0 %4293
      %4295 = vrot.lane.b32.xlu0 %v4272, 32
      %v4296 = vpop.permute.xlu0 %4295
      %v4305 = vadd.f32 %v4257, %v4282
      %v4306 = vadd.f32 %v4258, %v4284
      %v4307 = vadd.f32 %v4259, %v4286
      %v4308 = vadd.f32 %v4260, %v4288
      %v4309 = vadd.f32 %v4261, %v4290
      %v4310 = vadd.f32 %v4262, %v4292
      %v4311 = vadd.f32 %v4263, %v4294
      %v4312 = vadd.f32 %v4264, %v4296
      %v4313 = vperm.slane %v3983, 0
      %v4314 = vmul.f32 %v2401, %v4313
      %v4315 = vmul.f32 %v2405, %v4313
      %v4316 = vmul.f32 %v2409, %v4313
      %v4317 = vmul.f32 %v2413, %v4313
      %v4318 = vmul.f32 %v2417, %v4313
      %v4319 = vmul.f32 %v2421, %v4313
      %v4320 = vmul.f32 %v2425, %v4313
      %v4321 = vmul.f32 %v2429, %v4313
      %v4322 = vadd.f32 %v4305, %v4314
      %v4323 = vadd.f32 %v4306, %v4315
      %v4324 = vadd.f32 %v4307, %v4316
      %v4325 = vadd.f32 %v4308, %v4317
      %v4326 = vadd.f32 %v4309, %v4318
      %v4327 = vadd.f32 %v4310, %v4319
      %v4328 = vadd.f32 %v4311, %v4320
      %v4329 = vadd.f32 %v4312, %v4321
      %v4330 = vadd.f32 %v3892, %v4322
      %v4331 = vadd.f32 %v3893, %v4323
      %v4332 = vadd.f32 %v3894, %v4324
      %v4333 = vadd.f32 %v3895, %v4325
      %v4334 = vadd.f32 %v3896, %v4326
      %v4335 = vadd.f32 %v3897, %v4327
      %v4336 = vadd.f32 %v3898, %v4328
      %v4337 = vadd.f32 %v3899, %v4329
      %v4338 = vmax.f32 %v4330, 0.0
      %v4339 = vmax.f32 %v4331, 0.0
      %v4340 = vmax.f32 %v4332, 0.0
      %v4341 = vmax.f32 %v4333, 0.0
      %v4342 = vmax.f32 %v4334, 0.0
      %v4343 = vmax.f32 %v4335, 0.0
      %v4344 = vmax.f32 %v4336, 0.0
      %v4345 = vmax.f32 %v4337, 0.0
      %v4346 = vrot.slane %v4338, 7
      %v4347 = vrot.slane %v4339, 7
      %v4348 = vrot.slane %v4340, 7
      %v4349 = vrot.slane %v4341, 7
      %v4350 = vrot.slane %v4342, 7
      %v4351 = vrot.slane %v4343, 7
      %v4352 = vrot.slane %v4344, 7
      %v4353 = vrot.slane %v4345, 7
      %v4354 = vsel %vm1153, %v4352, %v4353
      %v4355 = vsel %vm1153, %v4351, %v4352
      %v4356 = vsel %vm1153, %v4350, %v4351
      %v4357 = vsel %vm1153, %v4349, %v4350
      %v4358 = vsel %vm1153, %v4348, %v4349
      %v4359 = vsel %vm1153, %v4347, %v4348
      %v4360 = vsel %vm1153, %v4346, %v4347
      %v4361 = vsel %vm1153, %v4353, %v4346
      %v4362 = vmul.f32 %v4361, %v1165
      %v4363 = vmul.f32 %v4360, %v1170
      %v4364 = vmul.f32 %v4359, %v1175
      %v4365 = vmul.f32 %v4358, %v1180
      %v4366 = vmul.f32 %v4357, %v1185
      %v4367 = vmul.f32 %v4356, %v1190
      %v4368 = vmul.f32 %v4355, %v1195
      %v4369 = vmul.f32 %v4354, %v1200
      %v4370 = vrot.slane %v4338, 1
      %v4371 = vrot.slane %v4339, 1
      %v4372 = vrot.slane %v4340, 1
      %v4373 = vrot.slane %v4341, 1
      %v4374 = vrot.slane %v4342, 1
      %v4375 = vrot.slane %v4343, 1
      %v4376 = vrot.slane %v4344, 1
      %v4377 = vrot.slane %v4345, 1
      %v4378 = vsel %vm1218, %v4376, %v4377
      %v4379 = vsel %vm1218, %v4375, %v4376
      %v4380 = vsel %vm1218, %v4374, %v4375
      %v4381 = vsel %vm1218, %v4373, %v4374
      %v4382 = vsel %vm1218, %v4372, %v4373
      %v4383 = vsel %vm1218, %v4371, %v4372
      %v4384 = vsel %vm1218, %v4370, %v4371
      %v4385 = vsel %vm1218, %v4377, %v4370
      %v4386 = vmul.f32 %v4384, %v1230
      %v4387 = vmul.f32 %v4383, %v1235
      %v4388 = vmul.f32 %v4382, %v1240
      %v4389 = vmul.f32 %v4381, %v1245
      %v4390 = vmul.f32 %v4380, %v1250
      %v4391 = vmul.f32 %v4379, %v1255
      %v4392 = vmul.f32 %v4378, %v1260
      %v4393 = vmul.f32 %v4385, %v1265
      %4402 = vrot.lane.b32.xlu0 %v4338, 32
      %v4403 = vpop.permute.xlu0 %4402
      %4404 = vrot.lane.b32.xlu0 %v4339, 32
      %v4405 = vpop.permute.xlu0 %4404
      %4406 = vrot.lane.b32.xlu0 %v4340, 32
      %v4407 = vpop.permute.xlu0 %4406
      %4408 = vrot.lane.b32.xlu0 %v4341, 32
      %v4409 = vpop.permute.xlu0 %4408
      %4410 = vrot.lane.b32.xlu0 %v4342, 32
      %v4411 = vpop.permute.xlu0 %4410
      %4412 = vrot.lane.b32.xlu0 %v4343, 32
      %v4413 = vpop.permute.xlu0 %4412
      %4414 = vrot.lane.b32.xlu0 %v4344, 32
      %v4415 = vpop.permute.xlu0 %4414
      %4416 = vrot.lane.b32.xlu0 %v4345, 32
      %v4417 = vpop.permute.xlu0 %4416
      %4434 = vrot.lane.b32.xlu0 %v4386, 64
      %v4435 = vpop.permute.xlu0 %4434
      %4436 = vrot.lane.b32.xlu0 %v4387, 64
      %v4437 = vpop.permute.xlu0 %4436
      %4438 = vrot.lane.b32.xlu0 %v4388, 64
      %v4439 = vpop.permute.xlu0 %4438
      %4440 = vrot.lane.b32.xlu0 %v4389, 64
      %v4441 = vpop.permute.xlu0 %4440
      %4442 = vrot.lane.b32.xlu0 %v4390, 64
      %v4443 = vpop.permute.xlu0 %4442
      %4444 = vrot.lane.b32.xlu0 %v4391, 64
      %v4445 = vpop.permute.xlu0 %4444
      %4446 = vrot.lane.b32.xlu0 %v4392, 64
      %v4447 = vpop.permute.xlu0 %4446
      %4448 = vrot.lane.b32.xlu0 %v4393, 64
      %v4449 = vpop.permute.xlu0 %4448
      %v4458 = vsel %vm1339, %v4362, %v4403
      %v4459 = vsel %vm1339, %v4363, %v4405
      %v4460 = vsel %vm1339, %v4364, %v4407
      %v4461 = vsel %vm1339, %v4365, %v4409
      %v4462 = vsel %vm1339, %v4366, %v4411
      %v4463 = vsel %vm1339, %v4367, %v4413
      %v4464 = vsel %vm1339, %v4368, %v4415
      %v4465 = vsel %vm1339, %v4369, %v4417
      %v4466 = vsel %vm1348, %v4458, %v4435
      %v4467 = vsel %vm1348, %v4459, %v4437
      %v4468 = vsel %vm1348, %v4460, %v4439
      %v4469 = vsel %vm1348, %v4461, %v4441
      %v4470 = vsel %vm1348, %v4462, %v4443
      %v4471 = vsel %vm1348, %v4463, %v4445
      %v4472 = vsel %vm1348, %v4464, %v4447
      %v4473 = vsel %vm1348, %v4465, %v4449
      %v4474 = vpack.c.bf16 %v4466, %v4466
      %v4475 = vpack.c.bf16 %v4467, %v4467
      %v4476 = vpack.c.bf16 %v4468, %v4468
      %v4477 = vpack.c.bf16 %v4469, %v4469
      %v4478 = vpack.c.bf16 %v4470, %v4470
      %v4479 = vpack.c.bf16 %v4471, %v4471
      %v4480 = vpack.c.bf16 %v4472, %v4472
      %v4481 = vpack.c.bf16 %v4473, %v4473
      %4482 = vst.msk [vmem:[#allocation2 + $0x8] sm:$0xf] %vm631, %v4474
      %4483 = vst.msk [vmem:[#allocation2 + $0xc] sm:$0xf] %vm631, %v4475
      %4484 = vst.msk [vmem:[#allocation2 + $0x10] sm:$0xf] %vm631, %v4476
      %4485 = vst.msk [vmem:[#allocation2 + $0x14] sm:$0xf] %vm631, %v4477
      %4486 = vst.msk [vmem:[#allocation2 + $0x18] sm:$0xf] %vm631, %v4478
      %4487 = vst.msk [vmem:[#allocation2 + $0x1c] sm:$0xf] %vm631, %v4479
      %4488 = vst.msk [vmem:[#allocation2 + $0x20] sm:$0xf] %vm631, %v4480
      %4489 = vst.msk [vmem:[#allocation2 + $0x24] sm:$0xf] %vm631, %v4481
      %s4490 = scalar_lea.vmem %s11, 480
      %v4491 = vld [vmem:[%s4490] sm:$0xf]
      %v4492 = vld [vmem:[%s4490 + $0x4] sm:$0xf]
      %v4493 = vld [vmem:[%s4490 + $0x8] sm:$0xf]
      %v4494 = vld [vmem:[%s4490 + $0xc] sm:$0xf]
      %v4495 = vld [vmem:[%s4490 + $0x10] sm:$0xf]
      %v4496 = vld [vmem:[%s4490 + $0x14] sm:$0xf]
      %v4497 = vld [vmem:[%s4490 + $0x18] sm:$0xf]
      %v4498 = vld [vmem:[%s4490 + $0x1c] sm:$0xf]
      %v4499 = vld [vmem:[%s4490 + $0x20] sm:$0xf]
      %v4500 = vld [vmem:[%s4490 + $0x24] sm:$0xf]
      %v4501 = vld [vmem:[%s4490 + $0x28] sm:$0xf]
      %v4502 = vld [vmem:[%s4490 + $0x2c] sm:$0xf]
      %v4503 = vld [vmem:[#allocation2 + $0x4] sm:$0xf]
      %v4504 = vld [vmem:[#allocation2 + $0x8] sm:$0xf]
      %v4505 = vld [vmem:[#allocation2 + $0xc] sm:$0xf]
      %v4506 = vld [vmem:[#allocation2 + $0x10] sm:$0xf]
      %v4507 = vld [vmem:[#allocation2 + $0x14] sm:$0xf]
      %v4508 = vld [vmem:[#allocation2 + $0x18] sm:$0xf]
      %v4509 = vld [vmem:[#allocation2 + $0x1c] sm:$0xf]
      %v4510 = vld [vmem:[#allocation2 + $0x20] sm:$0xf]
      %s4511 = scalar_lea.vmem %s11, 432
      %v4512 = vld [vmem:[%s4511] sm:$0xf]
      %v4513 = vld [vmem:[%s4511 + $0x4] sm:$0xf]
      %v4514 = vld [vmem:[%s4511 + $0x8] sm:$0xf]
      %v4515 = vld [vmem:[%s4511 + $0xc] sm:$0xf]
      %v4516 = vld [vmem:[%s4511 + $0x10] sm:$0xf]
      %v4517 = vld [vmem:[%s4511 + $0x14] sm:$0xf]
      %v4518 = vld [vmem:[%s4511 + $0x18] sm:$0xf]
      %v4519 = vld [vmem:[%s4511 + $0x1c] sm:$0xf]
      %v4520 = vld [vmem:[%s4511 + $0x20] sm:$0xf]
      %v4521 = vld [vmem:[%s4511 + $0x24] sm:$0xf]
      %v4522 = vld [vmem:[%s4511 + $0x28] sm:$0xf]
      %v4523 = vld [vmem:[%s4511 + $0x2c] sm:$0xf]
      %v4532 = vunpack.c.l.b16 %v4503
      %v4533 = vunpack.c.l.b16 %v4504
      %v4534 = vunpack.c.l.b16 %v4505
      %v4535 = vunpack.c.l.b16 %v4506
      %v4536 = vunpack.c.l.b16 %v4507
      %v4537 = vunpack.c.l.b16 %v4508
      %v4538 = vunpack.c.l.b16 %v4509
      %v4539 = vunpack.c.l.b16 %v4510
      %v4540 = vpack.c.b16 %v4533, %v4532
      %v4541 = vpack.c.b16 %v4535, %v4534
      %v4542 = vpack.c.b16 %v4537, %v4536
      %v4543 = vpack.c.b16 %v4539, %v4538
      %v4556 = vunpack.c.l.b16 %v4512
      %v4557 = vunpack.c.l.b16 %v4513
      %v4558 = vunpack.c.l.b16 %v4514
      %v4559 = vunpack.c.l.b16 %v4515
      %v4560 = vunpack.c.l.b16 %v4516
      %v4561 = vunpack.c.l.b16 %v4517
      %v4562 = vunpack.c.l.b16 %v4518
      %v4563 = vunpack.c.l.b16 %v4519
      %v4564 = vunpack.c.l.b16 %v4520
      %v4565 = vunpack.c.l.b16 %v4521
      %v4566 = vunpack.c.l.b16 %v4522
      %v4567 = vunpack.c.l.b16 %v4523
      %v4568 = vpack.c.b16 %v4557, %v4556
      %v4569 = vpack.c.b16 %v4559, %v4558
      %v4570 = vpack.c.b16 %v4561, %v4560
      %v4571 = vpack.c.b16 %v4563, %v4562
      %v4572 = vpack.c.b16 %v4565, %v4564
      %v4573 = vpack.c.b16 %v4567, %v4566
      %v4581 = vsel %vm1462, %v4540, 0
      %v4584 = vsel %vm1462, %v4541, 0
      %v4587 = vsel %vm1462, %v4542, 0
      %v4590 = vsel %vm1462, %v4543, 0
      %4592 = vmatpush.bf16.msra.mxu0 0
      %4593 = vmatpush.bf16.msra.mxu0 0
      %4594 = vmatpush.bf16.msra.mxu0 %v4573
      %4595 = vmatpush.bf16.msra.mxu0 %v4572
      %4596 = vmatpush.bf16.msra.mxu0 %v4571
      %4597 = vmatpush.bf16.msra.mxu0 %v4570
      %4598 = vmatpush.bf16.msra.mxu0 %v4569
      %4599 = vmatpush.bf16.msra.mxu0 %v4568
      %4600 = vmatmul.bf16.gmra.mxu0 %v4581
      %v4601 = vpop.f32.mrf.mxu0
      %v4602 = vadd.f32 0.0, %v4601
      %v4603 = vpop.f32.mrf.mxu0
      %v4604 = vadd.f32 0.0, %v4603
      %4605 = vmatmul.bf16.gmra.mxu0 %v4584
      %v4606 = vpop.f32.mrf.mxu0
      %v4607 = vadd.f32 0.0, %v4606
      %v4608 = vpop.f32.mrf.mxu0
      %v4609 = vadd.f32 0.0, %v4608
      %4610 = vmatmul.bf16.gmra.mxu0 %v4587
      %v4611 = vpop.f32.mrf.mxu0
      %v4612 = vadd.f32 0.0, %v4611
      %v4613 = vpop.f32.mrf.mxu0
      %v4614 = vadd.f32 0.0, %v4613
      %4615 = vmatmul.bf16.gmra.mxu0 %v4590
      %v4616 = vpop.f32.mrf.mxu0
      %v4617 = vadd.f32 0.0, %v4616
      %v4618 = vpop.f32.mrf.mxu0
      %v4619 = vadd.f32 0.0, %v4618
      %4620 = vdwg.mxu0
      %v4629 = vunpack.c.l.b16 %v4474
      %v4630 = vunpack.c.l.b16 %v4475
      %v4631 = vunpack.c.l.b16 %v4476
      %v4632 = vunpack.c.l.b16 %v4477
      %v4633 = vunpack.c.l.b16 %v4478
      %v4634 = vunpack.c.l.b16 %v4479
      %v4635 = vunpack.c.l.b16 %v4480
      %v4636 = vunpack.c.l.b16 %v4481
      %v4637 = vpack.c.b16 %v4630, %v4629
      %v4638 = vpack.c.b16 %v4632, %v4631
      %v4639 = vpack.c.b16 %v4634, %v4633
      %v4640 = vpack.c.b16 %v4636, %v4635
      %v4653 = vunpack.c.l.b16 %v4491
      %v4654 = vunpack.c.l.b16 %v4492
      %v4655 = vunpack.c.l.b16 %v4493
      %v4656 = vunpack.c.l.b16 %v4494
      %v4657 = vunpack.c.l.b16 %v4495
      %v4658 = vunpack.c.l.b16 %v4496
      %v4659 = vunpack.c.l.b16 %v4497
      %v4660 = vunpack.c.l.b16 %v4498
      %v4661 = vunpack.c.l.b16 %v4499
      %v4662 = vunpack.c.l.b16 %v4500
      %v4663 = vunpack.c.l.b16 %v4501
      %v4664 = vunpack.c.l.b16 %v4502
      %v4665 = vpack.c.b16 %v4654, %v4653
      %v4666 = vpack.c.b16 %v4656, %v4655
      %v4667 = vpack.c.b16 %v4658, %v4657
      %v4668 = vpack.c.b16 %v4660, %v4659
      %v4669 = vpack.c.b16 %v4662, %v4661
      %v4670 = vpack.c.b16 %v4664, %v4663
      %v4678 = vsel %vm1462, %v4637, 0
      %v4681 = vsel %vm1462, %v4638, 0
      %v4684 = vsel %vm1462, %v4639, 0
      %v4687 = vsel %vm1462, %v4640, 0
      %4689 = vmatpush.bf16.msra.mxu0 0
      %4690 = vmatpush.bf16.msra.mxu0 0
      %4691 = vmatpush.bf16.msra.mxu0 %v4670
      %4692 = vmatpush.bf16.msra.mxu0 %v4669
      %4693 = vmatpush.bf16.msra.mxu0 %v4668
      %4694 = vmatpush.bf16.msra.mxu0 %v4667
      %4695 = vmatpush.bf16.msra.mxu0 %v4666
      %4696 = vmatpush.bf16.msra.mxu0 %v4665
      %4697 = vmatmul.bf16.gmra.mxu0 %v4678
      %v4698 = vpop.f32.mrf.mxu0
      %v4699 = vadd.f32 %v4602, %v4698
      %v4700 = vpop.f32.mrf.mxu0
      %v4701 = vadd.f32 %v4604, %v4700
      %4702 = vmatmul.bf16.gmra.mxu0 %v4681
      %v4703 = vpop.f32.mrf.mxu0
      %v4704 = vadd.f32 %v4607, %v4703
      %v4705 = vpop.f32.mrf.mxu0
      %v4706 = vadd.f32 %v4609, %v4705
      %4707 = vmatmul.bf16.gmra.mxu0 %v4684
      %v4708 = vpop.f32.mrf.mxu0
      %v4709 = vadd.f32 %v4612, %v4708
      %v4710 = vpop.f32.mrf.mxu0
      %v4711 = vadd.f32 %v4614, %v4710
      %4712 = vmatmul.bf16.gmra.mxu0 %v4687
      %v4713 = vpop.f32.mrf.mxu0
      %v4714 = vadd.f32 %v4617, %v4713
      %v4715 = vpop.f32.mrf.mxu0
      %v4716 = vadd.f32 %v4619, %v4715
      %4717 = vdwg.mxu0
      %v4718 = vld [vmem:[#allocation2 + $0xc] sm:$0xf]
      %v4719 = vld [vmem:[#allocation2 + $0x10] sm:$0xf]
      %v4720 = vld [vmem:[#allocation2 + $0x14] sm:$0xf]
      %v4721 = vld [vmem:[#allocation2 + $0x18] sm:$0xf]
      %v4722 = vld [vmem:[#allocation2 + $0x1c] sm:$0xf]
      %v4723 = vld [vmem:[#allocation2 + $0x20] sm:$0xf]
      %v4724 = vld [vmem:[#allocation2 + $0x24] sm:$0xf]
      %v4725 = vld [vmem:[#allocation2 + $0x28] sm:$0xf]
      %s4726 = scalar_lea.vmem %s11, 528
      %v4727 = vld [vmem:[%s4726] sm:$0xf]
      %v4728 = vld [vmem:[%s4726 + $0x4] sm:$0xf]
      %v4729 = vld [vmem:[%s4726 + $0x8] sm:$0xf]
      %v4730 = vld [vmem:[%s4726 + $0xc] sm:$0xf]
      %v4731 = vld [vmem:[%s4726 + $0x10] sm:$0xf]
      %v4732 = vld [vmem:[%s4726 + $0x14] sm:$0xf]
      %v4733 = vld [vmem:[%s4726 + $0x18] sm:$0xf]
      %v4734 = vld [vmem:[%s4726 + $0x1c] sm:$0xf]
      %v4735 = vld [vmem:[%s4726 + $0x20] sm:$0xf]
      %v4736 = vld [vmem:[%s4726 + $0x24] sm:$0xf]
      %v4737 = vld [vmem:[%s4726 + $0x28] sm:$0xf]
      %v4738 = vld [vmem:[%s4726 + $0x2c] sm:$0xf]
      %v4747 = vunpack.c.l.b16 %v4718
      %v4748 = vunpack.c.l.b16 %v4719
      %v4749 = vunpack.c.l.b16 %v4720
      %v4750 = vunpack.c.l.b16 %v4721
      %v4751 = vunpack.c.l.b16 %v4722
      %v4752 = vunpack.c.l.b16 %v4723
      %v4753 = vunpack.c.l.b16 %v4724
      %v4754 = vunpack.c.l.b16 %v4725
      %v4755 = vpack.c.b16 %v4748, %v4747
      %v4756 = vpack.c.b16 %v4750, %v4749
      %v4757 = vpack.c.b16 %v4752, %v4751
      %v4758 = vpack.c.b16 %v4754, %v4753
      %v4771 = vunpack.c.l.b16 %v4727
      %v4772 = vunpack.c.l.b16 %v4728
      %v4773 = vunpack.c.l.b16 %v4729
      %v4774 = vunpack.c.l.b16 %v4730
      %v4775 = vunpack.c.l.b16 %v4731
      %v4776 = vunpack.c.l.b16 %v4732
      %v4777 = vunpack.c.l.b16 %v4733
      %v4778 = vunpack.c.l.b16 %v4734
      %v4779 = vunpack.c.l.b16 %v4735
      %v4780 = vunpack.c.l.b16 %v4736
      %v4781 = vunpack.c.l.b16 %v4737
      %v4782 = vunpack.c.l.b16 %v4738
      %v4783 = vpack.c.b16 %v4772, %v4771
      %v4784 = vpack.c.b16 %v4774, %v4773
      %v4785 = vpack.c.b16 %v4776, %v4775
      %v4786 = vpack.c.b16 %v4778, %v4777
      %v4787 = vpack.c.b16 %v4780, %v4779
      %v4788 = vpack.c.b16 %v4782, %v4781
      %v4796 = vsel %vm1462, %v4755, 0
      %v4799 = vsel %vm1462, %v4756, 0
      %v4802 = vsel %vm1462, %v4757, 0
      %v4805 = vsel %vm1462, %v4758, 0
      %4807 = vmatpush.bf16.msra.mxu0 0
      %4808 = vmatpush.bf16.msra.mxu0 0
      %4809 = vmatpush.bf16.msra.mxu0 %v4788
      %4810 = vmatpush.bf16.msra.mxu0 %v4787
      %4811 = vmatpush.bf16.msra.mxu0 %v4786
      %4812 = vmatpush.bf16.msra.mxu0 %v4785
      %4813 = vmatpush.bf16.msra.mxu0 %v4784
      %4814 = vmatpush.bf16.msra.mxu0 %v4783
      %4815 = vmatmul.bf16.gmra.mxu0 %v4796
      %v4816 = vpop.f32.mrf.mxu0
      %v4817 = vadd.f32 0.0, %v4816
      %v4818 = vpop.f32.mrf.mxu0
      %v4819 = vadd.f32 0.0, %v4818
      %4820 = vmatmul.bf16.gmra.mxu0 %v4799
      %v4821 = vpop.f32.mrf.mxu0
      %v4822 = vadd.f32 0.0, %v4821
      %v4823 = vpop.f32.mrf.mxu0
      %v4824 = vadd.f32 0.0, %v4823
      %4825 = vmatmul.bf16.gmra.mxu0 %v4802
      %v4826 = vpop.f32.mrf.mxu0
      %v4827 = vadd.f32 0.0, %v4826
      %v4828 = vpop.f32.mrf.mxu0
      %v4829 = vadd.f32 0.0, %v4828
      %4830 = vmatmul.bf16.gmra.mxu0 %v4805
      %v4831 = vpop.f32.mrf.mxu0
      %v4832 = vadd.f32 0.0, %v4831
      %v4833 = vpop.f32.mrf.mxu0
      %v4834 = vadd.f32 0.0, %v4833
      %4835 = vdwg.mxu0
      %v4836 = vadd.f32 %v4699, %v4817
      %v4837 = vadd.f32 %v4701, %v4819
      %v4838 = vadd.f32 %v4704, %v4822
      %v4839 = vadd.f32 %v4706, %v4824
      %v4840 = vadd.f32 %v4709, %v4827
      %v4841 = vadd.f32 %v4711, %v4829
      %v4842 = vadd.f32 %v4714, %v4832
      %v4843 = vadd.f32 %v4716, %v4834
      %s4844 = scalar_lea.vmem %s12, 144
      %v4845 = vld [vmem:[%s4844] sm:$0xff]
      %v4846 = vld [vmem:[%s4844 + $0x8] sm:$0xf]
      %v4847 = vld [vmem:[%s4844 + $0xc] sm:$0xff]
      %v4848 = vld [vmem:[%s4844 + $0x14] sm:$0xf]
      %v4849 = vld [vmem:[%s4844 + $0x18] sm:$0xff]
      %v4850 = vld [vmem:[%s4844 + $0x20] sm:$0xf]
      %v4851 = vld [vmem:[%s4844 + $0x24] sm:$0xff]
      %v4852 = vld [vmem:[%s4844 + $0x2c] sm:$0xf]
      %v4861 = vunpack.c.l.b16 %v4845
      %v4862 = vunpack.c.h.b16 %v4845
      %v4863 = vunpack.c.l.b16 %v4846
      %v4864 = vunpack.c.l.b16 %v4847
      %v4865 = vunpack.c.h.b16 %v4847
      %v4866 = vunpack.c.l.b16 %v4848
      %v4867 = vunpack.c.l.b16 %v4849
      %v4868 = vunpack.c.h.b16 %v4849
      %v4869 = vunpack.c.l.b16 %v4850
      %v4870 = vunpack.c.l.b16 %v4851
      %v4871 = vunpack.c.h.b16 %v4851
      %v4872 = vunpack.c.l.b16 %v4852
      %v4873 = vpack.c.b16 %v4864, %v4861
      %v4874 = vpack.c.b16 %v4865, %v4862
      %v4875 = vpack.c.b16 %v4866, %v4863
      %v4876 = vpack.c.b16 %v4870, %v4867
      %v4877 = vpack.c.b16 %v4871, %v4868
      %v4878 = vpack.c.b16 %v4872, %v4869
      %4885 = vmatpush.bf16.msra.mxu0 0
      %4886 = vmatpush.bf16.msra.mxu0 0
      %4887 = vmatpush.bf16.msra.mxu0 0
      %4888 = vmatpush.bf16.msra.mxu0 0
      %4889 = vmatpush.bf16.msra.mxu0 0
      %4890 = vmatpush.bf16.msra.mxu0 0
      %4891 = vmatpush.bf16.msra.mxu0 %v4876
      %4892 = vmatpush.bf16.msra.mxu0 %v4873
      %4893 = vmatmul.bf16.gmra.mxu0 %v3945
      %v4894 = vpop.f32.mrf.mxu0
      %v4895 = vadd.f32 0.0, %v4894
      %v4896 = vpop.f32.mrf.mxu0
      %4897 = vdwg.mxu0
      %4898 = vmatpush.bf16.msra.mxu0 0
      %4899 = vmatpush.bf16.msra.mxu0 0
      %4900 = vmatpush.bf16.msra.mxu0 0
      %4901 = vmatpush.bf16.msra.mxu0 0
      %4902 = vmatpush.bf16.msra.mxu0 0
      %4903 = vmatpush.bf16.msra.mxu0 0
      %4904 = vmatpush.bf16.msra.mxu0 %v4877
      %4905 = vmatpush.bf16.msra.mxu0 %v4874
      %4906 = vmatmul.bf16.gmra.mxu0 %v3945
      %v4907 = vpop.f32.mrf.mxu0
      %v4908 = vadd.f32 0.0, %v4907
      %v4909 = vpop.f32.mrf.mxu0
      %4910 = vdwg.mxu0
      %4911 = vmatpush.bf16.msra.mxu0 0
      %4912 = vmatpush.bf16.msra.mxu0 0
      %4913 = vmatpush.bf16.msra.mxu0 0
      %4914 = vmatpush.bf16.msra.mxu0 0
      %4915 = vmatpush.bf16.msra.mxu0 0
      %4916 = vmatpush.bf16.msra.mxu0 0
      %4917 = vmatpush.bf16.msra.mxu0 %v4878
      %4918 = vmatpush.bf16.msra.mxu0 %v4875
      %4919 = vmatmul.bf16.gmra.mxu0 %v3945
      %v4920 = vpop.f32.mrf.mxu0
      %v4921 = vadd.f32 0.0, %v4920
      %v4922 = vpop.f32.mrf.mxu0
      %4923 = vdwg.mxu0
      %s4924 = scalar_lea.vmem %s13, 3
      %v4925 = vld [vmem:[%s4924] sm:$0x1]
      %v4926 = vperm.slane %v4895, 0
      %v4927 = vmul.f32 %v1813, %v4926
      %v4928 = vmul.f32 %v1818, %v4926
      %v4929 = vmul.f32 %v1823, %v4926
      %v4930 = vmul.f32 %v1828, %v4926
      %v4931 = vmul.f32 %v1833, %v4926
      %v4932 = vmul.f32 %v1838, %v4926
      %v4933 = vmul.f32 %v1843, %v4926
      %v4934 = vmul.f32 %v1848, %v4926
      %v4936 = vperm.slane %v4925, 0
      %v4938 = vadd.f32 %v4936, %v4927
      %v4939 = vadd.f32 %v4936, %v4928
      %v4940 = vadd.f32 %v4936, %v4929
      %v4941 = vadd.f32 %v4936, %v4930
      %v4942 = vadd.f32 %v4936, %v4931
      %v4943 = vadd.f32 %v4936, %v4932
      %v4944 = vadd.f32 %v4936, %v4933
      %v4945 = vadd.f32 %v4936, %v4934
      %v4946 = vmul.f32 %v1872, %v4926
      %v4947 = vmul.f32 %v1876, %v4926
      %v4948 = vmul.f32 %v1880, %v4926
      %v4949 = vmul.f32 %v1884, %v4926
      %v4950 = vmul.f32 %v1888, %v4926
      %v4951 = vmul.f32 %v1892, %v4926
      %v4952 = vmul.f32 %v1896, %v4926
      %v4953 = vmul.f32 %v1900, %v4926
      %4962 = vrot.lane.b32.xlu0 %v4946, 96
      %v4963 = vpop.permute.xlu0 %4962
      %4964 = vrot.lane.b32.xlu0 %v4947, 96
      %v4965 = vpop.permute.xlu0 %4964
      %4966 = vrot.lane.b32.xlu0 %v4948, 96
      %v4967 = vpop.permute.xlu0 %4966
      %4968 = vrot.lane.b32.xlu0 %v4949, 96
      %v4969 = vpop.permute.xlu0 %4968
      %4970 = vrot.lane.b32.xlu0 %v4950, 96
      %v4971 = vpop.permute.xlu0 %4970
      %4972 = vrot.lane.b32.xlu0 %v4951, 96
      %v4973 = vpop.permute.xlu0 %4972
      %4974 = vrot.lane.b32.xlu0 %v4952, 96
      %v4975 = vpop.permute.xlu0 %4974
      %4976 = vrot.lane.b32.xlu0 %v4953, 96
      %v4977 = vpop.permute.xlu0 %4976
      %v4986 = vadd.f32 %v4938, %v4963
      %v4987 = vadd.f32 %v4939, %v4965
      %v4988 = vadd.f32 %v4940, %v4967
      %v4989 = vadd.f32 %v4941, %v4969
      %v4990 = vadd.f32 %v4942, %v4971
      %v4991 = vadd.f32 %v4943, %v4973
      %v4992 = vadd.f32 %v4944, %v4975
      %v4993 = vadd.f32 %v4945, %v4977
      %v4994 = vmul.f32 %v1952, %v4926
      %v4995 = vmul.f32 %v1956, %v4926
      %v4996 = vmul.f32 %v1960, %v4926
      %v4997 = vmul.f32 %v1964, %v4926
      %v4998 = vmul.f32 %v1968, %v4926
      %v4999 = vmul.f32 %v1972, %v4926
      %v5000 = vmul.f32 %v1976, %v4926
      %v5001 = vmul.f32 %v1980, %v4926
      %5010 = vrot.lane.b32.xlu0 %v4994, 64
      %v5011 = vpop.permute.xlu0 %5010
      %5012 = vrot.lane.b32.xlu0 %v4995, 64
      %v5013 = vpop.permute.xlu0 %5012
      %5014 = vrot.lane.b32.xlu0 %v4996, 64
      %v5015 = vpop.permute.xlu0 %5014
      %5016 = vrot.lane.b32.xlu0 %v4997, 64
      %v5017 = vpop.permute.xlu0 %5016
      %5018 = vrot.lane.b32.xlu0 %v4998, 64
      %v5019 = vpop.permute.xlu0 %5018
      %5020 = vrot.lane.b32.xlu0 %v4999, 64
      %v5021 = vpop.permute.xlu0 %5020
      %5022 = vrot.lane.b32.xlu0 %v5000, 64
      %v5023 = vpop.permute.xlu0 %5022
      %5024 = vrot.lane.b32.xlu0 %v5001, 64
      %v5025 = vpop.permute.xlu0 %5024
      %v5034 = vadd.f32 %v4986, %v5011
      %v5035 = vadd.f32 %v4987, %v5013
      %v5036 = vadd.f32 %v4988, %v5015
      %v5037 = vadd.f32 %v4989, %v5017
      %v5038 = vadd.f32 %v4990, %v5019
      %v5039 = vadd.f32 %v4991, %v5021
      %v5040 = vadd.f32 %v4992, %v5023
      %v5041 = vadd.f32 %v4993, %v5025
      %v5042 = vmul.f32 %v2032, %v4926
      %v5043 = vmul.f32 %v2036, %v4926
      %v5044 = vmul.f32 %v2040, %v4926
      %v5045 = vmul.f32 %v2044, %v4926
      %v5046 = vmul.f32 %v2048, %v4926
      %v5047 = vmul.f32 %v2052, %v4926
      %v5048 = vmul.f32 %v2056, %v4926
      %v5049 = vmul.f32 %v2060, %v4926
      %5058 = vrot.lane.b32.xlu0 %v5042, 32
      %v5059 = vpop.permute.xlu0 %5058
      %5060 = vrot.lane.b32.xlu0 %v5043, 32
      %v5061 = vpop.permute.xlu0 %5060
      %5062 = vrot.lane.b32.xlu0 %v5044, 32
      %v5063 = vpop.permute.xlu0 %5062
      %5064 = vrot.lane.b32.xlu0 %v5045, 32
      %v5065 = vpop.permute.xlu0 %5064
      %5066 = vrot.lane.b32.xlu0 %v5046, 32
      %v5067 = vpop.permute.xlu0 %5066
      %5068 = vrot.lane.b32.xlu0 %v5047, 32
      %v5069 = vpop.permute.xlu0 %5068
      %5070 = vrot.lane.b32.xlu0 %v5048, 32
      %v5071 = vpop.permute.xlu0 %5070
      %5072 = vrot.lane.b32.xlu0 %v5049, 32
      %v5073 = vpop.permute.xlu0 %5072
      %v5082 = vadd.f32 %v5034, %v5059
      %v5083 = vadd.f32 %v5035, %v5061
      %v5084 = vadd.f32 %v5036, %v5063
      %v5085 = vadd.f32 %v5037, %v5065
      %v5086 = vadd.f32 %v5038, %v5067
      %v5087 = vadd.f32 %v5039, %v5069
      %v5088 = vadd.f32 %v5040, %v5071
      %v5089 = vadd.f32 %v5041, %v5073
      %v5090 = vperm.slane %v4908, 0
      %v5091 = vmul.f32 %v2112, %v5090
      %v5092 = vmul.f32 %v2116, %v5090
      %v5093 = vmul.f32 %v2120, %v5090
      %v5094 = vmul.f32 %v2124, %v5090
      %v5095 = vmul.f32 %v2128, %v5090
      %v5096 = vmul.f32 %v2132, %v5090
      %v5097 = vmul.f32 %v2136, %v5090
      %v5098 = vmul.f32 %v2140, %v5090
      %v5099 = vadd.f32 %v5082, %v5091
      %v5100 = vadd.f32 %v5083, %v5092
      %v5101 = vadd.f32 %v5084, %v5093
      %v5102 = vadd.f32 %v5085, %v5094
      %v5103 = vadd.f32 %v5086, %v5095
      %v5104 = vadd.f32 %v5087, %v5096
      %v5105 = vadd.f32 %v5088, %v5097
      %v5106 = vadd.f32 %v5089, %v5098
      %v5107 = vmul.f32 %v2161, %v5090
      %v5108 = vmul.f32 %v2165, %v5090
      %v5109 = vmul.f32 %v2169, %v5090
      %v5110 = vmul.f32 %v2173, %v5090
      %v5111 = vmul.f32 %v2177, %v5090
      %v5112 = vmul.f32 %v2181, %v5090
      %v5113 = vmul.f32 %v2185, %v5090
      %v5114 = vmul.f32 %v2189, %v5090
      %5123 = vrot.lane.b32.xlu0 %v5107, 96
      %v5124 = vpop.permute.xlu0 %5123
      %5125 = vrot.lane.b32.xlu0 %v5108, 96
      %v5126 = vpop.permute.xlu0 %5125
      %5127 = vrot.lane.b32.xlu0 %v5109, 96
      %v5128 = vpop.permute.xlu0 %5127
      %5129 = vrot.lane.b32.xlu0 %v5110, 96
      %v5130 = vpop.permute.xlu0 %5129
      %5131 = vrot.lane.b32.xlu0 %v5111, 96
      %v5132 = vpop.permute.xlu0 %5131
      %5133 = vrot.lane.b32.xlu0 %v5112, 96
      %v5134 = vpop.permute.xlu0 %5133
      %5135 = vrot.lane.b32.xlu0 %v5113, 96
      %v5136 = vpop.permute.xlu0 %5135
      %5137 = vrot.lane.b32.xlu0 %v5114, 96
      %v5138 = vpop.permute.xlu0 %5137
      %v5147 = vadd.f32 %v5099, %v5124
      %v5148 = vadd.f32 %v5100, %v5126
      %v5149 = vadd.f32 %v5101, %v5128
      %v5150 = vadd.f32 %v5102, %v5130
      %v5151 = vadd.f32 %v5103, %v5132
      %v5152 = vadd.f32 %v5104, %v5134
      %v5153 = vadd.f32 %v5105, %v5136
      %v5154 = vadd.f32 %v5106, %v5138
      %v5155 = vmul.f32 %v2241, %v5090
      %v5156 = vmul.f32 %v2245, %v5090
      %v5157 = vmul.f32 %v2249, %v5090
      %v5158 = vmul.f32 %v2253, %v5090
      %v5159 = vmul.f32 %v2257, %v5090
      %v5160 = vmul.f32 %v2261, %v5090
      %v5161 = vmul.f32 %v2265, %v5090
      %v5162 = vmul.f32 %v2269, %v5090
      %5171 = vrot.lane.b32.xlu0 %v5155, 64
      %v5172 = vpop.permute.xlu0 %5171
      %5173 = vrot.lane.b32.xlu0 %v5156, 64
      %v5174 = vpop.permute.xlu0 %5173
      %5175 = vrot.lane.b32.xlu0 %v5157, 64
      %v5176 = vpop.permute.xlu0 %5175
      %5177 = vrot.lane.b32.xlu0 %v5158, 64
      %v5178 = vpop.permute.xlu0 %5177
      %5179 = vrot.lane.b32.xlu0 %v5159, 64
      %v5180 = vpop.permute.xlu0 %5179
      %5181 = vrot.lane.b32.xlu0 %v5160, 64
      %v5182 = vpop.permute.xlu0 %5181
      %5183 = vrot.lane.b32.xlu0 %v5161, 64
      %v5184 = vpop.permute.xlu0 %5183
      %5185 = vrot.lane.b32.xlu0 %v5162, 64
      %v5186 = vpop.permute.xlu0 %5185
      %v5195 = vadd.f32 %v5147, %v5172
      %v5196 = vadd.f32 %v5148, %v5174
      %v5197 = vadd.f32 %v5149, %v5176
      %v5198 = vadd.f32 %v5150, %v5178
      %v5199 = vadd.f32 %v5151, %v5180
      %v5200 = vadd.f32 %v5152, %v5182
      %v5201 = vadd.f32 %v5153, %v5184
      %v5202 = vadd.f32 %v5154, %v5186
      %v5203 = vmul.f32 %v2321, %v5090
      %v5204 = vmul.f32 %v2325, %v5090
      %v5205 = vmul.f32 %v2329, %v5090
      %v5206 = vmul.f32 %v2333, %v5090
      %v5207 = vmul.f32 %v2337, %v5090
      %v5208 = vmul.f32 %v2341, %v5090
      %v5209 = vmul.f32 %v2345, %v5090
      %v5210 = vmul.f32 %v2349, %v5090
      %5219 = vrot.lane.b32.xlu0 %v5203, 32
      %v5220 = vpop.permute.xlu0 %5219
      %5221 = vrot.lane.b32.xlu0 %v5204, 32
      %v5222 = vpop.permute.xlu0 %5221
      %5223 = vrot.lane.b32.xlu0 %v5205, 32
      %v5224 = vpop.permute.xlu0 %5223
      %5225 = vrot.lane.b32.xlu0 %v5206, 32
      %v5226 = vpop.permute.xlu0 %5225
      %5227 = vrot.lane.b32.xlu0 %v5207, 32
      %v5228 = vpop.permute.xlu0 %5227
      %5229 = vrot.lane.b32.xlu0 %v5208, 32
      %v5230 = vpop.permute.xlu0 %5229
      %5231 = vrot.lane.b32.xlu0 %v5209, 32
      %v5232 = vpop.permute.xlu0 %5231
      %5233 = vrot.lane.b32.xlu0 %v5210, 32
      %v5234 = vpop.permute.xlu0 %5233
      %v5243 = vadd.f32 %v5195, %v5220
      %v5244 = vadd.f32 %v5196, %v5222
      %v5245 = vadd.f32 %v5197, %v5224
      %v5246 = vadd.f32 %v5198, %v5226
      %v5247 = vadd.f32 %v5199, %v5228
      %v5248 = vadd.f32 %v5200, %v5230
      %v5249 = vadd.f32 %v5201, %v5232
      %v5250 = vadd.f32 %v5202, %v5234
      %v5251 = vperm.slane %v4921, 0
      %v5252 = vmul.f32 %v2401, %v5251
      %v5253 = vmul.f32 %v2405, %v5251
      %v5254 = vmul.f32 %v2409, %v5251
      %v5255 = vmul.f32 %v2413, %v5251
      %v5256 = vmul.f32 %v2417, %v5251
      %v5257 = vmul.f32 %v2421, %v5251
      %v5258 = vmul.f32 %v2425, %v5251
      %v5259 = vmul.f32 %v2429, %v5251
      %v5260 = vadd.f32 %v5243, %v5252
      %v5261 = vadd.f32 %v5244, %v5253
      %v5262 = vadd.f32 %v5245, %v5254
      %v5263 = vadd.f32 %v5246, %v5255
      %v5264 = vadd.f32 %v5247, %v5256
      %v5265 = vadd.f32 %v5248, %v5257
      %v5266 = vadd.f32 %v5249, %v5258
      %v5267 = vadd.f32 %v5250, %v5259
      %v5268 = vadd.f32 %v4836, %v5260
      %v5269 = vadd.f32 %v4837, %v5261
      %v5270 = vadd.f32 %v4838, %v5262
      %v5271 = vadd.f32 %v4839, %v5263
      %v5272 = vadd.f32 %v4840, %v5264
      %v5273 = vadd.f32 %v4841, %v5265
      %v5274 = vadd.f32 %v4842, %v5266
      %v5275 = vadd.f32 %v4843, %v5267
      %v5276 = vadd.f32 %v5268, %v3394
      %v5277 = vadd.f32 %v5269, %v3395
      %v5278 = vadd.f32 %v5270, %v3396
      %v5279 = vadd.f32 %v5271, %v3397
      %v5280 = vadd.f32 %v5272, %v3398
      %v5281 = vadd.f32 %v5273, %v3399
      %v5282 = vadd.f32 %v5274, %v3400
      %v5283 = vadd.f32 %v5275, %v3401
      %v5284 = vld [vmem:[%s14] sm:$0xf]
      %v5285 = vld [vmem:[%s14 + $0x4] sm:$0xf]
      %v5286 = vld [vmem:[%s14 + $0x8] sm:$0xf]
      %v5287 = vld [vmem:[%s14 + $0xc] sm:$0xf]
      %v5288 = vld [vmem:[%s14 + $0x10] sm:$0xf]
      %v5289 = vld [vmem:[%s14 + $0x14] sm:$0xf]
      %v5290 = vld [vmem:[%s14 + $0x18] sm:$0xf]
      %v5291 = vld [vmem:[%s14 + $0x1c] sm:$0xf]
      %v5292 = vld [vmem:[%s14 + $0x20] sm:$0xf]
      %v5293 = vld [vmem:[%s14 + $0x24] sm:$0xf]
      %v5294 = vld [vmem:[%s14 + $0x28] sm:$0xf]
      %v5295 = vld [vmem:[%s14 + $0x2c] sm:$0xf]
      %v5296 = vld [vmem:[%s14 + $0x30] sm:$0xf]
      %v5297 = vld [vmem:[%s14 + $0x34] sm:$0xf]
      %v5298 = vld [vmem:[%s14 + $0x38] sm:$0xf]
      %v5299 = vld [vmem:[%s14 + $0x3c] sm:$0xf]
      %v5300 = vld [vmem:[%s14 + $0x40] sm:$0xf]
      %v5301 = vld [vmem:[%s14 + $0x44] sm:$0xf]
      %v5302 = vld [vmem:[%s14 + $0x48] sm:$0xf]
      %v5303 = vld [vmem:[%s14 + $0x4c] sm:$0xf]
      %v5304 = vld [vmem:[%s14 + $0x50] sm:$0xf]
      %v5305 = vld [vmem:[%s14 + $0x54] sm:$0xf]
      %v5306 = vld [vmem:[%s14 + $0x58] sm:$0xf]
      %v5307 = vld [vmem:[%s14 + $0x5c] sm:$0xf]
      %v5308 = vld [vmem:[%s14 + $0x60] sm:$0xf]
      %v5309 = vld [vmem:[%s14 + $0x64] sm:$0xf]
      %v5310 = vld [vmem:[%s14 + $0x68] sm:$0xf]
      %v5311 = vld [vmem:[%s14 + $0x6c] sm:$0xf]
      %v5312 = vld [vmem:[%s14 + $0x70] sm:$0xf]
      %v5313 = vld [vmem:[%s14 + $0x74] sm:$0xf]
      %v5314 = vld [vmem:[%s14 + $0x78] sm:$0xf]
      %v5315 = vld [vmem:[%s14 + $0x7c] sm:$0xf]
      %v5316 = vld [vmem:[%s14 + $0x80] sm:$0xf]
      %v5317 = vld [vmem:[%s14 + $0x84] sm:$0xf]
      %v5318 = vld [vmem:[%s14 + $0x88] sm:$0xf]
      %v5319 = vld [vmem:[%s14 + $0x8c] sm:$0xf]
      %v5320 = vld [vmem:[%s15] sm:$0x1]
      %v5321 = vld [vmem:[%s15 + $0x1] sm:$0x1]
      %v5322 = vld [vmem:[%s15 + $0x2] sm:$0x1]
      %v5323 = vrot.slane %v5276, 1
      %v5324 = vrot.slane %v5277, 1
      %v5325 = vrot.slane %v5278, 1
      %v5326 = vrot.slane %v5279, 1
      %v5327 = vrot.slane %v5280, 1
      %v5328 = vrot.slane %v5281, 1
      %v5329 = vrot.slane %v5282, 1
      %v5330 = vrot.slane %v5283, 1
      %v5331 = vsel %vm1218, %v5329, %v5330
      %v5332 = vsel %vm1218, %v5328, %v5329
      %v5333 = vsel %vm1218, %v5327, %v5328
      %v5334 = vsel %vm1218, %v5326, %v5327
      %v5335 = vsel %vm1218, %v5325, %v5326
      %v5336 = vsel %vm1218, %v5324, %v5325
      %v5337 = vsel %vm1218, %v5323, %v5324
      %v5338 = vsel %vm1218, %v5330, %v5323
      %v5339 = vmul.f32 %v5337, %v1230
      %v5340 = vmul.f32 %v5336, %v1235
      %v5341 = vmul.f32 %v5335, %v1240
      %v5342 = vmul.f32 %v5334, %v1245
      %v5343 = vmul.f32 %v5333, %v1250
      %v5344 = vmul.f32 %v5332, %v1255
      %v5345 = vmul.f32 %v5331, %v1260
      %v5346 = vmul.f32 %v5338, %v1265
      %5355 = vrot.lane.b32.xlu0 %v5339, 32
      %v5356 = vpop.permute.xlu0 %5355
      %5357 = vrot.lane.b32.xlu0 %v5340, 32
      %v5358 = vpop.permute.xlu0 %5357
      %5359 = vrot.lane.b32.xlu0 %v5341, 32
      %v5360 = vpop.permute.xlu0 %5359
      %5361 = vrot.lane.b32.xlu0 %v5342, 32
      %v5362 = vpop.permute.xlu0 %5361
      %5363 = vrot.lane.b32.xlu0 %v5343, 32
      %v5364 = vpop.permute.xlu0 %5363
      %5365 = vrot.lane.b32.xlu0 %v5344, 32
      %v5366 = vpop.permute.xlu0 %5365
      %5367 = vrot.lane.b32.xlu0 %v5345, 32
      %v5368 = vpop.permute.xlu0 %5367
      %5369 = vrot.lane.b32.xlu0 %v5346, 32
      %v5370 = vpop.permute.xlu0 %5369
      %v5379 = vsel %vm1339, %v5276, %v5356
      %v5380 = vsel %vm1339, %v5277, %v5358
      %v5381 = vsel %vm1339, %v5278, %v5360
      %v5382 = vsel %vm1339, %v5279, %v5362
      %v5383 = vsel %vm1339, %v5280, %v5364
      %v5384 = vsel %vm1339, %v5281, %v5366
      %v5385 = vsel %vm1339, %v5282, %v5368
      %v5386 = vsel %vm1339, %v5283, %v5370
      %v5387 = vpack.c.bf16 %v5379, %v5379
      %v5388 = vpack.c.bf16 %v5380, %v5380
      %v5389 = vpack.c.bf16 %v5381, %v5381
      %v5390 = vpack.c.bf16 %v5382, %v5382
      %v5391 = vpack.c.bf16 %v5383, %v5383
      %v5392 = vpack.c.bf16 %v5384, %v5384
      %v5393 = vpack.c.bf16 %v5385, %v5385
      %v5394 = vpack.c.bf16 %v5386, %v5386
      %5395 = vst.msk [vmem:[#allocation3] sm:$0xf] %vm636, %v5387
      %5396 = vst.msk [vmem:[#allocation3 + $0x4] sm:$0xf] %vm636, %v5388
      %5397 = vst.msk [vmem:[#allocation3 + $0x8] sm:$0xf] %vm636, %v5389
      %5398 = vst.msk [vmem:[#allocation3 + $0xc] sm:$0xf] %vm636, %v5390
      %5399 = vst.msk [vmem:[#allocation3 + $0x10] sm:$0xf] %vm636, %v5391
      %5400 = vst.msk [vmem:[#allocation3 + $0x14] sm:$0xf] %vm636, %v5392
      %5401 = vst.msk [vmem:[#allocation3 + $0x18] sm:$0xf] %vm636, %v5393
      %5402 = vst.msk [vmem:[#allocation3 + $0x1c] sm:$0xf] %vm636, %v5394
      %v5403 = vld [vmem:[#allocation3 + $0x4] sm:$0xf]
      %v5404 = vld [vmem:[#allocation3 + $0x8] sm:$0xf]
      %v5405 = vld [vmem:[#allocation3 + $0xc] sm:$0xf]
      %v5406 = vld [vmem:[#allocation3 + $0x10] sm:$0xf]
      %v5407 = vld [vmem:[#allocation3 + $0x14] sm:$0xf]
      %v5408 = vld [vmem:[#allocation3 + $0x18] sm:$0xf]
      %v5409 = vld [vmem:[#allocation3 + $0x1c] sm:$0xf]
      %v5410 = vld [vmem:[#allocation3 + $0x20] sm:$0xf]
      %v5411 = vperm.slane %v5320, 0
      %v5420 = vunpack.c.l.b16 %v5387
      %v5421 = vunpack.c.l.b16 %v5388
      %v5422 = vunpack.c.l.b16 %v5389
      %v5423 = vunpack.c.l.b16 %v5390
      %v5424 = vunpack.c.l.b16 %v5391
      %v5425 = vunpack.c.l.b16 %v5392
      %v5426 = vunpack.c.l.b16 %v5393
      %v5427 = vunpack.c.l.b16 %v5394
      %v5428 = vpack.c.b16 %v5421, %v5420
      %v5429 = vpack.c.b16 %v5423, %v5422
      %v5430 = vpack.c.b16 %v5425, %v5424
      %v5431 = vpack.c.b16 %v5427, %v5426
      %v5436 = vunpack.c.l.b16 %v5284
      %v5437 = vunpack.c.l.b16 %v5285
      %v5438 = vunpack.c.l.b16 %v5286
      %v5439 = vunpack.c.l.b16 %v5287
      %v5440 = vpack.c.b16 %v5437, %v5436
      %v5441 = vpack.c.b16 %v5439, %v5438
      %v5445 = vsel %vm1339, %v5428, 0
      %v5448 = vsel %vm1339, %v5429, 0
      %v5451 = vsel %vm1339, %v5430, 0
      %v5454 = vsel %vm1339, %v5431, 0
      %5456 = vmatpush.bf16.msra.mxu0 0
      %5457 = vmatpush.bf16.msra.mxu0 0
      %5458 = vmatpush.bf16.msra.mxu0 0
      %5459 = vmatpush.bf16.msra.mxu0 0
      %5460 = vmatpush.bf16.msra.mxu0 0
      %5461 = vmatpush.bf16.msra.mxu0 0
      %5462 = vmatpush.bf16.msra.mxu0 %v5441
      %5463 = vmatpush.bf16.msra.mxu0 %v5440
      %5464 = vmatmul.bf16.gmra.mxu0 %v5445
      %v5465 = vpop.f32.mrf.mxu0
      %v5466 = vadd.f32 %v5411, %v5465
      %v5467 = vpop.f32.mrf.mxu0
      %v5468 = vadd.f32 %v5411, %v5467
      %5469 = vmatmul.bf16.gmra.mxu0 %v5448
      %v5470 = vpop.f32.mrf.mxu0
      %v5471 = vadd.f32 %v5411, %v5470
      %v5472 = vpop.f32.mrf.mxu0
      %v5473 = vadd.f32 %v5411, %v5472
      %5474 = vmatmul.bf16.gmra.mxu0 %v5451
      %v5475 = vpop.f32.mrf.mxu0
      %v5476 = vadd.f32 %v5411, %v5475
      %v5477 = vpop.f32.mrf.mxu0
      %v5478 = vadd.f32 %v5411, %v5477
      %5479 = vmatmul.bf16.gmra.mxu0 %v5454
      %v5480 = vpop.f32.mrf.mxu0
      %v5481 = vadd.f32 %v5411, %v5480
      %v5482 = vpop.f32.mrf.mxu0
      %v5483 = vadd.f32 %v5411, %v5482
      %5484 = vdwg.mxu0
      %v5493 = vunpack.c.l.b16 %v5288
      %v5494 = vunpack.c.l.b16 %v5289
      %v5495 = vunpack.c.l.b16 %v5290
      %v5496 = vunpack.c.l.b16 %v5291
      %v5497 = vunpack.c.l.b16 %v5292
      %v5498 = vunpack.c.l.b16 %v5293
      %v5499 = vunpack.c.l.b16 %v5294
      %v5500 = vunpack.c.l.b16 %v5295
      %v5501 = vpack.c.b16 %v5494, %v5493
      %v5502 = vpack.c.b16 %v5496, %v5495
      %v5503 = vpack.c.b16 %v5498, %v5497
      %v5504 = vpack.c.b16 %v5500, %v5499
      %v5509 = vsel %vm1348, %v5428, 0
      %v5511 = vsel %vm1348, %v5429, 0
      %v5513 = vsel %vm1348, %v5430, 0
      %v5515 = vsel %vm1348, %v5431, 0
      %5517 = vmatpush.bf16.msra.mxu0 0
      %5518 = vmatpush.bf16.msra.mxu0 0
      %5519 = vmatpush.bf16.msra.mxu0 0
      %5520 = vmatpush.bf16.msra.mxu0 0
      %5521 = vmatpush.bf16.msra.mxu0 %v5504
      %5522 = vmatpush.bf16.msra.mxu0 %v5503
      %5523 = vmatpush.bf16.msra.mxu0 %v5502
      %5524 = vmatpush.bf16.msra.mxu0 %v5501
      %5525 = vmatmul.bf16.gmra.mxu0 %v5509
      %v5526 = vpop.f32.mrf.mxu0
      %v5527 = vadd.f32 %v5411, %v5526
      %v5528 = vpop.f32.mrf.mxu0
      %v5529 = vadd.f32 %v5411, %v5528
      %5530 = vmatmul.bf16.gmra.mxu0 %v5511
      %v5531 = vpop.f32.mrf.mxu0
      %v5532 = vadd.f32 %v5411, %v5531
      %v5533 = vpop.f32.mrf.mxu0
      %v5534 = vadd.f32 %v5411, %v5533
      %5535 = vmatmul.bf16.gmra.mxu0 %v5513
      %v5536 = vpop.f32.mrf.mxu0
      %v5537 = vadd.f32 %v5411, %v5536
      %v5538 = vpop.f32.mrf.mxu0
      %v5539 = vadd.f32 %v5411, %v5538
      %5540 = vmatmul.bf16.gmra.mxu0 %v5515
      %v5541 = vpop.f32.mrf.mxu0
      %v5542 = vadd.f32 %v5411, %v5541
      %v5543 = vpop.f32.mrf.mxu0
      %v5544 = vadd.f32 %v5411, %v5543
      %5545 = vdwg.mxu0
      %v5554 = vunpack.c.l.b16 %v5403
      %v5555 = vunpack.c.l.b16 %v5404
      %v5556 = vunpack.c.l.b16 %v5405
      %v5557 = vunpack.c.l.b16 %v5406
      %v5558 = vunpack.c.l.b16 %v5407
      %v5559 = vunpack.c.l.b16 %v5408
      %v5560 = vunpack.c.l.b16 %v5409
      %v5561 = vunpack.c.l.b16 %v5410
      %v5562 = vpack.c.b16 %v5555, %v5554
      %v5563 = vpack.c.b16 %v5557, %v5556
      %v5564 = vpack.c.b16 %v5559, %v5558
      %v5565 = vpack.c.b16 %v5561, %v5560
      %5566 = vrot.lane.b32.xlu0 %v5562, 32
      %v5567 = vpop.permute.xlu0 %5566
      %5568 = vrot.lane.b32.xlu0 %v5563, 32
      %v5569 = vpop.permute.xlu0 %5568
      %5570 = vrot.lane.b32.xlu0 %v5564, 32
      %v5571 = vpop.permute.xlu0 %5570
      %5572 = vrot.lane.b32.xlu0 %v5565, 32
      %v5573 = vpop.permute.xlu0 %5572
      %v5575 = vsel %vm1339, %v5428, %v5567
      %v5577 = vsel %vm1339, %v5429, %v5569
      %v5579 = vsel %vm1339, %v5430, %v5571
      %v5581 = vsel %vm1339, %v5431, %v5573
      %v5590 = vunpack.c.l.b16 %v5296
      %v5591 = vunpack.c.l.b16 %v5297
      %v5592 = vunpack.c.l.b16 %v5298
      %v5593 = vunpack.c.l.b16 %v5299
      %v5594 = vunpack.c.l.b16 %v5300
      %v5595 = vunpack.c.l.b16 %v5301
      %v5596 = vunpack.c.l.b16 %v5302
      %v5597 = vunpack.c.l.b16 %v5303
      %v5598 = vpack.c.b16 %v5591, %v5590
      %v5599 = vpack.c.b16 %v5593, %v5592
      %v5600 = vpack.c.b16 %v5595, %v5594
      %v5601 = vpack.c.b16 %v5597, %v5596
      %v5606 = vsel %vm1348, %v5575, 0
      %v5608 = vsel %vm1348, %v5577, 0
      %v5610 = vsel %vm1348, %v5579, 0
      %v5612 = vsel %vm1348, %v5581, 0
      %5614 = vmatpush.bf16.msra.mxu0 0
      %5615 = vmatpush.bf16.msra.mxu0 0
      %5616 = vmatpush.bf16.msra.mxu0 0
      %5617 = vmatpush.bf16.msra.mxu0 0
      %5618 = vmatpush.bf16.msra.mxu0 %v5601
      %5619 = vmatpush.bf16.msra.mxu0 %v5600
      %5620 = vmatpush.bf16.msra.mxu0 %v5599
      %5621 = vmatpush.bf16.msra.mxu0 %v5598
      %5622 = vmatmul.bf16.gmra.mxu0 %v5606
      %v5623 = vpop.f32.mrf.mxu0
      %v5624 = vadd.f32 %v5411, %v5623
      %v5625 = vpop.f32.mrf.mxu0
      %v5626 = vadd.f32 %v5411, %v5625
      %5627 = vmatmul.bf16.gmra.mxu0 %v5608
      %v5628 = vpop.f32.mrf.mxu0
      %v5629 = vadd.f32 %v5411, %v5628
      %v5630 = vpop.f32.mrf.mxu0
      %v5631 = vadd.f32 %v5411, %v5630
      %5632 = vmatmul.bf16.gmra.mxu0 %v5610
      %v5633 = vpop.f32.mrf.mxu0
      %v5634 = vadd.f32 %v5411, %v5633
      %v5635 = vpop.f32.mrf.mxu0
      %v5636 = vadd.f32 %v5411, %v5635
      %5637 = vmatmul.bf16.gmra.mxu0 %v5612
      %v5638 = vpop.f32.mrf.mxu0
      %v5639 = vadd.f32 %v5411, %v5638
      %v5640 = vpop.f32.mrf.mxu0
      %v5641 = vadd.f32 %v5411, %v5640
      %5642 = vdwg.mxu0
      %5643 = vrot.lane.b32.xlu0 %v5562, 64
      %v5644 = vpop.permute.xlu0 %5643
      %5645 = vrot.lane.b32.xlu0 %v5563, 64
      %v5646 = vpop.permute.xlu0 %5645
      %5647 = vrot.lane.b32.xlu0 %v5564, 64
      %v5648 = vpop.permute.xlu0 %5647
      %5649 = vrot.lane.b32.xlu0 %v5565, 64
      %v5650 = vpop.permute.xlu0 %5649
      %v5652 = vsel %vm1348, %v5428, %v5644
      %v5654 = vsel %vm1348, %v5429, %v5646
      %v5656 = vsel %vm1348, %v5430, %v5648
      %v5658 = vsel %vm1348, %v5431, %v5650
      %v5659 = vsel %vm1462, %v5652, %v5644
      %v5661 = vsel %vm1462, %v5654, %v5646
      %v5663 = vsel %vm1462, %v5656, %v5648
      %v5665 = vsel %vm1462, %v5658, %v5650
      %v5683 = vunpack.c.l.b16 %v5304
      %v5684 = vunpack.c.l.b16 %v5305
      %v5685 = vunpack.c.l.b16 %v5306
      %v5686 = vunpack.c.l.b16 %v5307
      %v5687 = vunpack.c.l.b16 %v5308
      %v5688 = vunpack.c.l.b16 %v5309
      %v5689 = vunpack.c.l.b16 %v5310
      %v5690 = vunpack.c.l.b16 %v5311
      %v5691 = vunpack.c.l.b16 %v5312
      %v5692 = vunpack.c.l.b16 %v5313
      %v5693 = vunpack.c.l.b16 %v5314
      %v5694 = vunpack.c.l.b16 %v5315
      %v5695 = vunpack.c.l.b16 %v5316
      %v5696 = vunpack.c.l.b16 %v5317
      %v5697 = vunpack.c.l.b16 %v5318
      %v5698 = vunpack.c.l.b16 %v5319
      %v5699 = vpack.c.b16 %v5684, %v5683
      %v5700 = vpack.c.b16 %v5686, %v5685
      %v5701 = vpack.c.b16 %v5688, %v5687
      %v5702 = vpack.c.b16 %v5690, %v5689
      %v5703 = vpack.c.b16 %v5692, %v5691
      %v5704 = vpack.c.b16 %v5694, %v5693
      %v5705 = vpack.c.b16 %v5696, %v5695
      %v5706 = vpack.c.b16 %v5698, %v5697
      %5715 = vmatpush.bf16.msra.mxu0 %v5706
      %5716 = vmatpush.bf16.msra.mxu0 %v5705
      %5717 = vmatpush.bf16.msra.mxu0 %v5704
      %5718 = vmatpush.bf16.msra.mxu0 %v5703
      %5719 = vmatpush.bf16.msra.mxu0 %v5702
      %5720 = vmatpush.bf16.msra.mxu0 %v5701
      %5721 = vmatpush.bf16.msra.mxu0 %v5700
      %5722 = vmatpush.bf16.msra.mxu0 %v5699
      %5723 = vmatmul.bf16.gmra.mxu0 %v5659
      %v5724 = vpop.f32.mrf.mxu0
      %v5725 = vadd.f32 %v5411, %v5724
      %v5726 = vpop.f32.mrf.mxu0
      %v5727 = vadd.f32 %v5411, %v5726
      %5728 = vmatmul.bf16.gmra.mxu0 %v5661
      %v5729 = vpop.f32.mrf.mxu0
      %v5730 = vadd.f32 %v5411, %v5729
      %v5731 = vpop.f32.mrf.mxu0
      %v5732 = vadd.f32 %v5411, %v5731
      %5733 = vmatmul.bf16.gmra.mxu0 %v5663
      %v5734 = vpop.f32.mrf.mxu0
      %v5735 = vadd.f32 %v5411, %v5734
      %v5736 = vpop.f32.mrf.mxu0
      %v5737 = vadd.f32 %v5411, %v5736
      %5738 = vmatmul.bf16.gmra.mxu0 %v5665
      %v5739 = vpop.f32.mrf.mxu0
      %v5740 = vadd.f32 %v5411, %v5739
      %v5741 = vpop.f32.mrf.mxu0
      %v5742 = vadd.f32 %v5411, %v5741
      %5743 = vdwg.mxu0
      %vm5744 = vcmask 130048
      %v5745 = vsel %vm5744, %v5466, 0.0
      %v5746 = vsel %vm5744, %v5468, 0.0
      %v5747 = vadd.f32 %v5745, %v5746
      %v5748 = vsel %vm5744, %v5471, 0.0
      %v5749 = vadd.f32 %v5747, %v5748
      %v5750 = vsel %vm5744, %v5473, 0.0
      %v5751 = vadd.f32 %v5749, %v5750
      %v5752 = vsel %vm5744, %v5476, 0.0
      %v5753 = vadd.f32 %v5751, %v5752
      %v5754 = vsel %vm5744, %v5478, 0.0
      %v5755 = vadd.f32 %v5753, %v5754
      %v5756 = vsel %vm5744, %v5481, 0.0
      %v5757 = vadd.f32 %v5755, %v5756
      %v5758 = vsel %vm5744, %v5483, 0.0
      %v5759 = vadd.f32 %v5757, %v5758
      %v5760 = vrot.slane %v5759, 4
      %v5761 = vadd.f32 %v5759, %v5760
      %v5762 = vrot.slane %v5761, 2
      %v5763 = vadd.f32 %v5761, %v5762
      %v5764 = vrot.slane %v5763, 1
      %v5765 = vadd.f32 %v5763, %v5764
      %v5766 = vsel %vm5744, %v5765, 0.0
      %5767 = vadd.xlane.f32.xlu0 %v5766
      %v5768 = vpop.xlane.xlu0 %5767
      %v5769 = vadd.f32 %v5768, 0.0
      %v5770 = vsel %vm5744, %v5527, 0.0
      %v5771 = vsel %vm5744, %v5529, 0.0
      %v5772 = vadd.f32 %v5770, %v5771
      %v5773 = vsel %vm5744, %v5532, 0.0
      %v5774 = vadd.f32 %v5772, %v5773
      %v5775 = vsel %vm5744, %v5534, 0.0
      %v5776 = vadd.f32 %v5774, %v5775
      %v5777 = vsel %vm5744, %v5537, 0.0
      %v5778 = vadd.f32 %v5776, %v5777
      %v5779 = vsel %vm5744, %v5539, 0.0
      %v5780 = vadd.f32 %v5778, %v5779
      %v5781 = vsel %vm5744, %v5542, 0.0
      %v5782 = vadd.f32 %v5780, %v5781
      %v5783 = vsel %vm5744, %v5544, 0.0
      %v5784 = vadd.f32 %v5782, %v5783
      %v5785 = vrot.slane %v5784, 4
      %v5786 = vadd.f32 %v5784, %v5785
      %v5787 = vrot.slane %v5786, 2
      %v5788 = vadd.f32 %v5786, %v5787
      %v5789 = vrot.slane %v5788, 1
      %v5790 = vadd.f32 %v5788, %v5789
      %v5791 = vsel %vm5744, %v5790, 0.0
      %5792 = vadd.xlane.f32.xlu0 %v5791
      %v5793 = vpop.xlane.xlu0 %5792
      %v5794 = vadd.f32 %v5769, %v5793
      %v5795 = vsel %vm5744, %v5624, 0.0
      %v5796 = vsel %vm5744, %v5626, 0.0
      %v5797 = vadd.f32 %v5795, %v5796
      %v5798 = vsel %vm5744, %v5629, 0.0
      %v5799 = vadd.f32 %v5797, %v5798
      %v5800 = vsel %vm5744, %v5631, 0.0
      %v5801 = vadd.f32 %v5799, %v5800
      %v5802 = vsel %vm5744, %v5634, 0.0
      %v5803 = vadd.f32 %v5801, %v5802
      %v5804 = vsel %vm5744, %v5636, 0.0
      %v5805 = vadd.f32 %v5803, %v5804
      %v5806 = vsel %vm5744, %v5639, 0.0
      %v5807 = vadd.f32 %v5805, %v5806
      %v5808 = vsel %vm5744, %v5641, 0.0
      %v5809 = vadd.f32 %v5807, %v5808
      %v5810 = vrot.slane %v5809, 4
      %v5811 = vadd.f32 %v5809, %v5810
      %v5812 = vrot.slane %v5811, 2
      %v5813 = vadd.f32 %v5811, %v5812
      %v5814 = vrot.slane %v5813, 1
      %v5815 = vadd.f32 %v5813, %v5814
      %v5816 = vsel %vm5744, %v5815, 0.0
      %5817 = vadd.xlane.f32.xlu0 %v5816
      %v5818 = vpop.xlane.xlu0 %5817
      %v5819 = vadd.f32 %v5794, %v5818
      %v5820 = vsel %vm5744, %v5725, 0.0
      %v5821 = vsel %vm5744, %v5727, 0.0
      %v5822 = vadd.f32 %v5820, %v5821
      %v5823 = vsel %vm5744, %v5730, 0.0
      %v5824 = vadd.f32 %v5822, %v5823
      %v5825 = vsel %vm5744, %v5732, 0.0
      %v5826 = vadd.f32 %v5824, %v5825
      %v5827 = vsel %vm5744, %v5735, 0.0
      %v5828 = vadd.f32 %v5826, %v5827
      %v5829 = vsel %vm5744, %v5737, 0.0
      %v5830 = vadd.f32 %v5828, %v5829
      %v5831 = vsel %vm5744, %v5740, 0.0
      %v5832 = vadd.f32 %v5830, %v5831
      %v5833 = vsel %vm5744, %v5742, 0.0
      %v5834 = vadd.f32 %v5832, %v5833
      %v5835 = vrot.slane %v5834, 4
      %v5836 = vadd.f32 %v5834, %v5835
      %v5837 = vrot.slane %v5836, 2
      %v5838 = vadd.f32 %v5836, %v5837
      %v5839 = vrot.slane %v5838, 1
      %v5840 = vadd.f32 %v5838, %v5839
      %v5841 = vsel %vm5744, %v5840, 0.0
      %5842 = vadd.xlane.f32.xlu0 %v5841
      %v5843 = vpop.xlane.xlu0 %5842
      %v5844 = vadd.f32 %v5819, %v5843
      %v5845 = vmul.f32 %v5844, 0.00024414063
      %v5846 = vsub.f32 %v5466, %v5845
      %v5847 = vsub.f32 %v5468, %v5845
      %v5848 = vsub.f32 %v5471, %v5845
      %v5849 = vsub.f32 %v5473, %v5845
      %v5850 = vsub.f32 %v5476, %v5845
      %v5851 = vsub.f32 %v5478, %v5845
      %v5852 = vsub.f32 %v5481, %v5845
      %v5853 = vsub.f32 %v5483, %v5845
      %v5854 = vmul.f32 %v5846, %v5846
      %v5855 = vmul.f32 %v5847, %v5847
      %v5856 = vmul.f32 %v5848, %v5848
      %v5857 = vmul.f32 %v5849, %v5849
      %v5858 = vmul.f32 %v5850, %v5850
      %v5859 = vmul.f32 %v5851, %v5851
      %v5860 = vmul.f32 %v5852, %v5852
      %v5861 = vmul.f32 %v5853, %v5853
      %v5862 = vsel %vm5744, %v5854, 0.0
      %v5863 = vsel %vm5744, %v5855, 0.0
      %v5864 = vadd.f32 %v5862, %v5863
      %v5865 = vsel %vm5744, %v5856, 0.0
      %v5866 = vadd.f32 %v5864, %v5865
      %v5867 = vsel %vm5744, %v5857, 0.0
      %v5868 = vadd.f32 %v5866, %v5867
      %v5869 = vsel %vm5744, %v5858, 0.0
      %v5870 = vadd.f32 %v5868, %v5869
      %v5871 = vsel %vm5744, %v5859, 0.0
      %v5872 = vadd.f32 %v5870, %v5871
      %v5873 = vsel %vm5744, %v5860, 0.0
      %v5874 = vadd.f32 %v5872, %v5873
      %v5875 = vsel %vm5744, %v5861, 0.0
      %v5876 = vadd.f32 %v5874, %v5875
      %v5877 = vrot.slane %v5876, 4
      %v5878 = vadd.f32 %v5876, %v5877
      %v5879 = vrot.slane %v5878, 2
      %v5880 = vadd.f32 %v5878, %v5879
      %v5881 = vrot.slane %v5880, 1
      %v5882 = vadd.f32 %v5880, %v5881
      %v5883 = vsel %vm5744, %v5882, 0.0
      %5884 = vadd.xlane.f32.xlu0 %v5883
      %v5885 = vpop.xlane.xlu0 %5884
      %v5886 = vadd.f32 %v5885, 0.0
      %v5887 = vsub.f32 %v5527, %v5845
      %v5888 = vsub.f32 %v5529, %v5845
      %v5889 = vsub.f32 %v5532, %v5845
      %v5890 = vsub.f32 %v5534, %v5845
      %v5891 = vsub.f32 %v5537, %v5845
      %v5892 = vsub.f32 %v5539, %v5845
      %v5893 = vsub.f32 %v5542, %v5845
      %v5894 = vsub.f32 %v5544, %v5845
      %v5895 = vmul.f32 %v5887, %v5887
      %v5896 = vmul.f32 %v5888, %v5888
      %v5897 = vmul.f32 %v5889, %v5889
      %v5898 = vmul.f32 %v5890, %v5890
      %v5899 = vmul.f32 %v5891, %v5891
      %v5900 = vmul.f32 %v5892, %v5892
      %v5901 = vmul.f32 %v5893, %v5893
      %v5902 = vmul.f32 %v5894, %v5894
      %v5903 = vsel %vm5744, %v5895, 0.0
      %v5904 = vsel %vm5744, %v5896, 0.0
      %v5905 = vadd.f32 %v5903, %v5904
      %v5906 = vsel %vm5744, %v5897, 0.0
      %v5907 = vadd.f32 %v5905, %v5906
      %v5908 = vsel %vm5744, %v5898, 0.0
      %v5909 = vadd.f32 %v5907, %v5908
      %v5910 = vsel %vm5744, %v5899, 0.0
      %v5911 = vadd.f32 %v5909, %v5910
      %v5912 = vsel %vm5744, %v5900, 0.0
      %v5913 = vadd.f32 %v5911, %v5912
      %v5914 = vsel %vm5744, %v5901, 0.0
      %v5915 = vadd.f32 %v5913, %v5914
      %v5916 = vsel %vm5744, %v5902, 0.0
      %v5917 = vadd.f32 %v5915, %v5916
      %v5918 = vrot.slane %v5917, 4
      %v5919 = vadd.f32 %v5917, %v5918
      %v5920 = vrot.slane %v5919, 2
      %v5921 = vadd.f32 %v5919, %v5920
      %v5922 = vrot.slane %v5921, 1
      %v5923 = vadd.f32 %v5921, %v5922
      %v5924 = vsel %vm5744, %v5923, 0.0
      %5925 = vadd.xlane.f32.xlu0 %v5924
      %v5926 = vpop.xlane.xlu0 %5925
      %v5927 = vadd.f32 %v5886, %v5926
      %v5928 = vsub.f32 %v5624, %v5845
      %v5929 = vsub.f32 %v5626, %v5845
      %v5930 = vsub.f32 %v5629, %v5845
      %v5931 = vsub.f32 %v5631, %v5845
      %v5932 = vsub.f32 %v5634, %v5845
      %v5933 = vsub.f32 %v5636, %v5845
      %v5934 = vsub.f32 %v5639, %v5845
      %v5935 = vsub.f32 %v5641, %v5845
      %v5936 = vmul.f32 %v5928, %v5928
      %v5937 = vmul.f32 %v5929, %v5929
      %v5938 = vmul.f32 %v5930, %v5930
      %v5939 = vmul.f32 %v5931, %v5931
      %v5940 = vmul.f32 %v5932, %v5932
      %v5941 = vmul.f32 %v5933, %v5933
      %v5942 = vmul.f32 %v5934, %v5934
      %v5943 = vmul.f32 %v5935, %v5935
      %v5944 = vsel %vm5744, %v5936, 0.0
      %v5945 = vsel %vm5744, %v5937, 0.0
      %v5946 = vadd.f32 %v5944, %v5945
      %v5947 = vsel %vm5744, %v5938, 0.0
      %v5948 = vadd.f32 %v5946, %v5947
      %v5949 = vsel %vm5744, %v5939, 0.0
      %v5950 = vadd.f32 %v5948, %v5949
      %v5951 = vsel %vm5744, %v5940, 0.0
      %v5952 = vadd.f32 %v5950, %v5951
      %v5953 = vsel %vm5744, %v5941, 0.0
      %v5954 = vadd.f32 %v5952, %v5953
      %v5955 = vsel %vm5744, %v5942, 0.0
      %v5956 = vadd.f32 %v5954, %v5955
      %v5957 = vsel %vm5744, %v5943, 0.0
      %v5958 = vadd.f32 %v5956, %v5957
      %v5959 = vrot.slane %v5958, 4
      %v5960 = vadd.f32 %v5958, %v5959
      %v5961 = vrot.slane %v5960, 2
      %v5962 = vadd.f32 %v5960, %v5961
      %v5963 = vrot.slane %v5962, 1
      %v5964 = vadd.f32 %v5962, %v5963
      %v5965 = vsel %vm5744, %v5964, 0.0
      %5966 = vadd.xlane.f32.xlu0 %v5965
      %v5967 = vpop.xlane.xlu0 %5966
      %v5968 = vadd.f32 %v5927, %v5967
      %v5969 = vsub.f32 %v5725, %v5845
      %v5970 = vsub.f32 %v5727, %v5845
      %v5971 = vsub.f32 %v5730, %v5845
      %v5972 = vsub.f32 %v5732, %v5845
      %v5973 = vsub.f32 %v5735, %v5845
      %v5974 = vsub.f32 %v5737, %v5845
      %v5975 = vsub.f32 %v5740, %v5845
      %v5976 = vsub.f32 %v5742, %v5845
      %v5977 = vmul.f32 %v5969, %v5969
      %v5978 = vmul.f32 %v5970, %v5970
      %v5979 = vmul.f32 %v5971, %v5971
      %v5980 = vmul.f32 %v5972, %v5972
      %v5981 = vmul.f32 %v5973, %v5973
      %v5982 = vmul.f32 %v5974, %v5974
      %v5983 = vmul.f32 %v5975, %v5975
      %v5984 = vmul.f32 %v5976, %v5976
      %v5985 = vsel %vm5744, %v5977, 0.0
      %v5986 = vsel %vm5744, %v5978, 0.0
      %v5987 = vadd.f32 %v5985, %v5986
      %v5988 = vsel %vm5744, %v5979, 0.0
      %v5989 = vadd.f32 %v5987, %v5988
      %v5990 = vsel %vm5744, %v5980, 0.0
      %v5991 = vadd.f32 %v5989, %v5990
      %v5992 = vsel %vm5744, %v5981, 0.0
      %v5993 = vadd.f32 %v5991, %v5992
      %v5994 = vsel %vm5744, %v5982, 0.0
      %v5995 = vadd.f32 %v5993, %v5994
      %v5996 = vsel %vm5744, %v5983, 0.0
      %v5997 = vadd.f32 %v5995, %v5996
      %v5998 = vsel %vm5744, %v5984, 0.0
      %v5999 = vadd.f32 %v5997, %v5998
      %v6000 = vrot.slane %v5999, 4
      %v6001 = vadd.f32 %v5999, %v6000
      %v6002 = vrot.slane %v6001, 2
      %v6003 = vadd.f32 %v6001, %v6002
      %v6004 = vrot.slane %v6003, 1
      %v6005 = vadd.f32 %v6003, %v6004
      %v6006 = vsel %vm5744, %v6005, 0.0
      %6007 = vadd.xlane.f32.xlu0 %v6006
      %v6008 = vpop.xlane.xlu0 %6007
      %v6009 = vadd.f32 %v5968, %v6008
      %v6010 = vmul.f32 %v6009, 0.00024414063
      %v6011 = vadd.f32 %v6010, 1e-05
      %v6012 = vrsqrt.pop %v6011
      %v6013 = vmul.f32 %v6012, %v6011
      %v6014 = vmul.f32 %v6013, %v6012
      %v6015 = vmul.f32 0.5, %v6014
      %v6016 = vsub.f32 1.5, %v6015
      %v6017 = vmul.f32 %v6012, %v6016
      %vm6018 = vweird.f32 %v6011
      %vm6019 = vweird.f32 %v6012
      %vm6020 = vmor %vm6018, %vm6019
      %v6021 = vsel %vm6020, %v6012, %v6017
      %v6022 = vmul.f32 %v5846, %v6021
      %v6023 = vmul.f32 %v5847, %v6021
      %v6024 = vmul.f32 %v5848, %v6021
      %v6025 = vmul.f32 %v5849, %v6021
      %v6026 = vmul.f32 %v5850, %v6021
      %v6027 = vmul.f32 %v5851, %v6021
      %v6028 = vmul.f32 %v5852, %v6021
      %v6029 = vmul.f32 %v5853, %v6021
      %v6030 = vperm.slane %v5321, 0
      %v6031 = vmul.f32 %v6022, %v6030
      %v6032 = vmul.f32 %v6023, %v6030
      %v6033 = vmul.f32 %v6024, %v6030
      %v6034 = vmul.f32 %v6025, %v6030
      %v6035 = vmul.f32 %v6026, %v6030
      %v6036 = vmul.f32 %v6027, %v6030
      %v6037 = vmul.f32 %v6028, %v6030
      %v6038 = vmul.f32 %v6029, %v6030
      %v6039 = vperm.slane %v5322, 0
      %v6040 = vadd.f32 %v6031, %v6039
      %v6041 = vadd.f32 %v6032, %v6039
      %v6042 = vadd.f32 %v6033, %v6039
      %v6043 = vadd.f32 %v6034, %v6039
      %v6044 = vadd.f32 %v6035, %v6039
      %v6045 = vadd.f32 %v6036, %v6039
      %v6046 = vadd.f32 %v6037, %v6039
      %v6047 = vadd.f32 %v6038, %v6039
      %v6048 = vmax.f32 %v6040, 0.0
      %v6049 = vmax.f32 %v6041, 0.0
      %v6050 = vmax.f32 %v6042, 0.0
      %v6051 = vmax.f32 %v6043, 0.0
      %v6052 = vmax.f32 %v6044, 0.0
      %v6053 = vmax.f32 %v6045, 0.0
      %v6054 = vmax.f32 %v6046, 0.0
      %v6055 = vmax.f32 %v6047, 0.0
      %v6056 = vmul.f32 %v5887, %v6021
      %v6057 = vmul.f32 %v5888, %v6021
      %v6058 = vmul.f32 %v5889, %v6021
      %v6059 = vmul.f32 %v5890, %v6021
      %v6060 = vmul.f32 %v5891, %v6021
      %v6061 = vmul.f32 %v5892, %v6021
      %v6062 = vmul.f32 %v5893, %v6021
      %v6063 = vmul.f32 %v5894, %v6021
      %v6064 = vmul.f32 %v6056, %v6030
      %v6065 = vmul.f32 %v6057, %v6030
      %v6066 = vmul.f32 %v6058, %v6030
      %v6067 = vmul.f32 %v6059, %v6030
      %v6068 = vmul.f32 %v6060, %v6030
      %v6069 = vmul.f32 %v6061, %v6030
      %v6070 = vmul.f32 %v6062, %v6030
      %v6071 = vmul.f32 %v6063, %v6030
      %v6072 = vadd.f32 %v6064, %v6039
      %v6073 = vadd.f32 %v6065, %v6039
      %v6074 = vadd.f32 %v6066, %v6039
      %v6075 = vadd.f32 %v6067, %v6039
      %v6076 = vadd.f32 %v6068, %v6039
      %v6077 = vadd.f32 %v6069, %v6039
      %v6078 = vadd.f32 %v6070, %v6039
      %v6079 = vadd.f32 %v6071, %v6039
      %v6080 = vmax.f32 %v6072, 0.0
      %v6081 = vmax.f32 %v6073, 0.0
      %v6082 = vmax.f32 %v6074, 0.0
      %v6083 = vmax.f32 %v6075, 0.0
      %v6084 = vmax.f32 %v6076, 0.0
      %v6085 = vmax.f32 %v6077, 0.0
      %v6086 = vmax.f32 %v6078, 0.0
      %v6087 = vmax.f32 %v6079, 0.0
      %v6088 = vmul.f32 %v5928, %v6021
      %v6089 = vmul.f32 %v5929, %v6021
      %v6090 = vmul.f32 %v5930, %v6021
      %v6091 = vmul.f32 %v5931, %v6021
      %v6092 = vmul.f32 %v5932, %v6021
      %v6093 = vmul.f32 %v5933, %v6021
      %v6094 = vmul.f32 %v5934, %v6021
      %v6095 = vmul.f32 %v5935, %v6021
      %v6096 = vmul.f32 %v6088, %v6030
      %v6097 = vmul.f32 %v6089, %v6030
      %v6098 = vmul.f32 %v6090, %v6030
      %v6099 = vmul.f32 %v6091, %v6030
      %v6100 = vmul.f32 %v6092, %v6030
      %v6101 = vmul.f32 %v6093, %v6030
      %v6102 = vmul.f32 %v6094, %v6030
      %v6103 = vmul.f32 %v6095, %v6030
      %v6104 = vadd.f32 %v6096, %v6039
      %v6105 = vadd.f32 %v6097, %v6039
      %v6106 = vadd.f32 %v6098, %v6039
      %v6107 = vadd.f32 %v6099, %v6039
      %v6108 = vadd.f32 %v6100, %v6039
      %v6109 = vadd.f32 %v6101, %v6039
      %v6110 = vadd.f32 %v6102, %v6039
      %v6111 = vadd.f32 %v6103, %v6039
      %v6112 = vmax.f32 %v6104, 0.0
      %v6113 = vmax.f32 %v6105, 0.0
      %v6114 = vmax.f32 %v6106, 0.0
      %v6115 = vmax.f32 %v6107, 0.0
      %v6116 = vmax.f32 %v6108, 0.0
      %v6117 = vmax.f32 %v6109, 0.0
      %v6118 = vmax.f32 %v6110, 0.0
      %v6119 = vmax.f32 %v6111, 0.0
      %v6120 = vmul.f32 %v5969, %v6021
      %v6121 = vmul.f32 %v5970, %v6021
      %v6122 = vmul.f32 %v5971, %v6021
      %v6123 = vmul.f32 %v5972, %v6021
      %v6124 = vmul.f32 %v5973, %v6021
      %v6125 = vmul.f32 %v5974, %v6021
      %v6126 = vmul.f32 %v5975, %v6021
      %v6127 = vmul.f32 %v5976, %v6021
      %v6128 = vmul.f32 %v6120, %v6030
      %v6129 = vmul.f32 %v6121, %v6030
      %v6130 = vmul.f32 %v6122, %v6030
      %v6131 = vmul.f32 %v6123, %v6030
      %v6132 = vmul.f32 %v6124, %v6030
      %v6133 = vmul.f32 %v6125, %v6030
      %v6134 = vmul.f32 %v6126, %v6030
      %v6135 = vmul.f32 %v6127, %v6030
      %v6136 = vadd.f32 %v6128, %v6039
      %v6137 = vadd.f32 %v6129, %v6039
      %v6138 = vadd.f32 %v6130, %v6039
      %v6139 = vadd.f32 %v6131, %v6039
      %v6140 = vadd.f32 %v6132, %v6039
      %v6141 = vadd.f32 %v6133, %v6039
      %v6142 = vadd.f32 %v6134, %v6039
      %v6143 = vadd.f32 %v6135, %v6039
      %v6144 = vmax.f32 %v6136, 0.0
      %v6145 = vmax.f32 %v6137, 0.0
      %v6146 = vmax.f32 %v6138, 0.0
      %v6147 = vmax.f32 %v6139, 0.0
      %v6148 = vmax.f32 %v6140, 0.0
      %v6149 = vmax.f32 %v6141, 0.0
      %v6150 = vmax.f32 %v6142, 0.0
      %v6151 = vmax.f32 %v6143, 0.0
      %v6152 = vld [vmem:[%s16] sm:$0xf]
      %v6153 = vld [vmem:[%s16 + $0x4] sm:$0xf]
      %v6154 = vld [vmem:[%s16 + $0x8] sm:$0xf]
      %v6155 = vld [vmem:[%s16 + $0xc] sm:$0xf]
      %v6156 = vld [vmem:[%s16 + $0x10] sm:$0xf]
      %v6157 = vld [vmem:[%s16 + $0x14] sm:$0xf]
      %v6158 = vld [vmem:[%s16 + $0x18] sm:$0xf]
      %v6159 = vld [vmem:[%s16 + $0x1c] sm:$0xf]
      %v6160 = vld [vmem:[%s16 + $0x20] sm:$0xf]
      %v6161 = vld [vmem:[%s16 + $0x24] sm:$0xf]
      %v6162 = vld [vmem:[%s16 + $0x28] sm:$0xf]
      %v6163 = vld [vmem:[%s16 + $0x2c] sm:$0xf]
      %v6164 = vld [vmem:[%s16 + $0x30] sm:$0xf]
      %v6165 = vld [vmem:[%s16 + $0x34] sm:$0xf]
      %v6166 = vld [vmem:[%s16 + $0x38] sm:$0xf]
      %v6167 = vld [vmem:[%s16 + $0x3c] sm:$0xf]
      %v6168 = vld [vmem:[%s16 + $0x40] sm:$0xf]
      %v6169 = vld [vmem:[%s16 + $0x44] sm:$0xf]
      %v6170 = vld [vmem:[%s17] sm:$0x1]
      %v6171 = vld [vmem:[%s17 + $0x1] sm:$0x1]
      %v6172 = vld [vmem:[%s17 + $0x2] sm:$0x1]
      %6181 = vrot.lane.b32.xlu0 %v6080, 16
      %v6182 = vpop.permute.xlu0 %6181
      %6183 = vrot.lane.b32.xlu0 %v6081, 16
      %v6184 = vpop.permute.xlu0 %6183
      %6185 = vrot.lane.b32.xlu0 %v6082, 16
      %v6186 = vpop.permute.xlu0 %6185
      %6187 = vrot.lane.b32.xlu0 %v6083, 16
      %v6188 = vpop.permute.xlu0 %6187
      %6189 = vrot.lane.b32.xlu0 %v6084, 16
      %v6190 = vpop.permute.xlu0 %6189
      %6191 = vrot.lane.b32.xlu0 %v6085, 16
      %v6192 = vpop.permute.xlu0 %6191
      %6193 = vrot.lane.b32.xlu0 %v6086, 16
      %v6194 = vpop.permute.xlu0 %6193
      %6195 = vrot.lane.b32.xlu0 %v6087, 16
      %v6196 = vpop.permute.xlu0 %6195
      %6213 = vrot.lane.b32.xlu0 %v6112, 32
      %v6214 = vpop.permute.xlu0 %6213
      %6215 = vrot.lane.b32.xlu0 %v6113, 32
      %v6216 = vpop.permute.xlu0 %6215
      %6217 = vrot.lane.b32.xlu0 %v6114, 32
      %v6218 = vpop.permute.xlu0 %6217
      %6219 = vrot.lane.b32.xlu0 %v6115, 32
      %v6220 = vpop.permute.xlu0 %6219
      %6221 = vrot.lane.b32.xlu0 %v6116, 32
      %v6222 = vpop.permute.xlu0 %6221
      %6223 = vrot.lane.b32.xlu0 %v6117, 32
      %v6224 = vpop.permute.xlu0 %6223
      %6225 = vrot.lane.b32.xlu0 %v6118, 32
      %v6226 = vpop.permute.xlu0 %6225
      %6227 = vrot.lane.b32.xlu0 %v6119, 32
      %v6228 = vpop.permute.xlu0 %6227
      %6245 = vrot.lane.b32.xlu0 %v6144, 48
      %v6246 = vpop.permute.xlu0 %6245
      %6247 = vrot.lane.b32.xlu0 %v6145, 48
      %v6248 = vpop.permute.xlu0 %6247
      %6249 = vrot.lane.b32.xlu0 %v6146, 48
      %v6250 = vpop.permute.xlu0 %6249
      %6251 = vrot.lane.b32.xlu0 %v6147, 48
      %v6252 = vpop.permute.xlu0 %6251
      %6253 = vrot.lane.b32.xlu0 %v6148, 48
      %v6254 = vpop.permute.xlu0 %6253
      %6255 = vrot.lane.b32.xlu0 %v6149, 48
      %v6256 = vpop.permute.xlu0 %6255
      %6257 = vrot.lane.b32.xlu0 %v6150, 48
      %v6258 = vpop.permute.xlu0 %6257
      %6259 = vrot.lane.b32.xlu0 %v6151, 48
      %v6260 = vpop.permute.xlu0 %6259
      %v6269 = vsel %vm5744, %v6048, %v6182
      %v6270 = vsel %vm5744, %v6049, %v6184
      %v6271 = vsel %vm5744, %v6050, %v6186
      %v6272 = vsel %vm5744, %v6051, %v6188
      %v6273 = vsel %vm5744, %v6052, %v6190
      %v6274 = vsel %vm5744, %v6053, %v6192
      %v6275 = vsel %vm5744, %v6054, %v6194
      %v6276 = vsel %vm5744, %v6055, %v6196
      %v6277 = vsel %vm1339, %v6269, %v6214
      %v6278 = vsel %vm1339, %v6270, %v6216
      %v6279 = vsel %vm1339, %v6271, %v6218
      %v6280 = vsel %vm1339, %v6272, %v6220
      %v6281 = vsel %vm1339, %v6273, %v6222
      %v6282 = vsel %vm1339, %v6274, %v6224
      %v6283 = vsel %vm1339, %v6275, %v6226
      %v6284 = vsel %vm1339, %v6276, %v6228
      %vm6285 = vcmask 392192
      %v6286 = vsel %vm6285, %v6277, %v6246
      %v6287 = vsel %vm6285, %v6278, %v6248
      %v6288 = vsel %vm6285, %v6279, %v6250
      %v6289 = vsel %vm6285, %v6280, %v6252
      %v6290 = vsel %vm6285, %v6281, %v6254
      %v6291 = vsel %vm6285, %v6282, %v6256
      %v6292 = vsel %vm6285, %v6283, %v6258
      %v6293 = vsel %vm6285, %v6284, %v6260
      %v6294 = vrot.slane %v6286, 1
      %v6295 = vrot.slane %v6287, 1
      %v6296 = vrot.slane %v6288, 1
      %v6297 = vrot.slane %v6289, 1
      %v6298 = vrot.slane %v6290, 1
      %v6299 = vrot.slane %v6291, 1
      %v6300 = vrot.slane %v6292, 1
      %v6301 = vrot.slane %v6293, 1
      %v6302 = vsel %vm1218, %v6300, %v6301
      %v6303 = vsel %vm1218, %v6299, %v6300
      %v6304 = vsel %vm1218, %v6298, %v6299
      %v6305 = vsel %vm1218, %v6297, %v6298
      %v6306 = vsel %vm1218, %v6296, %v6297
      %v6307 = vsel %vm1218, %v6295, %v6296
      %v6308 = vsel %vm1218, %v6294, %v6295
      %v6309 = vsel %vm1218, %v6301, %v6294
      %v6310 = vmul.f32 %v6308, %v1230
      %v6311 = vmul.f32 %v6307, %v1235
      %v6312 = vmul.f32 %v6306, %v1240
      %v6313 = vmul.f32 %v6305, %v1245
      %v6314 = vmul.f32 %v6304, %v1250
      %v6315 = vmul.f32 %v6303, %v1255
      %v6316 = vmul.f32 %v6302, %v1260
      %v6317 = vmul.f32 %v6309, %v1265
      %6326 = vrot.lane.b32.xlu0 %v6310, 64
      %v6327 = vpop.permute.xlu0 %6326
      %6328 = vrot.lane.b32.xlu0 %v6311, 64
      %v6329 = vpop.permute.xlu0 %6328
      %6330 = vrot.lane.b32.xlu0 %v6312, 64
      %v6331 = vpop.permute.xlu0 %6330
      %6332 = vrot.lane.b32.xlu0 %v6313, 64
      %v6333 = vpop.permute.xlu0 %6332
      %6334 = vrot.lane.b32.xlu0 %v6314, 64
      %v6335 = vpop.permute.xlu0 %6334
      %6336 = vrot.lane.b32.xlu0 %v6315, 64
      %v6337 = vpop.permute.xlu0 %6336
      %6338 = vrot.lane.b32.xlu0 %v6316, 64
      %v6339 = vpop.permute.xlu0 %6338
      %6340 = vrot.lane.b32.xlu0 %v6317, 64
      %v6341 = vpop.permute.xlu0 %6340
      %v6350 = vsel %vm1348, %v6286, %v6327
      %v6351 = vsel %vm1348, %v6287, %v6329
      %v6352 = vsel %vm1348, %v6288, %v6331
      %v6353 = vsel %vm1348, %v6289, %v6333
      %v6354 = vsel %vm1348, %v6290, %v6335
      %v6355 = vsel %vm1348, %v6291, %v6337
      %v6356 = vsel %vm1348, %v6292, %v6339
      %v6357 = vsel %vm1348, %v6293, %v6341
      %v6358 = vpack.c.bf16 %v6350, %v6350
      %v6359 = vpack.c.bf16 %v6351, %v6351
      %v6360 = vpack.c.bf16 %v6352, %v6352
      %v6361 = vpack.c.bf16 %v6353, %v6353
      %v6362 = vpack.c.bf16 %v6354, %v6354
      %v6363 = vpack.c.bf16 %v6355, %v6355
      %v6364 = vpack.c.bf16 %v6356, %v6356
      %v6365 = vpack.c.bf16 %v6357, %v6357
      %6366 = vst [vmem:[#allocation4] sm:$0xf] %v6358
      %6367 = vst [vmem:[#allocation4 + $0x4] sm:$0xf] %v6359
      %6368 = vst [vmem:[#allocation4 + $0x8] sm:$0xf] %v6360
      %6369 = vst [vmem:[#allocation4 + $0xc] sm:$0xf] %v6361
      %6370 = vst [vmem:[#allocation4 + $0x10] sm:$0xf] %v6362
      %6371 = vst [vmem:[#allocation4 + $0x14] sm:$0xf] %v6363
      %6372 = vst [vmem:[#allocation4 + $0x18] sm:$0xf] %v6364
      %6373 = vst [vmem:[#allocation4 + $0x1c] sm:$0xf] %v6365
      %v6374 = vld [vmem:[#allocation4 + $0x4] sm:$0xf]
      %v6375 = vld [vmem:[#allocation4 + $0x8] sm:$0xf]
      %v6376 = vld [vmem:[#allocation4 + $0xc] sm:$0xf]
      %v6377 = vld [vmem:[#allocation4 + $0x10] sm:$0xf]
      %v6378 = vld [vmem:[#allocation4 + $0x14] sm:$0xf]
      %v6379 = vld [vmem:[#allocation4 + $0x18] sm:$0xf]
      %v6380 = vld [vmem:[#allocation4 + $0x1c] sm:$0xf]
      %v6381 = vld [vmem:[#allocation4 + $0x20] sm:$0xf]
      %v6382 = vperm.slane %v6170, 0
      %v6391 = vunpack.c.l.b16 %v6358
      %v6392 = vunpack.c.l.b16 %v6359
      %v6393 = vunpack.c.l.b16 %v6360
      %v6394 = vunpack.c.l.b16 %v6361
      %v6395 = vunpack.c.l.b16 %v6362
      %v6396 = vunpack.c.l.b16 %v6363
      %v6397 = vunpack.c.l.b16 %v6364
      %v6398 = vunpack.c.l.b16 %v6365
      %v6399 = vpack.c.b16 %v6392, %v6391
      %v6400 = vpack.c.b16 %v6394, %v6393
      %v6401 = vpack.c.b16 %v6396, %v6395
      %v6402 = vpack.c.b16 %v6398, %v6397
      %v6405 = vunpack.c.l.b16 %v6152
      %v6406 = vunpack.c.l.b16 %v6153
      %v6407 = vpack.c.b16 %v6406, %v6405
      %v6410 = vsel %vm5744, %v6399, 0
      %v6413 = vsel %vm5744, %v6400, 0
      %v6416 = vsel %vm5744, %v6401, 0
      %v6419 = vsel %vm5744, %v6402, 0
      %6421 = vmatpush.bf16.msra.mxu0 0
      %6422 = vmatpush.bf16.msra.mxu0 0
      %6423 = vmatpush.bf16.msra.mxu0 0
      %6424 = vmatpush.bf16.msra.mxu0 0
      %6425 = vmatpush.bf16.msra.mxu0 0
      %6426 = vmatpush.bf16.msra.mxu0 0
      %6427 = vmatpush.bf16.msra.mxu0 0
      %6428 = vmatpush.bf16.msra.mxu0 %v6407
      %6429 = vmatmul.bf16.gmra.mxu0 %v6410
      %v6430 = vpop.f32.mrf.mxu0
      %v6431 = vadd.f32 %v6382, %v6430
      %v6432 = vpop.f32.mrf.mxu0
      %v6433 = vadd.f32 %v6382, %v6432
      %6434 = vmatmul.bf16.gmra.mxu0 %v6413
      %v6435 = vpop.f32.mrf.mxu0
      %v6436 = vadd.f32 %v6382, %v6435
      %v6437 = vpop.f32.mrf.mxu0
      %v6438 = vadd.f32 %v6382, %v6437
      %6439 = vmatmul.bf16.gmra.mxu0 %v6416
      %v6440 = vpop.f32.mrf.mxu0
      %v6441 = vadd.f32 %v6382, %v6440
      %v6442 = vpop.f32.mrf.mxu0
      %v6443 = vadd.f32 %v6382, %v6442
      %6444 = vmatmul.bf16.gmra.mxu0 %v6419
      %v6445 = vpop.f32.mrf.mxu0
      %v6446 = vadd.f32 %v6382, %v6445
      %v6447 = vpop.f32.mrf.mxu0
      %v6448 = vadd.f32 %v6382, %v6447
      %6449 = vdwg.mxu0
      %v6454 = vunpack.c.l.b16 %v6154
      %v6455 = vunpack.c.l.b16 %v6155
      %v6456 = vunpack.c.l.b16 %v6156
      %v6457 = vunpack.c.l.b16 %v6157
      %v6458 = vpack.c.b16 %v6455, %v6454
      %v6459 = vpack.c.b16 %v6457, %v6456
      %v6462 = vsel %vm1339, %v6399, 0
      %v6464 = vsel %vm1339, %v6400, 0
      %v6466 = vsel %vm1339, %v6401, 0
      %v6468 = vsel %vm1339, %v6402, 0
      %6470 = vmatpush.bf16.msra.mxu0 0
      %6471 = vmatpush.bf16.msra.mxu0 0
      %6472 = vmatpush.bf16.msra.mxu0 0
      %6473 = vmatpush.bf16.msra.mxu0 0
      %6474 = vmatpush.bf16.msra.mxu0 0
      %6475 = vmatpush.bf16.msra.mxu0 0
      %6476 = vmatpush.bf16.msra.mxu0 %v6459
      %6477 = vmatpush.bf16.msra.mxu0 %v6458
      %6478 = vmatmul.bf16.gmra.mxu0 %v6462
      %v6479 = vpop.f32.mrf.mxu0
      %v6480 = vadd.f32 %v6382, %v6479
      %v6481 = vpop.f32.mrf.mxu0
      %v6482 = vadd.f32 %v6382, %v6481
      %6483 = vmatmul.bf16.gmra.mxu0 %v6464
      %v6484 = vpop.f32.mrf.mxu0
      %v6485 = vadd.f32 %v6382, %v6484
      %v6486 = vpop.f32.mrf.mxu0
      %v6487 = vadd.f32 %v6382, %v6486
      %6488 = vmatmul.bf16.gmra.mxu0 %v6466
      %v6489 = vpop.f32.mrf.mxu0
      %v6490 = vadd.f32 %v6382, %v6489
      %v6491 = vpop.f32.mrf.mxu0
      %v6492 = vadd.f32 %v6382, %v6491
      %6493 = vmatmul.bf16.gmra.mxu0 %v6468
      %v6494 = vpop.f32.mrf.mxu0
      %v6495 = vadd.f32 %v6382, %v6494
      %v6496 = vpop.f32.mrf.mxu0
      %v6497 = vadd.f32 %v6382, %v6496
      %6498 = vdwg.mxu0
      %6499 = vrot.lane.b32.xlu0 %v6399, 112
      %v6500 = vpop.permute.xlu0 %6499
      %6501 = vrot.lane.b32.xlu0 %v6400, 112
      %v6502 = vpop.permute.xlu0 %6501
      %6503 = vrot.lane.b32.xlu0 %v6401, 112
      %v6504 = vpop.permute.xlu0 %6503
      %6505 = vrot.lane.b32.xlu0 %v6402, 112
      %v6506 = vpop.permute.xlu0 %6505
      %v6508 = vsel %vm5744, %v6399, %v6500
      %v6510 = vsel %vm5744, %v6400, %v6502
      %v6512 = vsel %vm5744, %v6401, %v6504
      %v6514 = vsel %vm5744, %v6402, %v6506
      %v6519 = vunpack.c.l.b16 %v6158
      %v6520 = vunpack.c.l.b16 %v6159
      %v6521 = vunpack.c.l.b16 %v6160
      %v6522 = vunpack.c.l.b16 %v6161
      %v6523 = vpack.c.b16 %v6520, %v6519
      %v6524 = vpack.c.b16 %v6522, %v6521
      %v6527 = vsel %vm1339, %v6508, 0
      %v6529 = vsel %vm1339, %v6510, 0
      %v6531 = vsel %vm1339, %v6512, 0
      %v6533 = vsel %vm1339, %v6514, 0
      %6535 = vmatpush.bf16.msra.mxu0 0
      %6536 = vmatpush.bf16.msra.mxu0 0
      %6537 = vmatpush.bf16.msra.mxu0 0
      %6538 = vmatpush.bf16.msra.mxu0 0
      %6539 = vmatpush.bf16.msra.mxu0 0
      %6540 = vmatpush.bf16.msra.mxu0 0
      %6541 = vmatpush.bf16.msra.mxu0 %v6524
      %6542 = vmatpush.bf16.msra.mxu0 %v6523
      %6543 = vmatmul.bf16.gmra.mxu0 %v6527
      %v6544 = vpop.f32.mrf.mxu0
      %v6545 = vadd.f32 %v6382, %v6544
      %v6546 = vpop.f32.mrf.mxu0
      %v6547 = vadd.f32 %v6382, %v6546
      %6548 = vmatmul.bf16.gmra.mxu0 %v6529
      %v6549 = vpop.f32.mrf.mxu0
      %v6550 = vadd.f32 %v6382, %v6549
      %v6551 = vpop.f32.mrf.mxu0
      %v6552 = vadd.f32 %v6382, %v6551
      %6553 = vmatmul.bf16.gmra.mxu0 %v6531
      %v6554 = vpop.f32.mrf.mxu0
      %v6555 = vadd.f32 %v6382, %v6554
      %v6556 = vpop.f32.mrf.mxu0
      %v6557 = vadd.f32 %v6382, %v6556
      %6558 = vmatmul.bf16.gmra.mxu0 %v6533
      %v6559 = vpop.f32.mrf.mxu0
      %v6560 = vadd.f32 %v6382, %v6559
      %v6561 = vpop.f32.mrf.mxu0
      %v6562 = vadd.f32 %v6382, %v6561
      %6563 = vdwg.mxu0
      %v6564 = vsel %vm1339, %v6399, %v6399
      %v6565 = vsel %vm1339, %v6400, %v6400
      %v6566 = vsel %vm1339, %v6401, %v6401
      %v6567 = vsel %vm1339, %v6402, %v6402
      %v6568 = vsel %vm6285, %v6564, %v6399
      %v6569 = vsel %vm6285, %v6565, %v6400
      %v6570 = vsel %vm6285, %v6566, %v6401
      %v6571 = vsel %vm6285, %v6567, %v6402
      %v6580 = vunpack.c.l.b16 %v6162
      %v6581 = vunpack.c.l.b16 %v6163
      %v6582 = vunpack.c.l.b16 %v6164
      %v6583 = vunpack.c.l.b16 %v6165
      %v6584 = vunpack.c.l.b16 %v6166
      %v6585 = vunpack.c.l.b16 %v6167
      %v6586 = vunpack.c.l.b16 %v6168
      %v6587 = vunpack.c.l.b16 %v6169
      %v6588 = vpack.c.b16 %v6581, %v6580
      %v6589 = vpack.c.b16 %v6583, %v6582
      %v6590 = vpack.c.b16 %v6585, %v6584
      %v6591 = vpack.c.b16 %v6587, %v6586
      %v6596 = vsel %vm1348, %v6568, 0
      %v6598 = vsel %vm1348, %v6569, 0
      %v6600 = vsel %vm1348, %v6570, 0
      %v6602 = vsel %vm1348, %v6571, 0
      %6604 = vmatpush.bf16.msra.mxu0 0
      %6605 = vmatpush.bf16.msra.mxu0 0
      %6606 = vmatpush.bf16.msra.mxu0 0
      %6607 = vmatpush.bf16.msra.mxu0 0
      %6608 = vmatpush.bf16.msra.mxu0 %v6591
      %6609 = vmatpush.bf16.msra.mxu0 %v6590
      %6610 = vmatpush.bf16.msra.mxu0 %v6589
      %6611 = vmatpush.bf16.msra.mxu0 %v6588
      %6612 = vmatmul.bf16.gmra.mxu0 %v6596
      %v6613 = vpop.f32.mrf.mxu0
      %v6614 = vadd.f32 %v6382, %v6613
      %v6615 = vpop.f32.mrf.mxu0
      %v6616 = vadd.f32 %v6382, %v6615
      %6617 = vmatmul.bf16.gmra.mxu0 %v6598
      %v6618 = vpop.f32.mrf.mxu0
      %v6619 = vadd.f32 %v6382, %v6618
      %v6620 = vpop.f32.mrf.mxu0
      %v6621 = vadd.f32 %v6382, %v6620
      %6622 = vmatmul.bf16.gmra.mxu0 %v6600
      %v6623 = vpop.f32.mrf.mxu0
      %v6624 = vadd.f32 %v6382, %v6623
      %v6625 = vpop.f32.mrf.mxu0
      %v6626 = vadd.f32 %v6382, %v6625
      %6627 = vmatmul.bf16.gmra.mxu0 %v6602
      %v6628 = vpop.f32.mrf.mxu0
      %v6629 = vadd.f32 %v6382, %v6628
      %v6630 = vpop.f32.mrf.mxu0
      %v6631 = vadd.f32 %v6382, %v6630
      %6632 = vdwg.mxu0
      %vm6633 = vcmask 64512
      %v6634 = vsel %vm6633, %v6431, 0.0
      %v6635 = vsel %vm6633, %v6433, 0.0
      %v6636 = vadd.f32 %v6634, %v6635
      %v6637 = vsel %vm6633, %v6436, 0.0
      %v6638 = vadd.f32 %v6636, %v6637
      %v6639 = vsel %vm6633, %v6438, 0.0
      %v6640 = vadd.f32 %v6638, %v6639
      %v6641 = vsel %vm6633, %v6441, 0.0
      %v6642 = vadd.f32 %v6640, %v6641
      %v6643 = vsel %vm6633, %v6443, 0.0
      %v6644 = vadd.f32 %v6642, %v6643
      %v6645 = vsel %vm6633, %v6446, 0.0
      %v6646 = vadd.f32 %v6644, %v6645
      %v6647 = vsel %vm6633, %v6448, 0.0
      %v6648 = vadd.f32 %v6646, %v6647
      %v6649 = vrot.slane %v6648, 4
      %v6650 = vadd.f32 %v6648, %v6649
      %v6651 = vrot.slane %v6650, 2
      %v6652 = vadd.f32 %v6650, %v6651
      %v6653 = vrot.slane %v6652, 1
      %v6654 = vadd.f32 %v6652, %v6653
      %v6655 = vsel %vm6633, %v6654, 0.0
      %6656 = vadd.xlane.f32.xlu0 %v6655
      %v6657 = vpop.xlane.xlu0 %6656
      %v6658 = vadd.f32 %v6657, 0.0
      %v6659 = vsel %vm6633, %v6480, 0.0
      %v6660 = vsel %vm6633, %v6482, 0.0
      %v6661 = vadd.f32 %v6659, %v6660
      %v6662 = vsel %vm6633, %v6485, 0.0
      %v6663 = vadd.f32 %v6661, %v6662
      %v6664 = vsel %vm6633, %v6487, 0.0
      %v6665 = vadd.f32 %v6663, %v6664
      %v6666 = vsel %vm6633, %v6490, 0.0
      %v6667 = vadd.f32 %v6665, %v6666
      %v6668 = vsel %vm6633, %v6492, 0.0
      %v6669 = vadd.f32 %v6667, %v6668
      %v6670 = vsel %vm6633, %v6495, 0.0
      %v6671 = vadd.f32 %v6669, %v6670
      %v6672 = vsel %vm6633, %v6497, 0.0
      %v6673 = vadd.f32 %v6671, %v6672
      %v6674 = vrot.slane %v6673, 4
      %v6675 = vadd.f32 %v6673, %v6674
      %v6676 = vrot.slane %v6675, 2
      %v6677 = vadd.f32 %v6675, %v6676
      %v6678 = vrot.slane %v6677, 1
      %v6679 = vadd.f32 %v6677, %v6678
      %v6680 = vsel %vm6633, %v6679, 0.0
      %6681 = vadd.xlane.f32.xlu0 %v6680
      %v6682 = vpop.xlane.xlu0 %6681
      %v6683 = vadd.f32 %v6658, %v6682
      %v6684 = vsel %vm6633, %v6545, 0.0
      %v6685 = vsel %vm6633, %v6547, 0.0
      %v6686 = vadd.f32 %v6684, %v6685
      %v6687 = vsel %vm6633, %v6550, 0.0
      %v6688 = vadd.f32 %v6686, %v6687
      %v6689 = vsel %vm6633, %v6552, 0.0
      %v6690 = vadd.f32 %v6688, %v6689
      %v6691 = vsel %vm6633, %v6555, 0.0
      %v6692 = vadd.f32 %v6690, %v6691
      %v6693 = vsel %vm6633, %v6557, 0.0
      %v6694 = vadd.f32 %v6692, %v6693
      %v6695 = vsel %vm6633, %v6560, 0.0
      %v6696 = vadd.f32 %v6694, %v6695
      %v6697 = vsel %vm6633, %v6562, 0.0
      %v6698 = vadd.f32 %v6696, %v6697
      %v6699 = vrot.slane %v6698, 4
      %v6700 = vadd.f32 %v6698, %v6699
      %v6701 = vrot.slane %v6700, 2
      %v6702 = vadd.f32 %v6700, %v6701
      %v6703 = vrot.slane %v6702, 1
      %v6704 = vadd.f32 %v6702, %v6703
      %v6705 = vsel %vm6633, %v6704, 0.0
      %6706 = vadd.xlane.f32.xlu0 %v6705
      %v6707 = vpop.xlane.xlu0 %6706
      %v6708 = vadd.f32 %v6683, %v6707
      %v6709 = vsel %vm6633, %v6614, 0.0
      %v6710 = vsel %vm6633, %v6616, 0.0
      %v6711 = vadd.f32 %v6709, %v6710
      %v6712 = vsel %vm6633, %v6619, 0.0
      %v6713 = vadd.f32 %v6711, %v6712
      %v6714 = vsel %vm6633, %v6621, 0.0
      %v6715 = vadd.f32 %v6713, %v6714
      %v6716 = vsel %vm6633, %v6624, 0.0
      %v6717 = vadd.f32 %v6715, %v6716
      %v6718 = vsel %vm6633, %v6626, 0.0
      %v6719 = vadd.f32 %v6717, %v6718
      %v6720 = vsel %vm6633, %v6629, 0.0
      %v6721 = vadd.f32 %v6719, %v6720
      %v6722 = vsel %vm6633, %v6631, 0.0
      %v6723 = vadd.f32 %v6721, %v6722
      %v6724 = vrot.slane %v6723, 4
      %v6725 = vadd.f32 %v6723, %v6724
      %v6726 = vrot.slane %v6725, 2
      %v6727 = vadd.f32 %v6725, %v6726
      %v6728 = vrot.slane %v6727, 1
      %v6729 = vadd.f32 %v6727, %v6728
      %v6730 = vsel %vm6633, %v6729, 0.0
      %6731 = vadd.xlane.f32.xlu0 %v6730
      %v6732 = vpop.xlane.xlu0 %6731
      %v6733 = vadd.f32 %v6708, %v6732
      %v6734 = vsel %vm5744, %v6500, 0
      %v6736 = vsel %vm5744, %v6502, 0
      %v6738 = vsel %vm5744, %v6504, 0
      %v6740 = vsel %vm5744, %v6506, 0
      %6742 = vmatpush.bf16.msra.mxu0 0
      %6743 = vmatpush.bf16.msra.mxu0 0
      %6744 = vmatpush.bf16.msra.mxu0 0
      %6745 = vmatpush.bf16.msra.mxu0 0
      %6746 = vmatpush.bf16.msra.mxu0 0
      %6747 = vmatpush.bf16.msra.mxu0 0
      %6748 = vmatpush.bf16.msra.mxu0 0
      %6749 = vmatpush.bf16.msra.mxu0 %v6407
      %6750 = vmatmul.bf16.gmra.mxu0 %v6734
      %v6751 = vpop.f32.mrf.mxu0
      %v6752 = vadd.f32 %v6382, %v6751
      %v6753 = vpop.f32.mrf.mxu0
      %v6754 = vadd.f32 %v6382, %v6753
      %6755 = vmatmul.bf16.gmra.mxu0 %v6736
      %v6756 = vpop.f32.mrf.mxu0
      %v6757 = vadd.f32 %v6382, %v6756
      %v6758 = vpop.f32.mrf.mxu0
      %v6759 = vadd.f32 %v6382, %v6758
      %6760 = vmatmul.bf16.gmra.mxu0 %v6738
      %v6761 = vpop.f32.mrf.mxu0
      %v6762 = vadd.f32 %v6382, %v6761
      %v6763 = vpop.f32.mrf.mxu0
      %v6764 = vadd.f32 %v6382, %v6763
      %6765 = vmatmul.bf16.gmra.mxu0 %v6740
      %v6766 = vpop.f32.mrf.mxu0
      %v6767 = vadd.f32 %v6382, %v6766
      %v6768 = vpop.f32.mrf.mxu0
      %v6769 = vadd.f32 %v6382, %v6768
      %6770 = vdwg.mxu0
      %6771 = vrot.lane.b32.xlu0 %v6399, 80
      %v6772 = vpop.permute.xlu0 %6771
      %6773 = vrot.lane.b32.xlu0 %v6400, 80
      %v6774 = vpop.permute.xlu0 %6773
      %6775 = vrot.lane.b32.xlu0 %v6401, 80
      %v6776 = vpop.permute.xlu0 %6775
      %6777 = vrot.lane.b32.xlu0 %v6402, 80
      %v6778 = vpop.permute.xlu0 %6777
      %v6780 = vsel %vm5744, %v6500, %v6772
      %v6782 = vsel %vm5744, %v6502, %v6774
      %v6784 = vsel %vm5744, %v6504, %v6776
      %v6786 = vsel %vm5744, %v6506, %v6778
      %v6787 = vsel %vm1339, %v6780, 0
      %v6789 = vsel %vm1339, %v6782, 0
      %v6791 = vsel %vm1339, %v6784, 0
      %v6793 = vsel %vm1339, %v6786, 0
      %6795 = vmatpush.bf16.msra.mxu0 0
      %6796 = vmatpush.bf16.msra.mxu0 0
      %6797 = vmatpush.bf16.msra.mxu0 0
      %6798 = vmatpush.bf16.msra.mxu0 0
      %6799 = vmatpush.bf16.msra.mxu0 0
      %6800 = vmatpush.bf16.msra.mxu0 0
      %6801 = vmatpush.bf16.msra.mxu0 %v6459
      %6802 = vmatpush.bf16.msra.mxu0 %v6458
      %6803 = vmatmul.bf16.gmra.mxu0 %v6787
      %v6804 = vpop.f32.mrf.mxu0
      %v6805 = vadd.f32 %v6382, %v6804
      %v6806 = vpop.f32.mrf.mxu0
      %v6807 = vadd.f32 %v6382, %v6806
      %6808 = vmatmul.bf16.gmra.mxu0 %v6789
      %v6809 = vpop.f32.mrf.mxu0
      %v6810 = vadd.f32 %v6382, %v6809
      %v6811 = vpop.f32.mrf.mxu0
      %v6812 = vadd.f32 %v6382, %v6811
      %6813 = vmatmul.bf16.gmra.mxu0 %v6791
      %v6814 = vpop.f32.mrf.mxu0
      %v6815 = vadd.f32 %v6382, %v6814
      %v6816 = vpop.f32.mrf.mxu0
      %v6817 = vadd.f32 %v6382, %v6816
      %6818 = vmatmul.bf16.gmra.mxu0 %v6793
      %v6819 = vpop.f32.mrf.mxu0
      %v6820 = vadd.f32 %v6382, %v6819
      %v6821 = vpop.f32.mrf.mxu0
      %v6822 = vadd.f32 %v6382, %v6821
      %6823 = vdwg.mxu0
      %6824 = vrot.lane.b32.xlu0 %v6399, 96
      %v6825 = vpop.permute.xlu0 %6824
      %6826 = vrot.lane.b32.xlu0 %v6400, 96
      %v6827 = vpop.permute.xlu0 %6826
      %6828 = vrot.lane.b32.xlu0 %v6401, 96
      %v6829 = vpop.permute.xlu0 %6828
      %6830 = vrot.lane.b32.xlu0 %v6402, 96
      %v6831 = vpop.permute.xlu0 %6830
      %v6833 = vsel %vm5744, %v6500, %v6825
      %v6835 = vsel %vm5744, %v6502, %v6827
      %v6837 = vsel %vm5744, %v6504, %v6829
      %v6839 = vsel %vm5744, %v6506, %v6831
      %v6840 = vsel %vm1339, %v6833, 0
      %v6842 = vsel %vm1339, %v6835, 0
      %v6844 = vsel %vm1339, %v6837, 0
      %v6846 = vsel %vm1339, %v6839, 0
      %6848 = vmatpush.bf16.msra.mxu0 0
      %6849 = vmatpush.bf16.msra.mxu0 0
      %6850 = vmatpush.bf16.msra.mxu0 0
      %6851 = vmatpush.bf16.msra.mxu0 0
      %6852 = vmatpush.bf16.msra.mxu0 0
      %6853 = vmatpush.bf16.msra.mxu0 0
      %6854 = vmatpush.bf16.msra.mxu0 %v6524
      %6855 = vmatpush.bf16.msra.mxu0 %v6523
      %6856 = vmatmul.bf16.gmra.mxu0 %v6840
      %v6857 = vpop.f32.mrf.mxu0
      %v6858 = vadd.f32 %v6382, %v6857
      %v6859 = vpop.f32.mrf.mxu0
      %v6860 = vadd.f32 %v6382, %v6859
      %6861 = vmatmul.bf16.gmra.mxu0 %v6842
      %v6862 = vpop.f32.mrf.mxu0
      %v6863 = vadd.f32 %v6382, %v6862
      %v6864 = vpop.f32.mrf.mxu0
      %v6865 = vadd.f32 %v6382, %v6864
      %6866 = vmatmul.bf16.gmra.mxu0 %v6844
      %v6867 = vpop.f32.mrf.mxu0
      %v6868 = vadd.f32 %v6382, %v6867
      %v6869 = vpop.f32.mrf.mxu0
      %v6870 = vadd.f32 %v6382, %v6869
      %6871 = vmatmul.bf16.gmra.mxu0 %v6846
      %v6872 = vpop.f32.mrf.mxu0
      %v6873 = vadd.f32 %v6382, %v6872
      %v6874 = vpop.f32.mrf.mxu0
      %v6875 = vadd.f32 %v6382, %v6874
      %6876 = vdwg.mxu0
      %v6877 = vsel %vm1339, %v6780, %v6500
      %v6878 = vsel %vm1339, %v6782, %v6502
      %v6879 = vsel %vm1339, %v6784, %v6504
      %v6880 = vsel %vm1339, %v6786, %v6506
      %v6881 = vsel %vm6285, %v6877, %v6772
      %v6882 = vsel %vm6285, %v6878, %v6774
      %v6883 = vsel %vm6285, %v6879, %v6776
      %v6884 = vsel %vm6285, %v6880, %v6778
      %v6885 = vsel %vm1348, %v6881, 0
      %v6887 = vsel %vm1348, %v6882, 0
      %v6889 = vsel %vm1348, %v6883, 0
      %v6891 = vsel %vm1348, %v6884, 0
      %6893 = vmatpush.bf16.msra.mxu0 0
      %6894 = vmatpush.bf16.msra.mxu0 0
      %6895 = vmatpush.bf16.msra.mxu0 0
      %6896 = vmatpush.bf16.msra.mxu0 0
      %6897 = vmatpush.bf16.msra.mxu0 %v6591
      %6898 = vmatpush.bf16.msra.mxu0 %v6590
      %6899 = vmatpush.bf16.msra.mxu0 %v6589
      %6900 = vmatpush.bf16.msra.mxu0 %v6588
      %6901 = vmatmul.bf16.gmra.mxu0 %v6885
      %v6902 = vpop.f32.mrf.mxu0
      %v6903 = vadd.f32 %v6382, %v6902
      %v6904 = vpop.f32.mrf.mxu0
      %v6905 = vadd.f32 %v6382, %v6904
      %6906 = vmatmul.bf16.gmra.mxu0 %v6887
      %v6907 = vpop.f32.mrf.mxu0
      %v6908 = vadd.f32 %v6382, %v6907
      %v6909 = vpop.f32.mrf.mxu0
      %v6910 = vadd.f32 %v6382, %v6909
      %6911 = vmatmul.bf16.gmra.mxu0 %v6889
      %v6912 = vpop.f32.mrf.mxu0
      %v6913 = vadd.f32 %v6382, %v6912
      %v6914 = vpop.f32.mrf.mxu0
      %v6915 = vadd.f32 %v6382, %v6914
      %6916 = vmatmul.bf16.gmra.mxu0 %v6891
      %v6917 = vpop.f32.mrf.mxu0
      %v6918 = vadd.f32 %v6382, %v6917
      %v6919 = vpop.f32.mrf.mxu0
      %v6920 = vadd.f32 %v6382, %v6919
      %6921 = vdwg.mxu0
      %v6922 = vsel %vm6633, %v6752, 0.0
      %v6923 = vsel %vm6633, %v6754, 0.0
      %v6924 = vadd.f32 %v6922, %v6923
      %v6925 = vsel %vm6633, %v6757, 0.0
      %v6926 = vadd.f32 %v6924, %v6925
      %v6927 = vsel %vm6633, %v6759, 0.0
      %v6928 = vadd.f32 %v6926, %v6927
      %v6929 = vsel %vm6633, %v6762, 0.0
      %v6930 = vadd.f32 %v6928, %v6929
      %v6931 = vsel %vm6633, %v6764, 0.0
      %v6932 = vadd.f32 %v6930, %v6931
      %v6933 = vsel %vm6633, %v6767, 0.0
      %v6934 = vadd.f32 %v6932, %v6933
      %v6935 = vsel %vm6633, %v6769, 0.0
      %v6936 = vadd.f32 %v6934, %v6935
      %v6937 = vrot.slane %v6936, 4
      %v6938 = vadd.f32 %v6936, %v6937
      %v6939 = vrot.slane %v6938, 2
      %v6940 = vadd.f32 %v6938, %v6939
      %v6941 = vrot.slane %v6940, 1
      %v6942 = vadd.f32 %v6940, %v6941
      %v6943 = vsel %vm6633, %v6942, 0.0
      %6944 = vadd.xlane.f32.xlu0 %v6943
      %v6945 = vpop.xlane.xlu0 %6944
      %v6946 = vadd.f32 %v6733, %v6945
      %v6947 = vsel %vm6633, %v6805, 0.0
      %v6948 = vsel %vm6633, %v6807, 0.0
      %v6949 = vadd.f32 %v6947, %v6948
      %v6950 = vsel %vm6633, %v6810, 0.0
      %v6951 = vadd.f32 %v6949, %v6950
      %v6952 = vsel %vm6633, %v6812, 0.0
      %v6953 = vadd.f32 %v6951, %v6952
      %v6954 = vsel %vm6633, %v6815, 0.0
      %v6955 = vadd.f32 %v6953, %v6954
      %v6956 = vsel %vm6633, %v6817, 0.0
      %v6957 = vadd.f32 %v6955, %v6956
      %v6958 = vsel %vm6633, %v6820, 0.0
      %v6959 = vadd.f32 %v6957, %v6958
      %v6960 = vsel %vm6633, %v6822, 0.0
      %v6961 = vadd.f32 %v6959, %v6960
      %v6962 = vrot.slane %v6961, 4
      %v6963 = vadd.f32 %v6961, %v6962
      %v6964 = vrot.slane %v6963, 2
      %v6965 = vadd.f32 %v6963, %v6964
      %v6966 = vrot.slane %v6965, 1
      %v6967 = vadd.f32 %v6965, %v6966
      %v6968 = vsel %vm6633, %v6967, 0.0
      %6969 = vadd.xlane.f32.xlu0 %v6968
      %v6970 = vpop.xlane.xlu0 %6969
      %v6971 = vadd.f32 %v6946, %v6970
      %v6972 = vsel %vm6633, %v6858, 0.0
      %v6973 = vsel %vm6633, %v6860, 0.0
      %v6974 = vadd.f32 %v6972, %v6973
      %v6975 = vsel %vm6633, %v6863, 0.0
      %v6976 = vadd.f32 %v6974, %v6975
      %v6977 = vsel %vm6633, %v6865, 0.0
      %v6978 = vadd.f32 %v6976, %v6977
      %v6979 = vsel %vm6633, %v6868, 0.0
      %v6980 = vadd.f32 %v6978, %v6979
      %v6981 = vsel %vm6633, %v6870, 0.0
      %v6982 = vadd.f32 %v6980, %v6981
      %v6983 = vsel %vm6633, %v6873, 0.0
      %v6984 = vadd.f32 %v6982, %v6983
      %v6985 = vsel %vm6633, %v6875, 0.0
      %v6986 = vadd.f32 %v6984, %v6985
      %v6987 = vrot.slane %v6986, 4
      %v6988 = vadd.f32 %v6986, %v6987
      %v6989 = vrot.slane %v6988, 2
      %v6990 = vadd.f32 %v6988, %v6989
      %v6991 = vrot.slane %v6990, 1
      %v6992 = vadd.f32 %v6990, %v6991
      %v6993 = vsel %vm6633, %v6992, 0.0
      %6994 = vadd.xlane.f32.xlu0 %v6993
      %v6995 = vpop.xlane.xlu0 %6994
      %v6996 = vadd.f32 %v6971, %v6995
      %v6997 = vsel %vm6633, %v6903, 0.0
      %v6998 = vsel %vm6633, %v6905, 0.0
      %v6999 = vadd.f32 %v6997, %v6998
      %v7000 = vsel %vm6633, %v6908, 0.0
      %v7001 = vadd.f32 %v6999, %v7000
      %v7002 = vsel %vm6633, %v6910, 0.0
      %v7003 = vadd.f32 %v7001, %v7002
      %v7004 = vsel %vm6633, %v6913, 0.0
      %v7005 = vadd.f32 %v7003, %v7004
      %v7006 = vsel %vm6633, %v6915, 0.0
      %v7007 = vadd.f32 %v7005, %v7006
      %v7008 = vsel %vm6633, %v6918, 0.0
      %v7009 = vadd.f32 %v7007, %v7008
      %v7010 = vsel %vm6633, %v6920, 0.0
      %v7011 = vadd.f32 %v7009, %v7010
      %v7012 = vrot.slane %v7011, 4
      %v7013 = vadd.f32 %v7011, %v7012
      %v7014 = vrot.slane %v7013, 2
      %v7015 = vadd.f32 %v7013, %v7014
      %v7016 = vrot.slane %v7015, 1
      %v7017 = vadd.f32 %v7015, %v7016
      %v7018 = vsel %vm6633, %v7017, 0.0
      %7019 = vadd.xlane.f32.xlu0 %v7018
      %v7020 = vpop.xlane.xlu0 %7019
      %v7021 = vadd.f32 %v6996, %v7020
      %v7022 = vsel %vm5744, %v6825, 0
      %v7024 = vsel %vm5744, %v6827, 0
      %v7026 = vsel %vm5744, %v6829, 0
      %v7028 = vsel %vm5744, %v6831, 0
      %7030 = vmatpush.bf16.msra.mxu0 0
      %7031 = vmatpush.bf16.msra.mxu0 0
      %7032 = vmatpush.bf16.msra.mxu0 0
      %7033 = vmatpush.bf16.msra.mxu0 0
      %7034 = vmatpush.bf16.msra.mxu0 0
      %7035 = vmatpush.bf16.msra.mxu0 0
      %7036 = vmatpush.bf16.msra.mxu0 0
      %7037 = vmatpush.bf16.msra.mxu0 %v6407
      %7038 = vmatmul.bf16.gmra.mxu0 %v7022
      %v7039 = vpop.f32.mrf.mxu0
      %v7040 = vadd.f32 %v6382, %v7039
      %v7041 = vpop.f32.mrf.mxu0
      %v7042 = vadd.f32 %v6382, %v7041
      %7043 = vmatmul.bf16.gmra.mxu0 %v7024
      %v7044 = vpop.f32.mrf.mxu0
      %v7045 = vadd.f32 %v6382, %v7044
      %v7046 = vpop.f32.mrf.mxu0
      %v7047 = vadd.f32 %v6382, %v7046
      %7048 = vmatmul.bf16.gmra.mxu0 %v7026
      %v7049 = vpop.f32.mrf.mxu0
      %v7050 = vadd.f32 %v6382, %v7049
      %v7051 = vpop.f32.mrf.mxu0
      %v7052 = vadd.f32 %v6382, %v7051
      %7053 = vmatmul.bf16.gmra.mxu0 %v7028
      %v7054 = vpop.f32.mrf.mxu0
      %v7055 = vadd.f32 %v6382, %v7054
      %v7056 = vpop.f32.mrf.mxu0
      %v7057 = vadd.f32 %v6382, %v7056
      %7058 = vdwg.mxu0
      %v7059 = vsel %vm1339, %v6825, 0
      %v7061 = vsel %vm1339, %v6827, 0
      %v7063 = vsel %vm1339, %v6829, 0
      %v7065 = vsel %vm1339, %v6831, 0
      %7067 = vmatpush.bf16.msra.mxu0 0
      %7068 = vmatpush.bf16.msra.mxu0 0
      %7069 = vmatpush.bf16.msra.mxu0 0
      %7070 = vmatpush.bf16.msra.mxu0 0
      %7071 = vmatpush.bf16.msra.mxu0 0
      %7072 = vmatpush.bf16.msra.mxu0 0
      %7073 = vmatpush.bf16.msra.mxu0 %v6459
      %7074 = vmatpush.bf16.msra.mxu0 %v6458
      %7075 = vmatmul.bf16.gmra.mxu0 %v7059
      %v7076 = vpop.f32.mrf.mxu0
      %v7077 = vadd.f32 %v6382, %v7076
      %v7078 = vpop.f32.mrf.mxu0
      %v7079 = vadd.f32 %v6382, %v7078
      %7080 = vmatmul.bf16.gmra.mxu0 %v7061
      %v7081 = vpop.f32.mrf.mxu0
      %v7082 = vadd.f32 %v6382, %v7081
      %v7083 = vpop.f32.mrf.mxu0
      %v7084 = vadd.f32 %v6382, %v7083
      %7085 = vmatmul.bf16.gmra.mxu0 %v7063
      %v7086 = vpop.f32.mrf.mxu0
      %v7087 = vadd.f32 %v6382, %v7086
      %v7088 = vpop.f32.mrf.mxu0
      %v7089 = vadd.f32 %v6382, %v7088
      %7090 = vmatmul.bf16.gmra.mxu0 %v7065
      %v7091 = vpop.f32.mrf.mxu0
      %v7092 = vadd.f32 %v6382, %v7091
      %v7093 = vpop.f32.mrf.mxu0
      %v7094 = vadd.f32 %v6382, %v7093
      %7095 = vdwg.mxu0
      %v7104 = vunpack.c.l.b16 %v6374
      %v7105 = vunpack.c.l.b16 %v6375
      %v7106 = vunpack.c.l.b16 %v6376
      %v7107 = vunpack.c.l.b16 %v6377
      %v7108 = vunpack.c.l.b16 %v6378
      %v7109 = vunpack.c.l.b16 %v6379
      %v7110 = vunpack.c.l.b16 %v6380
      %v7111 = vunpack.c.l.b16 %v6381
      %v7112 = vpack.c.b16 %v7105, %v7104
      %v7113 = vpack.c.b16 %v7107, %v7106
      %v7114 = vpack.c.b16 %v7109, %v7108
      %v7115 = vpack.c.b16 %v7111, %v7110
      %7116 = vrot.lane.b32.xlu0 %v7112, 16
      %v7117 = vpop.permute.xlu0 %7116
      %7118 = vrot.lane.b32.xlu0 %v7113, 16
      %v7119 = vpop.permute.xlu0 %7118
      %7120 = vrot.lane.b32.xlu0 %v7114, 16
      %v7121 = vpop.permute.xlu0 %7120
      %7122 = vrot.lane.b32.xlu0 %v7115, 16
      %v7123 = vpop.permute.xlu0 %7122
      %v7125 = vsel %vm5744, %v6825, %v7117
      %v7127 = vsel %vm5744, %v6827, %v7119
      %v7129 = vsel %vm5744, %v6829, %v7121
      %v7131 = vsel %vm5744, %v6831, %v7123
      %v7132 = vsel %vm1339, %v7125, 0
      %v7134 = vsel %vm1339, %v7127, 0
      %v7136 = vsel %vm1339, %v7129, 0
      %v7138 = vsel %vm1339, %v7131, 0
      %7140 = vmatpush.bf16.msra.mxu0 0
      %7141 = vmatpush.bf16.msra.mxu0 0
      %7142 = vmatpush.bf16.msra.mxu0 0
      %7143 = vmatpush.bf16.msra.mxu0 0
      %7144 = vmatpush.bf16.msra.mxu0 0
      %7145 = vmatpush.bf16.msra.mxu0 0
      %7146 = vmatpush.bf16.msra.mxu0 %v6524
      %7147 = vmatpush.bf16.msra.mxu0 %v6523
      %7148 = vmatmul.bf16.gmra.mxu0 %v7132
      %v7149 = vpop.f32.mrf.mxu0
      %v7150 = vadd.f32 %v6382, %v7149
      %v7151 = vpop.f32.mrf.mxu0
      %v7152 = vadd.f32 %v6382, %v7151
      %7153 = vmatmul.bf16.gmra.mxu0 %v7134
      %v7154 = vpop.f32.mrf.mxu0
      %v7155 = vadd.f32 %v6382, %v7154
      %v7156 = vpop.f32.mrf.mxu0
      %v7157 = vadd.f32 %v6382, %v7156
      %7158 = vmatmul.bf16.gmra.mxu0 %v7136
      %v7159 = vpop.f32.mrf.mxu0
      %v7160 = vadd.f32 %v6382, %v7159
      %v7161 = vpop.f32.mrf.mxu0
      %v7162 = vadd.f32 %v6382, %v7161
      %7163 = vmatmul.bf16.gmra.mxu0 %v7138
      %v7164 = vpop.f32.mrf.mxu0
      %v7165 = vadd.f32 %v6382, %v7164
      %v7166 = vpop.f32.mrf.mxu0
      %v7167 = vadd.f32 %v6382, %v7166
      %7168 = vdwg.mxu0
      %7169 = vrot.lane.b32.xlu0 %v7112, 32
      %v7170 = vpop.permute.xlu0 %7169
      %7171 = vrot.lane.b32.xlu0 %v7113, 32
      %v7172 = vpop.permute.xlu0 %7171
      %7173 = vrot.lane.b32.xlu0 %v7114, 32
      %v7174 = vpop.permute.xlu0 %7173
      %7175 = vrot.lane.b32.xlu0 %v7115, 32
      %v7176 = vpop.permute.xlu0 %7175
      %v7178 = vsel %vm1339, %v6825, %v7170
      %v7180 = vsel %vm1339, %v6827, %v7172
      %v7182 = vsel %vm1339, %v6829, %v7174
      %v7184 = vsel %vm1339, %v6831, %v7176
      %v7185 = vsel %vm6285, %v7178, %v7170
      %v7186 = vsel %vm6285, %v7180, %v7172
      %v7187 = vsel %vm6285, %v7182, %v7174
      %v7188 = vsel %vm6285, %v7184, %v7176
      %v7189 = vsel %vm1348, %v7185, 0
      %v7191 = vsel %vm1348, %v7186, 0
      %v7193 = vsel %vm1348, %v7187, 0
      %v7195 = vsel %vm1348, %v7188, 0
      %7197 = vmatpush.bf16.msra.mxu0 0
      %7198 = vmatpush.bf16.msra.mxu0 0
      %7199 = vmatpush.bf16.msra.mxu0 0
      %7200 = vmatpush.bf16.msra.mxu0 0
      %7201 = vmatpush.bf16.msra.mxu0 %v6591
      %7202 = vmatpush.bf16.msra.mxu0 %v6590
      %7203 = vmatpush.bf16.msra.mxu0 %v6589
      %7204 = vmatpush.bf16.msra.mxu0 %v6588
      %7205 = vmatmul.bf16.gmra.mxu0 %v7189
      %v7206 = vpop.f32.mrf.mxu0
      %v7207 = vadd.f32 %v6382, %v7206
      %v7208 = vpop.f32.mrf.mxu0
      %v7209 = vadd.f32 %v6382, %v7208
      %7210 = vmatmul.bf16.gmra.mxu0 %v7191
      %v7211 = vpop.f32.mrf.mxu0
      %v7212 = vadd.f32 %v6382, %v7211
      %v7213 = vpop.f32.mrf.mxu0
      %v7214 = vadd.f32 %v6382, %v7213
      %7215 = vmatmul.bf16.gmra.mxu0 %v7193
      %v7216 = vpop.f32.mrf.mxu0
      %v7217 = vadd.f32 %v6382, %v7216
      %v7218 = vpop.f32.mrf.mxu0
      %v7219 = vadd.f32 %v6382, %v7218
      %7220 = vmatmul.bf16.gmra.mxu0 %v7195
      %v7221 = vpop.f32.mrf.mxu0
      %v7222 = vadd.f32 %v6382, %v7221
      %v7223 = vpop.f32.mrf.mxu0
      %v7224 = vadd.f32 %v6382, %v7223
      %7225 = vdwg.mxu0
      %v7226 = vsel %vm6633, %v7040, 0.0
      %v7227 = vsel %vm6633, %v7042, 0.0
      %v7228 = vadd.f32 %v7226, %v7227
      %v7229 = vsel %vm6633, %v7045, 0.0
      %v7230 = vadd.f32 %v7228, %v7229
      %v7231 = vsel %vm6633, %v7047, 0.0
      %v7232 = vadd.f32 %v7230, %v7231
      %v7233 = vsel %vm6633, %v7050, 0.0
      %v7234 = vadd.f32 %v7232, %v7233
      %v7235 = vsel %vm6633, %v7052, 0.0
      %v7236 = vadd.f32 %v7234, %v7235
      %v7237 = vsel %vm6633, %v7055, 0.0
      %v7238 = vadd.f32 %v7236, %v7237
      %v7239 = vsel %vm6633, %v7057, 0.0
      %v7240 = vadd.f32 %v7238, %v7239
      %v7241 = vrot.slane %v7240, 4
      %v7242 = vadd.f32 %v7240, %v7241
      %v7243 = vrot.slane %v7242, 2
      %v7244 = vadd.f32 %v7242, %v7243
      %v7245 = vrot.slane %v7244, 1
      %v7246 = vadd.f32 %v7244, %v7245
      %v7247 = vsel %vm6633, %v7246, 0.0
      %7248 = vadd.xlane.f32.xlu0 %v7247
      %v7249 = vpop.xlane.xlu0 %7248
      %v7250 = vadd.f32 %v7021, %v7249
      %v7251 = vsel %vm6633, %v7077, 0.0
      %v7252 = vsel %vm6633, %v7079, 0.0
      %v7253 = vadd.f32 %v7251, %v7252
      %v7254 = vsel %vm6633, %v7082, 0.0
      %v7255 = vadd.f32 %v7253, %v7254
      %v7256 = vsel %vm6633, %v7084, 0.0
      %v7257 = vadd.f32 %v7255, %v7256
      %v7258 = vsel %vm6633, %v7087, 0.0
      %v7259 = vadd.f32 %v7257, %v7258
      %v7260 = vsel %vm6633, %v7089, 0.0
      %v7261 = vadd.f32 %v7259, %v7260
      %v7262 = vsel %vm6633, %v7092, 0.0
      %v7263 = vadd.f32 %v7261, %v7262
      %v7264 = vsel %vm6633, %v7094, 0.0
      %v7265 = vadd.f32 %v7263, %v7264
      %v7266 = vrot.slane %v7265, 4
      %v7267 = vadd.f32 %v7265, %v7266
      %v7268 = vrot.slane %v7267, 2
      %v7269 = vadd.f32 %v7267, %v7268
      %v7270 = vrot.slane %v7269, 1
      %v7271 = vadd.f32 %v7269, %v7270
      %v7272 = vsel %vm6633, %v7271, 0.0
      %7273 = vadd.xlane.f32.xlu0 %v7272
      %v7274 = vpop.xlane.xlu0 %7273
      %v7275 = vadd.f32 %v7250, %v7274
      %v7276 = vsel %vm6633, %v7150, 0.0
      %v7277 = vsel %vm6633, %v7152, 0.0
      %v7278 = vadd.f32 %v7276, %v7277
      %v7279 = vsel %vm6633, %v7155, 0.0
      %v7280 = vadd.f32 %v7278, %v7279
      %v7281 = vsel %vm6633, %v7157, 0.0
      %v7282 = vadd.f32 %v7280, %v7281
      %v7283 = vsel %vm6633, %v7160, 0.0
      %v7284 = vadd.f32 %v7282, %v7283
      %v7285 = vsel %vm6633, %v7162, 0.0
      %v7286 = vadd.f32 %v7284, %v7285
      %v7287 = vsel %vm6633, %v7165, 0.0
      %v7288 = vadd.f32 %v7286, %v7287
      %v7289 = vsel %vm6633, %v7167, 0.0
      %v7290 = vadd.f32 %v7288, %v7289
      %v7291 = vrot.slane %v7290, 4
      %v7292 = vadd.f32 %v7290, %v7291
      %v7293 = vrot.slane %v7292, 2
      %v7294 = vadd.f32 %v7292, %v7293
      %v7295 = vrot.slane %v7294, 1
      %v7296 = vadd.f32 %v7294, %v7295
      %v7297 = vsel %vm6633, %v7296, 0.0
      %7298 = vadd.xlane.f32.xlu0 %v7297
      %v7299 = vpop.xlane.xlu0 %7298
      %v7300 = vadd.f32 %v7275, %v7299
      %v7301 = vsel %vm6633, %v7207, 0.0
      %v7302 = vsel %vm6633, %v7209, 0.0
      %v7303 = vadd.f32 %v7301, %v7302
      %v7304 = vsel %vm6633, %v7212, 0.0
      %v7305 = vadd.f32 %v7303, %v7304
      %v7306 = vsel %vm6633, %v7214, 0.0
      %v7307 = vadd.f32 %v7305, %v7306
      %v7308 = vsel %vm6633, %v7217, 0.0
      %v7309 = vadd.f32 %v7307, %v7308
      %v7310 = vsel %vm6633, %v7219, 0.0
      %v7311 = vadd.f32 %v7309, %v7310
      %v7312 = vsel %vm6633, %v7222, 0.0
      %v7313 = vadd.f32 %v7311, %v7312
      %v7314 = vsel %vm6633, %v7224, 0.0
      %v7315 = vadd.f32 %v7313, %v7314
      %v7316 = vrot.slane %v7315, 4
      %v7317 = vadd.f32 %v7315, %v7316
      %v7318 = vrot.slane %v7317, 2
      %v7319 = vadd.f32 %v7317, %v7318
      %v7320 = vrot.slane %v7319, 1
      %v7321 = vadd.f32 %v7319, %v7320
      %v7322 = vsel %vm6633, %v7321, 0.0
      %7323 = vadd.xlane.f32.xlu0 %v7322
      %v7324 = vpop.xlane.xlu0 %7323
      %v7325 = vadd.f32 %v7300, %v7324
      %v7326 = vsel %vm5744, %v6772, 0
      %v7328 = vsel %vm5744, %v6774, 0
      %v7330 = vsel %vm5744, %v6776, 0
      %v7332 = vsel %vm5744, %v6778, 0
      %7334 = vmatpush.bf16.msra.mxu0 0
      %7335 = vmatpush.bf16.msra.mxu0 0
      %7336 = vmatpush.bf16.msra.mxu0 0
      %7337 = vmatpush.bf16.msra.mxu0 0
      %7338 = vmatpush.bf16.msra.mxu0 0
      %7339 = vmatpush.bf16.msra.mxu0 0
      %7340 = vmatpush.bf16.msra.mxu0 0
      %7341 = vmatpush.bf16.msra.mxu0 %v6407
      %7342 = vmatmul.bf16.gmra.mxu0 %v7326
      %v7343 = vpop.f32.mrf.mxu0
      %v7344 = vadd.f32 %v6382, %v7343
      %v7345 = vpop.f32.mrf.mxu0
      %v7346 = vadd.f32 %v6382, %v7345
      %7347 = vmatmul.bf16.gmra.mxu0 %v7328
      %v7348 = vpop.f32.mrf.mxu0
      %v7349 = vadd.f32 %v6382, %v7348
      %v7350 = vpop.f32.mrf.mxu0
      %v7351 = vadd.f32 %v6382, %v7350
      %7352 = vmatmul.bf16.gmra.mxu0 %v7330
      %v7353 = vpop.f32.mrf.mxu0
      %v7354 = vadd.f32 %v6382, %v7353
      %v7355 = vpop.f32.mrf.mxu0
      %v7356 = vadd.f32 %v6382, %v7355
      %7357 = vmatmul.bf16.gmra.mxu0 %v7332
      %v7358 = vpop.f32.mrf.mxu0
      %v7359 = vadd.f32 %v6382, %v7358
      %v7360 = vpop.f32.mrf.mxu0
      %v7361 = vadd.f32 %v6382, %v7360
      %7362 = vdwg.mxu0
      %7363 = vrot.lane.b32.xlu0 %v6399, 48
      %v7364 = vpop.permute.xlu0 %7363
      %7365 = vrot.lane.b32.xlu0 %v6400, 48
      %v7366 = vpop.permute.xlu0 %7365
      %7367 = vrot.lane.b32.xlu0 %v6401, 48
      %v7368 = vpop.permute.xlu0 %7367
      %7369 = vrot.lane.b32.xlu0 %v6402, 48
      %v7370 = vpop.permute.xlu0 %7369
      %v7372 = vsel %vm5744, %v6772, %v7364
      %v7374 = vsel %vm5744, %v6774, %v7366
      %v7376 = vsel %vm5744, %v6776, %v7368
      %v7378 = vsel %vm5744, %v6778, %v7370
      %v7379 = vsel %vm1339, %v7372, 0
      %v7381 = vsel %vm1339, %v7374, 0
      %v7383 = vsel %vm1339, %v7376, 0
      %v7385 = vsel %vm1339, %v7378, 0
      %7387 = vmatpush.bf16.msra.mxu0 0
      %7388 = vmatpush.bf16.msra.mxu0 0
      %7389 = vmatpush.bf16.msra.mxu0 0
      %7390 = vmatpush.bf16.msra.mxu0 0
      %7391 = vmatpush.bf16.msra.mxu0 0
      %7392 = vmatpush.bf16.msra.mxu0 0
      %7393 = vmatpush.bf16.msra.mxu0 %v6459
      %7394 = vmatpush.bf16.msra.mxu0 %v6458
      %7395 = vmatmul.bf16.gmra.mxu0 %v7379
      %v7396 = vpop.f32.mrf.mxu0
      %v7397 = vadd.f32 %v6382, %v7396
      %v7398 = vpop.f32.mrf.mxu0
      %v7399 = vadd.f32 %v6382, %v7398
      %7400 = vmatmul.bf16.gmra.mxu0 %v7381
      %v7401 = vpop.f32.mrf.mxu0
      %v7402 = vadd.f32 %v6382, %v7401
      %v7403 = vpop.f32.mrf.mxu0
      %v7404 = vadd.f32 %v6382, %v7403
      %7405 = vmatmul.bf16.gmra.mxu0 %v7383
      %v7406 = vpop.f32.mrf.mxu0
      %v7407 = vadd.f32 %v6382, %v7406
      %v7408 = vpop.f32.mrf.mxu0
      %v7409 = vadd.f32 %v6382, %v7408
      %7410 = vmatmul.bf16.gmra.mxu0 %v7385
      %v7411 = vpop.f32.mrf.mxu0
      %v7412 = vadd.f32 %v6382, %v7411
      %v7413 = vpop.f32.mrf.mxu0
      %v7414 = vadd.f32 %v6382, %v7413
      %7415 = vdwg.mxu0
      %v7417 = vsel %vm5744, %v6772, %v7112
      %v7419 = vsel %vm5744, %v6774, %v7113
      %v7421 = vsel %vm5744, %v6776, %v7114
      %v7423 = vsel %vm5744, %v6778, %v7115
      %v7424 = vsel %vm1339, %v7417, 0
      %v7426 = vsel %vm1339, %v7419, 0
      %v7428 = vsel %vm1339, %v7421, 0
      %v7430 = vsel %vm1339, %v7423, 0
      %7432 = vmatpush.bf16.msra.mxu0 0
      %7433 = vmatpush.bf16.msra.mxu0 0
      %7434 = vmatpush.bf16.msra.mxu0 0
      %7435 = vmatpush.bf16.msra.mxu0 0
      %7436 = vmatpush.bf16.msra.mxu0 0
      %7437 = vmatpush.bf16.msra.mxu0 0
      %7438 = vmatpush.bf16.msra.mxu0 %v6524
      %7439 = vmatpush.bf16.msra.mxu0 %v6523
      %7440 = vmatmul.bf16.gmra.mxu0 %v7424
      %v7441 = vpop.f32.mrf.mxu0
      %v7442 = vadd.f32 %v6382, %v7441
      %v7443 = vpop.f32.mrf.mxu0
      %v7444 = vadd.f32 %v6382, %v7443
      %7445 = vmatmul.bf16.gmra.mxu0 %v7426
      %v7446 = vpop.f32.mrf.mxu0
      %v7447 = vadd.f32 %v6382, %v7446
      %v7448 = vpop.f32.mrf.mxu0
      %v7449 = vadd.f32 %v6382, %v7448
      %7450 = vmatmul.bf16.gmra.mxu0 %v7428
      %v7451 = vpop.f32.mrf.mxu0
      %v7452 = vadd.f32 %v6382, %v7451
      %v7453 = vpop.f32.mrf.mxu0
      %v7454 = vadd.f32 %v6382, %v7453
      %7455 = vmatmul.bf16.gmra.mxu0 %v7430
      %v7456 = vpop.f32.mrf.mxu0
      %v7457 = vadd.f32 %v6382, %v7456
      %v7458 = vpop.f32.mrf.mxu0
      %v7459 = vadd.f32 %v6382, %v7458
      %7460 = vdwg.mxu0
      %7461 = vrot.lane.b32.xlu0 %v7112, 112
      %v7462 = vpop.permute.xlu0 %7461
      %7463 = vrot.lane.b32.xlu0 %v7113, 112
      %v7464 = vpop.permute.xlu0 %7463
      %7465 = vrot.lane.b32.xlu0 %v7114, 112
      %v7466 = vpop.permute.xlu0 %7465
      %7467 = vrot.lane.b32.xlu0 %v7115, 112
      %v7468 = vpop.permute.xlu0 %7467
      %v7469 = vsel %vm1339, %v7372, %v7117
      %v7470 = vsel %vm1339, %v7374, %v7119
      %v7471 = vsel %vm1339, %v7376, %v7121
      %v7472 = vsel %vm1339, %v7378, %v7123
      %v7474 = vsel %vm6285, %v7469, %v7462
      %v7476 = vsel %vm6285, %v7470, %v7464
      %v7478 = vsel %vm6285, %v7471, %v7466
      %v7480 = vsel %vm6285, %v7472, %v7468
      %v7481 = vsel %vm1348, %v7474, 0
      %v7483 = vsel %vm1348, %v7476, 0
      %v7485 = vsel %vm1348, %v7478, 0
      %v7487 = vsel %vm1348, %v7480, 0
      %7489 = vmatpush.bf16.msra.mxu0 0
      %7490 = vmatpush.bf16.msra.mxu0 0
      %7491 = vmatpush.bf16.msra.mxu0 0
      %7492 = vmatpush.bf16.msra.mxu0 0
      %7493 = vmatpush.bf16.msra.mxu0 %v6591
      %7494 = vmatpush.bf16.msra.mxu0 %v6590
      %7495 = vmatpush.bf16.msra.mxu0 %v6589
      %7496 = vmatpush.bf16.msra.mxu0 %v6588
      %7497 = vmatmul.bf16.gmra.mxu0 %v7481
      %v7498 = vpop.f32.mrf.mxu0
      %v7499 = vadd.f32 %v6382, %v7498
      %v7500 = vpop.f32.mrf.mxu0
      %v7501 = vadd.f32 %v6382, %v7500
      %7502 = vmatmul.bf16.gmra.mxu0 %v7483
      %v7503 = vpop.f32.mrf.mxu0
      %v7504 = vadd.f32 %v6382, %v7503
      %v7505 = vpop.f32.mrf.mxu0
      %v7506 = vadd.f32 %v6382, %v7505
      %7507 = vmatmul.bf16.gmra.mxu0 %v7485
      %v7508 = vpop.f32.mrf.mxu0
      %v7509 = vadd.f32 %v6382, %v7508
      %v7510 = vpop.f32.mrf.mxu0
      %v7511 = vadd.f32 %v6382, %v7510
      %7512 = vmatmul.bf16.gmra.mxu0 %v7487
      %v7513 = vpop.f32.mrf.mxu0
      %v7514 = vadd.f32 %v6382, %v7513
      %v7515 = vpop.f32.mrf.mxu0
      %v7516 = vadd.f32 %v6382, %v7515
      %7517 = vdwg.mxu0
      %v7518 = vsel %vm6633, %v7344, 0.0
      %v7519 = vsel %vm6633, %v7346, 0.0
      %v7520 = vadd.f32 %v7518, %v7519
      %v7521 = vsel %vm6633, %v7349, 0.0
      %v7522 = vadd.f32 %v7520, %v7521
      %v7523 = vsel %vm6633, %v7351, 0.0
      %v7524 = vadd.f32 %v7522, %v7523
      %v7525 = vsel %vm6633, %v7354, 0.0
      %v7526 = vadd.f32 %v7524, %v7525
      %v7527 = vsel %vm6633, %v7356, 0.0
      %v7528 = vadd.f32 %v7526, %v7527
      %v7529 = vsel %vm6633, %v7359, 0.0
      %v7530 = vadd.f32 %v7528, %v7529
      %v7531 = vsel %vm6633, %v7361, 0.0
      %v7532 = vadd.f32 %v7530, %v7531
      %v7533 = vrot.slane %v7532, 4
      %v7534 = vadd.f32 %v7532, %v7533
      %v7535 = vrot.slane %v7534, 2
      %v7536 = vadd.f32 %v7534, %v7535
      %v7537 = vrot.slane %v7536, 1
      %v7538 = vadd.f32 %v7536, %v7537
      %v7539 = vsel %vm6633, %v7538, 0.0
      %7540 = vadd.xlane.f32.xlu0 %v7539
      %v7541 = vpop.xlane.xlu0 %7540
      %v7542 = vadd.f32 %v7325, %v7541
      %v7543 = vsel %vm6633, %v7397, 0.0
      %v7544 = vsel %vm6633, %v7399, 0.0
      %v7545 = vadd.f32 %v7543, %v7544
      %v7546 = vsel %vm6633, %v7402, 0.0
      %v7547 = vadd.f32 %v7545, %v7546
      %v7548 = vsel %vm6633, %v7404, 0.0
      %v7549 = vadd.f32 %v7547, %v7548
      %v7550 = vsel %vm6633, %v7407, 0.0
      %v7551 = vadd.f32 %v7549, %v7550
      %v7552 = vsel %vm6633, %v7409, 0.0
      %v7553 = vadd.f32 %v7551, %v7552
      %v7554 = vsel %vm6633, %v7412, 0.0
      %v7555 = vadd.f32 %v7553, %v7554
      %v7556 = vsel %vm6633, %v7414, 0.0
      %v7557 = vadd.f32 %v7555, %v7556
      %v7558 = vrot.slane %v7557, 4
      %v7559 = vadd.f32 %v7557, %v7558
      %v7560 = vrot.slane %v7559, 2
      %v7561 = vadd.f32 %v7559, %v7560
      %v7562 = vrot.slane %v7561, 1
      %v7563 = vadd.f32 %v7561, %v7562
      %v7564 = vsel %vm6633, %v7563, 0.0
      %7565 = vadd.xlane.f32.xlu0 %v7564
      %v7566 = vpop.xlane.xlu0 %7565
      %v7567 = vadd.f32 %v7542, %v7566
      %v7568 = vsel %vm6633, %v7442, 0.0
      %v7569 = vsel %vm6633, %v7444, 0.0
      %v7570 = vadd.f32 %v7568, %v7569
      %v7571 = vsel %vm6633, %v7447, 0.0
      %v7572 = vadd.f32 %v7570, %v7571
      %v7573 = vsel %vm6633, %v7449, 0.0
      %v7574 = vadd.f32 %v7572, %v7573
      %v7575 = vsel %vm6633, %v7452, 0.0
      %v7576 = vadd.f32 %v7574, %v7575
      %v7577 = vsel %vm6633, %v7454, 0.0
      %v7578 = vadd.f32 %v7576, %v7577
      %v7579 = vsel %vm6633, %v7457, 0.0
      %v7580 = vadd.f32 %v7578, %v7579
      %v7581 = vsel %vm6633, %v7459, 0.0
      %v7582 = vadd.f32 %v7580, %v7581
      %v7583 = vrot.slane %v7582, 4
      %v7584 = vadd.f32 %v7582, %v7583
      %v7585 = vrot.slane %v7584, 2
      %v7586 = vadd.f32 %v7584, %v7585
      %v7587 = vrot.slane %v7586, 1
      %v7588 = vadd.f32 %v7586, %v7587
      %v7589 = vsel %vm6633, %v7588, 0.0
      %7590 = vadd.xlane.f32.xlu0 %v7589
      %v7591 = vpop.xlane.xlu0 %7590
      %v7592 = vadd.f32 %v7567, %v7591
      %v7593 = vsel %vm6633, %v7499, 0.0
      %v7594 = vsel %vm6633, %v7501, 0.0
      %v7595 = vadd.f32 %v7593, %v7594
      %v7596 = vsel %vm6633, %v7504, 0.0
      %v7597 = vadd.f32 %v7595, %v7596
      %v7598 = vsel %vm6633, %v7506, 0.0
      %v7599 = vadd.f32 %v7597, %v7598
      %v7600 = vsel %vm6633, %v7509, 0.0
      %v7601 = vadd.f32 %v7599, %v7600
      %v7602 = vsel %vm6633, %v7511, 0.0
      %v7603 = vadd.f32 %v7601, %v7602
      %v7604 = vsel %vm6633, %v7514, 0.0
      %v7605 = vadd.f32 %v7603, %v7604
      %v7606 = vsel %vm6633, %v7516, 0.0
      %v7607 = vadd.f32 %v7605, %v7606
      %v7608 = vrot.slane %v7607, 4
      %v7609 = vadd.f32 %v7607, %v7608
      %v7610 = vrot.slane %v7609, 2
      %v7611 = vadd.f32 %v7609, %v7610
      %v7612 = vrot.slane %v7611, 1
      %v7613 = vadd.f32 %v7611, %v7612
      %v7614 = vsel %vm6633, %v7613, 0.0
      %7615 = vadd.xlane.f32.xlu0 %v7614
      %v7616 = vpop.xlane.xlu0 %7615
      %v7617 = vadd.f32 %v7592, %v7616
      %v7618 = vmul.f32 %v7617, 0.00012207031
      %v7619 = vsub.f32 %v6431, %v7618
      %v7620 = vsub.f32 %v6433, %v7618
      %v7621 = vsub.f32 %v6436, %v7618
      %v7622 = vsub.f32 %v6438, %v7618
      %v7623 = vsub.f32 %v6441, %v7618
      %v7624 = vsub.f32 %v6443, %v7618
      %v7625 = vsub.f32 %v6446, %v7618
      %v7626 = vsub.f32 %v6448, %v7618
      %v7627 = vmul.f32 %v7619, %v7619
      %v7628 = vmul.f32 %v7620, %v7620
      %v7629 = vmul.f32 %v7621, %v7621
      %v7630 = vmul.f32 %v7622, %v7622
      %v7631 = vmul.f32 %v7623, %v7623
      %v7632 = vmul.f32 %v7624, %v7624
      %v7633 = vmul.f32 %v7625, %v7625
      %v7634 = vmul.f32 %v7626, %v7626
      %v7635 = vsel %vm6633, %v7627, 0.0
      %v7636 = vsel %vm6633, %v7628, 0.0
      %v7637 = vadd.f32 %v7635, %v7636
      %v7638 = vsel %vm6633, %v7629, 0.0
      %v7639 = vadd.f32 %v7637, %v7638
      %v7640 = vsel %vm6633, %v7630, 0.0
      %v7641 = vadd.f32 %v7639, %v7640
      %v7642 = vsel %vm6633, %v7631, 0.0
      %v7643 = vadd.f32 %v7641, %v7642
      %v7644 = vsel %vm6633, %v7632, 0.0
      %v7645 = vadd.f32 %v7643, %v7644
      %v7646 = vsel %vm6633, %v7633, 0.0
      %v7647 = vadd.f32 %v7645, %v7646
      %v7648 = vsel %vm6633, %v7634, 0.0
      %v7649 = vadd.f32 %v7647, %v7648
      %v7650 = vrot.slane %v7649, 4
      %v7651 = vadd.f32 %v7649, %v7650
      %v7652 = vrot.slane %v7651, 2
      %v7653 = vadd.f32 %v7651, %v7652
      %v7654 = vrot.slane %v7653, 1
      %v7655 = vadd.f32 %v7653, %v7654
      %v7656 = vsel %vm6633, %v7655, 0.0
      %7657 = vadd.xlane.f32.xlu0 %v7656
      %v7658 = vpop.xlane.xlu0 %7657
      %v7659 = vadd.f32 %v7658, 0.0
      %v7660 = vsub.f32 %v6480, %v7618
      %v7661 = vsub.f32 %v6482, %v7618
      %v7662 = vsub.f32 %v6485, %v7618
      %v7663 = vsub.f32 %v6487, %v7618
      %v7664 = vsub.f32 %v6490, %v7618
      %v7665 = vsub.f32 %v6492, %v7618
      %v7666 = vsub.f32 %v6495, %v7618
      %v7667 = vsub.f32 %v6497, %v7618
      %v7668 = vmul.f32 %v7660, %v7660
      %v7669 = vmul.f32 %v7661, %v7661
      %v7670 = vmul.f32 %v7662, %v7662
      %v7671 = vmul.f32 %v7663, %v7663
      %v7672 = vmul.f32 %v7664, %v7664
      %v7673 = vmul.f32 %v7665, %v7665
      %v7674 = vmul.f32 %v7666, %v7666
      %v7675 = vmul.f32 %v7667, %v7667
      %v7676 = vsel %vm6633, %v7668, 0.0
      %v7677 = vsel %vm6633, %v7669, 0.0
      %v7678 = vadd.f32 %v7676, %v7677
      %v7679 = vsel %vm6633, %v7670, 0.0
      %v7680 = vadd.f32 %v7678, %v7679
      %v7681 = vsel %vm6633, %v7671, 0.0
      %v7682 = vadd.f32 %v7680, %v7681
      %v7683 = vsel %vm6633, %v7672, 0.0
      %v7684 = vadd.f32 %v7682, %v7683
      %v7685 = vsel %vm6633, %v7673, 0.0
      %v7686 = vadd.f32 %v7684, %v7685
      %v7687 = vsel %vm6633, %v7674, 0.0
      %v7688 = vadd.f32 %v7686, %v7687
      %v7689 = vsel %vm6633, %v7675, 0.0
      %v7690 = vadd.f32 %v7688, %v7689
      %v7691 = vrot.slane %v7690, 4
      %v7692 = vadd.f32 %v7690, %v7691
      %v7693 = vrot.slane %v7692, 2
      %v7694 = vadd.f32 %v7692, %v7693
      %v7695 = vrot.slane %v7694, 1
      %v7696 = vadd.f32 %v7694, %v7695
      %v7697 = vsel %vm6633, %v7696, 0.0
      %7698 = vadd.xlane.f32.xlu0 %v7697
      %v7699 = vpop.xlane.xlu0 %7698
      %v7700 = vadd.f32 %v7659, %v7699
      %v7701 = vsub.f32 %v6545, %v7618
      %v7702 = vsub.f32 %v6547, %v7618
      %v7703 = vsub.f32 %v6550, %v7618
      %v7704 = vsub.f32 %v6552, %v7618
      %v7705 = vsub.f32 %v6555, %v7618
      %v7706 = vsub.f32 %v6557, %v7618
      %v7707 = vsub.f32 %v6560, %v7618
      %v7708 = vsub.f32 %v6562, %v7618
      %v7709 = vmul.f32 %v7701, %v7701
      %v7710 = vmul.f32 %v7702, %v7702
      %v7711 = vmul.f32 %v7703, %v7703
      %v7712 = vmul.f32 %v7704, %v7704
      %v7713 = vmul.f32 %v7705, %v7705
      %v7714 = vmul.f32 %v7706, %v7706
      %v7715 = vmul.f32 %v7707, %v7707
      %v7716 = vmul.f32 %v7708, %v7708
      %v7717 = vsel %vm6633, %v7709, 0.0
      %v7718 = vsel %vm6633, %v7710, 0.0
      %v7719 = vadd.f32 %v7717, %v7718
      %v7720 = vsel %vm6633, %v7711, 0.0
      %v7721 = vadd.f32 %v7719, %v7720
      %v7722 = vsel %vm6633, %v7712, 0.0
      %v7723 = vadd.f32 %v7721, %v7722
      %v7724 = vsel %vm6633, %v7713, 0.0
      %v7725 = vadd.f32 %v7723, %v7724
      %v7726 = vsel %vm6633, %v7714, 0.0
      %v7727 = vadd.f32 %v7725, %v7726
      %v7728 = vsel %vm6633, %v7715, 0.0
      %v7729 = vadd.f32 %v7727, %v7728
      %v7730 = vsel %vm6633, %v7716, 0.0
      %v7731 = vadd.f32 %v7729, %v7730
      %v7732 = vrot.slane %v7731, 4
      %v7733 = vadd.f32 %v7731, %v7732
      %v7734 = vrot.slane %v7733, 2
      %v7735 = vadd.f32 %v7733, %v7734
      %v7736 = vrot.slane %v7735, 1
      %v7737 = vadd.f32 %v7735, %v7736
      %v7738 = vsel %vm6633, %v7737, 0.0
      %7739 = vadd.xlane.f32.xlu0 %v7738
      %v7740 = vpop.xlane.xlu0 %7739
      %v7741 = vadd.f32 %v7700, %v7740
      %v7742 = vsub.f32 %v6614, %v7618
      %v7743 = vsub.f32 %v6616, %v7618
      %v7744 = vsub.f32 %v6619, %v7618
      %v7745 = vsub.f32 %v6621, %v7618
      %v7746 = vsub.f32 %v6624, %v7618
      %v7747 = vsub.f32 %v6626, %v7618
      %v7748 = vsub.f32 %v6629, %v7618
      %v7749 = vsub.f32 %v6631, %v7618
      %v7750 = vmul.f32 %v7742, %v7742
      %v7751 = vmul.f32 %v7743, %v7743
      %v7752 = vmul.f32 %v7744, %v7744
      %v7753 = vmul.f32 %v7745, %v7745
      %v7754 = vmul.f32 %v7746, %v7746
      %v7755 = vmul.f32 %v7747, %v7747
      %v7756 = vmul.f32 %v7748, %v7748
      %v7757 = vmul.f32 %v7749, %v7749
      %v7758 = vsel %vm6633, %v7750, 0.0
      %v7759 = vsel %vm6633, %v7751, 0.0
      %v7760 = vadd.f32 %v7758, %v7759
      %v7761 = vsel %vm6633, %v7752, 0.0
      %v7762 = vadd.f32 %v7760, %v7761
      %v7763 = vsel %vm6633, %v7753, 0.0
      %v7764 = vadd.f32 %v7762, %v7763
      %v7765 = vsel %vm6633, %v7754, 0.0
      %v7766 = vadd.f32 %v7764, %v7765
      %v7767 = vsel %vm6633, %v7755, 0.0
      %v7768 = vadd.f32 %v7766, %v7767
      %v7769 = vsel %vm6633, %v7756, 0.0
      %v7770 = vadd.f32 %v7768, %v7769
      %v7771 = vsel %vm6633, %v7757, 0.0
      %v7772 = vadd.f32 %v7770, %v7771
      %v7773 = vrot.slane %v7772, 4
      %v7774 = vadd.f32 %v7772, %v7773
      %v7775 = vrot.slane %v7774, 2
      %v7776 = vadd.f32 %v7774, %v7775
      %v7777 = vrot.slane %v7776, 1
      %v7778 = vadd.f32 %v7776, %v7777
      %v7779 = vsel %vm6633, %v7778, 0.0
      %7780 = vadd.xlane.f32.xlu0 %v7779
      %v7781 = vpop.xlane.xlu0 %7780
      %v7782 = vadd.f32 %v7741, %v7781
      %v7783 = vsub.f32 %v6752, %v7618
      %v7784 = vsub.f32 %v6754, %v7618
      %v7785 = vsub.f32 %v6757, %v7618
      %v7786 = vsub.f32 %v6759, %v7618
      %v7787 = vsub.f32 %v6762, %v7618
      %v7788 = vsub.f32 %v6764, %v7618
      %v7789 = vsub.f32 %v6767, %v7618
      %v7790 = vsub.f32 %v6769, %v7618
      %v7791 = vmul.f32 %v7783, %v7783
      %v7792 = vmul.f32 %v7784, %v7784
      %v7793 = vmul.f32 %v7785, %v7785
      %v7794 = vmul.f32 %v7786, %v7786
      %v7795 = vmul.f32 %v7787, %v7787
      %v7796 = vmul.f32 %v7788, %v7788
      %v7797 = vmul.f32 %v7789, %v7789
      %v7798 = vmul.f32 %v7790, %v7790
      %v7799 = vsel %vm6633, %v7791, 0.0
      %v7800 = vsel %vm6633, %v7792, 0.0
      %v7801 = vadd.f32 %v7799, %v7800
      %v7802 = vsel %vm6633, %v7793, 0.0
      %v7803 = vadd.f32 %v7801, %v7802
      %v7804 = vsel %vm6633, %v7794, 0.0
      %v7805 = vadd.f32 %v7803, %v7804
      %v7806 = vsel %vm6633, %v7795, 0.0
      %v7807 = vadd.f32 %v7805, %v7806
      %v7808 = vsel %vm6633, %v7796, 0.0
      %v7809 = vadd.f32 %v7807, %v7808
      %v7810 = vsel %vm6633, %v7797, 0.0
      %v7811 = vadd.f32 %v7809, %v7810
      %v7812 = vsel %vm6633, %v7798, 0.0
      %v7813 = vadd.f32 %v7811, %v7812
      %v7814 = vrot.slane %v7813, 4
      %v7815 = vadd.f32 %v7813, %v7814
      %v7816 = vrot.slane %v7815, 2
      %v7817 = vadd.f32 %v7815, %v7816
      %v7818 = vrot.slane %v7817, 1
      %v7819 = vadd.f32 %v7817, %v7818
      %v7820 = vsel %vm6633, %v7819, 0.0
      %7821 = vadd.xlane.f32.xlu0 %v7820
      %v7822 = vpop.xlane.xlu0 %7821
      %v7823 = vadd.f32 %v7782, %v7822
      %v7824 = vsub.f32 %v6805, %v7618
      %v7825 = vsub.f32 %v6807, %v7618
      %v7826 = vsub.f32 %v6810, %v7618
      %v7827 = vsub.f32 %v6812, %v7618
      %v7828 = vsub.f32 %v6815, %v7618
      %v7829 = vsub.f32 %v6817, %v7618
      %v7830 = vsub.f32 %v6820, %v7618
      %v7831 = vsub.f32 %v6822, %v7618
      %v7832 = vmul.f32 %v7824, %v7824
      %v7833 = vmul.f32 %v7825, %v7825
      %v7834 = vmul.f32 %v7826, %v7826
      %v7835 = vmul.f32 %v7827, %v7827
      %v7836 = vmul.f32 %v7828, %v7828
      %v7837 = vmul.f32 %v7829, %v7829
      %v7838 = vmul.f32 %v7830, %v7830
      %v7839 = vmul.f32 %v7831, %v7831
      %v7840 = vsel %vm6633, %v7832, 0.0
      %v7841 = vsel %vm6633, %v7833, 0.0
      %v7842 = vadd.f32 %v7840, %v7841
      %v7843 = vsel %vm6633, %v7834, 0.0
      %v7844 = vadd.f32 %v7842, %v7843
      %v7845 = vsel %vm6633, %v7835, 0.0
      %v7846 = vadd.f32 %v7844, %v7845
      %v7847 = vsel %vm6633, %v7836, 0.0
      %v7848 = vadd.f32 %v7846, %v7847
      %v7849 = vsel %vm6633, %v7837, 0.0
      %v7850 = vadd.f32 %v7848, %v7849
      %v7851 = vsel %vm6633, %v7838, 0.0
      %v7852 = vadd.f32 %v7850, %v7851
      %v7853 = vsel %vm6633, %v7839, 0.0
      %v7854 = vadd.f32 %v7852, %v7853
      %v7855 = vrot.slane %v7854, 4
      %v7856 = vadd.f32 %v7854, %v7855
      %v7857 = vrot.slane %v7856, 2
      %v7858 = vadd.f32 %v7856, %v7857
      %v7859 = vrot.slane %v7858, 1
      %v7860 = vadd.f32 %v7858, %v7859
      %v7861 = vsel %vm6633, %v7860, 0.0
      %7862 = vadd.xlane.f32.xlu0 %v7861
      %v7863 = vpop.xlane.xlu0 %7862
      %v7864 = vadd.f32 %v7823, %v7863
      %v7865 = vsub.f32 %v6858, %v7618
      %v7866 = vsub.f32 %v6860, %v7618
      %v7867 = vsub.f32 %v6863, %v7618
      %v7868 = vsub.f32 %v6865, %v7618
      %v7869 = vsub.f32 %v6868, %v7618
      %v7870 = vsub.f32 %v6870, %v7618
      %v7871 = vsub.f32 %v6873, %v7618
      %v7872 = vsub.f32 %v6875, %v7618
      %v7873 = vmul.f32 %v7865, %v7865
      %v7874 = vmul.f32 %v7866, %v7866
      %v7875 = vmul.f32 %v7867, %v7867
      %v7876 = vmul.f32 %v7868, %v7868
      %v7877 = vmul.f32 %v7869, %v7869
      %v7878 = vmul.f32 %v7870, %v7870
      %v7879 = vmul.f32 %v7871, %v7871
      %v7880 = vmul.f32 %v7872, %v7872
      %v7881 = vsel %vm6633, %v7873, 0.0
      %v7882 = vsel %vm6633, %v7874, 0.0
      %v7883 = vadd.f32 %v7881, %v7882
      %v7884 = vsel %vm6633, %v7875, 0.0
      %v7885 = vadd.f32 %v7883, %v7884
      %v7886 = vsel %vm6633, %v7876, 0.0
      %v7887 = vadd.f32 %v7885, %v7886
      %v7888 = vsel %vm6633, %v7877, 0.0
      %v7889 = vadd.f32 %v7887, %v7888
      %v7890 = vsel %vm6633, %v7878, 0.0
      %v7891 = vadd.f32 %v7889, %v7890
      %v7892 = vsel %vm6633, %v7879, 0.0
      %v7893 = vadd.f32 %v7891, %v7892
      %v7894 = vsel %vm6633, %v7880, 0.0
      %v7895 = vadd.f32 %v7893, %v7894
      %v7896 = vrot.slane %v7895, 4
      %v7897 = vadd.f32 %v7895, %v7896
      %v7898 = vrot.slane %v7897, 2
      %v7899 = vadd.f32 %v7897, %v7898
      %v7900 = vrot.slane %v7899, 1
      %v7901 = vadd.f32 %v7899, %v7900
      %v7902 = vsel %vm6633, %v7901, 0.0
      %7903 = vadd.xlane.f32.xlu0 %v7902
      %v7904 = vpop.xlane.xlu0 %7903
      %v7905 = vadd.f32 %v7864, %v7904
      %v7906 = vsub.f32 %v6903, %v7618
      %v7907 = vsub.f32 %v6905, %v7618
      %v7908 = vsub.f32 %v6908, %v7618
      %v7909 = vsub.f32 %v6910, %v7618
      %v7910 = vsub.f32 %v6913, %v7618
      %v7911 = vsub.f32 %v6915, %v7618
      %v7912 = vsub.f32 %v6918, %v7618
      %v7913 = vsub.f32 %v6920, %v7618
      %v7914 = vmul.f32 %v7906, %v7906
      %v7915 = vmul.f32 %v7907, %v7907
      %v7916 = vmul.f32 %v7908, %v7908
      %v7917 = vmul.f32 %v7909, %v7909
      %v7918 = vmul.f32 %v7910, %v7910
      %v7919 = vmul.f32 %v7911, %v7911
      %v7920 = vmul.f32 %v7912, %v7912
      %v7921 = vmul.f32 %v7913, %v7913
      %v7922 = vsel %vm6633, %v7914, 0.0
      %v7923 = vsel %vm6633, %v7915, 0.0
      %v7924 = vadd.f32 %v7922, %v7923
      %v7925 = vsel %vm6633, %v7916, 0.0
      %v7926 = vadd.f32 %v7924, %v7925
      %v7927 = vsel %vm6633, %v7917, 0.0
      %v7928 = vadd.f32 %v7926, %v7927
      %v7929 = vsel %vm6633, %v7918, 0.0
      %v7930 = vadd.f32 %v7928, %v7929
      %v7931 = vsel %vm6633, %v7919, 0.0
      %v7932 = vadd.f32 %v7930, %v7931
      %v7933 = vsel %vm6633, %v7920, 0.0
      %v7934 = vadd.f32 %v7932, %v7933
      %v7935 = vsel %vm6633, %v7921, 0.0
      %v7936 = vadd.f32 %v7934, %v7935
      %v7937 = vrot.slane %v7936, 4
      %v7938 = vadd.f32 %v7936, %v7937
      %v7939 = vrot.slane %v7938, 2
      %v7940 = vadd.f32 %v7938, %v7939
      %v7941 = vrot.slane %v7940, 1
      %v7942 = vadd.f32 %v7940, %v7941
      %v7943 = vsel %vm6633, %v7942, 0.0
      %7944 = vadd.xlane.f32.xlu0 %v7943
      %v7945 = vpop.xlane.xlu0 %7944
      %v7946 = vadd.f32 %v7905, %v7945
      %v7947 = vsub.f32 %v7040, %v7618
      %v7948 = vsub.f32 %v7042, %v7618
      %v7949 = vsub.f32 %v7045, %v7618
      %v7950 = vsub.f32 %v7047, %v7618
      %v7951 = vsub.f32 %v7050, %v7618
      %v7952 = vsub.f32 %v7052, %v7618
      %v7953 = vsub.f32 %v7055, %v7618
      %v7954 = vsub.f32 %v7057, %v7618
      %v7955 = vmul.f32 %v7947, %v7947
      %v7956 = vmul.f32 %v7948, %v7948
      %v7957 = vmul.f32 %v7949, %v7949
      %v7958 = vmul.f32 %v7950, %v7950
      %v7959 = vmul.f32 %v7951, %v7951
      %v7960 = vmul.f32 %v7952, %v7952
      %v7961 = vmul.f32 %v7953, %v7953
      %v7962 = vmul.f32 %v7954, %v7954
      %v7963 = vsel %vm6633, %v7955, 0.0
      %v7964 = vsel %vm6633, %v7956, 0.0
      %v7965 = vadd.f32 %v7963, %v7964
      %v7966 = vsel %vm6633, %v7957, 0.0
      %v7967 = vadd.f32 %v7965, %v7966
      %v7968 = vsel %vm6633, %v7958, 0.0
      %v7969 = vadd.f32 %v7967, %v7968
      %v7970 = vsel %vm6633, %v7959, 0.0
      %v7971 = vadd.f32 %v7969, %v7970
      %v7972 = vsel %vm6633, %v7960, 0.0
      %v7973 = vadd.f32 %v7971, %v7972
      %v7974 = vsel %vm6633, %v7961, 0.0
      %v7975 = vadd.f32 %v7973, %v7974
      %v7976 = vsel %vm6633, %v7962, 0.0
      %v7977 = vadd.f32 %v7975, %v7976
      %v7978 = vrot.slane %v7977, 4
      %v7979 = vadd.f32 %v7977, %v7978
      %v7980 = vrot.slane %v7979, 2
      %v7981 = vadd.f32 %v7979, %v7980
      %v7982 = vrot.slane %v7981, 1
      %v7983 = vadd.f32 %v7981, %v7982
      %v7984 = vsel %vm6633, %v7983, 0.0
      %7985 = vadd.xlane.f32.xlu0 %v7984
      %v7986 = vpop.xlane.xlu0 %7985
      %v7987 = vadd.f32 %v7946, %v7986
      %v7988 = vsub.f32 %v7077, %v7618
      %v7989 = vsub.f32 %v7079, %v7618
      %v7990 = vsub.f32 %v7082, %v7618
      %v7991 = vsub.f32 %v7084, %v7618
      %v7992 = vsub.f32 %v7087, %v7618
      %v7993 = vsub.f32 %v7089, %v7618
      %v7994 = vsub.f32 %v7092, %v7618
      %v7995 = vsub.f32 %v7094, %v7618
      %v7996 = vmul.f32 %v7988, %v7988
      %v7997 = vmul.f32 %v7989, %v7989
      %v7998 = vmul.f32 %v7990, %v7990
      %v7999 = vmul.f32 %v7991, %v7991
      %v8000 = vmul.f32 %v7992, %v7992
      %v8001 = vmul.f32 %v7993, %v7993
      %v8002 = vmul.f32 %v7994, %v7994
      %v8003 = vmul.f32 %v7995, %v7995
      %v8004 = vsel %vm6633, %v7996, 0.0
      %v8005 = vsel %vm6633, %v7997, 0.0
      %v8006 = vadd.f32 %v8004, %v8005
      %v8007 = vsel %vm6633, %v7998, 0.0
      %v8008 = vadd.f32 %v8006, %v8007
      %v8009 = vsel %vm6633, %v7999, 0.0
      %v8010 = vadd.f32 %v8008, %v8009
      %v8011 = vsel %vm6633, %v8000, 0.0
      %v8012 = vadd.f32 %v8010, %v8011
      %v8013 = vsel %vm6633, %v8001, 0.0
      %v8014 = vadd.f32 %v8012, %v8013
      %v8015 = vsel %vm6633, %v8002, 0.0
      %v8016 = vadd.f32 %v8014, %v8015
      %v8017 = vsel %vm6633, %v8003, 0.0
      %v8018 = vadd.f32 %v8016, %v8017
      %v8019 = vrot.slane %v8018, 4
      %v8020 = vadd.f32 %v8018, %v8019
      %v8021 = vrot.slane %v8020, 2
      %v8022 = vadd.f32 %v8020, %v8021
      %v8023 = vrot.slane %v8022, 1
      %v8024 = vadd.f32 %v8022, %v8023
      %v8025 = vsel %vm6633, %v8024, 0.0
      %8026 = vadd.xlane.f32.xlu0 %v8025
      %v8027 = vpop.xlane.xlu0 %8026
      %v8028 = vadd.f32 %v7987, %v8027
      %v8029 = vsub.f32 %v7150, %v7618
      %v8030 = vsub.f32 %v7152, %v7618
      %v8031 = vsub.f32 %v7155, %v7618
      %v8032 = vsub.f32 %v7157, %v7618
      %v8033 = vsub.f32 %v7160, %v7618
      %v8034 = vsub.f32 %v7162, %v7618
      %v8035 = vsub.f32 %v7165, %v7618
      %v8036 = vsub.f32 %v7167, %v7618
      %v8037 = vmul.f32 %v8029, %v8029
      %v8038 = vmul.f32 %v8030, %v8030
      %v8039 = vmul.f32 %v8031, %v8031
      %v8040 = vmul.f32 %v8032, %v8032
      %v8041 = vmul.f32 %v8033, %v8033
      %v8042 = vmul.f32 %v8034, %v8034
      %v8043 = vmul.f32 %v8035, %v8035
      %v8044 = vmul.f32 %v8036, %v8036
      %v8045 = vsel %vm6633, %v8037, 0.0
      %v8046 = vsel %vm6633, %v8038, 0.0
      %v8047 = vadd.f32 %v8045, %v8046
      %v8048 = vsel %vm6633, %v8039, 0.0
      %v8049 = vadd.f32 %v8047, %v8048
      %v8050 = vsel %vm6633, %v8040, 0.0
      %v8051 = vadd.f32 %v8049, %v8050
      %v8052 = vsel %vm6633, %v8041, 0.0
      %v8053 = vadd.f32 %v8051, %v8052
      %v8054 = vsel %vm6633, %v8042, 0.0
      %v8055 = vadd.f32 %v8053, %v8054
      %v8056 = vsel %vm6633, %v8043, 0.0
      %v8057 = vadd.f32 %v8055, %v8056
      %v8058 = vsel %vm6633, %v8044, 0.0
      %v8059 = vadd.f32 %v8057, %v8058
      %v8060 = vrot.slane %v8059, 4
      %v8061 = vadd.f32 %v8059, %v8060
      %v8062 = vrot.slane %v8061, 2
      %v8063 = vadd.f32 %v8061, %v8062
      %v8064 = vrot.slane %v8063, 1
      %v8065 = vadd.f32 %v8063, %v8064
      %v8066 = vsel %vm6633, %v8065, 0.0
      %8067 = vadd.xlane.f32.xlu0 %v8066
      %v8068 = vpop.xlane.xlu0 %8067
      %v8069 = vadd.f32 %v8028, %v8068
      %v8070 = vsub.f32 %v7207, %v7618
      %v8071 = vsub.f32 %v7209, %v7618
      %v8072 = vsub.f32 %v7212, %v7618
      %v8073 = vsub.f32 %v7214, %v7618
      %v8074 = vsub.f32 %v7217, %v7618
      %v8075 = vsub.f32 %v7219, %v7618
      %v8076 = vsub.f32 %v7222, %v7618
      %v8077 = vsub.f32 %v7224, %v7618
      %v8078 = vmul.f32 %v8070, %v8070
      %v8079 = vmul.f32 %v8071, %v8071
      %v8080 = vmul.f32 %v8072, %v8072
      %v8081 = vmul.f32 %v8073, %v8073
      %v8082 = vmul.f32 %v8074, %v8074
      %v8083 = vmul.f32 %v8075, %v8075
      %v8084 = vmul.f32 %v8076, %v8076
      %v8085 = vmul.f32 %v8077, %v8077
      %v8086 = vsel %vm6633, %v8078, 0.0
      %v8087 = vsel %vm6633, %v8079, 0.0
      %v8088 = vadd.f32 %v8086, %v8087
      %v8089 = vsel %vm6633, %v8080, 0.0
      %v8090 = vadd.f32 %v8088, %v8089
      %v8091 = vsel %vm6633, %v8081, 0.0
      %v8092 = vadd.f32 %v8090, %v8091
      %v8093 = vsel %vm6633, %v8082, 0.0
      %v8094 = vadd.f32 %v8092, %v8093
      %v8095 = vsel %vm6633, %v8083, 0.0
      %v8096 = vadd.f32 %v8094, %v8095
      %v8097 = vsel %vm6633, %v8084, 0.0
      %v8098 = vadd.f32 %v8096, %v8097
      %v8099 = vsel %vm6633, %v8085, 0.0
      %v8100 = vadd.f32 %v8098, %v8099
      %v8101 = vrot.slane %v8100, 4
      %v8102 = vadd.f32 %v8100, %v8101
      %v8103 = vrot.slane %v8102, 2
      %v8104 = vadd.f32 %v8102, %v8103
      %v8105 = vrot.slane %v8104, 1
      %v8106 = vadd.f32 %v8104, %v8105
      %v8107 = vsel %vm6633, %v8106, 0.0
      %8108 = vadd.xlane.f32.xlu0 %v8107
      %v8109 = vpop.xlane.xlu0 %8108
      %v8110 = vadd.f32 %v8069, %v8109
      %v8111 = vsub.f32 %v7344, %v7618
      %v8112 = vsub.f32 %v7346, %v7618
      %v8113 = vsub.f32 %v7349, %v7618
      %v8114 = vsub.f32 %v7351, %v7618
      %v8115 = vsub.f32 %v7354, %v7618
      %v8116 = vsub.f32 %v7356, %v7618
      %v8117 = vsub.f32 %v7359, %v7618
      %v8118 = vsub.f32 %v7361, %v7618
      %v8119 = vmul.f32 %v8111, %v8111
      %v8120 = vmul.f32 %v8112, %v8112
      %v8121 = vmul.f32 %v8113, %v8113
      %v8122 = vmul.f32 %v8114, %v8114
      %v8123 = vmul.f32 %v8115, %v8115
      %v8124 = vmul.f32 %v8116, %v8116
      %v8125 = vmul.f32 %v8117, %v8117
      %v8126 = vmul.f32 %v8118, %v8118
      %v8127 = vsel %vm6633, %v8119, 0.0
      %v8128 = vsel %vm6633, %v8120, 0.0
      %v8129 = vadd.f32 %v8127, %v8128
      %v8130 = vsel %vm6633, %v8121, 0.0
      %v8131 = vadd.f32 %v8129, %v8130
      %v8132 = vsel %vm6633, %v8122, 0.0
      %v8133 = vadd.f32 %v8131, %v8132
      %v8134 = vsel %vm6633, %v8123, 0.0
      %v8135 = vadd.f32 %v8133, %v8134
      %v8136 = vsel %vm6633, %v8124, 0.0
      %v8137 = vadd.f32 %v8135, %v8136
      %v8138 = vsel %vm6633, %v8125, 0.0
      %v8139 = vadd.f32 %v8137, %v8138
      %v8140 = vsel %vm6633, %v8126, 0.0
      %v8141 = vadd.f32 %v8139, %v8140
      %v8142 = vrot.slane %v8141, 4
      %v8143 = vadd.f32 %v8141, %v8142
      %v8144 = vrot.slane %v8143, 2
      %v8145 = vadd.f32 %v8143, %v8144
      %v8146 = vrot.slane %v8145, 1
      %v8147 = vadd.f32 %v8145, %v8146
      %v8148 = vsel %vm6633, %v8147, 0.0
      %8149 = vadd.xlane.f32.xlu0 %v8148
      %v8150 = vpop.xlane.xlu0 %8149
      %v8151 = vadd.f32 %v8110, %v8150
      %v8152 = vsub.f32 %v7397, %v7618
      %v8153 = vsub.f32 %v7399, %v7618
      %v8154 = vsub.f32 %v7402, %v7618
      %v8155 = vsub.f32 %v7404, %v7618
      %v8156 = vsub.f32 %v7407, %v7618
      %v8157 = vsub.f32 %v7409, %v7618
      %v8158 = vsub.f32 %v7412, %v7618
      %v8159 = vsub.f32 %v7414, %v7618
      %v8160 = vmul.f32 %v8152, %v8152
      %v8161 = vmul.f32 %v8153, %v8153
      %v8162 = vmul.f32 %v8154, %v8154
      %v8163 = vmul.f32 %v8155, %v8155
      %v8164 = vmul.f32 %v8156, %v8156
      %v8165 = vmul.f32 %v8157, %v8157
      %v8166 = vmul.f32 %v8158, %v8158
      %v8167 = vmul.f32 %v8159, %v8159
      %v8168 = vsel %vm6633, %v8160, 0.0
      %v8169 = vsel %vm6633, %v8161, 0.0
      %v8170 = vadd.f32 %v8168, %v8169
      %v8171 = vsel %vm6633, %v8162, 0.0
      %v8172 = vadd.f32 %v8170, %v8171
      %v8173 = vsel %vm6633, %v8163, 0.0
      %v8174 = vadd.f32 %v8172, %v8173
      %v8175 = vsel %vm6633, %v8164, 0.0
      %v8176 = vadd.f32 %v8174, %v8175
      %v8177 = vsel %vm6633, %v8165, 0.0
      %v8178 = vadd.f32 %v8176, %v8177
      %v8179 = vsel %vm6633, %v8166, 0.0
      %v8180 = vadd.f32 %v8178, %v8179
      %v8181 = vsel %vm6633, %v8167, 0.0
      %v8182 = vadd.f32 %v8180, %v8181
      %v8183 = vrot.slane %v8182, 4
      %v8184 = vadd.f32 %v8182, %v8183
      %v8185 = vrot.slane %v8184, 2
      %v8186 = vadd.f32 %v8184, %v8185
      %v8187 = vrot.slane %v8186, 1
      %v8188 = vadd.f32 %v8186, %v8187
      %v8189 = vsel %vm6633, %v8188, 0.0
      %8190 = vadd.xlane.f32.xlu0 %v8189
      %v8191 = vpop.xlane.xlu0 %8190
      %v8192 = vadd.f32 %v8151, %v8191
      %v8193 = vsub.f32 %v7442, %v7618
      %v8194 = vsub.f32 %v7444, %v7618
      %v8195 = vsub.f32 %v7447, %v7618
      %v8196 = vsub.f32 %v7449, %v7618
      %v8197 = vsub.f32 %v7452, %v7618
      %v8198 = vsub.f32 %v7454, %v7618
      %v8199 = vsub.f32 %v7457, %v7618
      %v8200 = vsub.f32 %v7459, %v7618
      %v8201 = vmul.f32 %v8193, %v8193
      %v8202 = vmul.f32 %v8194, %v8194
      %v8203 = vmul.f32 %v8195, %v8195
      %v8204 = vmul.f32 %v8196, %v8196
      %v8205 = vmul.f32 %v8197, %v8197
      %v8206 = vmul.f32 %v8198, %v8198
      %v8207 = vmul.f32 %v8199, %v8199
      %v8208 = vmul.f32 %v8200, %v8200
      %v8209 = vsel %vm6633, %v8201, 0.0
      %v8210 = vsel %vm6633, %v8202, 0.0
      %v8211 = vadd.f32 %v8209, %v8210
      %v8212 = vsel %vm6633, %v8203, 0.0
      %v8213 = vadd.f32 %v8211, %v8212
      %v8214 = vsel %vm6633, %v8204, 0.0
      %v8215 = vadd.f32 %v8213, %v8214
      %v8216 = vsel %vm6633, %v8205, 0.0
      %v8217 = vadd.f32 %v8215, %v8216
      %v8218 = vsel %vm6633, %v8206, 0.0
      %v8219 = vadd.f32 %v8217, %v8218
      %v8220 = vsel %vm6633, %v8207, 0.0
      %v8221 = vadd.f32 %v8219, %v8220
      %v8222 = vsel %vm6633, %v8208, 0.0
      %v8223 = vadd.f32 %v8221, %v8222
      %v8224 = vrot.slane %v8223, 4
      %v8225 = vadd.f32 %v8223, %v8224
      %v8226 = vrot.slane %v8225, 2
      %v8227 = vadd.f32 %v8225, %v8226
      %v8228 = vrot.slane %v8227, 1
      %v8229 = vadd.f32 %v8227, %v8228
      %v8230 = vsel %vm6633, %v8229, 0.0
      %8231 = vadd.xlane.f32.xlu0 %v8230
      %v8232 = vpop.xlane.xlu0 %8231
      %v8233 = vadd.f32 %v8192, %v8232
      %v8234 = vsub.f32 %v7499, %v7618
      %v8235 = vsub.f32 %v7501, %v7618
      %v8236 = vsub.f32 %v7504, %v7618
      %v8237 = vsub.f32 %v7506, %v7618
      %v8238 = vsub.f32 %v7509, %v7618
      %v8239 = vsub.f32 %v7511, %v7618
      %v8240 = vsub.f32 %v7514, %v7618
      %v8241 = vsub.f32 %v7516, %v7618
      %v8242 = vmul.f32 %v8234, %v8234
      %v8243 = vmul.f32 %v8235, %v8235
      %v8244 = vmul.f32 %v8236, %v8236
      %v8245 = vmul.f32 %v8237, %v8237
      %v8246 = vmul.f32 %v8238, %v8238
      %v8247 = vmul.f32 %v8239, %v8239
      %v8248 = vmul.f32 %v8240, %v8240
      %v8249 = vmul.f32 %v8241, %v8241
      %v8250 = vsel %vm6633, %v8242, 0.0
      %v8251 = vsel %vm6633, %v8243, 0.0
      %v8252 = vadd.f32 %v8250, %v8251
      %v8253 = vsel %vm6633, %v8244, 0.0
      %v8254 = vadd.f32 %v8252, %v8253
      %v8255 = vsel %vm6633, %v8245, 0.0
      %v8256 = vadd.f32 %v8254, %v8255
      %v8257 = vsel %vm6633, %v8246, 0.0
      %v8258 = vadd.f32 %v8256, %v8257
      %v8259 = vsel %vm6633, %v8247, 0.0
      %v8260 = vadd.f32 %v8258, %v8259
      %v8261 = vsel %vm6633, %v8248, 0.0
      %v8262 = vadd.f32 %v8260, %v8261
      %v8263 = vsel %vm6633, %v8249, 0.0
      %v8264 = vadd.f32 %v8262, %v8263
      %v8265 = vrot.slane %v8264, 4
      %v8266 = vadd.f32 %v8264, %v8265
      %v8267 = vrot.slane %v8266, 2
      %v8268 = vadd.f32 %v8266, %v8267
      %v8269 = vrot.slane %v8268, 1
      %v8270 = vadd.f32 %v8268, %v8269
      %v8271 = vsel %vm6633, %v8270, 0.0
      %8272 = vadd.xlane.f32.xlu0 %v8271
      %v8273 = vpop.xlane.xlu0 %8272
      %v8274 = vadd.f32 %v8233, %v8273
      %v8275 = vmul.f32 %v8274, 0.00012207031
      %v8276 = vadd.f32 %v8275, 1e-05
      %v8277 = vrsqrt.pop %v8276
      %v8278 = vmul.f32 %v8277, %v8276
      %v8279 = vmul.f32 %v8278, %v8277
      %v8280 = vmul.f32 0.5, %v8279
      %v8281 = vsub.f32 1.5, %v8280
      %v8282 = vmul.f32 %v8277, %v8281
      %vm8283 = vweird.f32 %v8276
      %vm8284 = vweird.f32 %v8277
      %vm8285 = vmor %vm8283, %vm8284
      %v8286 = vsel %vm8285, %v8277, %v8282
      %v8287 = vmul.f32 %v7619, %v8286
      %v8288 = vmul.f32 %v7620, %v8286
      %v8289 = vmul.f32 %v7621, %v8286
      %v8290 = vmul.f32 %v7622, %v8286
      %v8291 = vmul.f32 %v7623, %v8286
      %v8292 = vmul.f32 %v7624, %v8286
      %v8293 = vmul.f32 %v7625, %v8286
      %v8294 = vmul.f32 %v7626, %v8286
      %v8295 = vperm.slane %v6171, 0
      %v8296 = vmul.f32 %v8287, %v8295
      %v8297 = vmul.f32 %v8288, %v8295
      %v8298 = vmul.f32 %v8289, %v8295
      %v8299 = vmul.f32 %v8290, %v8295
      %v8300 = vmul.f32 %v8291, %v8295
      %v8301 = vmul.f32 %v8292, %v8295
      %v8302 = vmul.f32 %v8293, %v8295
      %v8303 = vmul.f32 %v8294, %v8295
      %v8304 = vperm.slane %v6172, 0
      %v8305 = vadd.f32 %v8296, %v8304
      %v8306 = vadd.f32 %v8297, %v8304
      %v8307 = vadd.f32 %v8298, %v8304
      %v8308 = vadd.f32 %v8299, %v8304
      %v8309 = vadd.f32 %v8300, %v8304
      %v8310 = vadd.f32 %v8301, %v8304
      %v8311 = vadd.f32 %v8302, %v8304
      %v8312 = vadd.f32 %v8303, %v8304
      %v8313 = vmax.f32 %v8305, 0.0
      %v8314 = vmax.f32 %v8306, 0.0
      %v8315 = vmax.f32 %v8307, 0.0
      %v8316 = vmax.f32 %v8308, 0.0
      %v8317 = vmax.f32 %v8309, 0.0
      %v8318 = vmax.f32 %v8310, 0.0
      %v8319 = vmax.f32 %v8311, 0.0
      %v8320 = vmax.f32 %v8312, 0.0
      %v8321 = vmul.f32 %v7660, %v8286
      %v8322 = vmul.f32 %v7661, %v8286
      %v8323 = vmul.f32 %v7662, %v8286
      %v8324 = vmul.f32 %v7663, %v8286
      %v8325 = vmul.f32 %v7664, %v8286
      %v8326 = vmul.f32 %v7665, %v8286
      %v8327 = vmul.f32 %v7666, %v8286
      %v8328 = vmul.f32 %v7667, %v8286
      %v8329 = vmul.f32 %v8321, %v8295
      %v8330 = vmul.f32 %v8322, %v8295
      %v8331 = vmul.f32 %v8323, %v8295
      %v8332 = vmul.f32 %v8324, %v8295
      %v8333 = vmul.f32 %v8325, %v8295
      %v8334 = vmul.f32 %v8326, %v8295
      %v8335 = vmul.f32 %v8327, %v8295
      %v8336 = vmul.f32 %v8328, %v8295
      %v8337 = vadd.f32 %v8329, %v8304
      %v8338 = vadd.f32 %v8330, %v8304
      %v8339 = vadd.f32 %v8331, %v8304
      %v8340 = vadd.f32 %v8332, %v8304
      %v8341 = vadd.f32 %v8333, %v8304
      %v8342 = vadd.f32 %v8334, %v8304
      %v8343 = vadd.f32 %v8335, %v8304
      %v8344 = vadd.f32 %v8336, %v8304
      %v8345 = vmax.f32 %v8337, 0.0
      %v8346 = vmax.f32 %v8338, 0.0
      %v8347 = vmax.f32 %v8339, 0.0
      %v8348 = vmax.f32 %v8340, 0.0
      %v8349 = vmax.f32 %v8341, 0.0
      %v8350 = vmax.f32 %v8342, 0.0
      %v8351 = vmax.f32 %v8343, 0.0
      %v8352 = vmax.f32 %v8344, 0.0
      %v8353 = vmul.f32 %v7701, %v8286
      %v8354 = vmul.f32 %v7702, %v8286
      %v8355 = vmul.f32 %v7703, %v8286
      %v8356 = vmul.f32 %v7704, %v8286
      %v8357 = vmul.f32 %v7705, %v8286
      %v8358 = vmul.f32 %v7706, %v8286
      %v8359 = vmul.f32 %v7707, %v8286
      %v8360 = vmul.f32 %v7708, %v8286
      %v8361 = vmul.f32 %v8353, %v8295
      %v8362 = vmul.f32 %v8354, %v8295
      %v8363 = vmul.f32 %v8355, %v8295
      %v8364 = vmul.f32 %v8356, %v8295
      %v8365 = vmul.f32 %v8357, %v8295
      %v8366 = vmul.f32 %v8358, %v8295
      %v8367 = vmul.f32 %v8359, %v8295
      %v8368 = vmul.f32 %v8360, %v8295
      %v8369 = vadd.f32 %v8361, %v8304
      %v8370 = vadd.f32 %v8362, %v8304
      %v8371 = vadd.f32 %v8363, %v8304
      %v8372 = vadd.f32 %v8364, %v8304
      %v8373 = vadd.f32 %v8365, %v8304
      %v8374 = vadd.f32 %v8366, %v8304
      %v8375 = vadd.f32 %v8367, %v8304
      %v8376 = vadd.f32 %v8368, %v8304
      %v8377 = vmax.f32 %v8369, 0.0
      %v8378 = vmax.f32 %v8370, 0.0
      %v8379 = vmax.f32 %v8371, 0.0
      %v8380 = vmax.f32 %v8372, 0.0
      %v8381 = vmax.f32 %v8373, 0.0
      %v8382 = vmax.f32 %v8374, 0.0
      %v8383 = vmax.f32 %v8375, 0.0
      %v8384 = vmax.f32 %v8376, 0.0
      %v8385 = vmul.f32 %v7742, %v8286
      %v8386 = vmul.f32 %v7743, %v8286
      %v8387 = vmul.f32 %v7744, %v8286
      %v8388 = vmul.f32 %v7745, %v8286
      %v8389 = vmul.f32 %v7746, %v8286
      %v8390 = vmul.f32 %v7747, %v8286
      %v8391 = vmul.f32 %v7748, %v8286
      %v8392 = vmul.f32 %v7749, %v8286
      %v8393 = vmul.f32 %v8385, %v8295
      %v8394 = vmul.f32 %v8386, %v8295
      %v8395 = vmul.f32 %v8387, %v8295
      %v8396 = vmul.f32 %v8388, %v8295
      %v8397 = vmul.f32 %v8389, %v8295
      %v8398 = vmul.f32 %v8390, %v8295
      %v8399 = vmul.f32 %v8391, %v8295
      %v8400 = vmul.f32 %v8392, %v8295
      %v8401 = vadd.f32 %v8393, %v8304
      %v8402 = vadd.f32 %v8394, %v8304
      %v8403 = vadd.f32 %v8395, %v8304
      %v8404 = vadd.f32 %v8396, %v8304
      %v8405 = vadd.f32 %v8397, %v8304
      %v8406 = vadd.f32 %v8398, %v8304
      %v8407 = vadd.f32 %v8399, %v8304
      %v8408 = vadd.f32 %v8400, %v8304
      %v8409 = vmax.f32 %v8401, 0.0
      %v8410 = vmax.f32 %v8402, 0.0
      %v8411 = vmax.f32 %v8403, 0.0
      %v8412 = vmax.f32 %v8404, 0.0
      %v8413 = vmax.f32 %v8405, 0.0
      %v8414 = vmax.f32 %v8406, 0.0
      %v8415 = vmax.f32 %v8407, 0.0
      %v8416 = vmax.f32 %v8408, 0.0
      %v8417 = vmul.f32 %v7783, %v8286
      %v8418 = vmul.f32 %v7784, %v8286
      %v8419 = vmul.f32 %v7785, %v8286
      %v8420 = vmul.f32 %v7786, %v8286
      %v8421 = vmul.f32 %v7787, %v8286
      %v8422 = vmul.f32 %v7788, %v8286
      %v8423 = vmul.f32 %v7789, %v8286
      %v8424 = vmul.f32 %v7790, %v8286
      %v8425 = vmul.f32 %v8417, %v8295
      %v8426 = vmul.f32 %v8418, %v8295
      %v8427 = vmul.f32 %v8419, %v8295
      %v8428 = vmul.f32 %v8420, %v8295
      %v8429 = vmul.f32 %v8421, %v8295
      %v8430 = vmul.f32 %v8422, %v8295
      %v8431 = vmul.f32 %v8423, %v8295
      %v8432 = vmul.f32 %v8424, %v8295
      %v8433 = vadd.f32 %v8425, %v8304
      %v8434 = vadd.f32 %v8426, %v8304
      %v8435 = vadd.f32 %v8427, %v8304
      %v8436 = vadd.f32 %v8428, %v8304
      %v8437 = vadd.f32 %v8429, %v8304
      %v8438 = vadd.f32 %v8430, %v8304
      %v8439 = vadd.f32 %v8431, %v8304
      %v8440 = vadd.f32 %v8432, %v8304
      %v8441 = vmax.f32 %v8433, 0.0
      %v8442 = vmax.f32 %v8434, 0.0
      %v8443 = vmax.f32 %v8435, 0.0
      %v8444 = vmax.f32 %v8436, 0.0
      %v8445 = vmax.f32 %v8437, 0.0
      %v8446 = vmax.f32 %v8438, 0.0
      %v8447 = vmax.f32 %v8439, 0.0
      %v8448 = vmax.f32 %v8440, 0.0
      %v8449 = vmul.f32 %v7824, %v8286
      %v8450 = vmul.f32 %v7825, %v8286
      %v8451 = vmul.f32 %v7826, %v8286
      %v8452 = vmul.f32 %v7827, %v8286
      %v8453 = vmul.f32 %v7828, %v8286
      %v8454 = vmul.f32 %v7829, %v8286
      %v8455 = vmul.f32 %v7830, %v8286
      %v8456 = vmul.f32 %v7831, %v8286
      %v8457 = vmul.f32 %v8449, %v8295
      %v8458 = vmul.f32 %v8450, %v8295
      %v8459 = vmul.f32 %v8451, %v8295
      %v8460 = vmul.f32 %v8452, %v8295
      %v8461 = vmul.f32 %v8453, %v8295
      %v8462 = vmul.f32 %v8454, %v8295
      %v8463 = vmul.f32 %v8455, %v8295
      %v8464 = vmul.f32 %v8456, %v8295
      %v8465 = vadd.f32 %v8457, %v8304
      %v8466 = vadd.f32 %v8458, %v8304
      %v8467 = vadd.f32 %v8459, %v8304
      %v8468 = vadd.f32 %v8460, %v8304
      %v8469 = vadd.f32 %v8461, %v8304
      %v8470 = vadd.f32 %v8462, %v8304
      %v8471 = vadd.f32 %v8463, %v8304
      %v8472 = vadd.f32 %v8464, %v8304
      %v8473 = vmax.f32 %v8465, 0.0
      %v8474 = vmax.f32 %v8466, 0.0
      %v8475 = vmax.f32 %v8467, 0.0
      %v8476 = vmax.f32 %v8468, 0.0
      %v8477 = vmax.f32 %v8469, 0.0
      %v8478 = vmax.f32 %v8470, 0.0
      %v8479 = vmax.f32 %v8471, 0.0
      %v8480 = vmax.f32 %v8472, 0.0
      %v8481 = vmul.f32 %v7865, %v8286
      %v8482 = vmul.f32 %v7866, %v8286
      %v8483 = vmul.f32 %v7867, %v8286
      %v8484 = vmul.f32 %v7868, %v8286
      %v8485 = vmul.f32 %v7869, %v8286
      %v8486 = vmul.f32 %v7870, %v8286
      %v8487 = vmul.f32 %v7871, %v8286
      %v8488 = vmul.f32 %v7872, %v8286
      %v8489 = vmul.f32 %v8481, %v8295
      %v8490 = vmul.f32 %v8482, %v8295
      %v8491 = vmul.f32 %v8483, %v8295
      %v8492 = vmul.f32 %v8484, %v8295
      %v8493 = vmul.f32 %v8485, %v8295
      %v8494 = vmul.f32 %v8486, %v8295
      %v8495 = vmul.f32 %v8487, %v8295
      %v8496 = vmul.f32 %v8488, %v8295
      %v8497 = vadd.f32 %v8489, %v8304
      %v8498 = vadd.f32 %v8490, %v8304
      %v8499 = vadd.f32 %v8491, %v8304
      %v8500 = vadd.f32 %v8492, %v8304
      %v8501 = vadd.f32 %v8493, %v8304
      %v8502 = vadd.f32 %v8494, %v8304
      %v8503 = vadd.f32 %v8495, %v8304
      %v8504 = vadd.f32 %v8496, %v8304
      %v8505 = vmax.f32 %v8497, 0.0
      %v8506 = vmax.f32 %v8498, 0.0
      %v8507 = vmax.f32 %v8499, 0.0
      %v8508 = vmax.f32 %v8500, 0.0
      %v8509 = vmax.f32 %v8501, 0.0
      %v8510 = vmax.f32 %v8502, 0.0
      %v8511 = vmax.f32 %v8503, 0.0
      %v8512 = vmax.f32 %v8504, 0.0
      %v8513 = vmul.f32 %v7906, %v8286
      %v8514 = vmul.f32 %v7907, %v8286
      %v8515 = vmul.f32 %v7908, %v8286
      %v8516 = vmul.f32 %v7909, %v8286
      %v8517 = vmul.f32 %v7910, %v8286
      %v8518 = vmul.f32 %v7911, %v8286
      %v8519 = vmul.f32 %v7912, %v8286
      %v8520 = vmul.f32 %v7913, %v8286
      %v8521 = vmul.f32 %v8513, %v8295
      %v8522 = vmul.f32 %v8514, %v8295
      %v8523 = vmul.f32 %v8515, %v8295
      %v8524 = vmul.f32 %v8516, %v8295
      %v8525 = vmul.f32 %v8517, %v8295
      %v8526 = vmul.f32 %v8518, %v8295
      %v8527 = vmul.f32 %v8519, %v8295
      %v8528 = vmul.f32 %v8520, %v8295
      %v8529 = vadd.f32 %v8521, %v8304
      %v8530 = vadd.f32 %v8522, %v8304
      %v8531 = vadd.f32 %v8523, %v8304
      %v8532 = vadd.f32 %v8524, %v8304
      %v8533 = vadd.f32 %v8525, %v8304
      %v8534 = vadd.f32 %v8526, %v8304
      %v8535 = vadd.f32 %v8527, %v8304
      %v8536 = vadd.f32 %v8528, %v8304
      %v8537 = vmax.f32 %v8529, 0.0
      %v8538 = vmax.f32 %v8530, 0.0
      %v8539 = vmax.f32 %v8531, 0.0
      %v8540 = vmax.f32 %v8532, 0.0
      %v8541 = vmax.f32 %v8533, 0.0
      %v8542 = vmax.f32 %v8534, 0.0
      %v8543 = vmax.f32 %v8535, 0.0
      %v8544 = vmax.f32 %v8536, 0.0
      %v8545 = vmul.f32 %v7947, %v8286
      %v8546 = vmul.f32 %v7948, %v8286
      %v8547 = vmul.f32 %v7949, %v8286
      %v8548 = vmul.f32 %v7950, %v8286
      %v8549 = vmul.f32 %v7951, %v8286
      %v8550 = vmul.f32 %v7952, %v8286
      %v8551 = vmul.f32 %v7953, %v8286
      %v8552 = vmul.f32 %v7954, %v8286
      %v8553 = vmul.f32 %v8545, %v8295
      %v8554 = vmul.f32 %v8546, %v8295
      %v8555 = vmul.f32 %v8547, %v8295
      %v8556 = vmul.f32 %v8548, %v8295
      %v8557 = vmul.f32 %v8549, %v8295
      %v8558 = vmul.f32 %v8550, %v8295
      %v8559 = vmul.f32 %v8551, %v8295
      %v8560 = vmul.f32 %v8552, %v8295
      %v8561 = vadd.f32 %v8553, %v8304
      %v8562 = vadd.f32 %v8554, %v8304
      %v8563 = vadd.f32 %v8555, %v8304
      %v8564 = vadd.f32 %v8556, %v8304
      %v8565 = vadd.f32 %v8557, %v8304
      %v8566 = vadd.f32 %v8558, %v8304
      %v8567 = vadd.f32 %v8559, %v8304
      %v8568 = vadd.f32 %v8560, %v8304
      %v8569 = vmax.f32 %v8561, 0.0
      %v8570 = vmax.f32 %v8562, 0.0
      %v8571 = vmax.f32 %v8563, 0.0
      %v8572 = vmax.f32 %v8564, 0.0
      %v8573 = vmax.f32 %v8565, 0.0
      %v8574 = vmax.f32 %v8566, 0.0
      %v8575 = vmax.f32 %v8567, 0.0
      %v8576 = vmax.f32 %v8568, 0.0
      %v8577 = vmul.f32 %v7988, %v8286
      %v8578 = vmul.f32 %v7989, %v8286
      %v8579 = vmul.f32 %v7990, %v8286
      %v8580 = vmul.f32 %v7991, %v8286
      %v8581 = vmul.f32 %v7992, %v8286
      %v8582 = vmul.f32 %v7993, %v8286
      %v8583 = vmul.f32 %v7994, %v8286
      %v8584 = vmul.f32 %v7995, %v8286
      %v8585 = vmul.f32 %v8577, %v8295
      %v8586 = vmul.f32 %v8578, %v8295
      %v8587 = vmul.f32 %v8579, %v8295
      %v8588 = vmul.f32 %v8580, %v8295
      %v8589 = vmul.f32 %v8581, %v8295
      %v8590 = vmul.f32 %v8582, %v8295
      %v8591 = vmul.f32 %v8583, %v8295
      %v8592 = vmul.f32 %v8584, %v8295
      %v8593 = vadd.f32 %v8585, %v8304
      %v8594 = vadd.f32 %v8586, %v8304
      %v8595 = vadd.f32 %v8587, %v8304
      %v8596 = vadd.f32 %v8588, %v8304
      %v8597 = vadd.f32 %v8589, %v8304
      %v8598 = vadd.f32 %v8590, %v8304
      %v8599 = vadd.f32 %v8591, %v8304
      %v8600 = vadd.f32 %v8592, %v8304
      %v8601 = vmax.f32 %v8593, 0.0
      %v8602 = vmax.f32 %v8594, 0.0
      %v8603 = vmax.f32 %v8595, 0.0
      %v8604 = vmax.f32 %v8596, 0.0
      %v8605 = vmax.f32 %v8597, 0.0
      %v8606 = vmax.f32 %v8598, 0.0
      %v8607 = vmax.f32 %v8599, 0.0
      %v8608 = vmax.f32 %v8600, 0.0
      %v8609 = vmul.f32 %v8029, %v8286
      %v8610 = vmul.f32 %v8030, %v8286
      %v8611 = vmul.f32 %v8031, %v8286
      %v8612 = vmul.f32 %v8032, %v8286
      %v8613 = vmul.f32 %v8033, %v8286
      %v8614 = vmul.f32 %v8034, %v8286
      %v8615 = vmul.f32 %v8035, %v8286
      %v8616 = vmul.f32 %v8036, %v8286
      %v8617 = vmul.f32 %v8609, %v8295
      %v8618 = vmul.f32 %v8610, %v8295
      %v8619 = vmul.f32 %v8611, %v8295
      %v8620 = vmul.f32 %v8612, %v8295
      %v8621 = vmul.f32 %v8613, %v8295
      %v8622 = vmul.f32 %v8614, %v8295
      %v8623 = vmul.f32 %v8615, %v8295
      %v8624 = vmul.f32 %v8616, %v8295
      %v8625 = vadd.f32 %v8617, %v8304
      %v8626 = vadd.f32 %v8618, %v8304
      %v8627 = vadd.f32 %v8619, %v8304
      %v8628 = vadd.f32 %v8620, %v8304
      %v8629 = vadd.f32 %v8621, %v8304
      %v8630 = vadd.f32 %v8622, %v8304
      %v8631 = vadd.f32 %v8623, %v8304
      %v8632 = vadd.f32 %v8624, %v8304
      %v8633 = vmax.f32 %v8625, 0.0
      %v8634 = vmax.f32 %v8626, 0.0
      %v8635 = vmax.f32 %v8627, 0.0
      %v8636 = vmax.f32 %v8628, 0.0
      %v8637 = vmax.f32 %v8629, 0.0
      %v8638 = vmax.f32 %v8630, 0.0
      %v8639 = vmax.f32 %v8631, 0.0
      %v8640 = vmax.f32 %v8632, 0.0
      %v8641 = vmul.f32 %v8070, %v8286
      %v8642 = vmul.f32 %v8071, %v8286
      %v8643 = vmul.f32 %v8072, %v8286
      %v8644 = vmul.f32 %v8073, %v8286
      %v8645 = vmul.f32 %v8074, %v8286
      %v8646 = vmul.f32 %v8075, %v8286
      %v8647 = vmul.f32 %v8076, %v8286
      %v8648 = vmul.f32 %v8077, %v8286
      %v8649 = vmul.f32 %v8641, %v8295
      %v8650 = vmul.f32 %v8642, %v8295
      %v8651 = vmul.f32 %v8643, %v8295
      %v8652 = vmul.f32 %v8644, %v8295
      %v8653 = vmul.f32 %v8645, %v8295
      %v8654 = vmul.f32 %v8646, %v8295
      %v8655 = vmul.f32 %v8647, %v8295
      %v8656 = vmul.f32 %v8648, %v8295
      %v8657 = vadd.f32 %v8649, %v8304
      %v8658 = vadd.f32 %v8650, %v8304
      %v8659 = vadd.f32 %v8651, %v8304
      %v8660 = vadd.f32 %v8652, %v8304
      %v8661 = vadd.f32 %v8653, %v8304
      %v8662 = vadd.f32 %v8654, %v8304
      %v8663 = vadd.f32 %v8655, %v8304
      %v8664 = vadd.f32 %v8656, %v8304
      %v8665 = vmax.f32 %v8657, 0.0
      %v8666 = vmax.f32 %v8658, 0.0
      %v8667 = vmax.f32 %v8659, 0.0
      %v8668 = vmax.f32 %v8660, 0.0
      %v8669 = vmax.f32 %v8661, 0.0
      %v8670 = vmax.f32 %v8662, 0.0
      %v8671 = vmax.f32 %v8663, 0.0
      %v8672 = vmax.f32 %v8664, 0.0
      %v8673 = vmul.f32 %v8111, %v8286
      %v8674 = vmul.f32 %v8112, %v8286
      %v8675 = vmul.f32 %v8113, %v8286
      %v8676 = vmul.f32 %v8114, %v8286
      %v8677 = vmul.f32 %v8115, %v8286
      %v8678 = vmul.f32 %v8116, %v8286
      %v8679 = vmul.f32 %v8117, %v8286
      %v8680 = vmul.f32 %v8118, %v8286
      %v8681 = vmul.f32 %v8673, %v8295
      %v8682 = vmul.f32 %v8674, %v8295
      %v8683 = vmul.f32 %v8675, %v8295
      %v8684 = vmul.f32 %v8676, %v8295
      %v8685 = vmul.f32 %v8677, %v8295
      %v8686 = vmul.f32 %v8678, %v8295
      %v8687 = vmul.f32 %v8679, %v8295
      %v8688 = vmul.f32 %v8680, %v8295
      %v8689 = vadd.f32 %v8681, %v8304
      %v8690 = vadd.f32 %v8682, %v8304
      %v8691 = vadd.f32 %v8683, %v8304
      %v8692 = vadd.f32 %v8684, %v8304
      %v8693 = vadd.f32 %v8685, %v8304
      %v8694 = vadd.f32 %v8686, %v8304
      %v8695 = vadd.f32 %v8687, %v8304
      %v8696 = vadd.f32 %v8688, %v8304
      %v8697 = vmax.f32 %v8689, 0.0
      %v8698 = vmax.f32 %v8690, 0.0
      %v8699 = vmax.f32 %v8691, 0.0
      %v8700 = vmax.f32 %v8692, 0.0
      %v8701 = vmax.f32 %v8693, 0.0
      %v8702 = vmax.f32 %v8694, 0.0
      %v8703 = vmax.f32 %v8695, 0.0
      %v8704 = vmax.f32 %v8696, 0.0
      %v8705 = vmul.f32 %v8152, %v8286
      %v8706 = vmul.f32 %v8153, %v8286
      %v8707 = vmul.f32 %v8154, %v8286
      %v8708 = vmul.f32 %v8155, %v8286
      %v8709 = vmul.f32 %v8156, %v8286
      %v8710 = vmul.f32 %v8157, %v8286
      %v8711 = vmul.f32 %v8158, %v8286
      %v8712 = vmul.f32 %v8159, %v8286
      %v8713 = vmul.f32 %v8705, %v8295
      %v8714 = vmul.f32 %v8706, %v8295
      %v8715 = vmul.f32 %v8707, %v8295
      %v8716 = vmul.f32 %v8708, %v8295
      %v8717 = vmul.f32 %v8709, %v8295
      %v8718 = vmul.f32 %v8710, %v8295
      %v8719 = vmul.f32 %v8711, %v8295
      %v8720 = vmul.f32 %v8712, %v8295
      %v8721 = vadd.f32 %v8713, %v8304
      %v8722 = vadd.f32 %v8714, %v8304
      %v8723 = vadd.f32 %v8715, %v8304
      %v8724 = vadd.f32 %v8716, %v8304
      %v8725 = vadd.f32 %v8717, %v8304
      %v8726 = vadd.f32 %v8718, %v8304
      %v8727 = vadd.f32 %v8719, %v8304
      %v8728 = vadd.f32 %v8720, %v8304
      %v8729 = vmax.f32 %v8721, 0.0
      %v8730 = vmax.f32 %v8722, 0.0
      %v8731 = vmax.f32 %v8723, 0.0
      %v8732 = vmax.f32 %v8724, 0.0
      %v8733 = vmax.f32 %v8725, 0.0
      %v8734 = vmax.f32 %v8726, 0.0
      %v8735 = vmax.f32 %v8727, 0.0
      %v8736 = vmax.f32 %v8728, 0.0
      %v8737 = vmul.f32 %v8193, %v8286
      %v8738 = vmul.f32 %v8194, %v8286
      %v8739 = vmul.f32 %v8195, %v8286
      %v8740 = vmul.f32 %v8196, %v8286
      %v8741 = vmul.f32 %v8197, %v8286
      %v8742 = vmul.f32 %v8198, %v8286
      %v8743 = vmul.f32 %v8199, %v8286
      %v8744 = vmul.f32 %v8200, %v8286
      %v8745 = vmul.f32 %v8737, %v8295
      %v8746 = vmul.f32 %v8738, %v8295
      %v8747 = vmul.f32 %v8739, %v8295
      %v8748 = vmul.f32 %v8740, %v8295
      %v8749 = vmul.f32 %v8741, %v8295
      %v8750 = vmul.f32 %v8742, %v8295
      %v8751 = vmul.f32 %v8743, %v8295
      %v8752 = vmul.f32 %v8744, %v8295
      %v8753 = vadd.f32 %v8745, %v8304
      %v8754 = vadd.f32 %v8746, %v8304
      %v8755 = vadd.f32 %v8747, %v8304
      %v8756 = vadd.f32 %v8748, %v8304
      %v8757 = vadd.f32 %v8749, %v8304
      %v8758 = vadd.f32 %v8750, %v8304
      %v8759 = vadd.f32 %v8751, %v8304
      %v8760 = vadd.f32 %v8752, %v8304
      %v8761 = vmax.f32 %v8753, 0.0
      %v8762 = vmax.f32 %v8754, 0.0
      %v8763 = vmax.f32 %v8755, 0.0
      %v8764 = vmax.f32 %v8756, 0.0
      %v8765 = vmax.f32 %v8757, 0.0
      %v8766 = vmax.f32 %v8758, 0.0
      %v8767 = vmax.f32 %v8759, 0.0
      %v8768 = vmax.f32 %v8760, 0.0
      %v8769 = vmul.f32 %v8234, %v8286
      %v8770 = vmul.f32 %v8235, %v8286
      %v8771 = vmul.f32 %v8236, %v8286
      %v8772 = vmul.f32 %v8237, %v8286
      %v8773 = vmul.f32 %v8238, %v8286
      %v8774 = vmul.f32 %v8239, %v8286
      %v8775 = vmul.f32 %v8240, %v8286
      %v8776 = vmul.f32 %v8241, %v8286
      %v8777 = vmul.f32 %v8769, %v8295
      %v8778 = vmul.f32 %v8770, %v8295
      %v8779 = vmul.f32 %v8771, %v8295
      %v8780 = vmul.f32 %v8772, %v8295
      %v8781 = vmul.f32 %v8773, %v8295
      %v8782 = vmul.f32 %v8774, %v8295
      %v8783 = vmul.f32 %v8775, %v8295
      %v8784 = vmul.f32 %v8776, %v8295
      %v8785 = vadd.f32 %v8777, %v8304
      %v8786 = vadd.f32 %v8778, %v8304
      %v8787 = vadd.f32 %v8779, %v8304
      %v8788 = vadd.f32 %v8780, %v8304
      %v8789 = vadd.f32 %v8781, %v8304
      %v8790 = vadd.f32 %v8782, %v8304
      %v8791 = vadd.f32 %v8783, %v8304
      %v8792 = vadd.f32 %v8784, %v8304
      %v8793 = vmax.f32 %v8785, 0.0
      %v8794 = vmax.f32 %v8786, 0.0
      %v8795 = vmax.f32 %v8787, 0.0
      %v8796 = vmax.f32 %v8788, 0.0
      %v8797 = vmax.f32 %v8789, 0.0
      %v8798 = vmax.f32 %v8790, 0.0
      %v8799 = vmax.f32 %v8791, 0.0
      %v8800 = vmax.f32 %v8792, 0.0
      %v8801 = vpack.c.bf16 %v8313, %v8313
      %v8802 = vpack.c.bf16 %v8314, %v8314
      %v8803 = vpack.c.bf16 %v8315, %v8315
      %v8804 = vpack.c.bf16 %v8316, %v8316
      %v8805 = vpack.c.bf16 %v8317, %v8317
      %v8806 = vpack.c.bf16 %v8318, %v8318
      %v8807 = vpack.c.bf16 %v8319, %v8319
      %v8808 = vpack.c.bf16 %v8320, %v8320
      %v8809 = vpack.c.bf16 %v8345, %v8345
      %v8810 = vpack.c.bf16 %v8346, %v8346
      %v8811 = vpack.c.bf16 %v8347, %v8347
      %v8812 = vpack.c.bf16 %v8348, %v8348
      %v8813 = vpack.c.bf16 %v8349, %v8349
      %v8814 = vpack.c.bf16 %v8350, %v8350
      %v8815 = vpack.c.bf16 %v8351, %v8351
      %v8816 = vpack.c.bf16 %v8352, %v8352
      %v8817 = vpack.c.bf16 %v8441, %v8441
      %v8818 = vpack.c.bf16 %v8442, %v8442
      %v8819 = vpack.c.bf16 %v8443, %v8443
      %v8820 = vpack.c.bf16 %v8444, %v8444
      %v8821 = vpack.c.bf16 %v8445, %v8445
      %v8822 = vpack.c.bf16 %v8446, %v8446
      %v8823 = vpack.c.bf16 %v8447, %v8447
      %v8824 = vpack.c.bf16 %v8448, %v8448
      %v8825 = vpack.c.bf16 %v8473, %v8473
      %v8826 = vpack.c.bf16 %v8474, %v8474
      %v8827 = vpack.c.bf16 %v8475, %v8475
      %v8828 = vpack.c.bf16 %v8476, %v8476
      %v8829 = vpack.c.bf16 %v8477, %v8477
      %v8830 = vpack.c.bf16 %v8478, %v8478
      %v8831 = vpack.c.bf16 %v8479, %v8479
      %v8832 = vpack.c.bf16 %v8480, %v8480
      %v8833 = vpack.c.bf16 %v8377, %v8377
      %v8834 = vpack.c.bf16 %v8378, %v8378
      %v8835 = vpack.c.bf16 %v8379, %v8379
      %v8836 = vpack.c.bf16 %v8380, %v8380
      %v8837 = vpack.c.bf16 %v8381, %v8381
      %v8838 = vpack.c.bf16 %v8382, %v8382
      %v8839 = vpack.c.bf16 %v8383, %v8383
      %v8840 = vpack.c.bf16 %v8384, %v8384
      %v8841 = vpack.c.bf16 %v8409, %v8409
      %v8842 = vpack.c.bf16 %v8410, %v8410
      %v8843 = vpack.c.bf16 %v8411, %v8411
      %v8844 = vpack.c.bf16 %v8412, %v8412
      %v8845 = vpack.c.bf16 %v8413, %v8413
      %v8846 = vpack.c.bf16 %v8414, %v8414
      %v8847 = vpack.c.bf16 %v8415, %v8415
      %v8848 = vpack.c.bf16 %v8416, %v8416
      %v8849 = vpack.c.bf16 %v8505, %v8505
      %v8850 = vpack.c.bf16 %v8506, %v8506
      %v8851 = vpack.c.bf16 %v8507, %v8507
      %v8852 = vpack.c.bf16 %v8508, %v8508
      %v8853 = vpack.c.bf16 %v8509, %v8509
      %v8854 = vpack.c.bf16 %v8510, %v8510
      %v8855 = vpack.c.bf16 %v8511, %v8511
      %v8856 = vpack.c.bf16 %v8512, %v8512
      %v8857 = vpack.c.bf16 %v8537, %v8537
      %v8858 = vpack.c.bf16 %v8538, %v8538
      %v8859 = vpack.c.bf16 %v8539, %v8539
      %v8860 = vpack.c.bf16 %v8540, %v8540
      %v8861 = vpack.c.bf16 %v8541, %v8541
      %v8862 = vpack.c.bf16 %v8542, %v8542
      %v8863 = vpack.c.bf16 %v8543, %v8543
      %v8864 = vpack.c.bf16 %v8544, %v8544
      %v8865 = vpack.c.bf16 %v8569, %v8569
      %v8866 = vpack.c.bf16 %v8570, %v8570
      %v8867 = vpack.c.bf16 %v8571, %v8571
      %v8868 = vpack.c.bf16 %v8572, %v8572
      %v8869 = vpack.c.bf16 %v8573, %v8573
      %v8870 = vpack.c.bf16 %v8574, %v8574
      %v8871 = vpack.c.bf16 %v8575, %v8575
      %v8872 = vpack.c.bf16 %v8576, %v8576
      %v8873 = vpack.c.bf16 %v8601, %v8601
      %v8874 = vpack.c.bf16 %v8602, %v8602
      %v8875 = vpack.c.bf16 %v8603, %v8603
      %v8876 = vpack.c.bf16 %v8604, %v8604
      %v8877 = vpack.c.bf16 %v8605, %v8605
      %v8878 = vpack.c.bf16 %v8606, %v8606
      %v8879 = vpack.c.bf16 %v8607, %v8607
      %v8880 = vpack.c.bf16 %v8608, %v8608
      %v8881 = vpack.c.bf16 %v8697, %v8697
      %v8882 = vpack.c.bf16 %v8698, %v8698
      %v8883 = vpack.c.bf16 %v8699, %v8699
      %v8884 = vpack.c.bf16 %v8700, %v8700
      %v8885 = vpack.c.bf16 %v8701, %v8701
      %v8886 = vpack.c.bf16 %v8702, %v8702
      %v8887 = vpack.c.bf16 %v8703, %v8703
      %v8888 = vpack.c.bf16 %v8704, %v8704
      %v8889 = vpack.c.bf16 %v8729, %v8729
      %v8890 = vpack.c.bf16 %v8730, %v8730
      %v8891 = vpack.c.bf16 %v8731, %v8731
      %v8892 = vpack.c.bf16 %v8732, %v8732
      %v8893 = vpack.c.bf16 %v8733, %v8733
      %v8894 = vpack.c.bf16 %v8734, %v8734
      %v8895 = vpack.c.bf16 %v8735, %v8735
      %v8896 = vpack.c.bf16 %v8736, %v8736
      %v8897 = vpack.c.bf16 %v8633, %v8633
      %v8898 = vpack.c.bf16 %v8634, %v8634
      %v8899 = vpack.c.bf16 %v8635, %v8635
      %v8900 = vpack.c.bf16 %v8636, %v8636
      %v8901 = vpack.c.bf16 %v8637, %v8637
      %v8902 = vpack.c.bf16 %v8638, %v8638
      %v8903 = vpack.c.bf16 %v8639, %v8639
      %v8904 = vpack.c.bf16 %v8640, %v8640
      %v8905 = vpack.c.bf16 %v8665, %v8665
      %v8906 = vpack.c.bf16 %v8666, %v8666
      %v8907 = vpack.c.bf16 %v8667, %v8667
      %v8908 = vpack.c.bf16 %v8668, %v8668
      %v8909 = vpack.c.bf16 %v8669, %v8669
      %v8910 = vpack.c.bf16 %v8670, %v8670
      %v8911 = vpack.c.bf16 %v8671, %v8671
      %v8912 = vpack.c.bf16 %v8672, %v8672
      %v8913 = vpack.c.bf16 %v8761, %v8761
      %v8914 = vpack.c.bf16 %v8762, %v8762
      %v8915 = vpack.c.bf16 %v8763, %v8763
      %v8916 = vpack.c.bf16 %v8764, %v8764
      %v8917 = vpack.c.bf16 %v8765, %v8765
      %v8918 = vpack.c.bf16 %v8766, %v8766
      %v8919 = vpack.c.bf16 %v8767, %v8767
      %v8920 = vpack.c.bf16 %v8768, %v8768
      %v8921 = vpack.c.bf16 %v8793, %v8793
      %v8922 = vpack.c.bf16 %v8794, %v8794
      %v8923 = vpack.c.bf16 %v8795, %v8795
      %v8924 = vpack.c.bf16 %v8796, %v8796
      %v8925 = vpack.c.bf16 %v8797, %v8797
      %v8926 = vpack.c.bf16 %v8798, %v8798
      %v8927 = vpack.c.bf16 %v8799, %v8799
      %v8928 = vpack.c.bf16 %v8800, %v8800
      %v8937 = vunpack.c.l.b16 %v8801
      %v8938 = vunpack.c.l.b16 %v8802
      %v8939 = vunpack.c.l.b16 %v8803
      %v8940 = vunpack.c.l.b16 %v8804
      %v8941 = vunpack.c.l.b16 %v8805
      %v8942 = vunpack.c.l.b16 %v8806
      %v8943 = vunpack.c.l.b16 %v8807
      %v8944 = vunpack.c.l.b16 %v8808
      %v8945 = vpack.c.b16 %v8938, %v8937
      %v8946 = vpack.c.b16 %v8940, %v8939
      %v8947 = vpack.c.b16 %v8942, %v8941
      %v8948 = vpack.c.b16 %v8944, %v8943
      %v8957 = vunpack.c.l.b16 %v8809
      %v8958 = vunpack.c.l.b16 %v8810
      %v8959 = vunpack.c.l.b16 %v8811
      %v8960 = vunpack.c.l.b16 %v8812
      %v8961 = vunpack.c.l.b16 %v8813
      %v8962 = vunpack.c.l.b16 %v8814
      %v8963 = vunpack.c.l.b16 %v8815
      %v8964 = vunpack.c.l.b16 %v8816
      %v8965 = vpack.c.b16 %v8958, %v8957
      %v8966 = vpack.c.b16 %v8960, %v8959
      %v8967 = vpack.c.b16 %v8962, %v8961
      %v8968 = vpack.c.b16 %v8964, %v8963
      %8969 = vrot.lane.b32.xlu0 %v8965, 8
      %v8970 = vpop.permute.xlu0 %8969
      %8971 = vrot.lane.b32.xlu0 %v8966, 8
      %v8972 = vpop.permute.xlu0 %8971
      %8973 = vrot.lane.b32.xlu0 %v8967, 8
      %v8974 = vpop.permute.xlu0 %8973
      %8975 = vrot.lane.b32.xlu0 %v8968, 8
      %v8976 = vpop.permute.xlu0 %8975
      %v8985 = vunpack.c.l.b16 %v8817
      %v8986 = vunpack.c.l.b16 %v8818
      %v8987 = vunpack.c.l.b16 %v8819
      %v8988 = vunpack.c.l.b16 %v8820
      %v8989 = vunpack.c.l.b16 %v8821
      %v8990 = vunpack.c.l.b16 %v8822
      %v8991 = vunpack.c.l.b16 %v8823
      %v8992 = vunpack.c.l.b16 %v8824
      %v8993 = vpack.c.b16 %v8986, %v8985
      %v8994 = vpack.c.b16 %v8988, %v8987
      %v8995 = vpack.c.b16 %v8990, %v8989
      %v8996 = vpack.c.b16 %v8992, %v8991
      %8997 = vrot.lane.b32.xlu0 %v8993, 16
      %v8998 = vpop.permute.xlu0 %8997
      %8999 = vrot.lane.b32.xlu0 %v8994, 16
      %v9000 = vpop.permute.xlu0 %8999
      %9001 = vrot.lane.b32.xlu0 %v8995, 16
      %v9002 = vpop.permute.xlu0 %9001
      %9003 = vrot.lane.b32.xlu0 %v8996, 16
      %v9004 = vpop.permute.xlu0 %9003
      %v9013 = vunpack.c.l.b16 %v8825
      %v9014 = vunpack.c.l.b16 %v8826
      %v9015 = vunpack.c.l.b16 %v8827
      %v9016 = vunpack.c.l.b16 %v8828
      %v9017 = vunpack.c.l.b16 %v8829
      %v9018 = vunpack.c.l.b16 %v8830
      %v9019 = vunpack.c.l.b16 %v8831
      %v9020 = vunpack.c.l.b16 %v8832
      %v9021 = vpack.c.b16 %v9014, %v9013
      %v9022 = vpack.c.b16 %v9016, %v9015
      %v9023 = vpack.c.b16 %v9018, %v9017
      %v9024 = vpack.c.b16 %v9020, %v9019
      %9025 = vrot.lane.b32.xlu0 %v9021, 24
      %v9026 = vpop.permute.xlu0 %9025
      %9027 = vrot.lane.b32.xlu0 %v9022, 24
      %v9028 = vpop.permute.xlu0 %9027
      %9029 = vrot.lane.b32.xlu0 %v9023, 24
      %v9030 = vpop.permute.xlu0 %9029
      %9031 = vrot.lane.b32.xlu0 %v9024, 24
      %v9032 = vpop.permute.xlu0 %9031
      %v9041 = vunpack.c.l.b16 %v8833
      %v9042 = vunpack.c.l.b16 %v8834
      %v9043 = vunpack.c.l.b16 %v8835
      %v9044 = vunpack.c.l.b16 %v8836
      %v9045 = vunpack.c.l.b16 %v8837
      %v9046 = vunpack.c.l.b16 %v8838
      %v9047 = vunpack.c.l.b16 %v8839
      %v9048 = vunpack.c.l.b16 %v8840
      %v9049 = vpack.c.b16 %v9042, %v9041
      %v9050 = vpack.c.b16 %v9044, %v9043
      %v9051 = vpack.c.b16 %v9046, %v9045
      %v9052 = vpack.c.b16 %v9048, %v9047
      %9053 = vrot.lane.b32.xlu0 %v9049, 32
      %v9054 = vpop.permute.xlu0 %9053
      %9055 = vrot.lane.b32.xlu0 %v9050, 32
      %v9056 = vpop.permute.xlu0 %9055
      %9057 = vrot.lane.b32.xlu0 %v9051, 32
      %v9058 = vpop.permute.xlu0 %9057
      %9059 = vrot.lane.b32.xlu0 %v9052, 32
      %v9060 = vpop.permute.xlu0 %9059
      %v9069 = vunpack.c.l.b16 %v8841
      %v9070 = vunpack.c.l.b16 %v8842
      %v9071 = vunpack.c.l.b16 %v8843
      %v9072 = vunpack.c.l.b16 %v8844
      %v9073 = vunpack.c.l.b16 %v8845
      %v9074 = vunpack.c.l.b16 %v8846
      %v9075 = vunpack.c.l.b16 %v8847
      %v9076 = vunpack.c.l.b16 %v8848
      %v9077 = vpack.c.b16 %v9070, %v9069
      %v9078 = vpack.c.b16 %v9072, %v9071
      %v9079 = vpack.c.b16 %v9074, %v9073
      %v9080 = vpack.c.b16 %v9076, %v9075
      %9081 = vrot.lane.b32.xlu0 %v9077, 40
      %v9082 = vpop.permute.xlu0 %9081
      %9083 = vrot.lane.b32.xlu0 %v9078, 40
      %v9084 = vpop.permute.xlu0 %9083
      %9085 = vrot.lane.b32.xlu0 %v9079, 40
      %v9086 = vpop.permute.xlu0 %9085
      %9087 = vrot.lane.b32.xlu0 %v9080, 40
      %v9088 = vpop.permute.xlu0 %9087
      %v9097 = vunpack.c.l.b16 %v8849
      %v9098 = vunpack.c.l.b16 %v8850
      %v9099 = vunpack.c.l.b16 %v8851
      %v9100 = vunpack.c.l.b16 %v8852
      %v9101 = vunpack.c.l.b16 %v8853
      %v9102 = vunpack.c.l.b16 %v8854
      %v9103 = vunpack.c.l.b16 %v8855
      %v9104 = vunpack.c.l.b16 %v8856
      %v9105 = vpack.c.b16 %v9098, %v9097
      %v9106 = vpack.c.b16 %v9100, %v9099
      %v9107 = vpack.c.b16 %v9102, %v9101
      %v9108 = vpack.c.b16 %v9104, %v9103
      %9109 = vrot.lane.b32.xlu0 %v9105, 48
      %v9110 = vpop.permute.xlu0 %9109
      %9111 = vrot.lane.b32.xlu0 %v9106, 48
      %v9112 = vpop.permute.xlu0 %9111
      %9113 = vrot.lane.b32.xlu0 %v9107, 48
      %v9114 = vpop.permute.xlu0 %9113
      %9115 = vrot.lane.b32.xlu0 %v9108, 48
      %v9116 = vpop.permute.xlu0 %9115
      %v9125 = vunpack.c.l.b16 %v8857
      %v9126 = vunpack.c.l.b16 %v8858
      %v9127 = vunpack.c.l.b16 %v8859
      %v9128 = vunpack.c.l.b16 %v8860
      %v9129 = vunpack.c.l.b16 %v8861
      %v9130 = vunpack.c.l.b16 %v8862
      %v9131 = vunpack.c.l.b16 %v8863
      %v9132 = vunpack.c.l.b16 %v8864
      %v9133 = vpack.c.b16 %v9126, %v9125
      %v9134 = vpack.c.b16 %v9128, %v9127
      %v9135 = vpack.c.b16 %v9130, %v9129
      %v9136 = vpack.c.b16 %v9132, %v9131
      %9137 = vrot.lane.b32.xlu0 %v9133, 56
      %v9138 = vpop.permute.xlu0 %9137
      %9139 = vrot.lane.b32.xlu0 %v9134, 56
      %v9140 = vpop.permute.xlu0 %9139
      %9141 = vrot.lane.b32.xlu0 %v9135, 56
      %v9142 = vpop.permute.xlu0 %9141
      %9143 = vrot.lane.b32.xlu0 %v9136, 56
      %v9144 = vpop.permute.xlu0 %9143
      %v9153 = vunpack.c.l.b16 %v8865
      %v9154 = vunpack.c.l.b16 %v8866
      %v9155 = vunpack.c.l.b16 %v8867
      %v9156 = vunpack.c.l.b16 %v8868
      %v9157 = vunpack.c.l.b16 %v8869
      %v9158 = vunpack.c.l.b16 %v8870
      %v9159 = vunpack.c.l.b16 %v8871
      %v9160 = vunpack.c.l.b16 %v8872
      %v9161 = vpack.c.b16 %v9154, %v9153
      %v9162 = vpack.c.b16 %v9156, %v9155
      %v9163 = vpack.c.b16 %v9158, %v9157
      %v9164 = vpack.c.b16 %v9160, %v9159
      %9165 = vrot.lane.b32.xlu0 %v9161, 64
      %v9166 = vpop.permute.xlu0 %9165
      %9167 = vrot.lane.b32.xlu0 %v9162, 64
      %v9168 = vpop.permute.xlu0 %9167
      %9169 = vrot.lane.b32.xlu0 %v9163, 64
      %v9170 = vpop.permute.xlu0 %9169
      %9171 = vrot.lane.b32.xlu0 %v9164, 64
      %v9172 = vpop.permute.xlu0 %9171
      %v9181 = vunpack.c.l.b16 %v8873
      %v9182 = vunpack.c.l.b16 %v8874
      %v9183 = vunpack.c.l.b16 %v8875
      %v9184 = vunpack.c.l.b16 %v8876
      %v9185 = vunpack.c.l.b16 %v8877
      %v9186 = vunpack.c.l.b16 %v8878
      %v9187 = vunpack.c.l.b16 %v8879
      %v9188 = vunpack.c.l.b16 %v8880
      %v9189 = vpack.c.b16 %v9182, %v9181
      %v9190 = vpack.c.b16 %v9184, %v9183
      %v9191 = vpack.c.b16 %v9186, %v9185
      %v9192 = vpack.c.b16 %v9188, %v9187
      %9193 = vrot.lane.b32.xlu0 %v9189, 72
      %v9194 = vpop.permute.xlu0 %9193
      %9195 = vrot.lane.b32.xlu0 %v9190, 72
      %v9196 = vpop.permute.xlu0 %9195
      %9197 = vrot.lane.b32.xlu0 %v9191, 72
      %v9198 = vpop.permute.xlu0 %9197
      %9199 = vrot.lane.b32.xlu0 %v9192, 72
      %v9200 = vpop.permute.xlu0 %9199
      %v9209 = vunpack.c.l.b16 %v8881
      %v9210 = vunpack.c.l.b16 %v8882
      %v9211 = vunpack.c.l.b16 %v8883
      %v9212 = vunpack.c.l.b16 %v8884
      %v9213 = vunpack.c.l.b16 %v8885
      %v9214 = vunpack.c.l.b16 %v8886
      %v9215 = vunpack.c.l.b16 %v8887
      %v9216 = vunpack.c.l.b16 %v8888
      %v9217 = vpack.c.b16 %v9210, %v9209
      %v9218 = vpack.c.b16 %v9212, %v9211
      %v9219 = vpack.c.b16 %v9214, %v9213
      %v9220 = vpack.c.b16 %v9216, %v9215
      %9221 = vrot.lane.b32.xlu0 %v9217, 80
      %v9222 = vpop.permute.xlu0 %9221
      %9223 = vrot.lane.b32.xlu0 %v9218, 80
      %v9224 = vpop.permute.xlu0 %9223
      %9225 = vrot.lane.b32.xlu0 %v9219, 80
      %v9226 = vpop.permute.xlu0 %9225
      %9227 = vrot.lane.b32.xlu0 %v9220, 80
      %v9228 = vpop.permute.xlu0 %9227
      %v9237 = vunpack.c.l.b16 %v8889
      %v9238 = vunpack.c.l.b16 %v8890
      %v9239 = vunpack.c.l.b16 %v8891
      %v9240 = vunpack.c.l.b16 %v8892
      %v9241 = vunpack.c.l.b16 %v8893
      %v9242 = vunpack.c.l.b16 %v8894
      %v9243 = vunpack.c.l.b16 %v8895
      %v9244 = vunpack.c.l.b16 %v8896
      %v9245 = vpack.c.b16 %v9238, %v9237
      %v9246 = vpack.c.b16 %v9240, %v9239
      %v9247 = vpack.c.b16 %v9242, %v9241
      %v9248 = vpack.c.b16 %v9244, %v9243
      %9249 = vrot.lane.b32.xlu0 %v9245, 88
      %v9250 = vpop.permute.xlu0 %9249
      %9251 = vrot.lane.b32.xlu0 %v9246, 88
      %v9252 = vpop.permute.xlu0 %9251
      %9253 = vrot.lane.b32.xlu0 %v9247, 88
      %v9254 = vpop.permute.xlu0 %9253
      %9255 = vrot.lane.b32.xlu0 %v9248, 88
      %v9256 = vpop.permute.xlu0 %9255
      %v9265 = vunpack.c.l.b16 %v8897
      %v9266 = vunpack.c.l.b16 %v8898
      %v9267 = vunpack.c.l.b16 %v8899
      %v9268 = vunpack.c.l.b16 %v8900
      %v9269 = vunpack.c.l.b16 %v8901
      %v9270 = vunpack.c.l.b16 %v8902
      %v9271 = vunpack.c.l.b16 %v8903
      %v9272 = vunpack.c.l.b16 %v8904
      %v9273 = vpack.c.b16 %v9266, %v9265
      %v9274 = vpack.c.b16 %v9268, %v9267
      %v9275 = vpack.c.b16 %v9270, %v9269
      %v9276 = vpack.c.b16 %v9272, %v9271
      %9277 = vrot.lane.b32.xlu0 %v9273, 96
      %v9278 = vpop.permute.xlu0 %9277
      %9279 = vrot.lane.b32.xlu0 %v9274, 96
      %v9280 = vpop.permute.xlu0 %9279
      %9281 = vrot.lane.b32.xlu0 %v9275, 96
      %v9282 = vpop.permute.xlu0 %9281
      %9283 = vrot.lane.b32.xlu0 %v9276, 96
      %v9284 = vpop.permute.xlu0 %9283
      %v9293 = vunpack.c.l.b16 %v8905
      %v9294 = vunpack.c.l.b16 %v8906
      %v9295 = vunpack.c.l.b16 %v8907
      %v9296 = vunpack.c.l.b16 %v8908
      %v9297 = vunpack.c.l.b16 %v8909
      %v9298 = vunpack.c.l.b16 %v8910
      %v9299 = vunpack.c.l.b16 %v8911
      %v9300 = vunpack.c.l.b16 %v8912
      %v9301 = vpack.c.b16 %v9294, %v9293
      %v9302 = vpack.c.b16 %v9296, %v9295
      %v9303 = vpack.c.b16 %v9298, %v9297
      %v9304 = vpack.c.b16 %v9300, %v9299
      %9305 = vrot.lane.b32.xlu0 %v9301, 104
      %v9306 = vpop.permute.xlu0 %9305
      %9307 = vrot.lane.b32.xlu0 %v9302, 104
      %v9308 = vpop.permute.xlu0 %9307
      %9309 = vrot.lane.b32.xlu0 %v9303, 104
      %v9310 = vpop.permute.xlu0 %9309
      %9311 = vrot.lane.b32.xlu0 %v9304, 104
      %v9312 = vpop.permute.xlu0 %9311
      %v9321 = vunpack.c.l.b16 %v8913
      %v9322 = vunpack.c.l.b16 %v8914
      %v9323 = vunpack.c.l.b16 %v8915
      %v9324 = vunpack.c.l.b16 %v8916
      %v9325 = vunpack.c.l.b16 %v8917
      %v9326 = vunpack.c.l.b16 %v8918
      %v9327 = vunpack.c.l.b16 %v8919
      %v9328 = vunpack.c.l.b16 %v8920
      %v9329 = vpack.c.b16 %v9322, %v9321
      %v9330 = vpack.c.b16 %v9324, %v9323
      %v9331 = vpack.c.b16 %v9326, %v9325
      %v9332 = vpack.c.b16 %v9328, %v9327
      %9333 = vrot.lane.b32.xlu0 %v9329, 112
      %v9334 = vpop.permute.xlu0 %9333
      %9335 = vrot.lane.b32.xlu0 %v9330, 112
      %v9336 = vpop.permute.xlu0 %9335
      %9337 = vrot.lane.b32.xlu0 %v9331, 112
      %v9338 = vpop.permute.xlu0 %9337
      %9339 = vrot.lane.b32.xlu0 %v9332, 112
      %v9340 = vpop.permute.xlu0 %9339
      %v9349 = vunpack.c.l.b16 %v8921
      %v9350 = vunpack.c.l.b16 %v8922
      %v9351 = vunpack.c.l.b16 %v8923
      %v9352 = vunpack.c.l.b16 %v8924
      %v9353 = vunpack.c.l.b16 %v8925
      %v9354 = vunpack.c.l.b16 %v8926
      %v9355 = vunpack.c.l.b16 %v8927
      %v9356 = vunpack.c.l.b16 %v8928
      %v9357 = vpack.c.b16 %v9350, %v9349
      %v9358 = vpack.c.b16 %v9352, %v9351
      %v9359 = vpack.c.b16 %v9354, %v9353
      %v9360 = vpack.c.b16 %v9356, %v9355
      %9361 = vrot.lane.b32.xlu0 %v9357, 120
      %v9362 = vpop.permute.xlu0 %9361
      %9363 = vrot.lane.b32.xlu0 %v9358, 120
      %v9364 = vpop.permute.xlu0 %9363
      %9365 = vrot.lane.b32.xlu0 %v9359, 120
      %v9366 = vpop.permute.xlu0 %9365
      %9367 = vrot.lane.b32.xlu0 %v9360, 120
      %v9368 = vpop.permute.xlu0 %9367
      %v9371 = vsel %vm6633, %v8945, %v8970
      %v9374 = vsel %vm6633, %v8946, %v8972
      %v9377 = vsel %vm6633, %v8947, %v8974
      %v9380 = vsel %vm6633, %v8948, %v8976
      %v9382 = vsel %vm5744, %v9371, %v8998
      %v9384 = vsel %vm5744, %v9374, %v9000
      %v9386 = vsel %vm5744, %v9377, %v9002
      %v9388 = vsel %vm5744, %v9380, %v9004
      %vm9389 = vcmask 195584
      %v9391 = vsel %vm9389, %v9382, %v9026
      %v9393 = vsel %vm9389, %v9384, %v9028
      %v9395 = vsel %vm9389, %v9386, %v9030
      %v9397 = vsel %vm9389, %v9388, %v9032
      %v9399 = vsel %vm1339, %v9391, %v9054
      %v9401 = vsel %vm1339, %v9393, %v9056
      %v9403 = vsel %vm1339, %v9395, %v9058
      %v9405 = vsel %vm1339, %v9397, %v9060
      %vm9406 = vcmask 326656
      %v9408 = vsel %vm9406, %v9399, %v9082
      %v9410 = vsel %vm9406, %v9401, %v9084
      %v9412 = vsel %vm9406, %v9403, %v9086
      %v9414 = vsel %vm9406, %v9405, %v9088
      %v9416 = vsel %vm6285, %v9408, %v9110
      %v9418 = vsel %vm6285, %v9410, %v9112
      %v9420 = vsel %vm6285, %v9412, %v9114
      %v9422 = vsel %vm6285, %v9414, %v9116
      %vm9423 = vcmask 457728
      %v9425 = vsel %vm9423, %v9416, %v9138
      %v9427 = vsel %vm9423, %v9418, %v9140
      %v9429 = vsel %vm9423, %v9420, %v9142
      %v9431 = vsel %vm9423, %v9422, %v9144
      %v9433 = vsel %vm1348, %v9425, %v9166
      %v9435 = vsel %vm1348, %v9427, %v9168
      %v9437 = vsel %vm1348, %v9429, %v9170
      %v9439 = vsel %vm1348, %v9431, %v9172
      %vm9440 = vcmask 588800
      %v9442 = vsel %vm9440, %v9433, %v9194
      %v9444 = vsel %vm9440, %v9435, %v9196
      %v9446 = vsel %vm9440, %v9437, %v9198
      %v9448 = vsel %vm9440, %v9439, %v9200
      %vm9449 = vcmask 654336
      %v9451 = vsel %vm9449, %v9442, %v9222
      %v9453 = vsel %vm9449, %v9444, %v9224
      %v9455 = vsel %vm9449, %v9446, %v9226
      %v9457 = vsel %vm9449, %v9448, %v9228
      %vm9458 = vcmask 719872
      %v9460 = vsel %vm9458, %v9451, %v9250
      %v9462 = vsel %vm9458, %v9453, %v9252
      %v9464 = vsel %vm9458, %v9455, %v9254
      %v9466 = vsel %vm9458, %v9457, %v9256
      %v9468 = vsel %vm1462, %v9460, %v9278
      %v9470 = vsel %vm1462, %v9462, %v9280
      %v9472 = vsel %vm1462, %v9464, %v9282
      %v9474 = vsel %vm1462, %v9466, %v9284
      %vm9475 = vcmask 850944
      %v9477 = vsel %vm9475, %v9468, %v9306
      %v9479 = vsel %vm9475, %v9470, %v9308
      %v9481 = vsel %vm9475, %v9472, %v9310
      %v9483 = vsel %vm9475, %v9474, %v9312
      %vm9484 = vcmask 916480
      %v9486 = vsel %vm9484, %v9477, %v9334
      %v9488 = vsel %vm9484, %v9479, %v9336
      %v9490 = vsel %vm9484, %v9481, %v9338
      %v9492 = vsel %vm9484, %v9483, %v9340
      %vm9493 = vcmask 982016
      %v9495 = vsel %vm9493, %v9486, %v9362
      %v9498 = vsel %vm9493, %v9488, %v9364
      %v9501 = vsel %vm9493, %v9490, %v9366
      %v9504 = vsel %vm9493, %v9492, %v9368
      %v9506 = vld [vmem:[%s18] sm:$0xf]
      %v9507 = vld [vmem:[%s18 + $0x4] sm:$0xf]
      %v9508 = vld [vmem:[%s18 + $0x8] sm:$0xf]
      %v9509 = vld [vmem:[%s18 + $0xc] sm:$0xf]
      %v9510 = vld [vmem:[%s18 + $0x10] sm:$0xf]
      %v9511 = vld [vmem:[%s18 + $0x14] sm:$0xf]
      %v9512 = vld [vmem:[%s18 + $0x18] sm:$0xf]
      %v9513 = vld [vmem:[%s18 + $0x1c] sm:$0xf]
      %v9514 = vld [vmem:[%s18 + $0x20] sm:$0xf]
      %v9515 = vld [vmem:[%s18 + $0x24] sm:$0xf]
      %v9516 = vld [vmem:[%s18 + $0x28] sm:$0xf]
      %v9517 = vld [vmem:[%s18 + $0x2c] sm:$0xf]
      %v9518 = vld [vmem:[%s18 + $0x30] sm:$0xf]
      %v9519 = vld [vmem:[%s18 + $0x34] sm:$0xf]
      %v9520 = vld [vmem:[%s18 + $0x38] sm:$0xf]
      %v9521 = vld [vmem:[%s18 + $0x3c] sm:$0xf]
      %v9522 = vld [vmem:[%s19] sm:$0x1]
      %v9524 = vperm.slane %v9522, 0
      %v9542 = vunpack.c.l.b16 %v9506
      %v9543 = vunpack.c.l.b16 %v9507
      %v9544 = vunpack.c.l.b16 %v9508
      %v9545 = vunpack.c.l.b16 %v9509
      %v9546 = vunpack.c.l.b16 %v9510
      %v9547 = vunpack.c.l.b16 %v9511
      %v9548 = vunpack.c.l.b16 %v9512
      %v9549 = vunpack.c.l.b16 %v9513
      %v9550 = vunpack.c.l.b16 %v9514
      %v9551 = vunpack.c.l.b16 %v9515
      %v9552 = vunpack.c.l.b16 %v9516
      %v9553 = vunpack.c.l.b16 %v9517
      %v9554 = vunpack.c.l.b16 %v9518
      %v9555 = vunpack.c.l.b16 %v9519
      %v9556 = vunpack.c.l.b16 %v9520
      %v9557 = vunpack.c.l.b16 %v9521
      %v9558 = vpack.c.b16 %v9543, %v9542
      %v9559 = vpack.c.b16 %v9545, %v9544
      %v9560 = vpack.c.b16 %v9547, %v9546
      %v9561 = vpack.c.b16 %v9549, %v9548
      %v9562 = vpack.c.b16 %v9551, %v9550
      %v9563 = vpack.c.b16 %v9553, %v9552
      %v9564 = vpack.c.b16 %v9555, %v9554
      %v9565 = vpack.c.b16 %v9557, %v9556
      %9574 = vmatpush.bf16.msra.mxu0 %v9565
      %9575 = vmatpush.bf16.msra.mxu0 %v9564
      %9576 = vmatpush.bf16.msra.mxu0 %v9563
      %9577 = vmatpush.bf16.msra.mxu0 %v9562
      %9578 = vmatpush.bf16.msra.mxu0 %v9561
      %9579 = vmatpush.bf16.msra.mxu0 %v9560
      %9580 = vmatpush.bf16.msra.mxu0 %v9559
      %9581 = vmatpush.bf16.msra.mxu0 %v9558
      %9582 = vmatmul.bf16.gmra.mxu0 %v9495
      %v9583 = vpop.f32.mrf.mxu0
      %v9584 = vadd.f32 %v9524, %v9583
      %v9585 = vpop.f32.mrf.mxu0
      %v9586 = vadd.f32 %v9524, %v9585
      %9587 = vmatmul.bf16.gmra.mxu0 %v9498
      %v9588 = vpop.f32.mrf.mxu0
      %v9589 = vadd.f32 %v9524, %v9588
      %v9590 = vpop.f32.mrf.mxu0
      %v9591 = vadd.f32 %v9524, %v9590
      %9592 = vmatmul.bf16.gmra.mxu0 %v9501
      %v9593 = vpop.f32.mrf.mxu0
      %v9594 = vadd.f32 %v9524, %v9593
      %v9595 = vpop.f32.mrf.mxu0
      %v9596 = vadd.f32 %v9524, %v9595
      %9597 = vmatmul.bf16.gmra.mxu0 %v9504
      %v9598 = vpop.f32.mrf.mxu0
      %v9599 = vadd.f32 %v9524, %v9598
      %v9600 = vpop.f32.mrf.mxu0
      %v9601 = vadd.f32 %v9524, %v9600
      %9602 = vdwg.mxu0
      %v9603 = vtanh.pop %v9584
      %v9604 = vtanh.pop %v9586
      %v9605 = vtanh.pop %v9589
      %v9606 = vtanh.pop %v9591
      %v9607 = vtanh.pop %v9594
      %v9608 = vtanh.pop %v9596
      %v9609 = vtanh.pop %v9599
      %v9610 = vtanh.pop %v9601
      %9611 = vst.msk [vmem:[%s629] sm:$0xff] %vm6285, %v9603
      %9612 = vst.msk [vmem:[%s629 + $0x8] sm:$0xff] %vm6285, %v9604
      %9613 = vst.msk [vmem:[%s629 + $0x10] sm:$0xff] %vm6285, %v9605
      %9614 = vst.msk [vmem:[%s629 + $0x18] sm:$0xff] %vm6285, %v9606
      %9615 = vst.msk [vmem:[%s629 + $0x20] sm:$0xff] %vm6285, %v9607
      %9616 = vst.msk [vmem:[%s629 + $0x28] sm:$0xff] %vm6285, %v9608
      %9617 = vst.msk [vmem:[%s629 + $0x30] sm:$0xff] %vm6285, %v9609
      %9618 = vst.msk [vmem:[%s629 + $0x38] sm:$0xff] %vm6285, %v9610
      %p9619 = scmp.lt.s32.totalorder %s31, 1
      %s9620 = scalar_select %p9619, %s31, 1
      %s9621 = smul.addr %s9620, 8
      %s9622 = smul.addr %s9621, 8
      %s9623 = scalar_lea.vmem %s20, %s9622
      // Predicated region
      $region101: #{decoder_forward.1} parent=99 // pred_check
        %p9624 = pneg %p474
      $region102: #{decoder_forward.1} parent=99 // pred_check_branch
        %9626 = sbr.rel (%p9624) target = $region104
      $region103: #{decoder_forward.1} parent=99 // pred_region
        _
      $region104: #{decoder_forward.1} parent=99 // pred_fallthru
        _
    $region100: #{decoder_forward.1} parent=5 // pred_fallthru
      _
    %p9627 = scmp.le.s32.totalorder 2, %s26
    // Predicated region
    $region105: #{decoder_forward.1} parent=5 // pred_check
      %p9628 = pneg %p9627
    $region106: #{decoder_forward.1} parent=5 // pred_check_branch
      %9630 = sbr.rel (%p9628) target = $region108
    $region107: #{decoder_forward.1} parent=5 // pred_region
      %s9631 = ssub.s32 %s26, 2
      // Predicated region
      $region109: #{decoder_forward.1} parent=107 // pred_check
        %p9632 = pneg %p480
      $region110: #{decoder_forward.1} parent=107 // pred_check_branch
        %9634 = sbr.rel (%p9632) target = $region112
      $region111: #{decoder_forward.1} parent=107 // pred_region
        %p9635 = scmp.lt.s32.totalorder %s32, 1
        %s9636 = scalar_select %p9635, %s32, 1
        %s9637 = smul.addr %s9636, 8
        %s9638 = smul.addr %s9637, 8
        %s9639 = scalar_lea.vmem %s20, %s9638
      $region112: #{decoder_forward.1} parent=107 // pred_fallthru
        _
    $region108: #{decoder_forward.1} parent=5 // pred_fallthru
      _
  $region6: #{decoder_forward.1} parent=0 // loop_footer
    %s30 = sadd.s32 1, %s26
  $region7: #{decoder_forward.1} parent=0 // loop_footer_branch
    %25 = sbr.rel target = $region3
  $region8: #{decoder_forward.1} parent=0 // loop_exit
    _

</llo_original>
